<compile_context>
chip_gen: v6e
topology: v6e:2x2x1
jax: 0.10.0
libtpu: 0.0.40
codegen_flags: <defaults>
</compile_context>

<pallas_src>
import functools

import jax
import jax.numpy as jnp
import numpy as np
from jax.experimental import pallas as pl
from jax.experimental.pallas import tpu as pltpu

LANE = 128
ROWG = 16          # row granularity: lcm of f32 (8) and bf16 (16) sublane tiles


def _round_up(n, m):
    return ((n + m - 1) // m) * m


def _choose_tiles(B, tb_max=512):
    """Pick the batch tile.

    Rows are a multiple of 16 (valid for both f32 and bf16 tiles).  When the
    batch fits in <= 2 * tb_max rows we split it into two tiles so the grid has
    >= 2 steps and the "parallel" batch axis can use both v7x TensorCores;
    otherwise use tb_max-row tiles to amortize per-grid-step overhead.
    """
    B16 = _round_up(B, ROWG)
    if B16 <= 2 * tb_max:
        tb = max(ROWG, _round_up((B16 + 1) // 2, ROWG))
    else:
        tb = tb_max
    B_pad = _round_up(B16, tb)
    return tb, B_pad


# ----------------------------------------------------------------------------
# Kernel: one batch tile per grid step; weights/tables are VMEM-resident.
# ----------------------------------------------------------------------------
def _multimlp_kernel(
    x_ref, t_ref,
    wpt_ref, bpt_ref,                     # fused [proj ; time_embed[2]] weight + (bp+bt2)
    wt1_ref, bt1_ref,                     # time_embed[0]: Linear(1 -> dim_t) (affine)
    w0_ref, b0_ref, w1_ref, b1_ref,       # 4x [Linear + ReLU (+ Dropout=identity)]
    w2_ref, b2_ref, w3_ref, b3_ref,
    wh_ref, bh_ref,                       # head: Linear(512 -> d_out) (padded to 128 lanes)
    segS_ref,                             # (d_out_pad, d_out_pad) bf16 segment membership
    cid_ref,                              # (1, d_out_pad) f32: class-id+1 per softmax column
    pass_ref,                             # (1, d_out_pad) f32: 1 where raw head value is emitted
    out_ref,
    *, num_classes,
):
    f32 = jnp.float32
    bf16 = jnp.bfloat16

    x = x_ref[...]                        # (TB, d_pad) bf16 (zero-padded features)
    t = t_ref[...]                        # (TB, 1)     f32

    # --- time_embed[0] + SiLU -------------------------------------------------
    # fan_in == 1 => Linear(1, dim_t) is a broadcasted scale+shift (VPU only).
    h = t * wt1_ref[...] + bt1_ref[...]                       # (TB, dim_t) f32
    s = h * (1.0 / (1.0 + jnp.exp(-h)))                       # exact SiLU (exp on EUP)

    # --- fused proj(x) + time_embed[2](silu) as one K = d_pad + dim_t matmul --
    xs = jnp.concatenate([x, s.astype(bf16)], axis=1)         # (TB, d_pad+dim_t) bf16
    xe = jnp.dot(xs, wpt_ref[...], preferred_element_type=f32) + bpt_ref[...]

    # --- 4x MLP blocks: Linear -> ReLU -> Dropout(identity, eval mode) --------
    h = jnp.maximum(jnp.dot(xe.astype(bf16), w0_ref[...], preferred_element_type=f32) + b0_ref[...], 0.0)
    h = jnp.maximum(jnp.dot(h.astype(bf16),  w1_ref[...], preferred_element_type=f32) + b1_ref[...], 0.0)
    h = jnp.maximum(jnp.dot(h.astype(bf16),  w2_ref[...], preferred_element_type=f32) + b2_ref[...], 0.0)
    h = jnp.maximum(jnp.dot(h.astype(bf16),  w3_ref[...], preferred_element_type=f32) + b3_ref[...], 0.0)

    # --- head -----------------------------------------------------------------
    out = jnp.dot(h.astype(bf16), wh_ref[...],
                  preferred_element_type=f32) + bh_ref[...]   # (TB, d_out_pad) f32

    cid = cid_ref[...]                      # (1, d_out_pad), broadcasts over rows
    pass_mask = pass_ref[...] > 0.5         # columns that emit the raw head value

    # --- per-class-segment softmax along the feature axis ---------------------
    if num_classes > 0:
        seg_mask = cid > 0.5
        # Per-segment row max for numerical stability (len(classes) XLU reduces).
        m_b = jnp.zeros_like(out)
        for g in range(num_classes):                          # static Python unroll
            mg = cid == float(g + 1)
            m = jnp.max(jnp.where(mg, out, -jnp.inf), axis=1, keepdims=True)
            m_b = jnp.where(mg, m, m_b)
        # ONE exp for all segments; non-segment columns become exp(-1e30) == 0.
        e = jnp.exp(jnp.where(seg_mask, out - m_b, -1e30))
        e16 = e.astype(bf16)
        # Per-segment denominators on the MXU: d[:, j] = sum_k e[:, k] * S[k, j].
        d = jnp.dot(e16, segS_ref[...], preferred_element_type=f32)
        d = d + jnp.where(seg_mask, 0.0, 1.0)                 # avoid 0/0 off-segment
        # Exact division; numerator uses the same bf16-rounded e so each
        # segment's probabilities sum to ~1 (up to f32 rounding).
        seg_val = e16.astype(f32) / d
    else:
        seg_val = jnp.zeros_like(out)

    # --- single merged select ---------------------------------------------------
    # passthrough columns ([:num_feat] and the last real column) -> raw head
    # value; segment columns -> softmax; everything else (padding) -> 0.
    # For classification the wrapper overwrites the last column with the
    # batch-axis softmax of the raw head values emitted here.
    out_ref[...] = jnp.where(pass_mask, out, seg_val).astype(out_ref.dtype)


# ----------------------------------------------------------------------------
# Wrapper: padding, bf16 weight casts, batch-tiled pallas_call.
# ----------------------------------------------------------------------------
def multimlp_forward(params, x, t, *, num_feat, classes, task, tb=512):
    B, d_in = x.shape
    d_out = d_in                                   # MultiMLP sets d_out = d_in
    dim_t = params["wt2"].shape[0]
    hidden = params["w0"].shape[1]

    d_pad = _round_up(d_in, LANE)                  # lane-dense input tile
    d_out_pad = _round_up(d_out, LANE)             # lane-dense output tile
    tb, B_pad = _choose_tiles(B, tb_max=tb)

    f32, bf16 = jnp.float32, jnp.bfloat16

    # x stored in bf16 (the MXU consumes it in bf16 anyway) -> half the HBM
    # traffic of the previous padded-f32 copy; t stays f32 (tiny).
    x_p = jnp.zeros((B_pad, d_pad), bf16).at[:B, :d_in].set(x.astype(bf16))
    t_p = jnp.zeros((B_pad, 1), f32).at[:B, :].set(t.astype(f32))

    # Fused [proj ; time_embed[2]] weight: one K = d_pad + dim_t matmul.
    wpt = jnp.zeros((d_pad + dim_t, dim_t), bf16)
    wpt = wpt.at[:d_in, :].set(params["wp"].astype(bf16))
    wpt = wpt.at[d_pad:, :].set(params["wt2"].astype(bf16))
    bpt = (params["bp"] + params["bt2"]).astype(f32)

    wt1 = params["wt1"].astype(f32)
    bt1 = params["bt1"].astype(f32)
    w0, b0 = params["w0"].astype(bf16), params["b0"].astype(f32)
    w1, b1 = params["w1"].astype(bf16), params["b1"].astype(f32)
    w2, b2 = params["w2"].astype(bf16), params["b2"].astype(f32)
    w3, b3 = params["w3"].astype(bf16), params["b3"].astype(f32)
    wh = jnp.zeros((hidden, d_out_pad), bf16).at[:, :d_out].set(params["wh"].astype(bf16))
    bh = jnp.zeros((1, d_out_pad), f32).at[:, :d_out].set(params["bh"].astype(f32))

    # Precomputed per-column metadata + segment-membership matrix so the
    # epilogue is one exp, one small MXU matmul and one select.
    cid_np = np.zeros((1, d_out_pad), np.float32)   # class-id+1 per softmax column
    pass_np = np.zeros((1, d_out_pad), np.float32)  # 1 where raw head value is emitted
    segS_np = np.zeros((d_out_pad, d_out_pad), np.float32)
    pass_np[0, :num_feat] = 1.0
    pass_np[0, d_out - 1] = 1.0
    cum = num_feat
    for g, val in enumerate(classes):
        cid_np[0, cum:cum + val] = float(g + 1)
        segS_np[cum:cum + val, cum:cum + val] = 1.0
        cum += val
    segS = jnp.asarray(segS_np, bf16)
    cid = jnp.asarray(cid_np)
    pass_col = jnp.asarray(pass_np)

    inputs = (x_p, t_p, wpt, bpt, wt1, bt1,
              w0, b0, w1, b1, w2, b2, w3, b3, wh, bh,
              segS, cid, pass_col)

    batch_map = lambda i: (i, 0)
    const_map = lambda i: (0, 0)

    def const_spec(shape):
        # Constant block index -> single VMEM-resident copy, no double-buffering.
        return pl.BlockSpec(shape, const_map, pipeline_mode=pl.Buffered(1))

    in_specs = [
        pl.BlockSpec((tb, d_pad), batch_map),          # x  (tiled over batch)
        pl.BlockSpec((tb, 1), batch_map),              # t  (tiled over batch)
        const_spec((d_pad + dim_t, dim_t)),            # wpt  (VMEM-resident)
        const_spec((1, dim_t)),                        # bpt
        const_spec((1, dim_t)),                        # wt1
        const_spec((1, dim_t)),                        # bt1
        const_spec((dim_t, hidden)),                   # w0
        const_spec((1, hidden)),                       # b0
        const_spec((hidden, hidden)),                  # w1
        const_spec((1, hidden)),                       # b1
        const_spec((hidden, hidden)),                  # w2
        const_spec((1, hidden)),                       # b2
        const_spec((hidden, hidden)),                  # w3
        const_spec((1, hidden)),                       # b3
        const_spec((hidden, d_out_pad)),               # wh
        const_spec((1, d_out_pad)),                    # bh
        const_spec((d_out_pad, d_out_pad)),            # segS
        const_spec((1, d_out_pad)),                    # cid
        const_spec((1, d_out_pad)),                    # pass_col
    ]
    out_spec = pl.BlockSpec((tb, d_out_pad), batch_map)

    kernel = functools.partial(_multimlp_kernel, num_classes=len(classes))

    flops = 2 * B_pad * ((d_pad + dim_t) * dim_t + dim_t * hidden
                         + 3 * hidden * hidden + hidden * d_out_pad
                         + d_out_pad * d_out_pad)
    transcendentals = B_pad * (dim_t + d_out_pad)
    weight_bytes = sum(int(np.prod(a.shape)) * a.dtype.itemsize for a in inputs[2:])
    bytes_accessed = int(weight_bytes + B_pad * (d_pad * 2 + 4 + d_out_pad * 4))

    out_padded = pl.pallas_call(
        kernel,
        out_shape=jax.ShapeDtypeStruct((B_pad, d_out_pad), f32),
        grid=(B_pad // tb,),
        in_specs=in_specs,
        out_specs=out_spec,
        compiler_params=pltpu.CompilerParams(
            dimension_semantics=("parallel",),          # megacore split on v7x
            vmem_limit_bytes=32 * 1024 * 1024,
        ),
        cost_estimate=pl.CostEstimate(
            flops=flops,
            transcendentals=transcendentals,
            bytes_accessed=bytes_accessed,
        ),
    )(*inputs)

    res = out_padded[:B, :d_out]
    if task != "regression":
        # Batch-axis softmax of the last column must span the FULL batch, so it
        # is applied outside the (batch-tiled) kernel on the raw head values.
        res = res.at[:, d_out - 1].set(jax.nn.softmax(res[:, d_out - 1], axis=0))
    return res


# ----------------------------------------------------------------------------
# Deterministic parameter init (PyTorch-Linear-style uniform; weights stored
# as (fan_in, fan_out) = transposed relative to torch).
# ----------------------------------------------------------------------------
def _init_linear(key, fan_in, fan_out):
    kw, kb = jax.random.split(key)
    bound = 1.0 / (fan_in ** 0.5)
    W = jax.random.uniform(kw, (fan_in, fan_out), jnp.float32, -bound, bound)
    b = jax.random.uniform(kb, (1, fan_out), jnp.float32, -bound, bound)
    return W, b


def make_params(key, d_in, dim_t=128, hidden=512):
    keys = jax.random.split(key, 8)
    p = {}
    p["wp"], p["bp"] = _init_linear(keys[0], d_in, dim_t)      # proj
    p["wt1"], p["bt1"] = _init_linear(keys[1], 1, dim_t)       # time_embed[0]
    p["wt2"], p["bt2"] = _init_linear(keys[2], dim_t, dim_t)   # time_embed[2]
    p["w0"], p["b0"] = _init_linear(keys[3], dim_t, hidden)    # block 0
    p["w1"], p["b1"] = _init_linear(keys[4], hidden, hidden)   # block 1
    p["w2"], p["b2"] = _init_linear(keys[5], hidden, hidden)   # block 2
    p["w3"], p["b3"] = _init_linear(keys[6], hidden, hidden)   # block 3
    p["wh"], p["bh"] = _init_linear(keys[7], hidden, d_in)     # head (d_out = d_in)
    return p


# ----------------------------------------------------------------------------
# Pure-JAX reference. matmul_dtype=bf16 mimics the kernel's MXU precision
# (bf16 operands, f32 accumulation) for a tight numerical check; f32 gives the
# faithful "torch" math for a looser sanity check.
# ----------------------------------------------------------------------------
def reference_forward(params, x, t, *, num_feat, classes, task,
                      matmul_dtype=jnp.float32):
    def mm(a, w):
        return jnp.dot(a.astype(matmul_dtype), w.astype(matmul_dtype),
                       preferred_element_type=jnp.float32)

    h = t * params["wt1"] + params["bt1"]
    h = h * jax.nn.sigmoid(h)
    emb = mm(h, params["wt2"]) + params["bt2"]
    xe = mm(x, params["wp"]) + params["bp"] + emb
    h = jnp.maximum(mm(xe, params["w0"]) + params["b0"], 0.0)
    h = jnp.maximum(mm(h, params["w1"]) + params["b1"], 0.0)
    h = jnp.maximum(mm(h, params["w2"]) + params["b2"], 0.0)
    h = jnp.maximum(mm(h, params["w3"]) + params["b3"], 0.0)
    out = mm(h, params["wh"]) + params["bh"]

    res = jnp.zeros_like(out)
    res = res.at[:, :num_feat].set(out[:, :num_feat])
    cum = num_feat
    for val in classes:
        seg = out[:, cum:cum + val]
        res = res.at[:, cum:cum + val].set(jax.nn.softmax(seg, axis=1))
        cum += val
    if task == "regression":
        res = res.at[:, -1].set(out[:, -1])
    else:
        res = res.at[:, -1].set(jax.nn.softmax(out[:, -1], axis=0))
    return res


# ----------------------------------------------------------------------------
if __name__ == "__main__":
    # Small config consistent with the module: num_feat continuous features,
    # two categorical blocks, one trailing column -> d_in = 3 + (2 + 3) + 1 = 9.
    num_feat = 3
    classes = [2, 3]
    d_in = num_feat + sum(classes) + 1
    B = 500          # not a multiple of the batch tile -> exercises padding path
                     # (also gives a 2-step grid -> both v7x TensorCores used)

    key = jax.random.PRNGKey(0)
    kp, kx, kt = jax.random.split(key, 3)
    params = make_params(kp, d_in)
    x = jax.random.normal(kx, (B, d_in), jnp.float32)
    t = jax.random.uniform(kt, (B, 1), jnp.float32)

    for task in ("regression", "classification"):
        out = multimlp_forward(params, x, t, num_feat=num_feat, classes=classes,
                               task=task)
        out = jax.block_until_ready(out)

        assert out.shape == (B, d_in), out.shape
        assert bool(jnp.all(jnp.isfinite(out)))

        # Tight check against a reference with the same matmul precision (bf16
        # operands, f32 accumulation) as the kernel.
        ref_bf16 = jax.block_until_ready(
            reference_forward(params, x, t, num_feat=num_feat, classes=classes,
                              task=task, matmul_dtype=jnp.bfloat16))
        np.testing.assert_allclose(np.asarray(out), np.asarray(ref_bf16),
                                   rtol=1e-2, atol=1e-3)

        # Loose sanity check against the faithful f32 math of the module.
        ref_f32 = jax.block_until_ready(
            reference_forward(params, x, t, num_feat=num_feat, classes=classes,
                              task=task, matmul_dtype=jnp.float32))
        np.testing.assert_allclose(np.asarray(out), np.asarray(ref_f32),
                                   rtol=1e-1, atol=2e-2)

    print("KERNEL_OK")
</pallas_src>

<mosaic_0001>
module attributes {stable_mosaic.version = 11 : i64} {
  func.func @_multimlp_kernel(%arg0: i32, %arg1: memref<256x128xbf16, #tpu.memory_space<vmem>>, %arg2: memref<256x1xf32, #tpu.memory_space<vmem>>, %arg3: memref<256x128xbf16, #tpu.memory_space<vmem>>, %arg4: memref<1x128xf32, #tpu.memory_space<vmem>>, %arg5: memref<1x128xf32, #tpu.memory_space<vmem>>, %arg6: memref<1x128xf32, #tpu.memory_space<vmem>>, %arg7: memref<128x512xbf16, #tpu.memory_space<vmem>>, %arg8: memref<1x512xf32, #tpu.memory_space<vmem>>, %arg9: memref<512x512xbf16, #tpu.memory_space<vmem>>, %arg10: memref<1x512xf32, #tpu.memory_space<vmem>>, %arg11: memref<512x512xbf16, #tpu.memory_space<vmem>>, %arg12: memref<1x512xf32, #tpu.memory_space<vmem>>, %arg13: memref<512x512xbf16, #tpu.memory_space<vmem>>, %arg14: memref<1x512xf32, #tpu.memory_space<vmem>>, %arg15: memref<512x128xbf16, #tpu.memory_space<vmem>>, %arg16: memref<1x128xf32, #tpu.memory_space<vmem>>, %arg17: memref<128x128xbf16, #tpu.memory_space<vmem>>, %arg18: memref<1x128xf32, #tpu.memory_space<vmem>>, %arg19: memref<1x128xf32, #tpu.memory_space<vmem>>, %arg20: memref<256x128xf32, #tpu.memory_space<vmem>>) attributes {dimension_semantics = [#tpu.dimension_semantics<parallel>], iteration_bounds = array<i64: 2>, scalar_prefetch = 0 : i64, scratch_operands = 0 : i64, tpu.core_type = #tpu.core_type<tc>, window_params = [{transform_indices = @transform_0, window_bounds = array<i64: 256, 128>}, {transform_indices = @transform_1, window_bounds = array<i64: 256, 1>}, {pipeline_mode = #tpu.pipeline_mode<synchronous>, transform_indices = @transform_2, window_bounds = array<i64: 256, 128>}, {pipeline_mode = #tpu.pipeline_mode<synchronous>, transform_indices = @transform_3, window_bounds = array<i64: 1, 128>}, {pipeline_mode = #tpu.pipeline_mode<synchronous>, transform_indices = @transform_4, window_bounds = array<i64: 1, 128>}, {pipeline_mode = #tpu.pipeline_mode<synchronous>, transform_indices = @transform_5, window_bounds = array<i64: 1, 128>}, {pipeline_mode = #tpu.pipeline_mode<synchronous>, transform_indices = @transform_6, window_bounds = array<i64: 128, 512>}, {pipeline_mode = #tpu.pipeline_mode<synchronous>, transform_indices = @transform_7, window_bounds = array<i64: 1, 512>}, {pipeline_mode = #tpu.pipeline_mode<synchronous>, transform_indices = @transform_8, window_bounds = array<i64: 512, 512>}, {pipeline_mode = #tpu.pipeline_mode<synchronous>, transform_indices = @transform_9, window_bounds = array<i64: 1, 512>}, {pipeline_mode = #tpu.pipeline_mode<synchronous>, transform_indices = @transform_10, window_bounds = array<i64: 512, 512>}, {pipeline_mode = #tpu.pipeline_mode<synchronous>, transform_indices = @transform_11, window_bounds = array<i64: 1, 512>}, {pipeline_mode = #tpu.pipeline_mode<synchronous>, transform_indices = @transform_12, window_bounds = array<i64: 512, 512>}, {pipeline_mode = #tpu.pipeline_mode<synchronous>, transform_indices = @transform_13, window_bounds = array<i64: 1, 512>}, {pipeline_mode = #tpu.pipeline_mode<synchronous>, transform_indices = @transform_14, window_bounds = array<i64: 512, 128>}, {pipeline_mode = #tpu.pipeline_mode<synchronous>, transform_indices = @transform_15, window_bounds = array<i64: 1, 128>}, {pipeline_mode = #tpu.pipeline_mode<synchronous>, transform_indices = @transform_16, window_bounds = array<i64: 128, 128>}, {pipeline_mode = #tpu.pipeline_mode<synchronous>, transform_indices = @transform_17, window_bounds = array<i64: 1, 128>}, {pipeline_mode = #tpu.pipeline_mode<synchronous>, transform_indices = @transform_18, window_bounds = array<i64: 1, 128>}, {transform_indices = @transform_19, window_bounds = array<i64: 256, 128>}]} {
    %c0 = arith.constant 0 : index
    %c0_0 = arith.constant 0 : index
    %0 = vector.load %arg1[%c0, %c0_0] : memref<256x128xbf16, #tpu.memory_space<vmem>>, vector<256x128xbf16>
    %c0_1 = arith.constant 0 : index
    %c0_2 = arith.constant 0 : index
    %1 = vector.load %arg2[%c0_1, %c0_2] : memref<256x1xf32, #tpu.memory_space<vmem>>, vector<256x1xf32>
    %c0_3 = arith.constant 0 : index
    %c0_4 = arith.constant 0 : index
    %2 = vector.load %arg5[%c0_3, %c0_4] : memref<1x128xf32, #tpu.memory_space<vmem>>, vector<1x128xf32>
    %3 = vector.broadcast %1 : vector<256x1xf32> to vector<256x128xf32>
    %4 = vector.broadcast %2 : vector<1x128xf32> to vector<256x128xf32>
    %5 = arith.mulf %3, %4 : vector<256x128xf32>
    %c0_5 = arith.constant 0 : index
    %c0_6 = arith.constant 0 : index
    %6 = vector.load %arg6[%c0_5, %c0_6] : memref<1x128xf32, #tpu.memory_space<vmem>>, vector<1x128xf32>
    %7 = vector.broadcast %6 : vector<1x128xf32> to vector<256x128xf32>
    %8 = arith.addf %5, %7 : vector<256x128xf32>
    %cst = arith.constant 0.000000e+00 : f32
    %9 = vector.broadcast %cst : f32 to vector<256x128xf32>
    %10 = arith.subf %9, %8 : vector<256x128xf32>
    %11 = math.exp %10 : vector<256x128xf32>
    %cst_7 = arith.constant 1.000000e+00 : f32
    %12 = vector.broadcast %cst_7 : f32 to vector<256x128xf32>
    %13 = arith.addf %12, %11 : vector<256x128xf32>
    %cst_8 = arith.constant 1.000000e+00 : f32
    %14 = vector.broadcast %cst_8 : f32 to vector<256x128xf32>
    %15 = arith.divf %14, %13 : vector<256x128xf32>
    %16 = arith.mulf %8, %15 : vector<256x128xf32>
    %17 = arith.truncf %16 : vector<256x128xf32> to vector<256x128xbf16>
    %18 = tpu.concatenate %0, %17 in 1 : vector<256x128xbf16>, vector<256x128xbf16> -> vector<256x256xbf16>
    %c0_9 = arith.constant 0 : index
    %c0_10 = arith.constant 0 : index
    %19 = vector.load %arg3[%c0_9, %c0_10] : memref<256x128xbf16, #tpu.memory_space<vmem>>, vector<256x128xbf16>
    %cst_11 = arith.constant dense<0.000000e+00> : vector<256x128xf32>
    %20 = tpu.matmul %18, %19, %cst_11 {dimension_numbers = #tpu.dot_dimension_numbers<[1], [0], [0], [1], [0, 0, 1, 1], [], []>} : vector<256x256xbf16>, vector<256x128xbf16>, vector<256x128xf32> -> vector<256x128xf32>
    %c0_12 = arith.constant 0 : index
    %c0_13 = arith.constant 0 : index
    %21 = vector.load %arg4[%c0_12, %c0_13] : memref<1x128xf32, #tpu.memory_space<vmem>>, vector<1x128xf32>
    %22 = vector.broadcast %21 : vector<1x128xf32> to vector<256x128xf32>
    %23 = arith.addf %20, %22 : vector<256x128xf32>
    %24 = arith.truncf %23 : vector<256x128xf32> to vector<256x128xbf16>
    %c0_14 = arith.constant 0 : index
    %c0_15 = arith.constant 0 : index
    %25 = vector.load %arg7[%c0_14, %c0_15] : memref<128x512xbf16, #tpu.memory_space<vmem>>, vector<128x512xbf16>
    %cst_16 = arith.constant dense<0.000000e+00> : vector<256x512xf32>
    %26 = tpu.matmul %24, %25, %cst_16 {dimension_numbers = #tpu.dot_dimension_numbers<[1], [0], [0], [1], [0, 0, 1, 1], [], []>} : vector<256x128xbf16>, vector<128x512xbf16>, vector<256x512xf32> -> vector<256x512xf32>
    %c0_17 = arith.constant 0 : index
    %c0_18 = arith.constant 0 : index
    %27 = vector.load %arg8[%c0_17, %c0_18] : memref<1x512xf32, #tpu.memory_space<vmem>>, vector<1x512xf32>
    %28 = vector.broadcast %27 : vector<1x512xf32> to vector<256x512xf32>
    %29 = arith.addf %26, %28 : vector<256x512xf32>
    %cst_19 = arith.constant 0.000000e+00 : f32
    %30 = vector.broadcast %cst_19 : f32 to vector<256x512xf32>
    %31 = arith.maximumf %29, %30 : vector<256x512xf32>
    %32 = arith.truncf %31 : vector<256x512xf32> to vector<256x512xbf16>
    %c0_20 = arith.constant 0 : index
    %c0_21 = arith.constant 0 : index
    %33 = vector.load %arg9[%c0_20, %c0_21] : memref<512x512xbf16, #tpu.memory_space<vmem>>, vector<512x512xbf16>
    %cst_22 = arith.constant dense<0.000000e+00> : vector<256x512xf32>
    %34 = tpu.matmul %32, %33, %cst_22 {dimension_numbers = #tpu.dot_dimension_numbers<[1], [0], [0], [1], [0, 0, 1, 1], [], []>} : vector<256x512xbf16>, vector<512x512xbf16>, vector<256x512xf32> -> vector<256x512xf32>
    %c0_23 = arith.constant 0 : index
    %c0_24 = arith.constant 0 : index
    %35 = vector.load %arg10[%c0_23, %c0_24] : memref<1x512xf32, #tpu.memory_space<vmem>>, vector<1x512xf32>
    %36 = vector.broadcast %35 : vector<1x512xf32> to vector<256x512xf32>
    %37 = arith.addf %34, %36 : vector<256x512xf32>
    %cst_25 = arith.constant 0.000000e+00 : f32
    %38 = vector.broadcast %cst_25 : f32 to vector<256x512xf32>
    %39 = arith.maximumf %37, %38 : vector<256x512xf32>
    %40 = arith.truncf %39 : vector<256x512xf32> to vector<256x512xbf16>
    %c0_26 = arith.constant 0 : index
    %c0_27 = arith.constant 0 : index
    %41 = vector.load %arg11[%c0_26, %c0_27] : memref<512x512xbf16, #tpu.memory_space<vmem>>, vector<512x512xbf16>
    %cst_28 = arith.constant dense<0.000000e+00> : vector<256x512xf32>
    %42 = tpu.matmul %40, %41, %cst_28 {dimension_numbers = #tpu.dot_dimension_numbers<[1], [0], [0], [1], [0, 0, 1, 1], [], []>} : vector<256x512xbf16>, vector<512x512xbf16>, vector<256x512xf32> -> vector<256x512xf32>
    %c0_29 = arith.constant 0 : index
    %c0_30 = arith.constant 0 : index
    %43 = vector.load %arg12[%c0_29, %c0_30] : memref<1x512xf32, #tpu.memory_space<vmem>>, vector<1x512xf32>
    %44 = vector.broadcast %43 : vector<1x512xf32> to vector<256x512xf32>
    %45 = arith.addf %42, %44 : vector<256x512xf32>
    %cst_31 = arith.constant 0.000000e+00 : f32
    %46 = vector.broadcast %cst_31 : f32 to vector<256x512xf32>
    %47 = arith.maximumf %45, %46 : vector<256x512xf32>
    %48 = arith.truncf %47 : vector<256x512xf32> to vector<256x512xbf16>
    %c0_32 = arith.constant 0 : index
    %c0_33 = arith.constant 0 : index
    %49 = vector.load %arg13[%c0_32, %c0_33] : memref<512x512xbf16, #tpu.memory_space<vmem>>, vector<512x512xbf16>
    %cst_34 = arith.constant dense<0.000000e+00> : vector<256x512xf32>
    %50 = tpu.matmul %48, %49, %cst_34 {dimension_numbers = #tpu.dot_dimension_numbers<[1], [0], [0], [1], [0, 0, 1, 1], [], []>} : vector<256x512xbf16>, vector<512x512xbf16>, vector<256x512xf32> -> vector<256x512xf32>
    %c0_35 = arith.constant 0 : index
    %c0_36 = arith.constant 0 : index
    %51 = vector.load %arg14[%c0_35, %c0_36] : memref<1x512xf32, #tpu.memory_space<vmem>>, vector<1x512xf32>
    %52 = vector.broadcast %51 : vector<1x512xf32> to vector<256x512xf32>
    %53 = arith.addf %50, %52 : vector<256x512xf32>
    %cst_37 = arith.constant 0.000000e+00 : f32
    %54 = vector.broadcast %cst_37 : f32 to vector<256x512xf32>
    %55 = arith.maximumf %53, %54 : vector<256x512xf32>
    %56 = arith.truncf %55 : vector<256x512xf32> to vector<256x512xbf16>
    %c0_38 = arith.constant 0 : index
    %c0_39 = arith.constant 0 : index
    %57 = vector.load %arg15[%c0_38, %c0_39] : memref<512x128xbf16, #tpu.memory_space<vmem>>, vector<512x128xbf16>
    %cst_40 = arith.constant dense<0.000000e+00> : vector<256x128xf32>
    %58 = tpu.matmul %56, %57, %cst_40 {dimension_numbers = #tpu.dot_dimension_numbers<[1], [0], [0], [1], [0, 0, 1, 1], [], []>} : vector<256x512xbf16>, vector<512x128xbf16>, vector<256x128xf32> -> vector<256x128xf32>
    %c0_41 = arith.constant 0 : index
    %c0_42 = arith.constant 0 : index
    %59 = vector.load %arg16[%c0_41, %c0_42] : memref<1x128xf32, #tpu.memory_space<vmem>>, vector<1x128xf32>
    %60 = vector.broadcast %59 : vector<1x128xf32> to vector<256x128xf32>
    %61 = arith.addf %58, %60 : vector<256x128xf32>
    %c0_43 = arith.constant 0 : index
    %c0_44 = arith.constant 0 : index
    %62 = vector.load %arg18[%c0_43, %c0_44] : memref<1x128xf32, #tpu.memory_space<vmem>>, vector<1x128xf32>
    %c0_45 = arith.constant 0 : index
    %c0_46 = arith.constant 0 : index
    %63 = vector.load %arg19[%c0_45, %c0_46] : memref<1x128xf32, #tpu.memory_space<vmem>>, vector<1x128xf32>
    %cst_47 = arith.constant 5.000000e-01 : f32
    %64 = vector.broadcast %cst_47 : f32 to vector<1x128xf32>
    %65 = arith.cmpf ogt, %63, %64 : vector<1x128xf32>
    %cst_48 = arith.constant 5.000000e-01 : f32
    %66 = vector.broadcast %cst_48 : f32 to vector<1x128xf32>
    %67 = arith.cmpf ogt, %62, %66 : vector<1x128xf32>
    %cst_49 = arith.constant 0.000000e+00 : f32
    %68 = vector.broadcast %cst_49 : f32 to vector<256x128xf32>
    %cst_50 = arith.constant 1.000000e+00 : f32
    %69 = vector.broadcast %cst_50 : f32 to vector<1x128xf32>
    %70 = arith.cmpf oeq, %62, %69 : vector<1x128xf32>
    %cst_51 = arith.constant 0xFF800000 : f32
    %71 = vector.shape_cast %70 : vector<1x128xi1> to vector<1x128xi1>
    %72 = vector.broadcast %71 : vector<1x128xi1> to vector<256x128xi1>
    %73 = vector.broadcast %cst_51 : f32 to vector<256x128xf32>
    %74 = arith.select %72, %61, %73 : vector<256x128xi1>, vector<256x128xf32>
    %cst_52 = arith.constant dense<0xFF800000> : vector<256xf32>
    %75 = vector.multi_reduction <maximumf>, %74, %cst_52 [1] : vector<256x128xf32> to vector<256xf32>
    %76 = vector.shape_cast %75 : vector<256xf32> to vector<256x1xf32>
    %77 = vector.shape_cast %70 : vector<1x128xi1> to vector<1x128xi1>
    %78 = vector.broadcast %77 : vector<1x128xi1> to vector<256x128xi1>
    %79 = vector.shape_cast %76 : vector<256x1xf32> to vector<256x1xf32>
    %80 = vector.broadcast %79 : vector<256x1xf32> to vector<256x128xf32>
    %81 = arith.select %78, %80, %68 : vector<256x128xi1>, vector<256x128xf32>
    %cst_53 = arith.constant 2.000000e+00 : f32
    %82 = vector.broadcast %cst_53 : f32 to vector<1x128xf32>
    %83 = arith.cmpf oeq, %62, %82 : vector<1x128xf32>
    %cst_54 = arith.constant 0xFF800000 : f32
    %84 = vector.shape_cast %83 : vector<1x128xi1> to vector<1x128xi1>
    %85 = vector.broadcast %84 : vector<1x128xi1> to vector<256x128xi1>
    %86 = vector.broadcast %cst_54 : f32 to vector<256x128xf32>
    %87 = arith.select %85, %61, %86 : vector<256x128xi1>, vector<256x128xf32>
    %cst_55 = arith.constant dense<0xFF800000> : vector<256xf32>
    %88 = vector.multi_reduction <maximumf>, %87, %cst_55 [1] : vector<256x128xf32> to vector<256xf32>
    %89 = vector.shape_cast %88 : vector<256xf32> to vector<256x1xf32>
    %90 = vector.shape_cast %83 : vector<1x128xi1> to vector<1x128xi1>
    %91 = vector.broadcast %90 : vector<1x128xi1> to vector<256x128xi1>
    %92 = vector.shape_cast %89 : vector<256x1xf32> to vector<256x1xf32>
    %93 = vector.broadcast %92 : vector<256x1xf32> to vector<256x128xf32>
    %94 = arith.select %91, %93, %81 : vector<256x128xi1>, vector<256x128xf32>
    %95 = arith.subf %61, %94 : vector<256x128xf32>
    %cst_56 = arith.constant -1.000000e+30 : f32
    %96 = vector.shape_cast %67 : vector<1x128xi1> to vector<1x128xi1>
    %97 = vector.broadcast %96 : vector<1x128xi1> to vector<256x128xi1>
    %98 = vector.broadcast %cst_56 : f32 to vector<256x128xf32>
    %99 = arith.select %97, %95, %98 : vector<256x128xi1>, vector<256x128xf32>
    %100 = math.exp %99 : vector<256x128xf32>
    %101 = arith.truncf %100 : vector<256x128xf32> to vector<256x128xbf16>
    %c0_57 = arith.constant 0 : index
    %c0_58 = arith.constant 0 : index
    %102 = vector.load %arg17[%c0_57, %c0_58] : memref<128x128xbf16, #tpu.memory_space<vmem>>, vector<128x128xbf16>
    %cst_59 = arith.constant dense<0.000000e+00> : vector<256x128xf32>
    %103 = tpu.matmul %101, %102, %cst_59 {dimension_numbers = #tpu.dot_dimension_numbers<[1], [0], [0], [1], [0, 0, 1, 1], [], []>} : vector<256x128xbf16>, vector<128x128xbf16>, vector<256x128xf32> -> vector<256x128xf32>
    %cst_60 = arith.constant 0.000000e+00 : f32
    %cst_61 = arith.constant 1.000000e+00 : f32
    %104 = vector.broadcast %cst_60 : f32 to vector<1x128xf32>
    %105 = vector.broadcast %cst_61 : f32 to vector<1x128xf32>
    %106 = arith.select %67, %104, %105 : vector<1x128xi1>, vector<1x128xf32>
    %107 = vector.broadcast %106 : vector<1x128xf32> to vector<256x128xf32>
    %108 = arith.addf %103, %107 : vector<256x128xf32>
    %109 = arith.extf %101 : vector<256x128xbf16> to vector<256x128xf32>
    %110 = arith.divf %109, %108 : vector<256x128xf32>
    %111 = vector.shape_cast %65 : vector<1x128xi1> to vector<1x128xi1>
    %112 = vector.broadcast %111 : vector<1x128xi1> to vector<256x128xi1>
    %113 = arith.select %112, %61, %110 : vector<256x128xi1>, vector<256x128xf32>
    %c0_62 = arith.constant 0 : index
    %c0_63 = arith.constant 0 : index
    %114 = vector.load %arg20[%c0_62, %c0_63] : memref<256x128xf32, #tpu.memory_space<vmem>>, vector<256x128xf32>
    tpu.vector_store %arg20[%c0_62, %c0_63], %113 {strides = array<i32>} : memref<256x128xf32, #tpu.memory_space<vmem>>, vector<256x128xf32>,
    return
  }
  func.func @transform_0(%arg0: i32) -> (i32, i32) {
    %c0_i32 = arith.constant 0 : i32
    %c0_i32_0 = arith.constant 0 : i32
    return %arg0, %c0_i32 : i32, i32
  }
  func.func @transform_1(%arg0: i32) -> (i32, i32) {
    %c0_i32 = arith.constant 0 : i32
    %c0_i32_0 = arith.constant 0 : i32
    return %arg0, %c0_i32 : i32, i32
  }
  func.func @transform_2(%arg0: i32) -> (i32, i32) {
    %c0_i32 = arith.constant 0 : i32
    %c0_i32_0 = arith.constant 0 : i32
    %c0_i32_1 = arith.constant 0 : i32
    return %c0_i32, %c0_i32_0 : i32, i32
  }
  func.func @transform_3(%arg0: i32) -> (i32, i32) {
    %c0_i32 = arith.constant 0 : i32
    %c0_i32_0 = arith.constant 0 : i32
    %c0_i32_1 = arith.constant 0 : i32
    return %c0_i32, %c0_i32_0 : i32, i32
  }
  func.func @transform_4(%arg0: i32) -> (i32, i32) {
    %c0_i32 = arith.constant 0 : i32
    %c0_i32_0 = arith.constant 0 : i32
    %c0_i32_1 = arith.constant 0 : i32
    return %c0_i32, %c0_i32_0 : i32, i32
  }
  func.func @transform_5(%arg0: i32) -> (i32, i32) {
    %c0_i32 = arith.constant 0 : i32
    %c0_i32_0 = arith.constant 0 : i32
    %c0_i32_1 = arith.constant 0 : i32
    return %c0_i32, %c0_i32_0 : i32, i32
  }
  func.func @transform_6(%arg0: i32) -> (i32, i32) {
    %c0_i32 = arith.constant 0 : i32
    %c0_i32_0 = arith.constant 0 : i32
    %c0_i32_1 = arith.constant 0 : i32
    return %c0_i32, %c0_i32_0 : i32, i32
  }
  func.func @transform_7(%arg0: i32) -> (i32, i32) {
    %c0_i32 = arith.constant 0 : i32
    %c0_i32_0 = arith.constant 0 : i32
    %c0_i32_1 = arith.constant 0 : i32
    return %c0_i32, %c0_i32_0 : i32, i32
  }
  func.func @transform_8(%arg0: i32) -> (i32, i32) {
    %c0_i32 = arith.constant 0 : i32
    %c0_i32_0 = arith.constant 0 : i32
    %c0_i32_1 = arith.constant 0 : i32
    return %c0_i32, %c0_i32_0 : i32, i32
  }
  func.func @transform_9(%arg0: i32) -> (i32, i32) {
    %c0_i32 = arith.constant 0 : i32
    %c0_i32_0 = arith.constant 0 : i32
    %c0_i32_1 = arith.constant 0 : i32
    return %c0_i32, %c0_i32_0 : i32, i32
  }
  func.func @transform_10(%arg0: i32) -> (i32, i32) {
    %c0_i32 = arith.constant 0 : i32
    %c0_i32_0 = arith.constant 0 : i32
    %c0_i32_1 = arith.constant 0 : i32
    return %c0_i32, %c0_i32_0 : i32, i32
  }
  func.func @transform_11(%arg0: i32) -> (i32, i32) {
    %c0_i32 = arith.constant 0 : i32
    %c0_i32_0 = arith.constant 0 : i32
    %c0_i32_1 = arith.constant 0 : i32
    return %c0_i32, %c0_i32_0 : i32, i32
  }
  func.func @transform_12(%arg0: i32) -> (i32, i32) {
    %c0_i32 = arith.constant 0 : i32
    %c0_i32_0 = arith.constant 0 : i32
    %c0_i32_1 = arith.constant 0 : i32
    return %c0_i32, %c0_i32_0 : i32, i32
  }
  func.func @transform_13(%arg0: i32) -> (i32, i32) {
    %c0_i32 = arith.constant 0 : i32
    %c0_i32_0 = arith.constant 0 : i32
    %c0_i32_1 = arith.constant 0 : i32
    return %c0_i32, %c0_i32_0 : i32, i32
  }
  func.func @transform_14(%arg0: i32) -> (i32, i32) {
    %c0_i32 = arith.constant 0 : i32
    %c0_i32_0 = arith.constant 0 : i32
    %c0_i32_1 = arith.constant 0 : i32
    return %c0_i32, %c0_i32_0 : i32, i32
  }
  func.func @transform_15(%arg0: i32) -> (i32, i32) {
    %c0_i32 = arith.constant 0 : i32
    %c0_i32_0 = arith.constant 0 : i32
    %c0_i32_1 = arith.constant 0 : i32
    return %c0_i32, %c0_i32_0 : i32, i32
  }
  func.func @transform_16(%arg0: i32) -> (i32, i32) {
    %c0_i32 = arith.constant 0 : i32
    %c0_i32_0 = arith.constant 0 : i32
    %c0_i32_1 = arith.constant 0 : i32
    return %c0_i32, %c0_i32_0 : i32, i32
  }
  func.func @transform_17(%arg0: i32) -> (i32, i32) {
    %c0_i32 = arith.constant 0 : i32
    %c0_i32_0 = arith.constant 0 : i32
    %c0_i32_1 = arith.constant 0 : i32
    return %c0_i32, %c0_i32_0 : i32, i32
  }
  func.func @transform_18(%arg0: i32) -> (i32, i32) {
    %c0_i32 = arith.constant 0 : i32
    %c0_i32_0 = arith.constant 0 : i32
    %c0_i32_1 = arith.constant 0 : i32
    return %c0_i32, %c0_i32_0 : i32, i32
  }
  func.func @transform_19(%arg0: i32) -> (i32, i32) {
    %c0_i32 = arith.constant 0 : i32
    %c0_i32_0 = arith.constant 0 : i32
    return %arg0, %c0_i32 : i32, i32
  }
}

</mosaic_0001>

<llo_original>
// kernel: tpu_custom_call.1
$region0: #{tpu_custom_call.1}
  #allocation0 [shape = 'u32[]', space=smem, size = 0x4, offset = 0x4, fixed_abs, tag = 'smem constant byte address 0x4 - core index']
  #allocation1 [shape = 'u32[144,128]{1,0:T(1,128)}', space=vmem, size = 0x12000, scoped, tag = 'internal scratch']
  %s0 = inlined_call_operand.vmem [shape: bf16[512,128], index: 0, kind: input, shape index: {}]
  %s1 = inlined_call_operand.vmem [shape: f32[512,1], index: 1, kind: input, shape index: {}]
  %s2 = inlined_call_operand.hbm [shape: bf16[256,128], index: 2, kind: input, shape index: {}]
  %s3 = inlined_call_operand.vmem [shape: f32[1,128], index: 3, kind: input, shape index: {}]
  %s4 = inlined_call_operand.hbm [shape: f32[1,128], index: 4, kind: input, shape index: {}]
  %s5 = inlined_call_operand.hbm [shape: f32[1,128], index: 5, kind: input, shape index: {}]
  %s6 = inlined_call_operand.vmem [shape: bf16[128,512], index: 6, kind: input, shape index: {}]
  %s7 = inlined_call_operand.vmem [shape: f32[1,512], index: 7, kind: input, shape index: {}]
  %s8 = inlined_call_operand.hbm [shape: bf16[512,512], index: 8, kind: input, shape index: {}]
  %s9 = inlined_call_operand.vmem [shape: f32[1,512], index: 9, kind: input, shape index: {}]
  %s10 = inlined_call_operand.hbm [shape: bf16[512,512], index: 10, kind: input, shape index: {}]
  %s11 = inlined_call_operand.vmem [shape: f32[1,512], index: 11, kind: input, shape index: {}]
  %s12 = inlined_call_operand.hbm [shape: bf16[512,512], index: 12, kind: input, shape index: {}]
  %s13 = inlined_call_operand.vmem [shape: f32[1,512], index: 13, kind: input, shape index: {}]
  %s14 = inlined_call_operand.hbm [shape: bf16[512,128], index: 14, kind: input, shape index: {}]
  %s15 = inlined_call_operand.vmem [shape: f32[1,128], index: 15, kind: input, shape index: {}]
  %s16 = inlined_call_operand.hbm [shape: bf16[128,128], index: 16, kind: input, shape index: {}]
  %s17 = inlined_call_operand.vmem [shape: f32[1,128], index: 17, kind: input, shape index: {}]
  %s18 = inlined_call_operand.vmem [shape: f32[1,128], index: 18, kind: input, shape index: {}]
  %s19 = inlined_call_operand.hbm [shape: f32[512,128], index: 19, kind: output, shape index: {}]
  %s20 = sld [smem:[#allocation0]]
  $region141: #{tpu_custom_call.1} parent=0
    _
  %s22 = ssub.s32 1, %s20
  %s23 = scalar_select 0, %s22, %s20
  $region1: #{tpu_custom_call.1} parent=0
    #allocation2 [shape = 'u8[65536]{0}', space=vmem, size = 0x10000, scoped, tag = 'input window, operand 2, single buffered']
    #allocation3 [shape = 's32[2]{0}', space=sflag, size = 0x8, scoped, tag = 'scoped memory for tpu_custom_call.1']
    #allocation4 [shape = 's32[2]{0}', space=sflag, size = 0x8, scoped, tag = 'scoped memory for tpu_custom_call.1']
    #allocation5 [shape = 'u8[512]{0}', space=vmem, size = 0x400, scoped, tag = 'input window, operand 4, single buffered']
    #allocation6 [shape = 's32[1]{0}', space=sflag, size = 0x4, scoped, tag = 'scoped memory for tpu_custom_call.1']
    #allocation7 [shape = 'u8[512]{0}', space=vmem, size = 0x400, scoped, tag = 'input window, operand 5, single buffered']
    #allocation8 [shape = 'u8[524288]{0}', space=vmem, size = 0x80000, scoped, tag = 'input window, operand 8, single buffered']
    #allocation9 [shape = 's32[1]{0}', space=sflag, size = 0x4, scoped, tag = 'scoped memory for tpu_custom_call.1']
    #allocation10 [shape = 'u8[524288]{0}', space=vmem, size = 0x80000, scoped, tag = 'input window, operand 10, single buffered']
    #allocation11 [shape = 'u8[524288]{0}', space=vmem, size = 0x80000, scoped, tag = 'input window, operand 12, single buffered']
    #allocation12 [shape = 's32[1]{0}', space=sflag, size = 0x4, scoped, tag = 'scoped memory for tpu_custom_call.1']
    #allocation13 [shape = 'u8[131072]{0}', space=vmem, size = 0x20000, scoped, tag = 'input window, operand 14, single buffered']
    #allocation14 [shape = 'u8[32768]{0}', space=vmem, size = 0x8000, scoped, tag = 'input window, operand 16, single buffered']
    #allocation15 [shape = 's32[1]{0}', space=sflag, size = 0x4, scoped, tag = 'scoped memory for tpu_custom_call.1']
    #allocation16 [shape = 'u8[262144]{0}', space=vmem, size = 0x40000, scoped, tag = 'output window, operand 0']
    %24 = vsyncpa [#allocation3], 0
    %25 = vsyncpa [#allocation6], 0
    %26 = vsyncpa [#allocation9], 0
    %27 = vsyncpa [#allocation12], 0
    %28 = vsyncpa [#allocation15], 0
    %29 = vsyncpa [#allocation4], 0
    %s30 = scalar_lea.sflag [#allocation4], 1
    %31 = vsyncpa %s30, 0
    loop: start=0, step=1, limit=4
    $region2: #{tpu_custom_call.1} parent=1 // loop_pre_header
      _
    $region3: #{tpu_custom_call.1} parent=1 // loop_header
      %s33 = sphi 0, %s37
      %p34 = scmp.ge.s32.totalorder %s33, 4
      %s43 = sphi 0, %s45
      %s46 = sphi 0, %s43
      %s47 = sphi 0, %s46
      %s63 = sphi 0, %s47
      %s69 = sphi 0, %s71
      %s72 = sphi 0, %s69
      %s73 = sphi 0, %s72
      %s89 = sphi 0, %s73
      %s93 = sphi 0, %s93
      %s95 = sphi 0, %s93
      %s96 = sphi 0, %s95
      %s110 = sphi 0, %s96
      %s114 = sphi 0, %s114
      %s116 = sphi 0, %s114
      %s117 = sphi 0, %s116
      %s131 = sphi 0, %s117
      %s135 = sphi 0, %s135
      %s137 = sphi 0, %s135
      %s138 = sphi 0, %s137
      %s152 = sphi 0, %s138
      %s156 = sphi 0, %s156
      %s158 = sphi 0, %s156
      %s159 = sphi 0, %s158
      %s173 = sphi 0, %s159
      %s177 = sphi 0, %s177
      %s179 = sphi 0, %s177
      %s180 = sphi 0, %s179
      %s194 = sphi 0, %s180
      %s198 = sphi 0, %s198
      %s200 = sphi 0, %s198
      %s201 = sphi 0, %s200
      %s215 = sphi 0, %s201
      %s219 = sphi 0, %s219
      %s221 = sphi 0, %s219
      %s222 = sphi 0, %s221
      %s236 = sphi 0, %s222
      %s240 = sphi 0, %s240
      %s242 = sphi 0, %s240
      %s243 = sphi 0, %s242
      %s257 = sphi 0, %s243
      %s261 = sphi 0, %s261
      %s263 = sphi 0, %s261
      %s264 = sphi 0, %s263
      %s278 = sphi 0, %s264
      %s282 = sphi 0, %s282
      %s284 = sphi 0, %s282
      %s285 = sphi 0, %s284
      %s299 = sphi 0, %s285
      %s303 = sphi 0, %s303
      %s305 = sphi 0, %s303
      %s306 = sphi 0, %s305
      %s320 = sphi 0, %s306
      %s324 = sphi 0, %s324
      %s326 = sphi 0, %s324
      %s327 = sphi 0, %s326
      %s341 = sphi 0, %s327
      %s345 = sphi 0, %s345
      %s347 = sphi 0, %s345
      %s348 = sphi 0, %s347
      %s362 = sphi 0, %s348
      %s366 = sphi 0, %s366
      %s368 = sphi 0, %s366
      %s369 = sphi 0, %s368
      %s383 = sphi 0, %s369
      %s387 = sphi 0, %s387
      %s389 = sphi 0, %s387
      %s390 = sphi 0, %s389
      %s404 = sphi 0, %s390
      %s408 = sphi 0, %s408
      %s410 = sphi 0, %s408
      %s411 = sphi 0, %s410
      %s425 = sphi 0, %s411
      %s429 = sphi 0, %s429
      %s431 = sphi 0, %s429
      %s432 = sphi 0, %s431
      %s446 = sphi 0, %s432
      %s452 = sphi 0, %s454
      %s455 = sphi 0, %s452
      %s456 = sphi 0, %s455
      %s472 = sphi 0, %s456
    $region4: #{tpu_custom_call.1} parent=1 // loop_header_branch
      %36 = sbr.rel (%p34) target = $region8
    $region5: #{tpu_custom_call.1} parent=1 // loop_body
      %s38 = ssub.s32 %s33, 1
      %s39 = ssub.s32 %s33, 2
      %s40 = sadd.s32 %s33, 1
      %s41 = ssub.s32 %s33, %s40
      %p42 = scmp.eq.s32.totalorder %s41, 0
      %s44 = sadd.s32 %s43, 1
      %s45 = scalar_select %p42, %s43, %s44
      %p48 = pneg %p42
      %p49 = scmp.eq.s32.totalorder %s33, 1
      %p50 = por %p48, %p49
      %p51 = scmp.ne.s32.totalorder %s43, %s46
      %p52 = scmp.eq.s32.totalorder %s33, 0
      %p53 = por %p51, %p52
      %p54 = scmp.ne.s32.totalorder %s43, %s46
      %p55 = scmp.eq.s32.totalorder %s38, 1
      %p56 = por %p54, %p55
      %p57 = scmp.ne.s32.totalorder %s46, %s47
      %p58 = scmp.eq.s32.totalorder %s38, 0
      %p59 = por %p57, %p58
      %p60 = scmp.ne.s32.totalorder %s46, %s47
      %p61 = scmp.eq.s32.totalorder %s39, 1
      %p62 = por %p60, %p61
      %p64 = scmp.ne.s32.totalorder %s47, %s63
      %p65 = scmp.eq.s32.totalorder %s39, 0
      %p66 = por %p64, %p65
      %s67 = ssub.s32 %s33, %s40
      %p68 = scmp.eq.s32.totalorder %s67, 0
      %s70 = sadd.s32 %s69, 1
      %s71 = scalar_select %p68, %s69, %s70
      %p74 = pneg %p68
      %p75 = scmp.eq.s32.totalorder %s33, 1
      %p76 = por %p74, %p75
      %p77 = scmp.ne.s32.totalorder %s69, %s72
      %p78 = scmp.eq.s32.totalorder %s33, 0
      %p79 = por %p77, %p78
      %p80 = scmp.ne.s32.totalorder %s69, %s72
      %p81 = scmp.eq.s32.totalorder %s38, 1
      %p82 = por %p80, %p81
      %p83 = scmp.ne.s32.totalorder %s72, %s73
      %p84 = scmp.eq.s32.totalorder %s38, 0
      %p85 = por %p83, %p84
      %p86 = scmp.ne.s32.totalorder %s72, %s73
      %p87 = scmp.eq.s32.totalorder %s39, 1
      %p88 = por %p86, %p87
      %p90 = scmp.ne.s32.totalorder %s73, %s89
      %p91 = scmp.eq.s32.totalorder %s39, 0
      %p92 = por %p90, %p91
      %s94 = sadd.s32 %s93, 1
      %p97 = scmp.eq.s32.totalorder %s33, 1
      %p98 = scmp.ne.s32.totalorder %s93, %s95
      %p99 = scmp.eq.s32.totalorder %s33, 0
      %p100 = por %p98, %p99
      %p101 = scmp.ne.s32.totalorder %s93, %s95
      %p102 = scmp.eq.s32.totalorder %s38, 1
      %p103 = por %p101, %p102
      %p104 = scmp.ne.s32.totalorder %s95, %s96
      %p105 = scmp.eq.s32.totalorder %s38, 0
      %p106 = por %p104, %p105
      %p107 = scmp.ne.s32.totalorder %s95, %s96
      %p108 = scmp.eq.s32.totalorder %s39, 1
      %p109 = por %p107, %p108
      %p111 = scmp.ne.s32.totalorder %s96, %s110
      %p112 = scmp.eq.s32.totalorder %s39, 0
      %p113 = por %p111, %p112
      %s115 = sadd.s32 %s114, 1
      %p118 = scmp.eq.s32.totalorder %s33, 1
      %p119 = scmp.ne.s32.totalorder %s114, %s116
      %p120 = scmp.eq.s32.totalorder %s33, 0
      %p121 = por %p119, %p120
      %p122 = scmp.ne.s32.totalorder %s114, %s116
      %p123 = scmp.eq.s32.totalorder %s38, 1
      %p124 = por %p122, %p123
      %p125 = scmp.ne.s32.totalorder %s116, %s117
      %p126 = scmp.eq.s32.totalorder %s38, 0
      %p127 = por %p125, %p126
      %p128 = scmp.ne.s32.totalorder %s116, %s117
      %p129 = scmp.eq.s32.totalorder %s39, 1
      %p130 = por %p128, %p129
      %p132 = scmp.ne.s32.totalorder %s117, %s131
      %p133 = scmp.eq.s32.totalorder %s39, 0
      %p134 = por %p132, %p133
      %s136 = sadd.s32 %s135, 1
      %p139 = scmp.eq.s32.totalorder %s33, 1
      %p140 = scmp.ne.s32.totalorder %s135, %s137
      %p141 = scmp.eq.s32.totalorder %s33, 0
      %p142 = por %p140, %p141
      %p143 = scmp.ne.s32.totalorder %s135, %s137
      %p144 = scmp.eq.s32.totalorder %s38, 1
      %p145 = por %p143, %p144
      %p146 = scmp.ne.s32.totalorder %s137, %s138
      %p147 = scmp.eq.s32.totalorder %s38, 0
      %p148 = por %p146, %p147
      %p149 = scmp.ne.s32.totalorder %s137, %s138
      %p150 = scmp.eq.s32.totalorder %s39, 1
      %p151 = por %p149, %p150
      %p153 = scmp.ne.s32.totalorder %s138, %s152
      %p154 = scmp.eq.s32.totalorder %s39, 0
      %p155 = por %p153, %p154
      %s157 = sadd.s32 %s156, 1
      %p160 = scmp.eq.s32.totalorder %s33, 1
      %p161 = scmp.ne.s32.totalorder %s156, %s158
      %p162 = scmp.eq.s32.totalorder %s33, 0
      %p163 = por %p161, %p162
      %p164 = scmp.ne.s32.totalorder %s156, %s158
      %p165 = scmp.eq.s32.totalorder %s38, 1
      %p166 = por %p164, %p165
      %p167 = scmp.ne.s32.totalorder %s158, %s159
      %p168 = scmp.eq.s32.totalorder %s38, 0
      %p169 = por %p167, %p168
      %p170 = scmp.ne.s32.totalorder %s158, %s159
      %p171 = scmp.eq.s32.totalorder %s39, 1
      %p172 = por %p170, %p171
      %p174 = scmp.ne.s32.totalorder %s159, %s173
      %p175 = scmp.eq.s32.totalorder %s39, 0
      %p176 = por %p174, %p175
      %s178 = sadd.s32 %s177, 1
      %p181 = scmp.eq.s32.totalorder %s33, 1
      %p182 = scmp.ne.s32.totalorder %s177, %s179
      %p183 = scmp.eq.s32.totalorder %s33, 0
      %p184 = por %p182, %p183
      %p185 = scmp.ne.s32.totalorder %s177, %s179
      %p186 = scmp.eq.s32.totalorder %s38, 1
      %p187 = por %p185, %p186
      %p188 = scmp.ne.s32.totalorder %s179, %s180
      %p189 = scmp.eq.s32.totalorder %s38, 0
      %p190 = por %p188, %p189
      %p191 = scmp.ne.s32.totalorder %s179, %s180
      %p192 = scmp.eq.s32.totalorder %s39, 1
      %p193 = por %p191, %p192
      %p195 = scmp.ne.s32.totalorder %s180, %s194
      %p196 = scmp.eq.s32.totalorder %s39, 0
      %p197 = por %p195, %p196
      %s199 = sadd.s32 %s198, 1
      %p202 = scmp.eq.s32.totalorder %s33, 1
      %p203 = scmp.ne.s32.totalorder %s198, %s200
      %p204 = scmp.eq.s32.totalorder %s33, 0
      %p205 = por %p203, %p204
      %p206 = scmp.ne.s32.totalorder %s198, %s200
      %p207 = scmp.eq.s32.totalorder %s38, 1
      %p208 = por %p206, %p207
      %p209 = scmp.ne.s32.totalorder %s200, %s201
      %p210 = scmp.eq.s32.totalorder %s38, 0
      %p211 = por %p209, %p210
      %p212 = scmp.ne.s32.totalorder %s200, %s201
      %p213 = scmp.eq.s32.totalorder %s39, 1
      %p214 = por %p212, %p213
      %p216 = scmp.ne.s32.totalorder %s201, %s215
      %p217 = scmp.eq.s32.totalorder %s39, 0
      %p218 = por %p216, %p217
      %s220 = sadd.s32 %s219, 1
      %p223 = scmp.eq.s32.totalorder %s33, 1
      %p224 = scmp.ne.s32.totalorder %s219, %s221
      %p225 = scmp.eq.s32.totalorder %s33, 0
      %p226 = por %p224, %p225
      %p227 = scmp.ne.s32.totalorder %s219, %s221
      %p228 = scmp.eq.s32.totalorder %s38, 1
      %p229 = por %p227, %p228
      %p230 = scmp.ne.s32.totalorder %s221, %s222
      %p231 = scmp.eq.s32.totalorder %s38, 0
      %p232 = por %p230, %p231
      %p233 = scmp.ne.s32.totalorder %s221, %s222
      %p234 = scmp.eq.s32.totalorder %s39, 1
      %p235 = por %p233, %p234
      %p237 = scmp.ne.s32.totalorder %s222, %s236
      %p238 = scmp.eq.s32.totalorder %s39, 0
      %p239 = por %p237, %p238
      %s241 = sadd.s32 %s240, 1
      %p244 = scmp.eq.s32.totalorder %s33, 1
      %p245 = scmp.ne.s32.totalorder %s240, %s242
      %p246 = scmp.eq.s32.totalorder %s33, 0
      %p247 = por %p245, %p246
      %p248 = scmp.ne.s32.totalorder %s240, %s242
      %p249 = scmp.eq.s32.totalorder %s38, 1
      %p250 = por %p248, %p249
      %p251 = scmp.ne.s32.totalorder %s242, %s243
      %p252 = scmp.eq.s32.totalorder %s38, 0
      %p253 = por %p251, %p252
      %p254 = scmp.ne.s32.totalorder %s242, %s243
      %p255 = scmp.eq.s32.totalorder %s39, 1
      %p256 = por %p254, %p255
      %p258 = scmp.ne.s32.totalorder %s243, %s257
      %p259 = scmp.eq.s32.totalorder %s39, 0
      %p260 = por %p258, %p259
      %s262 = sadd.s32 %s261, 1
      %p265 = scmp.eq.s32.totalorder %s33, 1
      %p266 = scmp.ne.s32.totalorder %s261, %s263
      %p267 = scmp.eq.s32.totalorder %s33, 0
      %p268 = por %p266, %p267
      %p269 = scmp.ne.s32.totalorder %s261, %s263
      %p270 = scmp.eq.s32.totalorder %s38, 1
      %p271 = por %p269, %p270
      %p272 = scmp.ne.s32.totalorder %s263, %s264
      %p273 = scmp.eq.s32.totalorder %s38, 0
      %p274 = por %p272, %p273
      %p275 = scmp.ne.s32.totalorder %s263, %s264
      %p276 = scmp.eq.s32.totalorder %s39, 1
      %p277 = por %p275, %p276
      %p279 = scmp.ne.s32.totalorder %s264, %s278
      %p280 = scmp.eq.s32.totalorder %s39, 0
      %p281 = por %p279, %p280
      %s283 = sadd.s32 %s282, 1
      %p286 = scmp.eq.s32.totalorder %s33, 1
      %p287 = scmp.ne.s32.totalorder %s282, %s284
      %p288 = scmp.eq.s32.totalorder %s33, 0
      %p289 = por %p287, %p288
      %p290 = scmp.ne.s32.totalorder %s282, %s284
      %p291 = scmp.eq.s32.totalorder %s38, 1
      %p292 = por %p290, %p291
      %p293 = scmp.ne.s32.totalorder %s284, %s285
      %p294 = scmp.eq.s32.totalorder %s38, 0
      %p295 = por %p293, %p294
      %p296 = scmp.ne.s32.totalorder %s284, %s285
      %p297 = scmp.eq.s32.totalorder %s39, 1
      %p298 = por %p296, %p297
      %p300 = scmp.ne.s32.totalorder %s285, %s299
      %p301 = scmp.eq.s32.totalorder %s39, 0
      %p302 = por %p300, %p301
      %s304 = sadd.s32 %s303, 1
      %p307 = scmp.eq.s32.totalorder %s33, 1
      %p308 = scmp.ne.s32.totalorder %s303, %s305
      %p309 = scmp.eq.s32.totalorder %s33, 0
      %p310 = por %p308, %p309
      %p311 = scmp.ne.s32.totalorder %s303, %s305
      %p312 = scmp.eq.s32.totalorder %s38, 1
      %p313 = por %p311, %p312
      %p314 = scmp.ne.s32.totalorder %s305, %s306
      %p315 = scmp.eq.s32.totalorder %s38, 0
      %p316 = por %p314, %p315
      %p317 = scmp.ne.s32.totalorder %s305, %s306
      %p318 = scmp.eq.s32.totalorder %s39, 1
      %p319 = por %p317, %p318
      %p321 = scmp.ne.s32.totalorder %s306, %s320
      %p322 = scmp.eq.s32.totalorder %s39, 0
      %p323 = por %p321, %p322
      %s325 = sadd.s32 %s324, 1
      %p328 = scmp.eq.s32.totalorder %s33, 1
      %p329 = scmp.ne.s32.totalorder %s324, %s326
      %p330 = scmp.eq.s32.totalorder %s33, 0
      %p331 = por %p329, %p330
      %p332 = scmp.ne.s32.totalorder %s324, %s326
      %p333 = scmp.eq.s32.totalorder %s38, 1
      %p334 = por %p332, %p333
      %p335 = scmp.ne.s32.totalorder %s326, %s327
      %p336 = scmp.eq.s32.totalorder %s38, 0
      %p337 = por %p335, %p336
      %p338 = scmp.ne.s32.totalorder %s326, %s327
      %p339 = scmp.eq.s32.totalorder %s39, 1
      %p340 = por %p338, %p339
      %p342 = scmp.ne.s32.totalorder %s327, %s341
      %p343 = scmp.eq.s32.totalorder %s39, 0
      %p344 = por %p342, %p343
      %s346 = sadd.s32 %s345, 1
      %p349 = scmp.eq.s32.totalorder %s33, 1
      %p350 = scmp.ne.s32.totalorder %s345, %s347
      %p351 = scmp.eq.s32.totalorder %s33, 0
      %p352 = por %p350, %p351
      %p353 = scmp.ne.s32.totalorder %s345, %s347
      %p354 = scmp.eq.s32.totalorder %s38, 1
      %p355 = por %p353, %p354
      %p356 = scmp.ne.s32.totalorder %s347, %s348
      %p357 = scmp.eq.s32.totalorder %s38, 0
      %p358 = por %p356, %p357
      %p359 = scmp.ne.s32.totalorder %s347, %s348
      %p360 = scmp.eq.s32.totalorder %s39, 1
      %p361 = por %p359, %p360
      %p363 = scmp.ne.s32.totalorder %s348, %s362
      %p364 = scmp.eq.s32.totalorder %s39, 0
      %p365 = por %p363, %p364
      %s367 = sadd.s32 %s366, 1
      %p370 = scmp.eq.s32.totalorder %s33, 1
      %p371 = scmp.ne.s32.totalorder %s366, %s368
      %p372 = scmp.eq.s32.totalorder %s33, 0
      %p373 = por %p371, %p372
      %p374 = scmp.ne.s32.totalorder %s366, %s368
      %p375 = scmp.eq.s32.totalorder %s38, 1
      %p376 = por %p374, %p375
      %p377 = scmp.ne.s32.totalorder %s368, %s369
      %p378 = scmp.eq.s32.totalorder %s38, 0
      %p379 = por %p377, %p378
      %p380 = scmp.ne.s32.totalorder %s368, %s369
      %p381 = scmp.eq.s32.totalorder %s39, 1
      %p382 = por %p380, %p381
      %p384 = scmp.ne.s32.totalorder %s369, %s383
      %p385 = scmp.eq.s32.totalorder %s39, 0
      %p386 = por %p384, %p385
      %s388 = sadd.s32 %s387, 1
      %p391 = scmp.eq.s32.totalorder %s33, 1
      %p392 = scmp.ne.s32.totalorder %s387, %s389
      %p393 = scmp.eq.s32.totalorder %s33, 0
      %p394 = por %p392, %p393
      %p395 = scmp.ne.s32.totalorder %s387, %s389
      %p396 = scmp.eq.s32.totalorder %s38, 1
      %p397 = por %p395, %p396
      %p398 = scmp.ne.s32.totalorder %s389, %s390
      %p399 = scmp.eq.s32.totalorder %s38, 0
      %p400 = por %p398, %p399
      %p401 = scmp.ne.s32.totalorder %s389, %s390
      %p402 = scmp.eq.s32.totalorder %s39, 1
      %p403 = por %p401, %p402
      %p405 = scmp.ne.s32.totalorder %s390, %s404
      %p406 = scmp.eq.s32.totalorder %s39, 0
      %p407 = por %p405, %p406
      %s409 = sadd.s32 %s408, 1
      %p412 = scmp.eq.s32.totalorder %s33, 1
      %p413 = scmp.ne.s32.totalorder %s408, %s410
      %p414 = scmp.eq.s32.totalorder %s33, 0
      %p415 = por %p413, %p414
      %p416 = scmp.ne.s32.totalorder %s408, %s410
      %p417 = scmp.eq.s32.totalorder %s38, 1
      %p418 = por %p416, %p417
      %p419 = scmp.ne.s32.totalorder %s410, %s411
      %p420 = scmp.eq.s32.totalorder %s38, 0
      %p421 = por %p419, %p420
      %p422 = scmp.ne.s32.totalorder %s410, %s411
      %p423 = scmp.eq.s32.totalorder %s39, 1
      %p424 = por %p422, %p423
      %p426 = scmp.ne.s32.totalorder %s411, %s425
      %p427 = scmp.eq.s32.totalorder %s39, 0
      %p428 = por %p426, %p427
      %s430 = sadd.s32 %s429, 1
      %p433 = scmp.eq.s32.totalorder %s33, 1
      %p434 = scmp.ne.s32.totalorder %s429, %s431
      %p435 = scmp.eq.s32.totalorder %s33, 0
      %p436 = por %p434, %p435
      %p437 = scmp.ne.s32.totalorder %s429, %s431
      %p438 = scmp.eq.s32.totalorder %s38, 1
      %p439 = por %p437, %p438
      %p440 = scmp.ne.s32.totalorder %s431, %s432
      %p441 = scmp.eq.s32.totalorder %s38, 0
      %p442 = por %p440, %p441
      %p443 = scmp.ne.s32.totalorder %s431, %s432
      %p444 = scmp.eq.s32.totalorder %s39, 1
      %p445 = por %p443, %p444
      %p447 = scmp.ne.s32.totalorder %s432, %s446
      %p448 = scmp.eq.s32.totalorder %s39, 0
      %p449 = por %p447, %p448
      %s450 = ssub.s32 %s33, %s40
      %p451 = scmp.eq.s32.totalorder %s450, 0
      %s453 = sadd.s32 %s452, 1
      %s454 = scalar_select %p451, %s452, %s453
      %p457 = pneg %p451
      %p458 = scmp.eq.s32.totalorder %s33, 1
      %p459 = por %p457, %p458
      %p460 = scmp.ne.s32.totalorder %s452, %s455
      %p461 = scmp.eq.s32.totalorder %s33, 0
      %p462 = por %p460, %p461
      %p463 = scmp.ne.s32.totalorder %s452, %s455
      %p464 = scmp.eq.s32.totalorder %s38, 1
      %p465 = por %p463, %p464
      %p466 = scmp.ne.s32.totalorder %s455, %s456
      %p467 = scmp.eq.s32.totalorder %s38, 0
      %p468 = por %p466, %p467
      %p469 = scmp.ne.s32.totalorder %s455, %s456
      %p470 = scmp.eq.s32.totalorder %s39, 1
      %p471 = por %p469, %p470
      %p473 = scmp.ne.s32.totalorder %s456, %s472
      %p474 = scmp.eq.s32.totalorder %s39, 0
      %p475 = por %p473, %p474
      %p476 = scmp.le.s32.totalorder 1, %s33
      %p477 = scmp.lt.s32.totalorder %s33, 3
      %p478 = pnand %p476, %p477
      %p479 = pneg %p478
      // Predicated region
      $region9: #{tpu_custom_call.1} parent=5 // pred_check
        _
      $region10: #{tpu_custom_call.1} parent=5 // pred_check_branch
        %481 = sbr.rel (%p478) target = $region12
      $region11: #{tpu_custom_call.1} parent=5 // pred_region
        %s482 = ssub.s32 %s33, 1
        // Predicated region
        $region13: #{tpu_custom_call.1} parent=11 // pred_check
          %p483 = pneg %p106
        $region14: #{tpu_custom_call.1} parent=11 // pred_check_branch
          %485 = sbr.rel (%p483) target = $region16
        $region15: #{tpu_custom_call.1} parent=11 // pred_region
          %s487 = ssub.s32 2048, 2048
          %488 = vsyncadd [#allocation3], %s487
          %s489 = sshll.u32 [#allocation2], 4
          %s490 = int_to_ptr.vmem [resolvable:$true] %s489
          %495 = dma.hbm_to_vmem [thread:$0]  %s2, 2048, %s490, [#allocation3], 64, 64, 4
        $region16: #{tpu_custom_call.1} parent=11 // pred_fallthru
          _
        // Predicated region
        $region17: #{tpu_custom_call.1} parent=11 // pred_check
          %p496 = pneg %p127
        $region18: #{tpu_custom_call.1} parent=11 // pred_check_branch
          %498 = sbr.rel (%p496) target = $region20
        $region19: #{tpu_custom_call.1} parent=11 // pred_region
          _
        $region20: #{tpu_custom_call.1} parent=11 // pred_fallthru
          _
        // Predicated region
        $region21: #{tpu_custom_call.1} parent=11 // pred_check
          %p499 = pneg %p148
        $region22: #{tpu_custom_call.1} parent=11 // pred_check_branch
          %501 = sbr.rel (%p499) target = $region24
        $region23: #{tpu_custom_call.1} parent=11 // pred_region
          %s503 = ssub.s32 16, 16
          %504 = vsyncadd [#allocation6], %s503
          %s506 = sshll.u32 [#allocation5], 4
          %s507 = int_to_ptr.vmem [resolvable:$true] %s506
          %509 = dma.hbm_to_vmem [thread:$0]  %s4, 16, %s507, [#allocation6]
        $region24: #{tpu_custom_call.1} parent=11 // pred_fallthru
          _
        // Predicated region
        $region25: #{tpu_custom_call.1} parent=11 // pred_check
          %p510 = pneg %p169
        $region26: #{tpu_custom_call.1} parent=11 // pred_check_branch
          %512 = sbr.rel (%p510) target = $region28
        $region27: #{tpu_custom_call.1} parent=11 // pred_region
          %s514 = ssub.s32 16, 16
          %515 = vsyncadd [#allocation6], %s514
          %s517 = sshll.u32 [#allocation7], 4
          %s518 = int_to_ptr.vmem [resolvable:$true] %s517
          %520 = dma.hbm_to_vmem [thread:$0]  %s5, 16, %s518, [#allocation6]
        $region28: #{tpu_custom_call.1} parent=11 // pred_fallthru
          _
        // Predicated region
        $region29: #{tpu_custom_call.1} parent=11 // pred_check
          %p521 = pneg %p190
        $region30: #{tpu_custom_call.1} parent=11 // pred_check_branch
          %523 = sbr.rel (%p521) target = $region32
        $region31: #{tpu_custom_call.1} parent=11 // pred_region
          _
        $region32: #{tpu_custom_call.1} parent=11 // pred_fallthru
          _
        // Predicated region
        $region33: #{tpu_custom_call.1} parent=11 // pred_check
          %p524 = pneg %p211
        $region34: #{tpu_custom_call.1} parent=11 // pred_check_branch
          %526 = sbr.rel (%p524) target = $region36
        $region35: #{tpu_custom_call.1} parent=11 // pred_region
          _
        $region36: #{tpu_custom_call.1} parent=11 // pred_fallthru
          _
        // Predicated region
        $region37: #{tpu_custom_call.1} parent=11 // pred_check
          %p527 = pneg %p232
        $region38: #{tpu_custom_call.1} parent=11 // pred_check_branch
          %529 = sbr.rel (%p527) target = $region40
        $region39: #{tpu_custom_call.1} parent=11 // pred_region
          %s531 = ssub.s32 16384, 16384
          %532 = vsyncadd [#allocation9], %s531
          %s533 = sshll.u32 [#allocation8], 4
          %s534 = int_to_ptr.vmem [resolvable:$true] %s533
          %539 = dma.hbm_to_vmem [thread:$0]  %s8, 16384, %s534, [#allocation9], 256, 256, 16
        $region40: #{tpu_custom_call.1} parent=11 // pred_fallthru
          _
        // Predicated region
        $region41: #{tpu_custom_call.1} parent=11 // pred_check
          %p540 = pneg %p253
        $region42: #{tpu_custom_call.1} parent=11 // pred_check_branch
          %542 = sbr.rel (%p540) target = $region44
        $region43: #{tpu_custom_call.1} parent=11 // pred_region
          _
        $region44: #{tpu_custom_call.1} parent=11 // pred_fallthru
          _
        // Predicated region
        $region45: #{tpu_custom_call.1} parent=11 // pred_check
          %p543 = pneg %p274
        $region46: #{tpu_custom_call.1} parent=11 // pred_check_branch
          %545 = sbr.rel (%p543) target = $region48
        $region47: #{tpu_custom_call.1} parent=11 // pred_region
          %s547 = ssub.s32 16384, 16384
          %548 = vsyncadd [#allocation9], %s547
          %s549 = sshll.u32 [#allocation10], 4
          %s550 = int_to_ptr.vmem [resolvable:$true] %s549
          %555 = dma.hbm_to_vmem [thread:$0]  %s10, 16384, %s550, [#allocation9], 256, 256, 16
        $region48: #{tpu_custom_call.1} parent=11 // pred_fallthru
          _
        // Predicated region
        $region49: #{tpu_custom_call.1} parent=11 // pred_check
          %p556 = pneg %p295
        $region50: #{tpu_custom_call.1} parent=11 // pred_check_branch
          %558 = sbr.rel (%p556) target = $region52
        $region51: #{tpu_custom_call.1} parent=11 // pred_region
          _
        $region52: #{tpu_custom_call.1} parent=11 // pred_fallthru
          _
        // Predicated region
        $region53: #{tpu_custom_call.1} parent=11 // pred_check
          %p559 = pneg %p316
        $region54: #{tpu_custom_call.1} parent=11 // pred_check_branch
          %561 = sbr.rel (%p559) target = $region56
        $region55: #{tpu_custom_call.1} parent=11 // pred_region
          %s563 = ssub.s32 16384, 16384
          %564 = vsyncadd [#allocation12], %s563
          %s565 = sshll.u32 [#allocation11], 4
          %s566 = int_to_ptr.vmem [resolvable:$true] %s565
          %571 = dma.hbm_to_vmem [thread:$0]  %s12, 16384, %s566, [#allocation12], 256, 256, 16
        $region56: #{tpu_custom_call.1} parent=11 // pred_fallthru
          _
        // Predicated region
        $region57: #{tpu_custom_call.1} parent=11 // pred_check
          %p572 = pneg %p337
        $region58: #{tpu_custom_call.1} parent=11 // pred_check_branch
          %574 = sbr.rel (%p572) target = $region60
        $region59: #{tpu_custom_call.1} parent=11 // pred_region
          _
        $region60: #{tpu_custom_call.1} parent=11 // pred_fallthru
          _
        // Predicated region
        $region61: #{tpu_custom_call.1} parent=11 // pred_check
          %p575 = pneg %p358
        $region62: #{tpu_custom_call.1} parent=11 // pred_check_branch
          %577 = sbr.rel (%p575) target = $region64
        $region63: #{tpu_custom_call.1} parent=11 // pred_region
          %s579 = ssub.s32 4096, 4096
          %580 = vsyncadd [#allocation12], %s579
          %s581 = sshll.u32 [#allocation13], 4
          %s582 = int_to_ptr.vmem [resolvable:$true] %s581
          %587 = dma.hbm_to_vmem [thread:$0]  %s14, 4096, %s582, [#allocation12], 64, 64, 4
        $region64: #{tpu_custom_call.1} parent=11 // pred_fallthru
          _
        // Predicated region
        $region65: #{tpu_custom_call.1} parent=11 // pred_check
          %p588 = pneg %p379
        $region66: #{tpu_custom_call.1} parent=11 // pred_check_branch
          %590 = sbr.rel (%p588) target = $region68
        $region67: #{tpu_custom_call.1} parent=11 // pred_region
          _
        $region68: #{tpu_custom_call.1} parent=11 // pred_fallthru
          _
        // Predicated region
        $region69: #{tpu_custom_call.1} parent=11 // pred_check
          %p591 = pneg %p400
        $region70: #{tpu_custom_call.1} parent=11 // pred_check_branch
          %593 = sbr.rel (%p591) target = $region72
        $region71: #{tpu_custom_call.1} parent=11 // pred_region
          %s595 = ssub.s32 1024, 1024
          %596 = vsyncadd [#allocation15], %s595
          %s597 = sshll.u32 [#allocation14], 4
          %s598 = int_to_ptr.vmem [resolvable:$true] %s597
          %603 = dma.hbm_to_vmem [thread:$0]  %s16, 1024, %s598, [#allocation15], 64, 64, 4
        $region72: #{tpu_custom_call.1} parent=11 // pred_fallthru
          _
        // Predicated region
        $region73: #{tpu_custom_call.1} parent=11 // pred_check
          %p604 = pneg %p421
        $region74: #{tpu_custom_call.1} parent=11 // pred_check_branch
          %606 = sbr.rel (%p604) target = $region76
        $region75: #{tpu_custom_call.1} parent=11 // pred_region
          _
        $region76: #{tpu_custom_call.1} parent=11 // pred_fallthru
          _
        // Predicated region
        $region77: #{tpu_custom_call.1} parent=11 // pred_check
          %p607 = pneg %p442
        $region78: #{tpu_custom_call.1} parent=11 // pred_check_branch
          %609 = sbr.rel (%p607) target = $region80
        $region79: #{tpu_custom_call.1} parent=11 // pred_region
          _
        $region80: #{tpu_custom_call.1} parent=11 // pred_fallthru
          _
      $region12: #{tpu_custom_call.1} parent=5 // pred_fallthru
        _
      %p610 = scmp.lt.s32.totalorder %s33, 2
      // Predicated region
      $region81: #{tpu_custom_call.1} parent=5 // pred_check
        %p611 = pneg %p610
      $region82: #{tpu_custom_call.1} parent=5 // pred_check_branch
        %613 = sbr.rel (%p611) target = $region84
      $region83: #{tpu_custom_call.1} parent=5 // pred_region
        // Predicated region
        $region85: #{tpu_custom_call.1} parent=83 // pred_check
          %p614 = pneg %p53
        $region86: #{tpu_custom_call.1} parent=83 // pred_check_branch
          %616 = sbr.rel (%p614) target = $region88
        $region87: #{tpu_custom_call.1} parent=83 // pred_region
          %s617 = smul.u32 32, %s33
          %p618 = scmp.lt.s32.totalorder %s617, 63
          %s619 = scalar_select %p618, %s617, 63
          %s620 = smul.addr %s619, 4
          %s621 = scalar_lea.vmem %s0, %s620
          %s622 = smul.u32 32, %s33
        $region88: #{tpu_custom_call.1} parent=83 // pred_fallthru
          _
        // Predicated region
        $region89: #{tpu_custom_call.1} parent=83 // pred_check
          %p623 = pneg %p79
        $region90: #{tpu_custom_call.1} parent=83 // pred_check_branch
          %625 = sbr.rel (%p623) target = $region92
        $region91: #{tpu_custom_call.1} parent=83 // pred_region
          %s626 = smul.u32 32, %s33
          %p627 = scmp.lt.s32.totalorder %s626, 63
          %s628 = scalar_select %p627, %s626, 63
          %s629 = smul.addr %s628, 8
          %s630 = scalar_lea.vmem %s1, %s629
          %s631 = smul.u32 32, %s33
        $region92: #{tpu_custom_call.1} parent=83 // pred_fallthru
          _
      $region84: #{tpu_custom_call.1} parent=5 // pred_fallthru
        _
      %p632 = scmp.le.s32.totalorder 1, %s33
      %p633 = scmp.lt.s32.totalorder %s33, 3
      %p634 = pnand %p632, %p633
      %p635 = pneg %p634
      // Predicated region
      $region93: #{tpu_custom_call.1} parent=5 // pred_check
        _
      $region94: #{tpu_custom_call.1} parent=5 // pred_check_branch
        %637 = sbr.rel (%p634) target = $region96
      $region95: #{tpu_custom_call.1} parent=5 // pred_region
        %s638 = ssub.s32 %s33, 1
        // Predicated region
        $region97: #{tpu_custom_call.1} parent=95 // pred_check
          %p639 = pneg %p106
        $region98: #{tpu_custom_call.1} parent=95 // pred_check_branch
          %641 = sbr.rel (%p639) target = $region100
        $region99: #{tpu_custom_call.1} parent=95 // pred_region
          %642 = dma.done [#allocation3], 2048
        $region100: #{tpu_custom_call.1} parent=95 // pred_fallthru
          _
        // Predicated region
        $region101: #{tpu_custom_call.1} parent=95 // pred_check
          %p643 = pneg %p148
        $region102: #{tpu_custom_call.1} parent=95 // pred_check_branch
          %645 = sbr.rel (%p643) target = $region104
        $region103: #{tpu_custom_call.1} parent=95 // pred_region
          %646 = dma.done [#allocation6], 16
        $region104: #{tpu_custom_call.1} parent=95 // pred_fallthru
          _
        // Predicated region
        $region105: #{tpu_custom_call.1} parent=95 // pred_check
          %p647 = pneg %p169
        $region106: #{tpu_custom_call.1} parent=95 // pred_check_branch
          %649 = sbr.rel (%p647) target = $region108
        $region107: #{tpu_custom_call.1} parent=95 // pred_region
          %650 = dma.done [#allocation6], 16
        $region108: #{tpu_custom_call.1} parent=95 // pred_fallthru
          _
        // Predicated region
        $region109: #{tpu_custom_call.1} parent=95 // pred_check
          %p651 = pneg %p232
        $region110: #{tpu_custom_call.1} parent=95 // pred_check_branch
          %653 = sbr.rel (%p651) target = $region112
        $region111: #{tpu_custom_call.1} parent=95 // pred_region
          %654 = dma.done [#allocation9], 16384
        $region112: #{tpu_custom_call.1} parent=95 // pred_fallthru
          _
        // Predicated region
        $region113: #{tpu_custom_call.1} parent=95 // pred_check
          %p655 = pneg %p274
        $region114: #{tpu_custom_call.1} parent=95 // pred_check_branch
          %657 = sbr.rel (%p655) target = $region116
        $region115: #{tpu_custom_call.1} parent=95 // pred_region
          %658 = dma.done [#allocation9], 16384
        $region116: #{tpu_custom_call.1} parent=95 // pred_fallthru
          _
        // Predicated region
        $region117: #{tpu_custom_call.1} parent=95 // pred_check
          %p659 = pneg %p316
        $region118: #{tpu_custom_call.1} parent=95 // pred_check_branch
          %661 = sbr.rel (%p659) target = $region120
        $region119: #{tpu_custom_call.1} parent=95 // pred_region
          %662 = dma.done [#allocation12], 16384
        $region120: #{tpu_custom_call.1} parent=95 // pred_fallthru
          _
        // Predicated region
        $region121: #{tpu_custom_call.1} parent=95 // pred_check
          %p663 = pneg %p358
        $region122: #{tpu_custom_call.1} parent=95 // pred_check_branch
          %665 = sbr.rel (%p663) target = $region124
        $region123: #{tpu_custom_call.1} parent=95 // pred_region
          %666 = dma.done [#allocation12], 4096
        $region124: #{tpu_custom_call.1} parent=95 // pred_fallthru
          _
        // Predicated region
        $region125: #{tpu_custom_call.1} parent=95 // pred_check
          %p667 = pneg %p400
        $region126: #{tpu_custom_call.1} parent=95 // pred_check_branch
          %669 = sbr.rel (%p667) target = $region128
        $region127: #{tpu_custom_call.1} parent=95 // pred_region
          %670 = dma.done [#allocation15], 1024
        $region128: #{tpu_custom_call.1} parent=95 // pred_fallthru
          _
        %s671 = smul.u32 32, %s38
        %p672 = scmp.lt.s32.totalorder %s671, 63
        %s673 = scalar_select %p672, %s671, 63
        %s674 = smul.addr %s673, 4
        %s675 = scalar_lea.vmem %s0, %s674
        %p676 = pneg %p59
        %p677 = pneg %p56
        %s678 = smul.u32 32, %s38
        %p679 = scmp.lt.s32.totalorder %s678, 63
        %s680 = scalar_select %p679, %s678, 63
        %s681 = smul.addr %s680, 8
        %s682 = scalar_lea.vmem %s1, %s681
        %p683 = pneg %p85
        %p684 = pneg %p82
        %p685 = pneg %p106
        %p686 = pneg %p103
        %p687 = pneg %p127
        %p688 = pneg %p124
        %p689 = pneg %p148
        %p690 = pneg %p145
        %p691 = pneg %p169
        %p692 = pneg %p166
        %p693 = pneg %p190
        %p694 = pneg %p187
        %p695 = pneg %p211
        %p696 = pneg %p208
        %p697 = pneg %p232
        %p698 = pneg %p229
        %p699 = pneg %p253
        %p700 = pneg %p250
        %p701 = pneg %p274
        %p702 = pneg %p271
        %p703 = pneg %p295
        %p704 = pneg %p292
        %p705 = pneg %p316
        %p706 = pneg %p313
        %p707 = pneg %p337
        %p708 = pneg %p334
        %p709 = pneg %p358
        %p710 = pneg %p355
        %p711 = pneg %p379
        %p712 = pneg %p376
        %p713 = pneg %p400
        %p714 = pneg %p397
        %p715 = pneg %p421
        %p716 = pneg %p418
        %p717 = pneg %p442
        %p718 = pneg %p439
        %p719 = pneg %p468
        %p720 = pneg %p465
        %s721 = sand.u32 %s455, 1
        %s722 = scalar_lea.sflag [#allocation4], %s721
        %s723 = sand.u32 %s455, 1
        %s724 = smul.addr %s723, 256
        %s725 = scalar_lea.vmem [#allocation16], %s724
        %s726 = smul.u32 32, %s38
        %p727 = scmp.lt.s32.totalorder %s726, 63
        %s728 = scalar_select %p727, %s726, 63
        %s729 = smul.addr %s728, 4
        %s730 = scalar_lea.vmem %s0, %s729
        %s731 = smul.u32 32, %s38
        %s732 = smul.u32 32, %s38
        %p733 = scmp.lt.s32.totalorder %s732, 63
        %s734 = scalar_select %p733, %s732, 63
        %s735 = smul.addr %s734, 8
        %s736 = scalar_lea.vmem %s1, %s735
        %s737 = smul.u32 32, %s38
        %s738 = smul.u32 32, %s38
        %v740 = vld [vmem:[%s730] sm:$0xf]
        %v741 = vld [vmem:[%s730 + $0x4] sm:$0xf]
        %v742 = vld [vmem:[%s730 + $0x8] sm:$0xf]
        %v743 = vld [vmem:[%s730 + $0xc] sm:$0xf]
        %v744 = vld [vmem:[%s730 + $0x10] sm:$0xf]
        %v745 = vld [vmem:[%s730 + $0x14] sm:$0xf]
        %v746 = vld [vmem:[%s730 + $0x18] sm:$0xf]
        %v747 = vld [vmem:[%s730 + $0x1c] sm:$0xf]
        %v748 = vld [vmem:[%s730 + $0x20] sm:$0xf]
        %v749 = vld [vmem:[%s730 + $0x24] sm:$0xf]
        %v750 = vld [vmem:[%s730 + $0x28] sm:$0xf]
        %v751 = vld [vmem:[%s730 + $0x2c] sm:$0xf]
        %v752 = vld [vmem:[%s730 + $0x30] sm:$0xf]
        %v753 = vld [vmem:[%s730 + $0x34] sm:$0xf]
        %v754 = vld [vmem:[%s730 + $0x38] sm:$0xf]
        %v755 = vld [vmem:[%s730 + $0x3c] sm:$0xf]
        %v756 = vld [vmem:[%s730 + $0x40] sm:$0xf]
        %v757 = vld [vmem:[%s730 + $0x44] sm:$0xf]
        %v758 = vld [vmem:[%s730 + $0x48] sm:$0xf]
        %v759 = vld [vmem:[%s730 + $0x4c] sm:$0xf]
        %v760 = vld [vmem:[%s730 + $0x50] sm:$0xf]
        %v761 = vld [vmem:[%s730 + $0x54] sm:$0xf]
        %v762 = vld [vmem:[%s730 + $0x58] sm:$0xf]
        %v763 = vld [vmem:[%s730 + $0x5c] sm:$0xf]
        %v764 = vld [vmem:[%s730 + $0x60] sm:$0xf]
        %v765 = vld [vmem:[%s730 + $0x64] sm:$0xf]
        %v766 = vld [vmem:[%s730 + $0x68] sm:$0xf]
        %v767 = vld [vmem:[%s730 + $0x6c] sm:$0xf]
        %v768 = vld [vmem:[%s730 + $0x70] sm:$0xf]
        %v769 = vld [vmem:[%s730 + $0x74] sm:$0xf]
        %v770 = vld [vmem:[%s730 + $0x78] sm:$0xf]
        %v771 = vld [vmem:[%s730 + $0x7c] sm:$0xf]
        %v772 = vld [vmem:[%s736] sm:$0xff]
        %v773 = vld [vmem:[%s736 + $0x8] sm:$0xff]
        %v774 = vld [vmem:[%s736 + $0x10] sm:$0xff]
        %v775 = vld [vmem:[%s736 + $0x18] sm:$0xff]
        %v776 = vld [vmem:[%s736 + $0x20] sm:$0xff]
        %v777 = vld [vmem:[%s736 + $0x28] sm:$0xff]
        %v778 = vld [vmem:[%s736 + $0x30] sm:$0xff]
        %v779 = vld [vmem:[%s736 + $0x38] sm:$0xff]
        %v780 = vld [vmem:[%s736 + $0x40] sm:$0xff]
        %v781 = vld [vmem:[%s736 + $0x48] sm:$0xff]
        %v782 = vld [vmem:[%s736 + $0x50] sm:$0xff]
        %v783 = vld [vmem:[%s736 + $0x58] sm:$0xff]
        %v784 = vld [vmem:[%s736 + $0x60] sm:$0xff]
        %v785 = vld [vmem:[%s736 + $0x68] sm:$0xff]
        %v786 = vld [vmem:[%s736 + $0x70] sm:$0xff]
        %v787 = vld [vmem:[%s736 + $0x78] sm:$0xff]
        %v788 = vld [vmem:[%s736 + $0x80] sm:$0xff]
        %v789 = vld [vmem:[%s736 + $0x88] sm:$0xff]
        %v790 = vld [vmem:[%s736 + $0x90] sm:$0xff]
        %v791 = vld [vmem:[%s736 + $0x98] sm:$0xff]
        %v792 = vld [vmem:[%s736 + $0xa0] sm:$0xff]
        %v793 = vld [vmem:[%s736 + $0xa8] sm:$0xff]
        %v794 = vld [vmem:[%s736 + $0xb0] sm:$0xff]
        %v795 = vld [vmem:[%s736 + $0xb8] sm:$0xff]
        %v796 = vld [vmem:[%s736 + $0xc0] sm:$0xff]
        %v797 = vld [vmem:[%s736 + $0xc8] sm:$0xff]
        %v798 = vld [vmem:[%s736 + $0xd0] sm:$0xff]
        %v799 = vld [vmem:[%s736 + $0xd8] sm:$0xff]
        %v800 = vld [vmem:[%s736 + $0xe0] sm:$0xff]
        %v801 = vld [vmem:[%s736 + $0xe8] sm:$0xff]
        %v802 = vld [vmem:[%s736 + $0xf0] sm:$0xff]
        %v803 = vld [vmem:[%s736 + $0xf8] sm:$0xff]
        %v804 = vld [vmem:[#allocation5] sm:$0x1]
        %806 = vset.pattern.permute.xlu0 0
        %807 = vperm.xlu0 %806, %v772
        %v808 = vpop.permute.xlu0 %807
        %811 = vset.pattern.permute.xlu0 0
        %812 = vperm.xlu0 %811, %v773
        %v813 = vpop.permute.xlu0 %812
        %816 = vset.pattern.permute.xlu0 0
        %817 = vperm.xlu0 %816, %v774
        %v818 = vpop.permute.xlu0 %817
        %821 = vset.pattern.permute.xlu0 0
        %822 = vperm.xlu0 %821, %v775
        %v823 = vpop.permute.xlu0 %822
        %826 = vset.pattern.permute.xlu0 0
        %827 = vperm.xlu0 %826, %v776
        %v828 = vpop.permute.xlu0 %827
        %831 = vset.pattern.permute.xlu0 0
        %832 = vperm.xlu0 %831, %v777
        %v833 = vpop.permute.xlu0 %832
        %836 = vset.pattern.permute.xlu0 0
        %837 = vperm.xlu0 %836, %v778
        %v838 = vpop.permute.xlu0 %837
        %841 = vset.pattern.permute.xlu0 0
        %842 = vperm.xlu0 %841, %v779
        %v843 = vpop.permute.xlu0 %842
        %846 = vset.pattern.permute.xlu0 0
        %847 = vperm.xlu0 %846, %v780
        %v848 = vpop.permute.xlu0 %847
        %851 = vset.pattern.permute.xlu0 0
        %852 = vperm.xlu0 %851, %v781
        %v853 = vpop.permute.xlu0 %852
        %856 = vset.pattern.permute.xlu0 0
        %857 = vperm.xlu0 %856, %v782
        %v858 = vpop.permute.xlu0 %857
        %861 = vset.pattern.permute.xlu0 0
        %862 = vperm.xlu0 %861, %v783
        %v863 = vpop.permute.xlu0 %862
        %866 = vset.pattern.permute.xlu0 0
        %867 = vperm.xlu0 %866, %v784
        %v868 = vpop.permute.xlu0 %867
        %871 = vset.pattern.permute.xlu0 0
        %872 = vperm.xlu0 %871, %v785
        %v873 = vpop.permute.xlu0 %872
        %876 = vset.pattern.permute.xlu0 0
        %877 = vperm.xlu0 %876, %v786
        %v878 = vpop.permute.xlu0 %877
        %881 = vset.pattern.permute.xlu0 0
        %882 = vperm.xlu0 %881, %v787
        %v883 = vpop.permute.xlu0 %882
        %886 = vset.pattern.permute.xlu0 0
        %887 = vperm.xlu0 %886, %v788
        %v888 = vpop.permute.xlu0 %887
        %891 = vset.pattern.permute.xlu0 0
        %892 = vperm.xlu0 %891, %v789
        %v893 = vpop.permute.xlu0 %892
        %896 = vset.pattern.permute.xlu0 0
        %897 = vperm.xlu0 %896, %v790
        %v898 = vpop.permute.xlu0 %897
        %901 = vset.pattern.permute.xlu0 0
        %902 = vperm.xlu0 %901, %v791
        %v903 = vpop.permute.xlu0 %902
        %906 = vset.pattern.permute.xlu0 0
        %907 = vperm.xlu0 %906, %v792
        %v908 = vpop.permute.xlu0 %907
        %911 = vset.pattern.permute.xlu0 0
        %912 = vperm.xlu0 %911, %v793
        %v913 = vpop.permute.xlu0 %912
        %916 = vset.pattern.permute.xlu0 0
        %917 = vperm.xlu0 %916, %v794
        %v918 = vpop.permute.xlu0 %917
        %921 = vset.pattern.permute.xlu0 0
        %922 = vperm.xlu0 %921, %v795
        %v923 = vpop.permute.xlu0 %922
        %926 = vset.pattern.permute.xlu0 0
        %927 = vperm.xlu0 %926, %v796
        %v928 = vpop.permute.xlu0 %927
        %931 = vset.pattern.permute.xlu0 0
        %932 = vperm.xlu0 %931, %v797
        %v933 = vpop.permute.xlu0 %932
        %936 = vset.pattern.permute.xlu0 0
        %937 = vperm.xlu0 %936, %v798
        %v938 = vpop.permute.xlu0 %937
        %941 = vset.pattern.permute.xlu0 0
        %942 = vperm.xlu0 %941, %v799
        %v943 = vpop.permute.xlu0 %942
        %946 = vset.pattern.permute.xlu0 0
        %947 = vperm.xlu0 %946, %v800
        %v948 = vpop.permute.xlu0 %947
        %951 = vset.pattern.permute.xlu0 0
        %952 = vperm.xlu0 %951, %v801
        %v953 = vpop.permute.xlu0 %952
        %956 = vset.pattern.permute.xlu0 0
        %957 = vperm.xlu0 %956, %v802
        %v958 = vpop.permute.xlu0 %957
        %961 = vset.pattern.permute.xlu0 0
        %962 = vperm.xlu0 %961, %v803
        %v963 = vpop.permute.xlu0 %962
        %v966 = vlaneseq
        %v967 = vshrl.u32 %v966, 7
        %v968 = vsub.s32 0, %v967
        %v969 = vrot.slane %v804, %v968
        %v971 = vmul.f32 %v808, %v969
        %v972 = vmul.f32 %v813, %v969
        %v973 = vmul.f32 %v818, %v969
        %v974 = vmul.f32 %v823, %v969
        %v975 = vmul.f32 %v828, %v969
        %v976 = vmul.f32 %v833, %v969
        %v977 = vmul.f32 %v838, %v969
        %v978 = vmul.f32 %v843, %v969
        %v979 = vmul.f32 %v848, %v969
        %v980 = vmul.f32 %v853, %v969
        %v981 = vmul.f32 %v858, %v969
        %v982 = vmul.f32 %v863, %v969
        %v983 = vmul.f32 %v868, %v969
        %v984 = vmul.f32 %v873, %v969
        %v985 = vmul.f32 %v878, %v969
        %v986 = vmul.f32 %v883, %v969
        %v987 = vmul.f32 %v888, %v969
        %v988 = vmul.f32 %v893, %v969
        %v989 = vmul.f32 %v898, %v969
        %v990 = vmul.f32 %v903, %v969
        %v991 = vmul.f32 %v908, %v969
        %v992 = vmul.f32 %v913, %v969
        %v993 = vmul.f32 %v918, %v969
        %v994 = vmul.f32 %v923, %v969
        %v995 = vmul.f32 %v928, %v969
        %v996 = vmul.f32 %v933, %v969
        %v997 = vmul.f32 %v938, %v969
        %v998 = vmul.f32 %v943, %v969
        %v999 = vmul.f32 %v948, %v969
        %v1000 = vmul.f32 %v953, %v969
        %v1001 = vmul.f32 %v958, %v969
        %v1002 = vmul.f32 %v963, %v969
        %v1003 = vld [vmem:[#allocation7] sm:$0x1]
        %v1005 = vlaneseq
        %v1006 = vshrl.u32 %v1005, 7
        %v1007 = vsub.s32 0, %v1006
        %v1008 = vrot.slane %v1003, %v1007
        %v1010 = vadd.f32 %v971, %v1008
        %v1011 = vadd.f32 %v972, %v1008
        %v1012 = vadd.f32 %v973, %v1008
        %v1013 = vadd.f32 %v974, %v1008
        %v1014 = vadd.f32 %v975, %v1008
        %v1015 = vadd.f32 %v976, %v1008
        %v1016 = vadd.f32 %v977, %v1008
        %v1017 = vadd.f32 %v978, %v1008
        %v1018 = vadd.f32 %v979, %v1008
        %v1019 = vadd.f32 %v980, %v1008
        %v1020 = vadd.f32 %v981, %v1008
        %v1021 = vadd.f32 %v982, %v1008
        %v1022 = vadd.f32 %v983, %v1008
        %v1023 = vadd.f32 %v984, %v1008
        %v1024 = vadd.f32 %v985, %v1008
        %v1025 = vadd.f32 %v986, %v1008
        %v1026 = vadd.f32 %v987, %v1008
        %v1027 = vadd.f32 %v988, %v1008
        %v1028 = vadd.f32 %v989, %v1008
        %v1029 = vadd.f32 %v990, %v1008
        %v1030 = vadd.f32 %v991, %v1008
        %v1031 = vadd.f32 %v992, %v1008
        %v1032 = vadd.f32 %v993, %v1008
        %v1033 = vadd.f32 %v994, %v1008
        %v1034 = vadd.f32 %v995, %v1008
        %v1035 = vadd.f32 %v996, %v1008
        %v1036 = vadd.f32 %v997, %v1008
        %v1037 = vadd.f32 %v998, %v1008
        %v1038 = vadd.f32 %v999, %v1008
        %v1039 = vadd.f32 %v1000, %v1008
        %v1040 = vadd.f32 %v1001, %v1008
        %v1041 = vadd.f32 %v1002, %v1008
        %v1042 = vsub.f32 0.0, %v1010
        %v1043 = vsub.f32 0.0, %v1011
        %v1044 = vsub.f32 0.0, %v1012
        %v1045 = vsub.f32 0.0, %v1013
        %v1046 = vsub.f32 0.0, %v1014
        %v1047 = vsub.f32 0.0, %v1015
        %v1048 = vsub.f32 0.0, %v1016
        %v1049 = vsub.f32 0.0, %v1017
        %v1050 = vsub.f32 0.0, %v1018
        %v1051 = vsub.f32 0.0, %v1019
        %v1052 = vsub.f32 0.0, %v1020
        %v1053 = vsub.f32 0.0, %v1021
        %v1054 = vsub.f32 0.0, %v1022
        %v1055 = vsub.f32 0.0, %v1023
        %v1056 = vsub.f32 0.0, %v1024
        %v1057 = vsub.f32 0.0, %v1025
        %v1058 = vsub.f32 0.0, %v1026
        %v1059 = vsub.f32 0.0, %v1027
        %v1060 = vsub.f32 0.0, %v1028
        %v1061 = vsub.f32 0.0, %v1029
        %v1062 = vsub.f32 0.0, %v1030
        %v1063 = vsub.f32 0.0, %v1031
        %v1064 = vsub.f32 0.0, %v1032
        %v1065 = vsub.f32 0.0, %v1033
        %v1066 = vsub.f32 0.0, %v1034
        %v1067 = vsub.f32 0.0, %v1035
        %v1068 = vsub.f32 0.0, %v1036
        %v1069 = vsub.f32 0.0, %v1037
        %v1070 = vsub.f32 0.0, %v1038
        %v1071 = vsub.f32 0.0, %v1039
        %v1072 = vsub.f32 0.0, %v1040
        %v1073 = vsub.f32 0.0, %v1041
        %v1074 = vmul.f32 %v1042, 1.442695
        %v1075 = vpow.pop %v1074
        %v1076 = vmul.f32 %v1043, 1.442695
        %v1077 = vpow.pop %v1076
        %v1078 = vmul.f32 %v1044, 1.442695
        %v1079 = vpow.pop %v1078
        %v1080 = vmul.f32 %v1045, 1.442695
        %v1081 = vpow.pop %v1080
        %v1082 = vmul.f32 %v1046, 1.442695
        %v1083 = vpow.pop %v1082
        %v1084 = vmul.f32 %v1047, 1.442695
        %v1085 = vpow.pop %v1084
        %v1086 = vmul.f32 %v1048, 1.442695
        %v1087 = vpow.pop %v1086
        %v1088 = vmul.f32 %v1049, 1.442695
        %v1089 = vpow.pop %v1088
        %v1090 = vmul.f32 %v1050, 1.442695
        %v1091 = vpow.pop %v1090
        %v1092 = vmul.f32 %v1051, 1.442695
        %v1093 = vpow.pop %v1092
        %v1094 = vmul.f32 %v1052, 1.442695
        %v1095 = vpow.pop %v1094
        %v1096 = vmul.f32 %v1053, 1.442695
        %v1097 = vpow.pop %v1096
        %v1098 = vmul.f32 %v1054, 1.442695
        %v1099 = vpow.pop %v1098
        %v1100 = vmul.f32 %v1055, 1.442695
        %v1101 = vpow.pop %v1100
        %v1102 = vmul.f32 %v1056, 1.442695
        %v1103 = vpow.pop %v1102
        %v1104 = vmul.f32 %v1057, 1.442695
        %v1105 = vpow.pop %v1104
        %v1106 = vmul.f32 %v1058, 1.442695
        %v1107 = vpow.pop %v1106
        %v1108 = vmul.f32 %v1059, 1.442695
        %v1109 = vpow.pop %v1108
        %v1110 = vmul.f32 %v1060, 1.442695
        %v1111 = vpow.pop %v1110
        %v1112 = vmul.f32 %v1061, 1.442695
        %v1113 = vpow.pop %v1112
        %v1114 = vmul.f32 %v1062, 1.442695
        %v1115 = vpow.pop %v1114
        %v1116 = vmul.f32 %v1063, 1.442695
        %v1117 = vpow.pop %v1116
        %v1118 = vmul.f32 %v1064, 1.442695
        %v1119 = vpow.pop %v1118
        %v1120 = vmul.f32 %v1065, 1.442695
        %v1121 = vpow.pop %v1120
        %v1122 = vmul.f32 %v1066, 1.442695
        %v1123 = vpow.pop %v1122
        %v1124 = vmul.f32 %v1067, 1.442695
        %v1125 = vpow.pop %v1124
        %v1126 = vmul.f32 %v1068, 1.442695
        %v1127 = vpow.pop %v1126
        %v1128 = vmul.f32 %v1069, 1.442695
        %v1129 = vpow.pop %v1128
        %v1130 = vmul.f32 %v1070, 1.442695
        %v1131 = vpow.pop %v1130
        %v1132 = vmul.f32 %v1071, 1.442695
        %v1133 = vpow.pop %v1132
        %v1134 = vmul.f32 %v1072, 1.442695
        %v1135 = vpow.pop %v1134
        %v1136 = vmul.f32 %v1073, 1.442695
        %v1137 = vpow.pop %v1136
        %v1138 = vadd.f32 %v1075, 1.0
        %v1139 = vadd.f32 %v1077, 1.0
        %v1140 = vadd.f32 %v1079, 1.0
        %v1141 = vadd.f32 %v1081, 1.0
        %v1142 = vadd.f32 %v1083, 1.0
        %v1143 = vadd.f32 %v1085, 1.0
        %v1144 = vadd.f32 %v1087, 1.0
        %v1145 = vadd.f32 %v1089, 1.0
        %v1146 = vadd.f32 %v1091, 1.0
        %v1147 = vadd.f32 %v1093, 1.0
        %v1148 = vadd.f32 %v1095, 1.0
        %v1149 = vadd.f32 %v1097, 1.0
        %v1150 = vadd.f32 %v1099, 1.0
        %v1151 = vadd.f32 %v1101, 1.0
        %v1152 = vadd.f32 %v1103, 1.0
        %v1153 = vadd.f32 %v1105, 1.0
        %v1154 = vadd.f32 %v1107, 1.0
        %v1155 = vadd.f32 %v1109, 1.0
        %v1156 = vadd.f32 %v1111, 1.0
        %v1157 = vadd.f32 %v1113, 1.0
        %v1158 = vadd.f32 %v1115, 1.0
        %v1159 = vadd.f32 %v1117, 1.0
        %v1160 = vadd.f32 %v1119, 1.0
        %v1161 = vadd.f32 %v1121, 1.0
        %v1162 = vadd.f32 %v1123, 1.0
        %v1163 = vadd.f32 %v1125, 1.0
        %v1164 = vadd.f32 %v1127, 1.0
        %v1165 = vadd.f32 %v1129, 1.0
        %v1166 = vadd.f32 %v1131, 1.0
        %v1167 = vadd.f32 %v1133, 1.0
        %v1168 = vadd.f32 %v1135, 1.0
        %v1169 = vadd.f32 %v1137, 1.0
        %v1170 = vrcp.pop %v1138
        %v1171 = vmul.f32 1.0, %v1170
        %v1172 = vrcp.pop %v1139
        %v1173 = vmul.f32 1.0, %v1172
        %v1174 = vrcp.pop %v1140
        %v1175 = vmul.f32 1.0, %v1174
        %v1176 = vrcp.pop %v1141
        %v1177 = vmul.f32 1.0, %v1176
        %v1178 = vrcp.pop %v1142
        %v1179 = vmul.f32 1.0, %v1178
        %v1180 = vrcp.pop %v1143
        %v1181 = vmul.f32 1.0, %v1180
        %v1182 = vrcp.pop %v1144
        %v1183 = vmul.f32 1.0, %v1182
        %v1184 = vrcp.pop %v1145
        %v1185 = vmul.f32 1.0, %v1184
        %v1186 = vrcp.pop %v1146
        %v1187 = vmul.f32 1.0, %v1186
        %v1188 = vrcp.pop %v1147
        %v1189 = vmul.f32 1.0, %v1188
        %v1190 = vrcp.pop %v1148
        %v1191 = vmul.f32 1.0, %v1190
        %v1192 = vrcp.pop %v1149
        %v1193 = vmul.f32 1.0, %v1192
        %v1194 = vrcp.pop %v1150
        %v1195 = vmul.f32 1.0, %v1194
        %v1196 = vrcp.pop %v1151
        %v1197 = vmul.f32 1.0, %v1196
        %v1198 = vrcp.pop %v1152
        %v1199 = vmul.f32 1.0, %v1198
        %v1200 = vrcp.pop %v1153
        %v1201 = vmul.f32 1.0, %v1200
        %v1202 = vrcp.pop %v1154
        %v1203 = vmul.f32 1.0, %v1202
        %v1204 = vrcp.pop %v1155
        %v1205 = vmul.f32 1.0, %v1204
        %v1206 = vrcp.pop %v1156
        %v1207 = vmul.f32 1.0, %v1206
        %v1208 = vrcp.pop %v1157
        %v1209 = vmul.f32 1.0, %v1208
        %v1210 = vrcp.pop %v1158
        %v1211 = vmul.f32 1.0, %v1210
        %v1212 = vrcp.pop %v1159
        %v1213 = vmul.f32 1.0, %v1212
        %v1214 = vrcp.pop %v1160
        %v1215 = vmul.f32 1.0, %v1214
        %v1216 = vrcp.pop %v1161
        %v1217 = vmul.f32 1.0, %v1216
        %v1218 = vrcp.pop %v1162
        %v1219 = vmul.f32 1.0, %v1218
        %v1220 = vrcp.pop %v1163
        %v1221 = vmul.f32 1.0, %v1220
        %v1222 = vrcp.pop %v1164
        %v1223 = vmul.f32 1.0, %v1222
        %v1224 = vrcp.pop %v1165
        %v1225 = vmul.f32 1.0, %v1224
        %v1226 = vrcp.pop %v1166
        %v1227 = vmul.f32 1.0, %v1226
        %v1228 = vrcp.pop %v1167
        %v1229 = vmul.f32 1.0, %v1228
        %v1230 = vrcp.pop %v1168
        %v1231 = vmul.f32 1.0, %v1230
        %v1232 = vrcp.pop %v1169
        %v1233 = vmul.f32 1.0, %v1232
        %v1234 = vmul.f32 %v1010, %v1171
        %v1235 = vmul.f32 %v1011, %v1173
        %v1236 = vmul.f32 %v1012, %v1175
        %v1237 = vmul.f32 %v1013, %v1177
        %v1238 = vmul.f32 %v1014, %v1179
        %v1239 = vmul.f32 %v1015, %v1181
        %v1240 = vmul.f32 %v1016, %v1183
        %v1241 = vmul.f32 %v1017, %v1185
        %v1242 = vmul.f32 %v1018, %v1187
        %v1243 = vmul.f32 %v1019, %v1189
        %v1244 = vmul.f32 %v1020, %v1191
        %v1245 = vmul.f32 %v1021, %v1193
        %v1246 = vmul.f32 %v1022, %v1195
        %v1247 = vmul.f32 %v1023, %v1197
        %v1248 = vmul.f32 %v1024, %v1199
        %v1249 = vmul.f32 %v1025, %v1201
        %v1250 = vmul.f32 %v1026, %v1203
        %v1251 = vmul.f32 %v1027, %v1205
        %v1252 = vmul.f32 %v1028, %v1207
        %v1253 = vmul.f32 %v1029, %v1209
        %v1254 = vmul.f32 %v1030, %v1211
        %v1255 = vmul.f32 %v1031, %v1213
        %v1256 = vmul.f32 %v1032, %v1215
        %v1257 = vmul.f32 %v1033, %v1217
        %v1258 = vmul.f32 %v1034, %v1219
        %v1259 = vmul.f32 %v1035, %v1221
        %v1260 = vmul.f32 %v1036, %v1223
        %v1261 = vmul.f32 %v1037, %v1225
        %v1262 = vmul.f32 %v1038, %v1227
        %v1263 = vmul.f32 %v1039, %v1229
        %v1264 = vmul.f32 %v1040, %v1231
        %v1265 = vmul.f32 %v1041, %v1233
        %v1266 = vpack.c.bf16 %v1235, %v1234
        %v1267 = vpack.c.bf16 %v1237, %v1236
        %v1268 = vpack.c.bf16 %v1239, %v1238
        %v1269 = vpack.c.bf16 %v1241, %v1240
        %v1270 = vpack.c.bf16 %v1243, %v1242
        %v1271 = vpack.c.bf16 %v1245, %v1244
        %v1272 = vpack.c.bf16 %v1247, %v1246
        %v1273 = vpack.c.bf16 %v1249, %v1248
        %v1274 = vpack.c.bf16 %v1251, %v1250
        %v1275 = vpack.c.bf16 %v1253, %v1252
        %v1276 = vpack.c.bf16 %v1255, %v1254
        %v1277 = vpack.c.bf16 %v1257, %v1256
        %v1278 = vpack.c.bf16 %v1259, %v1258
        %v1279 = vpack.c.bf16 %v1261, %v1260
        %v1280 = vpack.c.bf16 %v1263, %v1262
        %v1281 = vpack.c.bf16 %v1265, %v1264
        %v1314 = vunpack.c.l.b16 %v740
        %v1315 = vunpack.c.l.b16 %v741
        %v1316 = vunpack.c.l.b16 %v742
        %v1317 = vunpack.c.l.b16 %v743
        %v1318 = vunpack.c.l.b16 %v744
        %v1319 = vunpack.c.l.b16 %v745
        %v1320 = vunpack.c.l.b16 %v746
        %v1321 = vunpack.c.l.b16 %v747
        %v1322 = vunpack.c.l.b16 %v748
        %v1323 = vunpack.c.l.b16 %v749
        %v1324 = vunpack.c.l.b16 %v750
        %v1325 = vunpack.c.l.b16 %v751
        %v1326 = vunpack.c.l.b16 %v752
        %v1327 = vunpack.c.l.b16 %v753
        %v1328 = vunpack.c.l.b16 %v754
        %v1329 = vunpack.c.l.b16 %v755
        %v1330 = vunpack.c.l.b16 %v756
        %v1331 = vunpack.c.l.b16 %v757
        %v1332 = vunpack.c.l.b16 %v758
        %v1333 = vunpack.c.l.b16 %v759
        %v1334 = vunpack.c.l.b16 %v760
        %v1335 = vunpack.c.l.b16 %v761
        %v1336 = vunpack.c.l.b16 %v762
        %v1337 = vunpack.c.l.b16 %v763
        %v1338 = vunpack.c.l.b16 %v764
        %v1339 = vunpack.c.l.b16 %v765
        %v1340 = vunpack.c.l.b16 %v766
        %v1341 = vunpack.c.l.b16 %v767
        %v1342 = vunpack.c.l.b16 %v768
        %v1343 = vunpack.c.l.b16 %v769
        %v1344 = vunpack.c.l.b16 %v770
        %v1345 = vunpack.c.l.b16 %v771
        %v1346 = vpack.c.b16 %v1315, %v1314
        %v1347 = vpack.c.b16 %v1317, %v1316
        %v1348 = vpack.c.b16 %v1319, %v1318
        %v1349 = vpack.c.b16 %v1321, %v1320
        %v1350 = vpack.c.b16 %v1323, %v1322
        %v1351 = vpack.c.b16 %v1325, %v1324
        %v1352 = vpack.c.b16 %v1327, %v1326
        %v1353 = vpack.c.b16 %v1329, %v1328
        %v1354 = vpack.c.b16 %v1331, %v1330
        %v1355 = vpack.c.b16 %v1333, %v1332
        %v1356 = vpack.c.b16 %v1335, %v1334
        %v1357 = vpack.c.b16 %v1337, %v1336
        %v1358 = vpack.c.b16 %v1339, %v1338
        %v1359 = vpack.c.b16 %v1341, %v1340
        %v1360 = vpack.c.b16 %v1343, %v1342
        %v1361 = vpack.c.b16 %v1345, %v1344
        %v1378 = vld [vmem:[#allocation2] sm:$0xf]
        %v1379 = vld [vmem:[#allocation2 + $0x4] sm:$0xf]
        %v1380 = vld [vmem:[#allocation2 + $0x8] sm:$0xf]
        %v1381 = vld [vmem:[#allocation2 + $0xc] sm:$0xf]
        %v1382 = vld [vmem:[#allocation2 + $0x10] sm:$0xf]
        %v1383 = vld [vmem:[#allocation2 + $0x14] sm:$0xf]
        %v1384 = vld [vmem:[#allocation2 + $0x18] sm:$0xf]
        %v1385 = vld [vmem:[#allocation2 + $0x1c] sm:$0xf]
        %v1386 = vld [vmem:[#allocation2 + $0x20] sm:$0xf]
        %v1387 = vld [vmem:[#allocation2 + $0x24] sm:$0xf]
        %v1388 = vld [vmem:[#allocation2 + $0x28] sm:$0xf]
        %v1389 = vld [vmem:[#allocation2 + $0x2c] sm:$0xf]
        %v1390 = vld [vmem:[#allocation2 + $0x30] sm:$0xf]
        %v1391 = vld [vmem:[#allocation2 + $0x34] sm:$0xf]
        %v1392 = vld [vmem:[#allocation2 + $0x38] sm:$0xf]
        %v1393 = vld [vmem:[#allocation2 + $0x3c] sm:$0xf]
        %v1394 = vld [vmem:[#allocation2 + $0x40] sm:$0xf]
        %v1395 = vld [vmem:[#allocation2 + $0x44] sm:$0xf]
        %v1396 = vld [vmem:[#allocation2 + $0x48] sm:$0xf]
        %v1397 = vld [vmem:[#allocation2 + $0x4c] sm:$0xf]
        %v1398 = vld [vmem:[#allocation2 + $0x50] sm:$0xf]
        %v1399 = vld [vmem:[#allocation2 + $0x54] sm:$0xf]
        %v1400 = vld [vmem:[#allocation2 + $0x58] sm:$0xf]
        %v1401 = vld [vmem:[#allocation2 + $0x5c] sm:$0xf]
        %v1402 = vld [vmem:[#allocation2 + $0x60] sm:$0xf]
        %v1403 = vld [vmem:[#allocation2 + $0x64] sm:$0xf]
        %v1404 = vld [vmem:[#allocation2 + $0x68] sm:$0xf]
        %v1405 = vld [vmem:[#allocation2 + $0x6c] sm:$0xf]
        %v1406 = vld [vmem:[#allocation2 + $0x70] sm:$0xf]
        %v1407 = vld [vmem:[#allocation2 + $0x74] sm:$0xf]
        %v1408 = vld [vmem:[#allocation2 + $0x78] sm:$0xf]
        %v1409 = vld [vmem:[#allocation2 + $0x7c] sm:$0xf]
        %v1410 = vld [vmem:[%s3] sm:$0x1]
        %v1412 = vlaneseq
        %v1413 = vshrl.u32 %v1412, 7
        %v1414 = vsub.s32 0, %v1413
        %v1415 = vrot.slane %v1410, %v1414
        %v1449 = vunpack.c.l.b16 %v1378
        %v1450 = vunpack.c.l.b16 %v1379
        %v1451 = vunpack.c.l.b16 %v1380
        %v1452 = vunpack.c.l.b16 %v1381
        %v1453 = vunpack.c.l.b16 %v1382
        %v1454 = vunpack.c.l.b16 %v1383
        %v1455 = vunpack.c.l.b16 %v1384
        %v1456 = vunpack.c.l.b16 %v1385
        %v1457 = vunpack.c.l.b16 %v1386
        %v1458 = vunpack.c.l.b16 %v1387
        %v1459 = vunpack.c.l.b16 %v1388
        %v1460 = vunpack.c.l.b16 %v1389
        %v1461 = vunpack.c.l.b16 %v1390
        %v1462 = vunpack.c.l.b16 %v1391
        %v1463 = vunpack.c.l.b16 %v1392
        %v1464 = vunpack.c.l.b16 %v1393
        %v1465 = vunpack.c.l.b16 %v1394
        %v1466 = vunpack.c.l.b16 %v1395
        %v1467 = vunpack.c.l.b16 %v1396
        %v1468 = vunpack.c.l.b16 %v1397
        %v1469 = vunpack.c.l.b16 %v1398
        %v1470 = vunpack.c.l.b16 %v1399
        %v1471 = vunpack.c.l.b16 %v1400
        %v1472 = vunpack.c.l.b16 %v1401
        %v1473 = vunpack.c.l.b16 %v1402
        %v1474 = vunpack.c.l.b16 %v1403
        %v1475 = vunpack.c.l.b16 %v1404
        %v1476 = vunpack.c.l.b16 %v1405
        %v1477 = vunpack.c.l.b16 %v1406
        %v1478 = vunpack.c.l.b16 %v1407
        %v1479 = vunpack.c.l.b16 %v1408
        %v1480 = vunpack.c.l.b16 %v1409
        %v1481 = vpack.c.b16 %v1450, %v1449
        %v1482 = vpack.c.b16 %v1452, %v1451
        %v1483 = vpack.c.b16 %v1454, %v1453
        %v1484 = vpack.c.b16 %v1456, %v1455
        %v1485 = vpack.c.b16 %v1458, %v1457
        %v1486 = vpack.c.b16 %v1460, %v1459
        %v1487 = vpack.c.b16 %v1462, %v1461
        %v1488 = vpack.c.b16 %v1464, %v1463
        %v1489 = vpack.c.b16 %v1466, %v1465
        %v1490 = vpack.c.b16 %v1468, %v1467
        %v1491 = vpack.c.b16 %v1470, %v1469
        %v1492 = vpack.c.b16 %v1472, %v1471
        %v1493 = vpack.c.b16 %v1474, %v1473
        %v1494 = vpack.c.b16 %v1476, %v1475
        %v1495 = vpack.c.b16 %v1478, %v1477
        %v1496 = vpack.c.b16 %v1480, %v1479
        %1513 = vmatprep.subr.bf16.mxu0 0
        %1514 = vmatpush1.bf16.msra.mxu0 %v1488
        %1515 = vmatprep.subr.bf16.mxu0 0
        %1516 = vmatpush1.bf16.msra.mxu0 %v1487
        %1517 = vmatprep.subr.bf16.mxu0 0
        %1518 = vmatpush1.bf16.msra.mxu0 %v1486
        %1519 = vmatprep.subr.bf16.mxu0 0
        %1520 = vmatpush1.bf16.msra.mxu0 %v1485
        %1521 = vmatprep.subr.bf16.mxu0 0
        %1522 = vmatpush1.bf16.msra.mxu0 %v1484
        %1523 = vmatprep.subr.bf16.mxu0 0
        %1524 = vmatpush1.bf16.msra.mxu0 %v1483
        %1525 = vmatprep.subr.bf16.mxu0 0
        %1526 = vmatpush1.bf16.msra.mxu0 %v1482
        %1527 = vmatprep.subr.bf16.mxu0 0
        %1528 = vmatpush1.bf16.msra.mxu0 %v1481
        %1529 = vmatprep.subr.bf16.mxu0 0
        %1530 = vmatpush2.bf16.msra.mxu0 %v1496
        %1531 = vmatprep.subr.bf16.mxu0 0
        %1532 = vmatpush2.bf16.msra.mxu0 %v1495
        %1533 = vmatprep.subr.bf16.mxu0 0
        %1534 = vmatpush2.bf16.msra.mxu0 %v1494
        %1535 = vmatprep.subr.bf16.mxu0 0
        %1536 = vmatpush2.bf16.msra.mxu0 %v1493
        %1537 = vmatprep.subr.bf16.mxu0 0
        %1538 = vmatpush2.bf16.msra.mxu0 %v1492
        %1539 = vmatprep.subr.bf16.mxu0 0
        %1540 = vmatpush2.bf16.msra.mxu0 %v1491
        %1541 = vmatprep.subr.bf16.mxu0 0
        %1542 = vmatpush2.bf16.msra.mxu0 %v1490
        %1543 = vmatprep.subr.bf16.mxu0 0
        %1544 = vmatpush2.bf16.msra.mxu0 %v1489
        %1545 = vmatprep.mubr.bf16.mxu0 %v1266
        %1546 = vmatmul.mubr.bf16.gmra.mxu0 %v1346
        %v1547 = vpop.f32.mrf.mxu0
        %v1548 = vadd.f32 %v1415, %v1547
        %v1549 = vpop.f32.mrf.mxu0
        %v1550 = vpop.f32.mrf.mxu0
        %v1551 = vadd.f32 %v1415, %v1550
        %v1552 = vpop.f32.mrf.mxu0
        %1553 = vmatprep.mubr.bf16.mxu0 %v1267
        %1554 = vmatmul.mubr.bf16.gmra.mxu0 %v1347
        %v1555 = vpop.f32.mrf.mxu0
        %v1556 = vadd.f32 %v1415, %v1555
        %v1557 = vpop.f32.mrf.mxu0
        %v1558 = vpop.f32.mrf.mxu0
        %v1559 = vadd.f32 %v1415, %v1558
        %v1560 = vpop.f32.mrf.mxu0
        %1561 = vmatprep.mubr.bf16.mxu0 %v1268
        %1562 = vmatmul.mubr.bf16.gmra.mxu0 %v1348
        %v1563 = vpop.f32.mrf.mxu0
        %v1564 = vadd.f32 %v1415, %v1563
        %v1565 = vpop.f32.mrf.mxu0
        %v1566 = vpop.f32.mrf.mxu0
        %v1567 = vadd.f32 %v1415, %v1566
        %v1568 = vpop.f32.mrf.mxu0
        %1569 = vmatprep.mubr.bf16.mxu0 %v1269
        %1570 = vmatmul.mubr.bf16.gmra.mxu0 %v1349
        %v1571 = vpop.f32.mrf.mxu0
        %v1572 = vadd.f32 %v1415, %v1571
        %v1573 = vpop.f32.mrf.mxu0
        %v1574 = vpop.f32.mrf.mxu0
        %v1575 = vadd.f32 %v1415, %v1574
        %v1576 = vpop.f32.mrf.mxu0
        %1577 = vmatprep.mubr.bf16.mxu0 %v1270
        %1578 = vmatmul.mubr.bf16.gmra.mxu0 %v1350
        %v1579 = vpop.f32.mrf.mxu0
        %v1580 = vadd.f32 %v1415, %v1579
        %v1581 = vpop.f32.mrf.mxu0
        %v1582 = vpop.f32.mrf.mxu0
        %v1583 = vadd.f32 %v1415, %v1582
        %v1584 = vpop.f32.mrf.mxu0
        %1585 = vmatprep.mubr.bf16.mxu0 %v1271
        %1586 = vmatmul.mubr.bf16.gmra.mxu0 %v1351
        %v1587 = vpop.f32.mrf.mxu0
        %v1588 = vadd.f32 %v1415, %v1587
        %v1589 = vpop.f32.mrf.mxu0
        %v1590 = vpop.f32.mrf.mxu0
        %v1591 = vadd.f32 %v1415, %v1590
        %v1592 = vpop.f32.mrf.mxu0
        %1593 = vmatprep.mubr.bf16.mxu0 %v1272
        %1594 = vmatmul.mubr.bf16.gmra.mxu0 %v1352
        %v1595 = vpop.f32.mrf.mxu0
        %v1596 = vadd.f32 %v1415, %v1595
        %v1597 = vpop.f32.mrf.mxu0
        %v1598 = vpop.f32.mrf.mxu0
        %v1599 = vadd.f32 %v1415, %v1598
        %v1600 = vpop.f32.mrf.mxu0
        %1601 = vmatprep.mubr.bf16.mxu0 %v1273
        %1602 = vmatmul.mubr.bf16.gmra.mxu0 %v1353
        %v1603 = vpop.f32.mrf.mxu0
        %v1604 = vadd.f32 %v1415, %v1603
        %v1605 = vpop.f32.mrf.mxu0
        %v1606 = vpop.f32.mrf.mxu0
        %v1607 = vadd.f32 %v1415, %v1606
        %v1608 = vpop.f32.mrf.mxu0
        %1609 = vmatprep.mubr.bf16.mxu0 %v1274
        %1610 = vmatmul.mubr.bf16.gmra.mxu0 %v1354
        %v1611 = vpop.f32.mrf.mxu0
        %v1612 = vadd.f32 %v1415, %v1611
        %v1613 = vpop.f32.mrf.mxu0
        %v1614 = vpop.f32.mrf.mxu0
        %v1615 = vadd.f32 %v1415, %v1614
        %v1616 = vpop.f32.mrf.mxu0
        %1617 = vmatprep.mubr.bf16.mxu0 %v1275
        %1618 = vmatmul.mubr.bf16.gmra.mxu0 %v1355
        %v1619 = vpop.f32.mrf.mxu0
        %v1620 = vadd.f32 %v1415, %v1619
        %v1621 = vpop.f32.mrf.mxu0
        %v1622 = vpop.f32.mrf.mxu0
        %v1623 = vadd.f32 %v1415, %v1622
        %v1624 = vpop.f32.mrf.mxu0
        %1625 = vmatprep.mubr.bf16.mxu0 %v1276
        %1626 = vmatmul.mubr.bf16.gmra.mxu0 %v1356
        %v1627 = vpop.f32.mrf.mxu0
        %v1628 = vadd.f32 %v1415, %v1627
        %v1629 = vpop.f32.mrf.mxu0
        %v1630 = vpop.f32.mrf.mxu0
        %v1631 = vadd.f32 %v1415, %v1630
        %v1632 = vpop.f32.mrf.mxu0
        %1633 = vmatprep.mubr.bf16.mxu0 %v1277
        %1634 = vmatmul.mubr.bf16.gmra.mxu0 %v1357
        %v1635 = vpop.f32.mrf.mxu0
        %v1636 = vadd.f32 %v1415, %v1635
        %v1637 = vpop.f32.mrf.mxu0
        %v1638 = vpop.f32.mrf.mxu0
        %v1639 = vadd.f32 %v1415, %v1638
        %v1640 = vpop.f32.mrf.mxu0
        %1641 = vmatprep.mubr.bf16.mxu0 %v1278
        %1642 = vmatmul.mubr.bf16.gmra.mxu0 %v1358
        %v1643 = vpop.f32.mrf.mxu0
        %v1644 = vadd.f32 %v1415, %v1643
        %v1645 = vpop.f32.mrf.mxu0
        %v1646 = vpop.f32.mrf.mxu0
        %v1647 = vadd.f32 %v1415, %v1646
        %v1648 = vpop.f32.mrf.mxu0
        %1649 = vmatprep.mubr.bf16.mxu0 %v1279
        %1650 = vmatmul.mubr.bf16.gmra.mxu0 %v1359
        %v1651 = vpop.f32.mrf.mxu0
        %v1652 = vadd.f32 %v1415, %v1651
        %v1653 = vpop.f32.mrf.mxu0
        %v1654 = vpop.f32.mrf.mxu0
        %v1655 = vadd.f32 %v1415, %v1654
        %v1656 = vpop.f32.mrf.mxu0
        %1657 = vmatprep.mubr.bf16.mxu0 %v1280
        %1658 = vmatmul.mubr.bf16.gmra.mxu0 %v1360
        %v1659 = vpop.f32.mrf.mxu0
        %v1660 = vadd.f32 %v1415, %v1659
        %v1661 = vpop.f32.mrf.mxu0
        %v1662 = vpop.f32.mrf.mxu0
        %v1663 = vadd.f32 %v1415, %v1662
        %v1664 = vpop.f32.mrf.mxu0
        %1665 = vmatprep.mubr.bf16.mxu0 %v1281
        %1666 = vmatmul.mubr.bf16.gmra.mxu0 %v1361
        %v1667 = vpop.f32.mrf.mxu0
        %v1668 = vadd.f32 %v1415, %v1667
        %v1669 = vpop.f32.mrf.mxu0
        %v1670 = vpop.f32.mrf.mxu0
        %v1671 = vadd.f32 %v1415, %v1670
        %v1672 = vpop.f32.mrf.mxu0
        %1673 = vdwg.mxu0
        %v1674 = vpack.c.bf16 %v1551, %v1548
        %v1675 = vpack.c.bf16 %v1559, %v1556
        %v1676 = vpack.c.bf16 %v1567, %v1564
        %v1677 = vpack.c.bf16 %v1575, %v1572
        %v1678 = vpack.c.bf16 %v1583, %v1580
        %v1679 = vpack.c.bf16 %v1591, %v1588
        %v1680 = vpack.c.bf16 %v1599, %v1596
        %v1681 = vpack.c.bf16 %v1607, %v1604
        %v1682 = vpack.c.bf16 %v1615, %v1612
        %v1683 = vpack.c.bf16 %v1623, %v1620
        %v1684 = vpack.c.bf16 %v1631, %v1628
        %v1685 = vpack.c.bf16 %v1639, %v1636
        %v1686 = vpack.c.bf16 %v1647, %v1644
        %v1687 = vpack.c.bf16 %v1655, %v1652
        %v1688 = vpack.c.bf16 %v1663, %v1660
        %v1689 = vpack.c.bf16 %v1671, %v1668
        %v1690 = vld [vmem:[%s6] sm:$0xff]
        %v1691 = vld [vmem:[%s6 + $0x8] sm:$0xff]
        %v1692 = vld [vmem:[%s6 + $0x10] sm:$0xff]
        %v1693 = vld [vmem:[%s6 + $0x18] sm:$0xff]
        %v1694 = vld [vmem:[%s6 + $0x20] sm:$0xff]
        %v1695 = vld [vmem:[%s6 + $0x28] sm:$0xff]
        %v1696 = vld [vmem:[%s6 + $0x30] sm:$0xff]
        %v1697 = vld [vmem:[%s6 + $0x38] sm:$0xff]
        %v1698 = vld [vmem:[%s6 + $0x40] sm:$0xff]
        %v1699 = vld [vmem:[%s6 + $0x48] sm:$0xff]
        %v1700 = vld [vmem:[%s6 + $0x50] sm:$0xff]
        %v1701 = vld [vmem:[%s6 + $0x58] sm:$0xff]
        %v1702 = vld [vmem:[%s6 + $0x60] sm:$0xff]
        %v1703 = vld [vmem:[%s6 + $0x68] sm:$0xff]
        %v1704 = vld [vmem:[%s6 + $0x70] sm:$0xff]
        %v1705 = vld [vmem:[%s6 + $0x78] sm:$0xff]
        %v1706 = vld [vmem:[%s6 + $0x80] sm:$0xff]
        %v1707 = vld [vmem:[%s6 + $0x88] sm:$0xff]
        %v1708 = vld [vmem:[%s6 + $0x90] sm:$0xff]
        %v1709 = vld [vmem:[%s6 + $0x98] sm:$0xff]
        %v1710 = vld [vmem:[%s6 + $0xa0] sm:$0xff]
        %v1711 = vld [vmem:[%s6 + $0xa8] sm:$0xff]
        %v1712 = vld [vmem:[%s6 + $0xb0] sm:$0xff]
        %v1713 = vld [vmem:[%s6 + $0xb8] sm:$0xff]
        %v1714 = vld [vmem:[%s6 + $0xc0] sm:$0xff]
        %v1715 = vld [vmem:[%s6 + $0xc8] sm:$0xff]
        %v1716 = vld [vmem:[%s6 + $0xd0] sm:$0xff]
        %v1717 = vld [vmem:[%s6 + $0xd8] sm:$0xff]
        %v1718 = vld [vmem:[%s6 + $0xe0] sm:$0xff]
        %v1719 = vld [vmem:[%s6 + $0xe8] sm:$0xff]
        %v1720 = vld [vmem:[%s6 + $0xf0] sm:$0xff]
        %v1721 = vld [vmem:[%s6 + $0xf8] sm:$0xff]
        %v1722 = vld [vmem:[%s7] sm:$0xf]
        %v1724 = vlaneseq
        %v1725 = vshrl.u32 %v1724, 7
        %v1726 = vsub.s32 0, %v1725
        %v1727 = vrot.slane %v1722, %v1726
        %v1728 = vlaneseq
        %v1729 = vshrl.u32 %v1728, 7
        %v1730 = vsub.s32 1, %v1729
        %v1731 = vrot.slane %v1722, %v1730
        %v1732 = vlaneseq
        %v1733 = vshrl.u32 %v1732, 7
        %v1734 = vsub.s32 2, %v1733
        %v1735 = vrot.slane %v1722, %v1734
        %v1736 = vlaneseq
        %v1737 = vshrl.u32 %v1736, 7
        %v1738 = vsub.s32 3, %v1737
        %v1739 = vrot.slane %v1722, %v1738
        %v1776 = vunpack.c.l.b16 %v1690
        %v1777 = vunpack.c.h.b16 %v1690
        %v1778 = vunpack.c.l.b16 %v1691
        %v1779 = vunpack.c.h.b16 %v1691
        %v1780 = vunpack.c.l.b16 %v1692
        %v1781 = vunpack.c.h.b16 %v1692
        %v1782 = vunpack.c.l.b16 %v1693
        %v1783 = vunpack.c.h.b16 %v1693
        %v1784 = vunpack.c.l.b16 %v1694
        %v1785 = vunpack.c.h.b16 %v1694
        %v1786 = vunpack.c.l.b16 %v1695
        %v1787 = vunpack.c.h.b16 %v1695
        %v1788 = vunpack.c.l.b16 %v1696
        %v1789 = vunpack.c.h.b16 %v1696
        %v1790 = vunpack.c.l.b16 %v1697
        %v1791 = vunpack.c.h.b16 %v1697
        %v1792 = vunpack.c.l.b16 %v1698
        %v1793 = vunpack.c.h.b16 %v1698
        %v1794 = vunpack.c.l.b16 %v1699
        %v1795 = vunpack.c.h.b16 %v1699
        %v1796 = vunpack.c.l.b16 %v1700
        %v1797 = vunpack.c.h.b16 %v1700
        %v1798 = vunpack.c.l.b16 %v1701
        %v1799 = vunpack.c.h.b16 %v1701
        %v1800 = vunpack.c.l.b16 %v1702
        %v1801 = vunpack.c.h.b16 %v1702
        %v1802 = vunpack.c.l.b16 %v1703
        %v1803 = vunpack.c.h.b16 %v1703
        %v1804 = vunpack.c.l.b16 %v1704
        %v1805 = vunpack.c.h.b16 %v1704
        %v1806 = vunpack.c.l.b16 %v1705
        %v1807 = vunpack.c.h.b16 %v1705
        %v1808 = vunpack.c.l.b16 %v1706
        %v1809 = vunpack.c.h.b16 %v1706
        %v1810 = vunpack.c.l.b16 %v1707
        %v1811 = vunpack.c.h.b16 %v1707
        %v1812 = vunpack.c.l.b16 %v1708
        %v1813 = vunpack.c.h.b16 %v1708
        %v1814 = vunpack.c.l.b16 %v1709
        %v1815 = vunpack.c.h.b16 %v1709
        %v1816 = vunpack.c.l.b16 %v1710
        %v1817 = vunpack.c.h.b16 %v1710
        %v1818 = vunpack.c.l.b16 %v1711
        %v1819 = vunpack.c.h.b16 %v1711
        %v1820 = vunpack.c.l.b16 %v1712
        %v1821 = vunpack.c.h.b16 %v1712
        %v1822 = vunpack.c.l.b16 %v1713
        %v1823 = vunpack.c.h.b16 %v1713
        %v1824 = vunpack.c.l.b16 %v1714
        %v1825 = vunpack.c.h.b16 %v1714
        %v1826 = vunpack.c.l.b16 %v1715
        %v1827 = vunpack.c.h.b16 %v1715
        %v1828 = vunpack.c.l.b16 %v1716
        %v1829 = vunpack.c.h.b16 %v1716
        %v1830 = vunpack.c.l.b16 %v1717
        %v1831 = vunpack.c.h.b16 %v1717
        %v1832 = vunpack.c.l.b16 %v1718
        %v1833 = vunpack.c.h.b16 %v1718
        %v1834 = vunpack.c.l.b16 %v1719
        %v1835 = vunpack.c.h.b16 %v1719
        %v1836 = vunpack.c.l.b16 %v1720
        %v1837 = vunpack.c.h.b16 %v1720
        %v1838 = vunpack.c.l.b16 %v1721
        %v1839 = vunpack.c.h.b16 %v1721
        %v1840 = vpack.c.b16 %v1780, %v1776
        %v1841 = vpack.c.b16 %v1781, %v1777
        %v1842 = vpack.c.b16 %v1782, %v1778
        %v1843 = vpack.c.b16 %v1783, %v1779
        %v1844 = vpack.c.b16 %v1788, %v1784
        %v1845 = vpack.c.b16 %v1789, %v1785
        %v1846 = vpack.c.b16 %v1790, %v1786
        %v1847 = vpack.c.b16 %v1791, %v1787
        %v1848 = vpack.c.b16 %v1796, %v1792
        %v1849 = vpack.c.b16 %v1797, %v1793
        %v1850 = vpack.c.b16 %v1798, %v1794
        %v1851 = vpack.c.b16 %v1799, %v1795
        %v1852 = vpack.c.b16 %v1804, %v1800
        %v1853 = vpack.c.b16 %v1805, %v1801
        %v1854 = vpack.c.b16 %v1806, %v1802
        %v1855 = vpack.c.b16 %v1807, %v1803
        %v1856 = vpack.c.b16 %v1812, %v1808
        %v1857 = vpack.c.b16 %v1813, %v1809
        %v1858 = vpack.c.b16 %v1814, %v1810
        %v1859 = vpack.c.b16 %v1815, %v1811
        %v1860 = vpack.c.b16 %v1820, %v1816
        %v1861 = vpack.c.b16 %v1821, %v1817
        %v1862 = vpack.c.b16 %v1822, %v1818
        %v1863 = vpack.c.b16 %v1823, %v1819
        %v1864 = vpack.c.b16 %v1828, %v1824
        %v1865 = vpack.c.b16 %v1829, %v1825
        %v1866 = vpack.c.b16 %v1830, %v1826
        %v1867 = vpack.c.b16 %v1831, %v1827
        %v1868 = vpack.c.b16 %v1836, %v1832
        %v1869 = vpack.c.b16 %v1837, %v1833
        %v1870 = vpack.c.b16 %v1838, %v1834
        %v1871 = vpack.c.b16 %v1839, %v1835
        %1904 = vmatprep.subr.bf16.mxu0 %v1869
        %1905 = vmatpush1.bf16.msra.mxu0 %v1868
        %1906 = vmatprep.subr.bf16.mxu0 %v1865
        %1907 = vmatpush1.bf16.msra.mxu0 %v1864
        %1908 = vmatprep.subr.bf16.mxu0 %v1861
        %1909 = vmatpush1.bf16.msra.mxu0 %v1860
        %1910 = vmatprep.subr.bf16.mxu0 %v1857
        %1911 = vmatpush1.bf16.msra.mxu0 %v1856
        %1912 = vmatprep.subr.bf16.mxu0 %v1853
        %1913 = vmatpush1.bf16.msra.mxu0 %v1852
        %1914 = vmatprep.subr.bf16.mxu0 %v1849
        %1915 = vmatpush1.bf16.msra.mxu0 %v1848
        %1916 = vmatprep.subr.bf16.mxu0 %v1845
        %1917 = vmatpush1.bf16.msra.mxu0 %v1844
        %1918 = vmatprep.subr.bf16.mxu0 %v1841
        %1919 = vmatpush1.bf16.msra.mxu0 %v1840
        %1920 = vmatprep.subr.bf16.mxu0 0
        %1921 = vmatpush2.bf16.msra.mxu0 0
        %1922 = vmatprep.subr.bf16.mxu0 0
        %1923 = vmatpush2.bf16.msra.mxu0 0
        %1924 = vmatprep.subr.bf16.mxu0 0
        %1925 = vmatpush2.bf16.msra.mxu0 0
        %1926 = vmatprep.subr.bf16.mxu0 0
        %1927 = vmatpush2.bf16.msra.mxu0 0
        %1928 = vmatprep.subr.bf16.mxu0 0
        %1929 = vmatpush2.bf16.msra.mxu0 0
        %1930 = vmatprep.subr.bf16.mxu0 0
        %1931 = vmatpush2.bf16.msra.mxu0 0
        %1932 = vmatprep.subr.bf16.mxu0 0
        %1933 = vmatpush2.bf16.msra.mxu0 0
        %1934 = vmatprep.subr.bf16.mxu0 0
        %1935 = vmatpush2.bf16.msra.mxu0 0
        %1936 = vmatprep.mubr.bf16.mxu0 0
        %1937 = vmatmul.mubr.bf16.gmra.mxu0 %v1674
        %v1938 = vpop.f32.mrf.mxu0
        %v1939 = vadd.f32 %v1727, %v1938
        %v1940 = vpop.f32.mrf.mxu0
        %v1941 = vadd.f32 %v1731, %v1940
        %v1942 = vpop.f32.mrf.mxu0
        %v1943 = vadd.f32 %v1727, %v1942
        %v1944 = vpop.f32.mrf.mxu0
        %v1945 = vadd.f32 %v1731, %v1944
        %1946 = vmatprep.mubr.bf16.mxu0 0
        %1947 = vmatmul.mubr.bf16.gmra.mxu0 %v1675
        %v1948 = vpop.f32.mrf.mxu0
        %v1949 = vadd.f32 %v1727, %v1948
        %v1950 = vpop.f32.mrf.mxu0
        %v1951 = vadd.f32 %v1731, %v1950
        %v1952 = vpop.f32.mrf.mxu0
        %v1953 = vadd.f32 %v1727, %v1952
        %v1954 = vpop.f32.mrf.mxu0
        %v1955 = vadd.f32 %v1731, %v1954
        %1956 = vmatprep.mubr.bf16.mxu0 0
        %1957 = vmatmul.mubr.bf16.gmra.mxu0 %v1676
        %v1958 = vpop.f32.mrf.mxu0
        %v1959 = vadd.f32 %v1727, %v1958
        %v1960 = vpop.f32.mrf.mxu0
        %v1961 = vadd.f32 %v1731, %v1960
        %v1962 = vpop.f32.mrf.mxu0
        %v1963 = vadd.f32 %v1727, %v1962
        %v1964 = vpop.f32.mrf.mxu0
        %v1965 = vadd.f32 %v1731, %v1964
        %1966 = vmatprep.mubr.bf16.mxu0 0
        %1967 = vmatmul.mubr.bf16.gmra.mxu0 %v1677
        %v1968 = vpop.f32.mrf.mxu0
        %v1969 = vadd.f32 %v1727, %v1968
        %v1970 = vpop.f32.mrf.mxu0
        %v1971 = vadd.f32 %v1731, %v1970
        %v1972 = vpop.f32.mrf.mxu0
        %v1973 = vadd.f32 %v1727, %v1972
        %v1974 = vpop.f32.mrf.mxu0
        %v1975 = vadd.f32 %v1731, %v1974
        %1976 = vmatprep.mubr.bf16.mxu0 0
        %1977 = vmatmul.mubr.bf16.gmra.mxu0 %v1678
        %v1978 = vpop.f32.mrf.mxu0
        %v1979 = vadd.f32 %v1727, %v1978
        %v1980 = vpop.f32.mrf.mxu0
        %v1981 = vadd.f32 %v1731, %v1980
        %v1982 = vpop.f32.mrf.mxu0
        %v1983 = vadd.f32 %v1727, %v1982
        %v1984 = vpop.f32.mrf.mxu0
        %v1985 = vadd.f32 %v1731, %v1984
        %1986 = vmatprep.mubr.bf16.mxu0 0
        %1987 = vmatmul.mubr.bf16.gmra.mxu0 %v1679
        %v1988 = vpop.f32.mrf.mxu0
        %v1989 = vadd.f32 %v1727, %v1988
        %v1990 = vpop.f32.mrf.mxu0
        %v1991 = vadd.f32 %v1731, %v1990
        %v1992 = vpop.f32.mrf.mxu0
        %v1993 = vadd.f32 %v1727, %v1992
        %v1994 = vpop.f32.mrf.mxu0
        %v1995 = vadd.f32 %v1731, %v1994
        %1996 = vmatprep.mubr.bf16.mxu0 0
        %1997 = vmatmul.mubr.bf16.gmra.mxu0 %v1680
        %v1998 = vpop.f32.mrf.mxu0
        %v1999 = vadd.f32 %v1727, %v1998
        %v2000 = vpop.f32.mrf.mxu0
        %v2001 = vadd.f32 %v1731, %v2000
        %v2002 = vpop.f32.mrf.mxu0
        %v2003 = vadd.f32 %v1727, %v2002
        %v2004 = vpop.f32.mrf.mxu0
        %v2005 = vadd.f32 %v1731, %v2004
        %2006 = vmatprep.mubr.bf16.mxu0 0
        %2007 = vmatmul.mubr.bf16.gmra.mxu0 %v1681
        %v2008 = vpop.f32.mrf.mxu0
        %v2009 = vadd.f32 %v1727, %v2008
        %v2010 = vpop.f32.mrf.mxu0
        %v2011 = vadd.f32 %v1731, %v2010
        %v2012 = vpop.f32.mrf.mxu0
        %v2013 = vadd.f32 %v1727, %v2012
        %v2014 = vpop.f32.mrf.mxu0
        %v2015 = vadd.f32 %v1731, %v2014
        %2016 = vmatprep.mubr.bf16.mxu0 0
        %2017 = vmatmul.mubr.bf16.gmra.mxu0 %v1682
        %v2018 = vpop.f32.mrf.mxu0
        %v2019 = vadd.f32 %v1727, %v2018
        %v2020 = vpop.f32.mrf.mxu0
        %v2021 = vadd.f32 %v1731, %v2020
        %v2022 = vpop.f32.mrf.mxu0
        %v2023 = vadd.f32 %v1727, %v2022
        %v2024 = vpop.f32.mrf.mxu0
        %v2025 = vadd.f32 %v1731, %v2024
        %2026 = vmatprep.mubr.bf16.mxu0 0
        %2027 = vmatmul.mubr.bf16.gmra.mxu0 %v1683
        %v2028 = vpop.f32.mrf.mxu0
        %v2029 = vadd.f32 %v1727, %v2028
        %v2030 = vpop.f32.mrf.mxu0
        %v2031 = vadd.f32 %v1731, %v2030
        %v2032 = vpop.f32.mrf.mxu0
        %v2033 = vadd.f32 %v1727, %v2032
        %v2034 = vpop.f32.mrf.mxu0
        %v2035 = vadd.f32 %v1731, %v2034
        %2036 = vmatprep.mubr.bf16.mxu0 0
        %2037 = vmatmul.mubr.bf16.gmra.mxu0 %v1684
        %v2038 = vpop.f32.mrf.mxu0
        %v2039 = vadd.f32 %v1727, %v2038
        %v2040 = vpop.f32.mrf.mxu0
        %v2041 = vadd.f32 %v1731, %v2040
        %v2042 = vpop.f32.mrf.mxu0
        %v2043 = vadd.f32 %v1727, %v2042
        %v2044 = vpop.f32.mrf.mxu0
        %v2045 = vadd.f32 %v1731, %v2044
        %2046 = vmatprep.mubr.bf16.mxu0 0
        %2047 = vmatmul.mubr.bf16.gmra.mxu0 %v1685
        %v2048 = vpop.f32.mrf.mxu0
        %v2049 = vadd.f32 %v1727, %v2048
        %v2050 = vpop.f32.mrf.mxu0
        %v2051 = vadd.f32 %v1731, %v2050
        %v2052 = vpop.f32.mrf.mxu0
        %v2053 = vadd.f32 %v1727, %v2052
        %v2054 = vpop.f32.mrf.mxu0
        %v2055 = vadd.f32 %v1731, %v2054
        %2056 = vmatprep.mubr.bf16.mxu0 0
        %2057 = vmatmul.mubr.bf16.gmra.mxu0 %v1686
        %v2058 = vpop.f32.mrf.mxu0
        %v2059 = vadd.f32 %v1727, %v2058
        %v2060 = vpop.f32.mrf.mxu0
        %v2061 = vadd.f32 %v1731, %v2060
        %v2062 = vpop.f32.mrf.mxu0
        %v2063 = vadd.f32 %v1727, %v2062
        %v2064 = vpop.f32.mrf.mxu0
        %v2065 = vadd.f32 %v1731, %v2064
        %2066 = vmatprep.mubr.bf16.mxu0 0
        %2067 = vmatmul.mubr.bf16.gmra.mxu0 %v1687
        %v2068 = vpop.f32.mrf.mxu0
        %v2069 = vadd.f32 %v1727, %v2068
        %v2070 = vpop.f32.mrf.mxu0
        %v2071 = vadd.f32 %v1731, %v2070
        %v2072 = vpop.f32.mrf.mxu0
        %v2073 = vadd.f32 %v1727, %v2072
        %v2074 = vpop.f32.mrf.mxu0
        %v2075 = vadd.f32 %v1731, %v2074
        %2076 = vmatprep.mubr.bf16.mxu0 0
        %2077 = vmatmul.mubr.bf16.gmra.mxu0 %v1688
        %v2078 = vpop.f32.mrf.mxu0
        %v2079 = vadd.f32 %v1727, %v2078
        %v2080 = vpop.f32.mrf.mxu0
        %v2081 = vadd.f32 %v1731, %v2080
        %v2082 = vpop.f32.mrf.mxu0
        %v2083 = vadd.f32 %v1727, %v2082
        %v2084 = vpop.f32.mrf.mxu0
        %v2085 = vadd.f32 %v1731, %v2084
        %2086 = vmatprep.mubr.bf16.mxu0 0
        %2087 = vmatmul.mubr.bf16.gmra.mxu0 %v1689
        %v2088 = vpop.f32.mrf.mxu0
        %v2089 = vadd.f32 %v1727, %v2088
        %v2090 = vpop.f32.mrf.mxu0
        %v2091 = vadd.f32 %v1731, %v2090
        %v2092 = vpop.f32.mrf.mxu0
        %v2093 = vadd.f32 %v1727, %v2092
        %v2094 = vpop.f32.mrf.mxu0
        %v2095 = vadd.f32 %v1731, %v2094
        %2096 = vdwg.mxu0
        %2097 = vmatprep.subr.bf16.mxu0 %v1871
        %2098 = vmatpush1.bf16.msra.mxu0 %v1870
        %2099 = vmatprep.subr.bf16.mxu0 %v1867
        %2100 = vmatpush1.bf16.msra.mxu0 %v1866
        %2101 = vmatprep.subr.bf16.mxu0 %v1863
        %2102 = vmatpush1.bf16.msra.mxu0 %v1862
        %2103 = vmatprep.subr.bf16.mxu0 %v1859
        %2104 = vmatpush1.bf16.msra.mxu0 %v1858
        %2105 = vmatprep.subr.bf16.mxu0 %v1855
        %2106 = vmatpush1.bf16.msra.mxu0 %v1854
        %2107 = vmatprep.subr.bf16.mxu0 %v1851
        %2108 = vmatpush1.bf16.msra.mxu0 %v1850
        %2109 = vmatprep.subr.bf16.mxu0 %v1847
        %2110 = vmatpush1.bf16.msra.mxu0 %v1846
        %2111 = vmatprep.subr.bf16.mxu0 %v1843
        %2112 = vmatpush1.bf16.msra.mxu0 %v1842
        %2113 = vmatprep.subr.bf16.mxu0 0
        %2114 = vmatpush2.bf16.msra.mxu0 0
        %2115 = vmatprep.subr.bf16.mxu0 0
        %2116 = vmatpush2.bf16.msra.mxu0 0
        %2117 = vmatprep.subr.bf16.mxu0 0
        %2118 = vmatpush2.bf16.msra.mxu0 0
        %2119 = vmatprep.subr.bf16.mxu0 0
        %2120 = vmatpush2.bf16.msra.mxu0 0
        %2121 = vmatprep.subr.bf16.mxu0 0
        %2122 = vmatpush2.bf16.msra.mxu0 0
        %2123 = vmatprep.subr.bf16.mxu0 0
        %2124 = vmatpush2.bf16.msra.mxu0 0
        %2125 = vmatprep.subr.bf16.mxu0 0
        %2126 = vmatpush2.bf16.msra.mxu0 0
        %2127 = vmatprep.subr.bf16.mxu0 0
        %2128 = vmatpush2.bf16.msra.mxu0 0
        %2129 = vmatprep.mubr.bf16.mxu0 0
        %2130 = vmatmul.mubr.bf16.gmra.mxu0 %v1674
        %v2131 = vpop.f32.mrf.mxu0
        %v2132 = vadd.f32 %v1735, %v2131
        %v2133 = vpop.f32.mrf.mxu0
        %v2134 = vadd.f32 %v1739, %v2133
        %v2135 = vpop.f32.mrf.mxu0
        %v2136 = vadd.f32 %v1735, %v2135
        %v2137 = vpop.f32.mrf.mxu0
        %v2138 = vadd.f32 %v1739, %v2137
        %2139 = vmatprep.mubr.bf16.mxu0 0
        %2140 = vmatmul.mubr.bf16.gmra.mxu0 %v1675
        %v2141 = vpop.f32.mrf.mxu0
        %v2142 = vadd.f32 %v1735, %v2141
        %v2143 = vpop.f32.mrf.mxu0
        %v2144 = vadd.f32 %v1739, %v2143
        %v2145 = vpop.f32.mrf.mxu0
        %v2146 = vadd.f32 %v1735, %v2145
        %v2147 = vpop.f32.mrf.mxu0
        %v2148 = vadd.f32 %v1739, %v2147
        %2149 = vmatprep.mubr.bf16.mxu0 0
        %2150 = vmatmul.mubr.bf16.gmra.mxu0 %v1676
        %v2151 = vpop.f32.mrf.mxu0
        %v2152 = vadd.f32 %v1735, %v2151
        %v2153 = vpop.f32.mrf.mxu0
        %v2154 = vadd.f32 %v1739, %v2153
        %v2155 = vpop.f32.mrf.mxu0
        %v2156 = vadd.f32 %v1735, %v2155
        %v2157 = vpop.f32.mrf.mxu0
        %v2158 = vadd.f32 %v1739, %v2157
        %2159 = vmatprep.mubr.bf16.mxu0 0
        %2160 = vmatmul.mubr.bf16.gmra.mxu0 %v1677
        %v2161 = vpop.f32.mrf.mxu0
        %v2162 = vadd.f32 %v1735, %v2161
        %v2163 = vpop.f32.mrf.mxu0
        %v2164 = vadd.f32 %v1739, %v2163
        %v2165 = vpop.f32.mrf.mxu0
        %v2166 = vadd.f32 %v1735, %v2165
        %v2167 = vpop.f32.mrf.mxu0
        %v2168 = vadd.f32 %v1739, %v2167
        %2169 = vmatprep.mubr.bf16.mxu0 0
        %2170 = vmatmul.mubr.bf16.gmra.mxu0 %v1678
        %v2171 = vpop.f32.mrf.mxu0
        %v2172 = vadd.f32 %v1735, %v2171
        %v2173 = vpop.f32.mrf.mxu0
        %v2174 = vadd.f32 %v1739, %v2173
        %v2175 = vpop.f32.mrf.mxu0
        %v2176 = vadd.f32 %v1735, %v2175
        %v2177 = vpop.f32.mrf.mxu0
        %v2178 = vadd.f32 %v1739, %v2177
        %2179 = vmatprep.mubr.bf16.mxu0 0
        %2180 = vmatmul.mubr.bf16.gmra.mxu0 %v1679
        %v2181 = vpop.f32.mrf.mxu0
        %v2182 = vadd.f32 %v1735, %v2181
        %v2183 = vpop.f32.mrf.mxu0
        %v2184 = vadd.f32 %v1739, %v2183
        %v2185 = vpop.f32.mrf.mxu0
        %v2186 = vadd.f32 %v1735, %v2185
        %v2187 = vpop.f32.mrf.mxu0
        %v2188 = vadd.f32 %v1739, %v2187
        %2189 = vmatprep.mubr.bf16.mxu0 0
        %2190 = vmatmul.mubr.bf16.gmra.mxu0 %v1680
        %v2191 = vpop.f32.mrf.mxu0
        %v2192 = vadd.f32 %v1735, %v2191
        %v2193 = vpop.f32.mrf.mxu0
        %v2194 = vadd.f32 %v1739, %v2193
        %v2195 = vpop.f32.mrf.mxu0
        %v2196 = vadd.f32 %v1735, %v2195
        %v2197 = vpop.f32.mrf.mxu0
        %v2198 = vadd.f32 %v1739, %v2197
        %2199 = vmatprep.mubr.bf16.mxu0 0
        %2200 = vmatmul.mubr.bf16.gmra.mxu0 %v1681
        %v2201 = vpop.f32.mrf.mxu0
        %v2202 = vadd.f32 %v1735, %v2201
        %v2203 = vpop.f32.mrf.mxu0
        %v2204 = vadd.f32 %v1739, %v2203
        %v2205 = vpop.f32.mrf.mxu0
        %v2206 = vadd.f32 %v1735, %v2205
        %v2207 = vpop.f32.mrf.mxu0
        %v2208 = vadd.f32 %v1739, %v2207
        %2209 = vmatprep.mubr.bf16.mxu0 0
        %2210 = vmatmul.mubr.bf16.gmra.mxu0 %v1682
        %v2211 = vpop.f32.mrf.mxu0
        %v2212 = vadd.f32 %v1735, %v2211
        %v2213 = vpop.f32.mrf.mxu0
        %v2214 = vadd.f32 %v1739, %v2213
        %v2215 = vpop.f32.mrf.mxu0
        %v2216 = vadd.f32 %v1735, %v2215
        %v2217 = vpop.f32.mrf.mxu0
        %v2218 = vadd.f32 %v1739, %v2217
        %2219 = vmatprep.mubr.bf16.mxu0 0
        %2220 = vmatmul.mubr.bf16.gmra.mxu0 %v1683
        %v2221 = vpop.f32.mrf.mxu0
        %v2222 = vadd.f32 %v1735, %v2221
        %v2223 = vpop.f32.mrf.mxu0
        %v2224 = vadd.f32 %v1739, %v2223
        %v2225 = vpop.f32.mrf.mxu0
        %v2226 = vadd.f32 %v1735, %v2225
        %v2227 = vpop.f32.mrf.mxu0
        %v2228 = vadd.f32 %v1739, %v2227
        %2229 = vmatprep.mubr.bf16.mxu0 0
        %2230 = vmatmul.mubr.bf16.gmra.mxu0 %v1684
        %v2231 = vpop.f32.mrf.mxu0
        %v2232 = vadd.f32 %v1735, %v2231
        %v2233 = vpop.f32.mrf.mxu0
        %v2234 = vadd.f32 %v1739, %v2233
        %v2235 = vpop.f32.mrf.mxu0
        %v2236 = vadd.f32 %v1735, %v2235
        %v2237 = vpop.f32.mrf.mxu0
        %v2238 = vadd.f32 %v1739, %v2237
        %2239 = vmatprep.mubr.bf16.mxu0 0
        %2240 = vmatmul.mubr.bf16.gmra.mxu0 %v1685
        %v2241 = vpop.f32.mrf.mxu0
        %v2242 = vadd.f32 %v1735, %v2241
        %v2243 = vpop.f32.mrf.mxu0
        %v2244 = vadd.f32 %v1739, %v2243
        %v2245 = vpop.f32.mrf.mxu0
        %v2246 = vadd.f32 %v1735, %v2245
        %v2247 = vpop.f32.mrf.mxu0
        %v2248 = vadd.f32 %v1739, %v2247
        %2249 = vmatprep.mubr.bf16.mxu0 0
        %2250 = vmatmul.mubr.bf16.gmra.mxu0 %v1686
        %v2251 = vpop.f32.mrf.mxu0
        %v2252 = vadd.f32 %v1735, %v2251
        %v2253 = vpop.f32.mrf.mxu0
        %v2254 = vadd.f32 %v1739, %v2253
        %v2255 = vpop.f32.mrf.mxu0
        %v2256 = vadd.f32 %v1735, %v2255
        %v2257 = vpop.f32.mrf.mxu0
        %v2258 = vadd.f32 %v1739, %v2257
        %2259 = vmatprep.mubr.bf16.mxu0 0
        %2260 = vmatmul.mubr.bf16.gmra.mxu0 %v1687
        %v2261 = vpop.f32.mrf.mxu0
        %v2262 = vadd.f32 %v1735, %v2261
        %v2263 = vpop.f32.mrf.mxu0
        %v2264 = vadd.f32 %v1739, %v2263
        %v2265 = vpop.f32.mrf.mxu0
        %v2266 = vadd.f32 %v1735, %v2265
        %v2267 = vpop.f32.mrf.mxu0
        %v2268 = vadd.f32 %v1739, %v2267
        %2269 = vmatprep.mubr.bf16.mxu0 0
        %2270 = vmatmul.mubr.bf16.gmra.mxu0 %v1688
        %v2271 = vpop.f32.mrf.mxu0
        %v2272 = vadd.f32 %v1735, %v2271
        %v2273 = vpop.f32.mrf.mxu0
        %v2274 = vadd.f32 %v1739, %v2273
        %v2275 = vpop.f32.mrf.mxu0
        %v2276 = vadd.f32 %v1735, %v2275
        %v2277 = vpop.f32.mrf.mxu0
        %v2278 = vadd.f32 %v1739, %v2277
        %2279 = vmatprep.mubr.bf16.mxu0 0
        %2280 = vmatmul.mubr.bf16.gmra.mxu0 %v1689
        %v2281 = vpop.f32.mrf.mxu0
        %v2282 = vadd.f32 %v1735, %v2281
        %v2283 = vpop.f32.mrf.mxu0
        %v2284 = vadd.f32 %v1739, %v2283
        %v2285 = vpop.f32.mrf.mxu0
        %v2286 = vadd.f32 %v1735, %v2285
        %v2287 = vpop.f32.mrf.mxu0
        %v2288 = vadd.f32 %v1739, %v2287
        %2289 = vdwg.mxu0
        %v2290 = vmax.f32 %v1939, 0.0
        %v2291 = vmax.f32 %v1941, 0.0
        %v2292 = vmax.f32 %v2132, 0.0
        %v2293 = vmax.f32 %v2134, 0.0
        %v2294 = vmax.f32 %v1943, 0.0
        %v2295 = vmax.f32 %v1945, 0.0
        %v2296 = vmax.f32 %v2136, 0.0
        %v2297 = vmax.f32 %v2138, 0.0
        %v2298 = vmax.f32 %v1949, 0.0
        %v2299 = vmax.f32 %v1951, 0.0
        %v2300 = vmax.f32 %v2142, 0.0
        %v2301 = vmax.f32 %v2144, 0.0
        %v2302 = vmax.f32 %v1953, 0.0
        %v2303 = vmax.f32 %v1955, 0.0
        %v2304 = vmax.f32 %v2146, 0.0
        %v2305 = vmax.f32 %v2148, 0.0
        %v2306 = vmax.f32 %v1959, 0.0
        %v2307 = vmax.f32 %v1961, 0.0
        %v2308 = vmax.f32 %v2152, 0.0
        %v2309 = vmax.f32 %v2154, 0.0
        %v2310 = vmax.f32 %v1963, 0.0
        %v2311 = vmax.f32 %v1965, 0.0
        %v2312 = vmax.f32 %v2156, 0.0
        %v2313 = vmax.f32 %v2158, 0.0
        %v2314 = vmax.f32 %v1969, 0.0
        %v2315 = vmax.f32 %v1971, 0.0
        %v2316 = vmax.f32 %v2162, 0.0
        %v2317 = vmax.f32 %v2164, 0.0
        %v2318 = vmax.f32 %v1973, 0.0
        %v2319 = vmax.f32 %v1975, 0.0
        %v2320 = vmax.f32 %v2166, 0.0
        %v2321 = vmax.f32 %v2168, 0.0
        %v2322 = vmax.f32 %v1979, 0.0
        %v2323 = vmax.f32 %v1981, 0.0
        %v2324 = vmax.f32 %v2172, 0.0
        %v2325 = vmax.f32 %v2174, 0.0
        %v2326 = vmax.f32 %v1983, 0.0
        %v2327 = vmax.f32 %v1985, 0.0
        %v2328 = vmax.f32 %v2176, 0.0
        %v2329 = vmax.f32 %v2178, 0.0
        %v2330 = vmax.f32 %v1989, 0.0
        %v2331 = vmax.f32 %v1991, 0.0
        %v2332 = vmax.f32 %v2182, 0.0
        %v2333 = vmax.f32 %v2184, 0.0
        %v2334 = vmax.f32 %v1993, 0.0
        %v2335 = vmax.f32 %v1995, 0.0
        %v2336 = vmax.f32 %v2186, 0.0
        %v2337 = vmax.f32 %v2188, 0.0
        %v2338 = vmax.f32 %v1999, 0.0
        %v2339 = vmax.f32 %v2001, 0.0
        %v2340 = vmax.f32 %v2192, 0.0
        %v2341 = vmax.f32 %v2194, 0.0
        %v2342 = vmax.f32 %v2003, 0.0
        %v2343 = vmax.f32 %v2005, 0.0
        %v2344 = vmax.f32 %v2196, 0.0
        %v2345 = vmax.f32 %v2198, 0.0
        %v2346 = vmax.f32 %v2009, 0.0
        %v2347 = vmax.f32 %v2011, 0.0
        %v2348 = vmax.f32 %v2202, 0.0
        %v2349 = vmax.f32 %v2204, 0.0
        %v2350 = vmax.f32 %v2013, 0.0
        %v2351 = vmax.f32 %v2015, 0.0
        %v2352 = vmax.f32 %v2206, 0.0
        %v2353 = vmax.f32 %v2208, 0.0
        %v2354 = vmax.f32 %v2019, 0.0
        %v2355 = vmax.f32 %v2021, 0.0
        %v2356 = vmax.f32 %v2212, 0.0
        %v2357 = vmax.f32 %v2214, 0.0
        %v2358 = vmax.f32 %v2023, 0.0
        %v2359 = vmax.f32 %v2025, 0.0
        %v2360 = vmax.f32 %v2216, 0.0
        %v2361 = vmax.f32 %v2218, 0.0
        %v2362 = vmax.f32 %v2029, 0.0
        %v2363 = vmax.f32 %v2031, 0.0
        %v2364 = vmax.f32 %v2222, 0.0
        %v2365 = vmax.f32 %v2224, 0.0
        %v2366 = vmax.f32 %v2033, 0.0
        %v2367 = vmax.f32 %v2035, 0.0
        %v2368 = vmax.f32 %v2226, 0.0
        %v2369 = vmax.f32 %v2228, 0.0
        %v2370 = vmax.f32 %v2039, 0.0
        %v2371 = vmax.f32 %v2041, 0.0
        %v2372 = vmax.f32 %v2232, 0.0
        %v2373 = vmax.f32 %v2234, 0.0
        %v2374 = vmax.f32 %v2043, 0.0
        %v2375 = vmax.f32 %v2045, 0.0
        %v2376 = vmax.f32 %v2236, 0.0
        %v2377 = vmax.f32 %v2238, 0.0
        %v2378 = vmax.f32 %v2049, 0.0
        %v2379 = vmax.f32 %v2051, 0.0
        %v2380 = vmax.f32 %v2242, 0.0
        %v2381 = vmax.f32 %v2244, 0.0
        %v2382 = vmax.f32 %v2053, 0.0
        %v2383 = vmax.f32 %v2055, 0.0
        %v2384 = vmax.f32 %v2246, 0.0
        %v2385 = vmax.f32 %v2248, 0.0
        %v2386 = vmax.f32 %v2059, 0.0
        %v2387 = vmax.f32 %v2061, 0.0
        %v2388 = vmax.f32 %v2252, 0.0
        %v2389 = vmax.f32 %v2254, 0.0
        %v2390 = vmax.f32 %v2063, 0.0
        %v2391 = vmax.f32 %v2065, 0.0
        %v2392 = vmax.f32 %v2256, 0.0
        %v2393 = vmax.f32 %v2258, 0.0
        %v2394 = vmax.f32 %v2069, 0.0
        %v2395 = vmax.f32 %v2071, 0.0
        %v2396 = vmax.f32 %v2262, 0.0
        %v2397 = vmax.f32 %v2264, 0.0
        %v2398 = vmax.f32 %v2073, 0.0
        %v2399 = vmax.f32 %v2075, 0.0
        %v2400 = vmax.f32 %v2266, 0.0
        %v2401 = vmax.f32 %v2268, 0.0
        %v2402 = vmax.f32 %v2079, 0.0
        %v2403 = vmax.f32 %v2081, 0.0
        %v2404 = vmax.f32 %v2272, 0.0
        %v2405 = vmax.f32 %v2274, 0.0
        %v2406 = vmax.f32 %v2083, 0.0
        %v2407 = vmax.f32 %v2085, 0.0
        %v2408 = vmax.f32 %v2276, 0.0
        %v2409 = vmax.f32 %v2278, 0.0
        %v2410 = vmax.f32 %v2089, 0.0
        %v2411 = vmax.f32 %v2091, 0.0
        %v2412 = vmax.f32 %v2282, 0.0
        %v2413 = vmax.f32 %v2284, 0.0
        %v2414 = vmax.f32 %v2093, 0.0
        %v2415 = vmax.f32 %v2095, 0.0
        %v2416 = vmax.f32 %v2286, 0.0
        %v2417 = vmax.f32 %v2288, 0.0
        %v2418 = vpack.c.bf16 %v2294, %v2290
        %v2419 = vpack.c.bf16 %v2295, %v2291
        %v2420 = vpack.c.bf16 %v2296, %v2292
        %v2421 = vpack.c.bf16 %v2297, %v2293
        %v2422 = vpack.c.bf16 %v2302, %v2298
        %v2423 = vpack.c.bf16 %v2303, %v2299
        %v2424 = vpack.c.bf16 %v2304, %v2300
        %v2425 = vpack.c.bf16 %v2305, %v2301
        %v2426 = vpack.c.bf16 %v2310, %v2306
        %v2427 = vpack.c.bf16 %v2311, %v2307
        %v2428 = vpack.c.bf16 %v2312, %v2308
        %v2429 = vpack.c.bf16 %v2313, %v2309
        %v2430 = vpack.c.bf16 %v2318, %v2314
        %v2431 = vpack.c.bf16 %v2319, %v2315
        %v2432 = vpack.c.bf16 %v2320, %v2316
        %v2433 = vpack.c.bf16 %v2321, %v2317
        %v2434 = vpack.c.bf16 %v2326, %v2322
        %v2435 = vpack.c.bf16 %v2327, %v2323
        %v2436 = vpack.c.bf16 %v2328, %v2324
        %v2437 = vpack.c.bf16 %v2329, %v2325
        %v2438 = vpack.c.bf16 %v2334, %v2330
        %v2439 = vpack.c.bf16 %v2335, %v2331
        %v2440 = vpack.c.bf16 %v2336, %v2332
        %v2441 = vpack.c.bf16 %v2337, %v2333
        %v2442 = vpack.c.bf16 %v2342, %v2338
        %v2443 = vpack.c.bf16 %v2343, %v2339
        %v2444 = vpack.c.bf16 %v2344, %v2340
        %v2445 = vpack.c.bf16 %v2345, %v2341
        %v2446 = vpack.c.bf16 %v2350, %v2346
        %v2447 = vpack.c.bf16 %v2351, %v2347
        %v2448 = vpack.c.bf16 %v2352, %v2348
        %v2449 = vpack.c.bf16 %v2353, %v2349
        %v2450 = vpack.c.bf16 %v2358, %v2354
        %v2451 = vpack.c.bf16 %v2359, %v2355
        %v2452 = vpack.c.bf16 %v2360, %v2356
        %v2453 = vpack.c.bf16 %v2361, %v2357
        %v2454 = vpack.c.bf16 %v2366, %v2362
        %v2455 = vpack.c.bf16 %v2367, %v2363
        %v2456 = vpack.c.bf16 %v2368, %v2364
        %v2457 = vpack.c.bf16 %v2369, %v2365
        %v2458 = vpack.c.bf16 %v2374, %v2370
        %v2459 = vpack.c.bf16 %v2375, %v2371
        %v2460 = vpack.c.bf16 %v2376, %v2372
        %v2461 = vpack.c.bf16 %v2377, %v2373
        %v2462 = vpack.c.bf16 %v2382, %v2378
        %v2463 = vpack.c.bf16 %v2383, %v2379
        %v2464 = vpack.c.bf16 %v2384, %v2380
        %v2465 = vpack.c.bf16 %v2385, %v2381
        %v2466 = vpack.c.bf16 %v2390, %v2386
        %v2467 = vpack.c.bf16 %v2391, %v2387
        %v2468 = vpack.c.bf16 %v2392, %v2388
        %v2469 = vpack.c.bf16 %v2393, %v2389
        %v2470 = vpack.c.bf16 %v2398, %v2394
        %v2471 = vpack.c.bf16 %v2399, %v2395
        %v2472 = vpack.c.bf16 %v2400, %v2396
        %v2473 = vpack.c.bf16 %v2401, %v2397
        %v2474 = vpack.c.bf16 %v2406, %v2402
        %v2475 = vpack.c.bf16 %v2407, %v2403
        %v2476 = vpack.c.bf16 %v2408, %v2404
        %v2477 = vpack.c.bf16 %v2409, %v2405
        %v2478 = vpack.c.bf16 %v2414, %v2410
        %v2479 = vpack.c.bf16 %v2415, %v2411
        %v2480 = vpack.c.bf16 %v2416, %v2412
        %v2481 = vpack.c.bf16 %v2417, %v2413
        %v2482 = vld [vmem:[#allocation8] sm:$0xff]
        %v2483 = vld [vmem:[#allocation8 + $0x8] sm:$0xff]
        %v2484 = vld [vmem:[#allocation8 + $0x10] sm:$0xff]
        %v2485 = vld [vmem:[#allocation8 + $0x18] sm:$0xff]
        %v2486 = vld [vmem:[#allocation8 + $0x20] sm:$0xff]
        %v2487 = vld [vmem:[#allocation8 + $0x28] sm:$0xff]
        %v2488 = vld [vmem:[#allocation8 + $0x30] sm:$0xff]
        %v2489 = vld [vmem:[#allocation8 + $0x38] sm:$0xff]
        %v2490 = vld [vmem:[#allocation8 + $0x40] sm:$0xff]
        %v2491 = vld [vmem:[#allocation8 + $0x48] sm:$0xff]
        %v2492 = vld [vmem:[#allocation8 + $0x50] sm:$0xff]
        %v2493 = vld [vmem:[#allocation8 + $0x58] sm:$0xff]
        %v2494 = vld [vmem:[#allocation8 + $0x60] sm:$0xff]
        %v2495 = vld [vmem:[#allocation8 + $0x68] sm:$0xff]
        %v2496 = vld [vmem:[#allocation8 + $0x70] sm:$0xff]
        %v2497 = vld [vmem:[#allocation8 + $0x78] sm:$0xff]
        %v2498 = vld [vmem:[#allocation8 + $0x80] sm:$0xff]
        %v2499 = vld [vmem:[#allocation8 + $0x88] sm:$0xff]
        %v2500 = vld [vmem:[#allocation8 + $0x90] sm:$0xff]
        %v2501 = vld [vmem:[#allocation8 + $0x98] sm:$0xff]
        %v2502 = vld [vmem:[#allocation8 + $0xa0] sm:$0xff]
        %v2503 = vld [vmem:[#allocation8 + $0xa8] sm:$0xff]
        %v2504 = vld [vmem:[#allocation8 + $0xb0] sm:$0xff]
        %v2505 = vld [vmem:[#allocation8 + $0xb8] sm:$0xff]
        %v2506 = vld [vmem:[#allocation8 + $0xc0] sm:$0xff]
        %v2507 = vld [vmem:[#allocation8 + $0xc8] sm:$0xff]
        %v2508 = vld [vmem:[#allocation8 + $0xd0] sm:$0xff]
        %v2509 = vld [vmem:[#allocation8 + $0xd8] sm:$0xff]
        %v2510 = vld [vmem:[#allocation8 + $0xe0] sm:$0xff]
        %v2511 = vld [vmem:[#allocation8 + $0xe8] sm:$0xff]
        %v2512 = vld [vmem:[#allocation8 + $0xf0] sm:$0xff]
        %v2513 = vld [vmem:[#allocation8 + $0xf8] sm:$0xff]
        %v2514 = vld [vmem:[#allocation8 + $0x100] sm:$0xff]
        %v2515 = vld [vmem:[#allocation8 + $0x108] sm:$0xff]
        %v2516 = vld [vmem:[#allocation8 + $0x110] sm:$0xff]
        %v2517 = vld [vmem:[#allocation8 + $0x118] sm:$0xff]
        %v2518 = vld [vmem:[#allocation8 + $0x120] sm:$0xff]
        %v2519 = vld [vmem:[#allocation8 + $0x128] sm:$0xff]
        %v2520 = vld [vmem:[#allocation8 + $0x130] sm:$0xff]
        %v2521 = vld [vmem:[#allocation8 + $0x138] sm:$0xff]
        %v2522 = vld [vmem:[#allocation8 + $0x140] sm:$0xff]
        %v2523 = vld [vmem:[#allocation8 + $0x148] sm:$0xff]
        %v2524 = vld [vmem:[#allocation8 + $0x150] sm:$0xff]
        %v2525 = vld [vmem:[#allocation8 + $0x158] sm:$0xff]
        %v2526 = vld [vmem:[#allocation8 + $0x160] sm:$0xff]
        %v2527 = vld [vmem:[#allocation8 + $0x168] sm:$0xff]
        %v2528 = vld [vmem:[#allocation8 + $0x170] sm:$0xff]
        %v2529 = vld [vmem:[#allocation8 + $0x178] sm:$0xff]
        %v2530 = vld [vmem:[#allocation8 + $0x180] sm:$0xff]
        %v2531 = vld [vmem:[#allocation8 + $0x188] sm:$0xff]
        %v2532 = vld [vmem:[#allocation8 + $0x190] sm:$0xff]
        %v2533 = vld [vmem:[#allocation8 + $0x198] sm:$0xff]
        %v2534 = vld [vmem:[#allocation8 + $0x1a0] sm:$0xff]
        %v2535 = vld [vmem:[#allocation8 + $0x1a8] sm:$0xff]
        %v2536 = vld [vmem:[#allocation8 + $0x1b0] sm:$0xff]
        %v2537 = vld [vmem:[#allocation8 + $0x1b8] sm:$0xff]
        %v2538 = vld [vmem:[#allocation8 + $0x1c0] sm:$0xff]
        %v2539 = vld [vmem:[#allocation8 + $0x1c8] sm:$0xff]
        %v2540 = vld [vmem:[#allocation8 + $0x1d0] sm:$0xff]
        %v2541 = vld [vmem:[#allocation8 + $0x1d8] sm:$0xff]
        %v2542 = vld [vmem:[#allocation8 + $0x1e0] sm:$0xff]
        %v2543 = vld [vmem:[#allocation8 + $0x1e8] sm:$0xff]
        %v2544 = vld [vmem:[#allocation8 + $0x1f0] sm:$0xff]
        %v2545 = vld [vmem:[#allocation8 + $0x1f8] sm:$0xff]
        %v2546 = vld [vmem:[#allocation8 + $0x200] sm:$0xff]
        %v2547 = vld [vmem:[#allocation8 + $0x208] sm:$0xff]
        %v2548 = vld [vmem:[#allocation8 + $0x210] sm:$0xff]
        %v2549 = vld [vmem:[#allocation8 + $0x218] sm:$0xff]
        %v2550 = vld [vmem:[#allocation8 + $0x220] sm:$0xff]
        %v2551 = vld [vmem:[#allocation8 + $0x228] sm:$0xff]
        %v2552 = vld [vmem:[#allocation8 + $0x230] sm:$0xff]
        %v2553 = vld [vmem:[#allocation8 + $0x238] sm:$0xff]
        %v2554 = vld [vmem:[#allocation8 + $0x240] sm:$0xff]
        %v2555 = vld [vmem:[#allocation8 + $0x248] sm:$0xff]
        %v2556 = vld [vmem:[#allocation8 + $0x250] sm:$0xff]
        %v2557 = vld [vmem:[#allocation8 + $0x258] sm:$0xff]
        %v2558 = vld [vmem:[#allocation8 + $0x260] sm:$0xff]
        %v2559 = vld [vmem:[#allocation8 + $0x268] sm:$0xff]
        %v2560 = vld [vmem:[#allocation8 + $0x270] sm:$0xff]
        %v2561 = vld [vmem:[#allocation8 + $0x278] sm:$0xff]
        %v2562 = vld [vmem:[#allocation8 + $0x280] sm:$0xff]
        %v2563 = vld [vmem:[#allocation8 + $0x288] sm:$0xff]
        %v2564 = vld [vmem:[#allocation8 + $0x290] sm:$0xff]
        %v2565 = vld [vmem:[#allocation8 + $0x298] sm:$0xff]
        %v2566 = vld [vmem:[#allocation8 + $0x2a0] sm:$0xff]
        %v2567 = vld [vmem:[#allocation8 + $0x2a8] sm:$0xff]
        %v2568 = vld [vmem:[#allocation8 + $0x2b0] sm:$0xff]
        %v2569 = vld [vmem:[#allocation8 + $0x2b8] sm:$0xff]
        %v2570 = vld [vmem:[#allocation8 + $0x2c0] sm:$0xff]
        %v2571 = vld [vmem:[#allocation8 + $0x2c8] sm:$0xff]
        %v2572 = vld [vmem:[#allocation8 + $0x2d0] sm:$0xff]
        %v2573 = vld [vmem:[#allocation8 + $0x2d8] sm:$0xff]
        %v2574 = vld [vmem:[#allocation8 + $0x2e0] sm:$0xff]
        %v2575 = vld [vmem:[#allocation8 + $0x2e8] sm:$0xff]
        %v2576 = vld [vmem:[#allocation8 + $0x2f0] sm:$0xff]
        %v2577 = vld [vmem:[#allocation8 + $0x2f8] sm:$0xff]
        %v2578 = vld [vmem:[#allocation8 + $0x300] sm:$0xff]
        %v2579 = vld [vmem:[#allocation8 + $0x308] sm:$0xff]
        %v2580 = vld [vmem:[#allocation8 + $0x310] sm:$0xff]
        %v2581 = vld [vmem:[#allocation8 + $0x318] sm:$0xff]
        %v2582 = vld [vmem:[#allocation8 + $0x320] sm:$0xff]
        %v2583 = vld [vmem:[#allocation8 + $0x328] sm:$0xff]
        %v2584 = vld [vmem:[#allocation8 + $0x330] sm:$0xff]
        %v2585 = vld [vmem:[#allocation8 + $0x338] sm:$0xff]
        %v2586 = vld [vmem:[#allocation8 + $0x340] sm:$0xff]
        %v2587 = vld [vmem:[#allocation8 + $0x348] sm:$0xff]
        %v2588 = vld [vmem:[#allocation8 + $0x350] sm:$0xff]
        %v2589 = vld [vmem:[#allocation8 + $0x358] sm:$0xff]
        %v2590 = vld [vmem:[#allocation8 + $0x360] sm:$0xff]
        %v2591 = vld [vmem:[#allocation8 + $0x368] sm:$0xff]
        %v2592 = vld [vmem:[#allocation8 + $0x370] sm:$0xff]
        %v2593 = vld [vmem:[#allocation8 + $0x378] sm:$0xff]
        %v2594 = vld [vmem:[#allocation8 + $0x380] sm:$0xff]
        %v2595 = vld [vmem:[#allocation8 + $0x388] sm:$0xff]
        %v2596 = vld [vmem:[#allocation8 + $0x390] sm:$0xff]
        %v2597 = vld [vmem:[#allocation8 + $0x398] sm:$0xff]
        %v2598 = vld [vmem:[#allocation8 + $0x3a0] sm:$0xff]
        %v2599 = vld [vmem:[#allocation8 + $0x3a8] sm:$0xff]
        %v2600 = vld [vmem:[#allocation8 + $0x3b0] sm:$0xff]
        %v2601 = vld [vmem:[#allocation8 + $0x3b8] sm:$0xff]
        %v2602 = vld [vmem:[#allocation8 + $0x3c0] sm:$0xff]
        %v2603 = vld [vmem:[#allocation8 + $0x3c8] sm:$0xff]
        %v2604 = vld [vmem:[#allocation8 + $0x3d0] sm:$0xff]
        %v2605 = vld [vmem:[#allocation8 + $0x3d8] sm:$0xff]
        %v2606 = vld [vmem:[#allocation8 + $0x3e0] sm:$0xff]
        %v2607 = vld [vmem:[#allocation8 + $0x3e8] sm:$0xff]
        %v2608 = vld [vmem:[#allocation8 + $0x3f0] sm:$0xff]
        %v2609 = vld [vmem:[#allocation8 + $0x3f8] sm:$0xff]
        %v2610 = vld [vmem:[%s9] sm:$0xf]
        %v2612 = vlaneseq
        %v2613 = vshrl.u32 %v2612, 7
        %v2614 = vsub.s32 0, %v2613
        %v2615 = vrot.slane %v2610, %v2614
        %v2616 = vlaneseq
        %v2617 = vshrl.u32 %v2616, 7
        %v2618 = vsub.s32 1, %v2617
        %v2619 = vrot.slane %v2610, %v2618
        %v2620 = vlaneseq
        %v2621 = vshrl.u32 %v2620, 7
        %v2622 = vsub.s32 2, %v2621
        %v2623 = vrot.slane %v2610, %v2622
        %v2624 = vlaneseq
        %v2625 = vshrl.u32 %v2624, 7
        %v2626 = vsub.s32 3, %v2625
        %v2627 = vrot.slane %v2610, %v2626
        %v2760 = vunpack.c.l.b16 %v2482
        %v2761 = vunpack.c.h.b16 %v2482
        %v2762 = vunpack.c.l.b16 %v2483
        %v2763 = vunpack.c.h.b16 %v2483
        %v2764 = vunpack.c.l.b16 %v2484
        %v2765 = vunpack.c.h.b16 %v2484
        %v2766 = vunpack.c.l.b16 %v2485
        %v2767 = vunpack.c.h.b16 %v2485
        %v2768 = vunpack.c.l.b16 %v2486
        %v2769 = vunpack.c.h.b16 %v2486
        %v2770 = vunpack.c.l.b16 %v2487
        %v2771 = vunpack.c.h.b16 %v2487
        %v2772 = vunpack.c.l.b16 %v2488
        %v2773 = vunpack.c.h.b16 %v2488
        %v2774 = vunpack.c.l.b16 %v2489
        %v2775 = vunpack.c.h.b16 %v2489
        %v2776 = vunpack.c.l.b16 %v2490
        %v2777 = vunpack.c.h.b16 %v2490
        %v2778 = vunpack.c.l.b16 %v2491
        %v2779 = vunpack.c.h.b16 %v2491
        %v2780 = vunpack.c.l.b16 %v2492
        %v2781 = vunpack.c.h.b16 %v2492
        %v2782 = vunpack.c.l.b16 %v2493
        %v2783 = vunpack.c.h.b16 %v2493
        %v2784 = vunpack.c.l.b16 %v2494
        %v2785 = vunpack.c.h.b16 %v2494
        %v2786 = vunpack.c.l.b16 %v2495
        %v2787 = vunpack.c.h.b16 %v2495
        %v2788 = vunpack.c.l.b16 %v2496
        %v2789 = vunpack.c.h.b16 %v2496
        %v2790 = vunpack.c.l.b16 %v2497
        %v2791 = vunpack.c.h.b16 %v2497
        %v2792 = vunpack.c.l.b16 %v2498
        %v2793 = vunpack.c.h.b16 %v2498
        %v2794 = vunpack.c.l.b16 %v2499
        %v2795 = vunpack.c.h.b16 %v2499
        %v2796 = vunpack.c.l.b16 %v2500
        %v2797 = vunpack.c.h.b16 %v2500
        %v2798 = vunpack.c.l.b16 %v2501
        %v2799 = vunpack.c.h.b16 %v2501
        %v2800 = vunpack.c.l.b16 %v2502
        %v2801 = vunpack.c.h.b16 %v2502
        %v2802 = vunpack.c.l.b16 %v2503
        %v2803 = vunpack.c.h.b16 %v2503
        %v2804 = vunpack.c.l.b16 %v2504
        %v2805 = vunpack.c.h.b16 %v2504
        %v2806 = vunpack.c.l.b16 %v2505
        %v2807 = vunpack.c.h.b16 %v2505
        %v2808 = vunpack.c.l.b16 %v2506
        %v2809 = vunpack.c.h.b16 %v2506
        %v2810 = vunpack.c.l.b16 %v2507
        %v2811 = vunpack.c.h.b16 %v2507
        %v2812 = vunpack.c.l.b16 %v2508
        %v2813 = vunpack.c.h.b16 %v2508
        %v2814 = vunpack.c.l.b16 %v2509
        %v2815 = vunpack.c.h.b16 %v2509
        %v2816 = vunpack.c.l.b16 %v2510
        %v2817 = vunpack.c.h.b16 %v2510
        %v2818 = vunpack.c.l.b16 %v2511
        %v2819 = vunpack.c.h.b16 %v2511
        %v2820 = vunpack.c.l.b16 %v2512
        %v2821 = vunpack.c.h.b16 %v2512
        %v2822 = vunpack.c.l.b16 %v2513
        %v2823 = vunpack.c.h.b16 %v2513
        %v2824 = vunpack.c.l.b16 %v2514
        %v2825 = vunpack.c.h.b16 %v2514
        %v2826 = vunpack.c.l.b16 %v2515
        %v2827 = vunpack.c.h.b16 %v2515
        %v2828 = vunpack.c.l.b16 %v2516
        %v2829 = vunpack.c.h.b16 %v2516
        %v2830 = vunpack.c.l.b16 %v2517
        %v2831 = vunpack.c.h.b16 %v2517
        %v2832 = vunpack.c.l.b16 %v2518
        %v2833 = vunpack.c.h.b16 %v2518
        %v2834 = vunpack.c.l.b16 %v2519
        %v2835 = vunpack.c.h.b16 %v2519
        %v2836 = vunpack.c.l.b16 %v2520
        %v2837 = vunpack.c.h.b16 %v2520
        %v2838 = vunpack.c.l.b16 %v2521
        %v2839 = vunpack.c.h.b16 %v2521
        %v2840 = vunpack.c.l.b16 %v2522
        %v2841 = vunpack.c.h.b16 %v2522
        %v2842 = vunpack.c.l.b16 %v2523
        %v2843 = vunpack.c.h.b16 %v2523
        %v2844 = vunpack.c.l.b16 %v2524
        %v2845 = vunpack.c.h.b16 %v2524
        %v2846 = vunpack.c.l.b16 %v2525
        %v2847 = vunpack.c.h.b16 %v2525
        %v2848 = vunpack.c.l.b16 %v2526
        %v2849 = vunpack.c.h.b16 %v2526
        %v2850 = vunpack.c.l.b16 %v2527
        %v2851 = vunpack.c.h.b16 %v2527
        %v2852 = vunpack.c.l.b16 %v2528
        %v2853 = vunpack.c.h.b16 %v2528
        %v2854 = vunpack.c.l.b16 %v2529
        %v2855 = vunpack.c.h.b16 %v2529
        %v2856 = vunpack.c.l.b16 %v2530
        %v2857 = vunpack.c.h.b16 %v2530
        %v2858 = vunpack.c.l.b16 %v2531
        %v2859 = vunpack.c.h.b16 %v2531
        %v2860 = vunpack.c.l.b16 %v2532
        %v2861 = vunpack.c.h.b16 %v2532
        %v2862 = vunpack.c.l.b16 %v2533
        %v2863 = vunpack.c.h.b16 %v2533
        %v2864 = vunpack.c.l.b16 %v2534
        %v2865 = vunpack.c.h.b16 %v2534
        %v2866 = vunpack.c.l.b16 %v2535
        %v2867 = vunpack.c.h.b16 %v2535
        %v2868 = vunpack.c.l.b16 %v2536
        %v2869 = vunpack.c.h.b16 %v2536
        %v2870 = vunpack.c.l.b16 %v2537
        %v2871 = vunpack.c.h.b16 %v2537
        %v2872 = vunpack.c.l.b16 %v2538
        %v2873 = vunpack.c.h.b16 %v2538
        %v2874 = vunpack.c.l.b16 %v2539
        %v2875 = vunpack.c.h.b16 %v2539
        %v2876 = vunpack.c.l.b16 %v2540
        %v2877 = vunpack.c.h.b16 %v2540
        %v2878 = vunpack.c.l.b16 %v2541
        %v2879 = vunpack.c.h.b16 %v2541
        %v2880 = vunpack.c.l.b16 %v2542
        %v2881 = vunpack.c.h.b16 %v2542
        %v2882 = vunpack.c.l.b16 %v2543
        %v2883 = vunpack.c.h.b16 %v2543
        %v2884 = vunpack.c.l.b16 %v2544
        %v2885 = vunpack.c.h.b16 %v2544
        %v2886 = vunpack.c.l.b16 %v2545
        %v2887 = vunpack.c.h.b16 %v2545
        %v2888 = vunpack.c.l.b16 %v2546
        %v2889 = vunpack.c.h.b16 %v2546
        %v2890 = vunpack.c.l.b16 %v2547
        %v2891 = vunpack.c.h.b16 %v2547
        %v2892 = vunpack.c.l.b16 %v2548
        %v2893 = vunpack.c.h.b16 %v2548
        %v2894 = vunpack.c.l.b16 %v2549
        %v2895 = vunpack.c.h.b16 %v2549
        %v2896 = vunpack.c.l.b16 %v2550
        %v2897 = vunpack.c.h.b16 %v2550
        %v2898 = vunpack.c.l.b16 %v2551
        %v2899 = vunpack.c.h.b16 %v2551
        %v2900 = vunpack.c.l.b16 %v2552
        %v2901 = vunpack.c.h.b16 %v2552
        %v2902 = vunpack.c.l.b16 %v2553
        %v2903 = vunpack.c.h.b16 %v2553
        %v2904 = vunpack.c.l.b16 %v2554
        %v2905 = vunpack.c.h.b16 %v2554
        %v2906 = vunpack.c.l.b16 %v2555
        %v2907 = vunpack.c.h.b16 %v2555
        %v2908 = vunpack.c.l.b16 %v2556
        %v2909 = vunpack.c.h.b16 %v2556
        %v2910 = vunpack.c.l.b16 %v2557
        %v2911 = vunpack.c.h.b16 %v2557
        %v2912 = vunpack.c.l.b16 %v2558
        %v2913 = vunpack.c.h.b16 %v2558
        %v2914 = vunpack.c.l.b16 %v2559
        %v2915 = vunpack.c.h.b16 %v2559
        %v2916 = vunpack.c.l.b16 %v2560
        %v2917 = vunpack.c.h.b16 %v2560
        %v2918 = vunpack.c.l.b16 %v2561
        %v2919 = vunpack.c.h.b16 %v2561
        %v2920 = vunpack.c.l.b16 %v2562
        %v2921 = vunpack.c.h.b16 %v2562
        %v2922 = vunpack.c.l.b16 %v2563
        %v2923 = vunpack.c.h.b16 %v2563
        %v2924 = vunpack.c.l.b16 %v2564
        %v2925 = vunpack.c.h.b16 %v2564
        %v2926 = vunpack.c.l.b16 %v2565
        %v2927 = vunpack.c.h.b16 %v2565
        %v2928 = vunpack.c.l.b16 %v2566
        %v2929 = vunpack.c.h.b16 %v2566
        %v2930 = vunpack.c.l.b16 %v2567
        %v2931 = vunpack.c.h.b16 %v2567
        %v2932 = vunpack.c.l.b16 %v2568
        %v2933 = vunpack.c.h.b16 %v2568
        %v2934 = vunpack.c.l.b16 %v2569
        %v2935 = vunpack.c.h.b16 %v2569
        %v2936 = vunpack.c.l.b16 %v2570
        %v2937 = vunpack.c.h.b16 %v2570
        %v2938 = vunpack.c.l.b16 %v2571
        %v2939 = vunpack.c.h.b16 %v2571
        %v2940 = vunpack.c.l.b16 %v2572
        %v2941 = vunpack.c.h.b16 %v2572
        %v2942 = vunpack.c.l.b16 %v2573
        %v2943 = vunpack.c.h.b16 %v2573
        %v2944 = vunpack.c.l.b16 %v2574
        %v2945 = vunpack.c.h.b16 %v2574
        %v2946 = vunpack.c.l.b16 %v2575
        %v2947 = vunpack.c.h.b16 %v2575
        %v2948 = vunpack.c.l.b16 %v2576
        %v2949 = vunpack.c.h.b16 %v2576
        %v2950 = vunpack.c.l.b16 %v2577
        %v2951 = vunpack.c.h.b16 %v2577
        %v2952 = vunpack.c.l.b16 %v2578
        %v2953 = vunpack.c.h.b16 %v2578
        %v2954 = vunpack.c.l.b16 %v2579
        %v2955 = vunpack.c.h.b16 %v2579
        %v2956 = vunpack.c.l.b16 %v2580
        %v2957 = vunpack.c.h.b16 %v2580
        %v2958 = vunpack.c.l.b16 %v2581
        %v2959 = vunpack.c.h.b16 %v2581
        %v2960 = vunpack.c.l.b16 %v2582
        %v2961 = vunpack.c.h.b16 %v2582
        %v2962 = vunpack.c.l.b16 %v2583
        %v2963 = vunpack.c.h.b16 %v2583
        %v2964 = vunpack.c.l.b16 %v2584
        %v2965 = vunpack.c.h.b16 %v2584
        %v2966 = vunpack.c.l.b16 %v2585
        %v2967 = vunpack.c.h.b16 %v2585
        %v2968 = vunpack.c.l.b16 %v2586
        %v2969 = vunpack.c.h.b16 %v2586
        %v2970 = vunpack.c.l.b16 %v2587
        %v2971 = vunpack.c.h.b16 %v2587
        %v2972 = vunpack.c.l.b16 %v2588
        %v2973 = vunpack.c.h.b16 %v2588
        %v2974 = vunpack.c.l.b16 %v2589
        %v2975 = vunpack.c.h.b16 %v2589
        %v2976 = vunpack.c.l.b16 %v2590
        %v2977 = vunpack.c.h.b16 %v2590
        %v2978 = vunpack.c.l.b16 %v2591
        %v2979 = vunpack.c.h.b16 %v2591
        %v2980 = vunpack.c.l.b16 %v2592
        %v2981 = vunpack.c.h.b16 %v2592
        %v2982 = vunpack.c.l.b16 %v2593
        %v2983 = vunpack.c.h.b16 %v2593
        %v2984 = vunpack.c.l.b16 %v2594
        %v2985 = vunpack.c.h.b16 %v2594
        %v2986 = vunpack.c.l.b16 %v2595
        %v2987 = vunpack.c.h.b16 %v2595
        %v2988 = vunpack.c.l.b16 %v2596
        %v2989 = vunpack.c.h.b16 %v2596
        %v2990 = vunpack.c.l.b16 %v2597
        %v2991 = vunpack.c.h.b16 %v2597
        %v2992 = vunpack.c.l.b16 %v2598
        %v2993 = vunpack.c.h.b16 %v2598
        %v2994 = vunpack.c.l.b16 %v2599
        %v2995 = vunpack.c.h.b16 %v2599
        %v2996 = vunpack.c.l.b16 %v2600
        %v2997 = vunpack.c.h.b16 %v2600
        %v2998 = vunpack.c.l.b16 %v2601
        %v2999 = vunpack.c.h.b16 %v2601
        %v3000 = vunpack.c.l.b16 %v2602
        %v3001 = vunpack.c.h.b16 %v2602
        %v3002 = vunpack.c.l.b16 %v2603
        %v3003 = vunpack.c.h.b16 %v2603
        %v3004 = vunpack.c.l.b16 %v2604
        %v3005 = vunpack.c.h.b16 %v2604
        %v3006 = vunpack.c.l.b16 %v2605
        %v3007 = vunpack.c.h.b16 %v2605
        %v3008 = vunpack.c.l.b16 %v2606
        %v3009 = vunpack.c.h.b16 %v2606
        %v3010 = vunpack.c.l.b16 %v2607
        %v3011 = vunpack.c.h.b16 %v2607
        %v3012 = vunpack.c.l.b16 %v2608
        %v3013 = vunpack.c.h.b16 %v2608
        %v3014 = vunpack.c.l.b16 %v2609
        %v3015 = vunpack.c.h.b16 %v2609
        %v3016 = vpack.c.b16 %v2764, %v2760
        %v3017 = vpack.c.b16 %v2765, %v2761
        %v3018 = vpack.c.b16 %v2766, %v2762
        %v3019 = vpack.c.b16 %v2767, %v2763
        %v3020 = vpack.c.b16 %v2772, %v2768
        %v3021 = vpack.c.b16 %v2773, %v2769
        %v3022 = vpack.c.b16 %v2774, %v2770
        %v3023 = vpack.c.b16 %v2775, %v2771
        %v3024 = vpack.c.b16 %v2780, %v2776
        %v3025 = vpack.c.b16 %v2781, %v2777
        %v3026 = vpack.c.b16 %v2782, %v2778
        %v3027 = vpack.c.b16 %v2783, %v2779
        %v3028 = vpack.c.b16 %v2788, %v2784
        %v3029 = vpack.c.b16 %v2789, %v2785
        %v3030 = vpack.c.b16 %v2790, %v2786
        %v3031 = vpack.c.b16 %v2791, %v2787
        %v3032 = vpack.c.b16 %v2796, %v2792
        %v3033 = vpack.c.b16 %v2797, %v2793
        %v3034 = vpack.c.b16 %v2798, %v2794
        %v3035 = vpack.c.b16 %v2799, %v2795
        %v3036 = vpack.c.b16 %v2804, %v2800
        %v3037 = vpack.c.b16 %v2805, %v2801
        %v3038 = vpack.c.b16 %v2806, %v2802
        %v3039 = vpack.c.b16 %v2807, %v2803
        %v3040 = vpack.c.b16 %v2812, %v2808
        %v3041 = vpack.c.b16 %v2813, %v2809
        %v3042 = vpack.c.b16 %v2814, %v2810
        %v3043 = vpack.c.b16 %v2815, %v2811
        %v3044 = vpack.c.b16 %v2820, %v2816
        %v3045 = vpack.c.b16 %v2821, %v2817
        %v3046 = vpack.c.b16 %v2822, %v2818
        %v3047 = vpack.c.b16 %v2823, %v2819
        %v3048 = vpack.c.b16 %v2828, %v2824
        %v3049 = vpack.c.b16 %v2829, %v2825
        %v3050 = vpack.c.b16 %v2830, %v2826
        %v3051 = vpack.c.b16 %v2831, %v2827
        %v3052 = vpack.c.b16 %v2836, %v2832
        %v3053 = vpack.c.b16 %v2837, %v2833
        %v3054 = vpack.c.b16 %v2838, %v2834
        %v3055 = vpack.c.b16 %v2839, %v2835
        %v3056 = vpack.c.b16 %v2844, %v2840
        %v3057 = vpack.c.b16 %v2845, %v2841
        %v3058 = vpack.c.b16 %v2846, %v2842
        %v3059 = vpack.c.b16 %v2847, %v2843
        %v3060 = vpack.c.b16 %v2852, %v2848
        %v3061 = vpack.c.b16 %v2853, %v2849
        %v3062 = vpack.c.b16 %v2854, %v2850
        %v3063 = vpack.c.b16 %v2855, %v2851
        %v3064 = vpack.c.b16 %v2860, %v2856
        %v3065 = vpack.c.b16 %v2861, %v2857
        %v3066 = vpack.c.b16 %v2862, %v2858
        %v3067 = vpack.c.b16 %v2863, %v2859
        %v3068 = vpack.c.b16 %v2868, %v2864
        %v3069 = vpack.c.b16 %v2869, %v2865
        %v3070 = vpack.c.b16 %v2870, %v2866
        %v3071 = vpack.c.b16 %v2871, %v2867
        %v3072 = vpack.c.b16 %v2876, %v2872
        %v3073 = vpack.c.b16 %v2877, %v2873
        %v3074 = vpack.c.b16 %v2878, %v2874
        %v3075 = vpack.c.b16 %v2879, %v2875
        %v3076 = vpack.c.b16 %v2884, %v2880
        %v3077 = vpack.c.b16 %v2885, %v2881
        %v3078 = vpack.c.b16 %v2886, %v2882
        %v3079 = vpack.c.b16 %v2887, %v2883
        %v3080 = vpack.c.b16 %v2892, %v2888
        %v3081 = vpack.c.b16 %v2893, %v2889
        %v3082 = vpack.c.b16 %v2894, %v2890
        %v3083 = vpack.c.b16 %v2895, %v2891
        %v3084 = vpack.c.b16 %v2900, %v2896
        %v3085 = vpack.c.b16 %v2901, %v2897
        %v3086 = vpack.c.b16 %v2902, %v2898
        %v3087 = vpack.c.b16 %v2903, %v2899
        %v3088 = vpack.c.b16 %v2908, %v2904
        %v3089 = vpack.c.b16 %v2909, %v2905
        %v3090 = vpack.c.b16 %v2910, %v2906
        %v3091 = vpack.c.b16 %v2911, %v2907
        %v3092 = vpack.c.b16 %v2916, %v2912
        %v3093 = vpack.c.b16 %v2917, %v2913
        %v3094 = vpack.c.b16 %v2918, %v2914
        %v3095 = vpack.c.b16 %v2919, %v2915
        %v3096 = vpack.c.b16 %v2924, %v2920
        %v3097 = vpack.c.b16 %v2925, %v2921
        %v3098 = vpack.c.b16 %v2926, %v2922
        %v3099 = vpack.c.b16 %v2927, %v2923
        %v3100 = vpack.c.b16 %v2932, %v2928
        %v3101 = vpack.c.b16 %v2933, %v2929
        %v3102 = vpack.c.b16 %v2934, %v2930
        %v3103 = vpack.c.b16 %v2935, %v2931
        %v3104 = vpack.c.b16 %v2940, %v2936
        %v3105 = vpack.c.b16 %v2941, %v2937
        %v3106 = vpack.c.b16 %v2942, %v2938
        %v3107 = vpack.c.b16 %v2943, %v2939
        %v3108 = vpack.c.b16 %v2948, %v2944
        %v3109 = vpack.c.b16 %v2949, %v2945
        %v3110 = vpack.c.b16 %v2950, %v2946
        %v3111 = vpack.c.b16 %v2951, %v2947
        %v3112 = vpack.c.b16 %v2956, %v2952
        %v3113 = vpack.c.b16 %v2957, %v2953
        %v3114 = vpack.c.b16 %v2958, %v2954
        %v3115 = vpack.c.b16 %v2959, %v2955
        %v3116 = vpack.c.b16 %v2964, %v2960
        %v3117 = vpack.c.b16 %v2965, %v2961
        %v3118 = vpack.c.b16 %v2966, %v2962
        %v3119 = vpack.c.b16 %v2967, %v2963
        %v3120 = vpack.c.b16 %v2972, %v2968
        %v3121 = vpack.c.b16 %v2973, %v2969
        %v3122 = vpack.c.b16 %v2974, %v2970
        %v3123 = vpack.c.b16 %v2975, %v2971
        %v3124 = vpack.c.b16 %v2980, %v2976
        %v3125 = vpack.c.b16 %v2981, %v2977
        %v3126 = vpack.c.b16 %v2982, %v2978
        %v3127 = vpack.c.b16 %v2983, %v2979
        %v3128 = vpack.c.b16 %v2988, %v2984
        %v3129 = vpack.c.b16 %v2989, %v2985
        %v3130 = vpack.c.b16 %v2990, %v2986
        %v3131 = vpack.c.b16 %v2991, %v2987
        %v3132 = vpack.c.b16 %v2996, %v2992
        %v3133 = vpack.c.b16 %v2997, %v2993
        %v3134 = vpack.c.b16 %v2998, %v2994
        %v3135 = vpack.c.b16 %v2999, %v2995
        %v3136 = vpack.c.b16 %v3004, %v3000
        %v3137 = vpack.c.b16 %v3005, %v3001
        %v3138 = vpack.c.b16 %v3006, %v3002
        %v3139 = vpack.c.b16 %v3007, %v3003
        %v3140 = vpack.c.b16 %v3012, %v3008
        %v3141 = vpack.c.b16 %v3013, %v3009
        %v3142 = vpack.c.b16 %v3014, %v3010
        %v3143 = vpack.c.b16 %v3015, %v3011
        %3272 = vmatprep.subr.bf16.mxu0 %v3045
        %3273 = vmatpush1.bf16.msra.mxu0 %v3044
        %3274 = vmatprep.subr.bf16.mxu0 %v3041
        %3275 = vmatpush1.bf16.msra.mxu0 %v3040
        %3276 = vmatprep.subr.bf16.mxu0 %v3037
        %3277 = vmatpush1.bf16.msra.mxu0 %v3036
        %3278 = vmatprep.subr.bf16.mxu0 %v3033
        %3279 = vmatpush1.bf16.msra.mxu0 %v3032
        %3280 = vmatprep.subr.bf16.mxu0 %v3029
        %3281 = vmatpush1.bf16.msra.mxu0 %v3028
        %3282 = vmatprep.subr.bf16.mxu0 %v3025
        %3283 = vmatpush1.bf16.msra.mxu0 %v3024
        %3284 = vmatprep.subr.bf16.mxu0 %v3021
        %3285 = vmatpush1.bf16.msra.mxu0 %v3020
        %3286 = vmatprep.subr.bf16.mxu0 %v3017
        %3287 = vmatpush1.bf16.msra.mxu0 %v3016
        %3288 = vmatprep.subr.bf16.mxu0 %v3077
        %3289 = vmatpush2.bf16.msra.mxu0 %v3076
        %3290 = vmatprep.subr.bf16.mxu0 %v3073
        %3291 = vmatpush2.bf16.msra.mxu0 %v3072
        %3292 = vmatprep.subr.bf16.mxu0 %v3069
        %3293 = vmatpush2.bf16.msra.mxu0 %v3068
        %3294 = vmatprep.subr.bf16.mxu0 %v3065
        %3295 = vmatpush2.bf16.msra.mxu0 %v3064
        %3296 = vmatprep.subr.bf16.mxu0 %v3061
        %3297 = vmatpush2.bf16.msra.mxu0 %v3060
        %3298 = vmatprep.subr.bf16.mxu0 %v3057
        %3299 = vmatpush2.bf16.msra.mxu0 %v3056
        %3300 = vmatprep.subr.bf16.mxu0 %v3053
        %3301 = vmatpush2.bf16.msra.mxu0 %v3052
        %3302 = vmatprep.subr.bf16.mxu0 %v3049
        %3303 = vmatpush2.bf16.msra.mxu0 %v3048
        %3304 = vmatprep.mubr.bf16.mxu0 %v2419
        %3305 = vmatmul.mubr.bf16.gmra.mxu0 %v2418
        %v3306 = vpop.f32.mrf.mxu0
        %v3307 = vadd.f32 %v2615, %v3306
        %v3308 = vpop.f32.mrf.mxu0
        %v3309 = vadd.f32 %v2619, %v3308
        %v3310 = vpop.f32.mrf.mxu0
        %v3311 = vadd.f32 %v2615, %v3310
        %v3312 = vpop.f32.mrf.mxu0
        %v3313 = vadd.f32 %v2619, %v3312
        %3314 = vmatprep.mubr.bf16.mxu0 %v2423
        %3315 = vmatmul.mubr.bf16.gmra.mxu0 %v2422
        %v3316 = vpop.f32.mrf.mxu0
        %v3317 = vadd.f32 %v2615, %v3316
        %v3318 = vpop.f32.mrf.mxu0
        %v3319 = vadd.f32 %v2619, %v3318
        %v3320 = vpop.f32.mrf.mxu0
        %v3321 = vadd.f32 %v2615, %v3320
        %v3322 = vpop.f32.mrf.mxu0
        %v3323 = vadd.f32 %v2619, %v3322
        %3324 = vmatprep.mubr.bf16.mxu0 %v2427
        %3325 = vmatmul.mubr.bf16.gmra.mxu0 %v2426
        %v3326 = vpop.f32.mrf.mxu0
        %v3327 = vadd.f32 %v2615, %v3326
        %v3328 = vpop.f32.mrf.mxu0
        %v3329 = vadd.f32 %v2619, %v3328
        %v3330 = vpop.f32.mrf.mxu0
        %v3331 = vadd.f32 %v2615, %v3330
        %v3332 = vpop.f32.mrf.mxu0
        %v3333 = vadd.f32 %v2619, %v3332
        %3334 = vmatprep.mubr.bf16.mxu0 %v2431
        %3335 = vmatmul.mubr.bf16.gmra.mxu0 %v2430
        %v3336 = vpop.f32.mrf.mxu0
        %v3337 = vadd.f32 %v2615, %v3336
        %v3338 = vpop.f32.mrf.mxu0
        %v3339 = vadd.f32 %v2619, %v3338
        %v3340 = vpop.f32.mrf.mxu0
        %v3341 = vadd.f32 %v2615, %v3340
        %v3342 = vpop.f32.mrf.mxu0
        %v3343 = vadd.f32 %v2619, %v3342
        %3344 = vmatprep.mubr.bf16.mxu0 %v2435
        %3345 = vmatmul.mubr.bf16.gmra.mxu0 %v2434
        %v3346 = vpop.f32.mrf.mxu0
        %v3347 = vadd.f32 %v2615, %v3346
        %v3348 = vpop.f32.mrf.mxu0
        %v3349 = vadd.f32 %v2619, %v3348
        %v3350 = vpop.f32.mrf.mxu0
        %v3351 = vadd.f32 %v2615, %v3350
        %v3352 = vpop.f32.mrf.mxu0
        %v3353 = vadd.f32 %v2619, %v3352
        %3354 = vmatprep.mubr.bf16.mxu0 %v2439
        %3355 = vmatmul.mubr.bf16.gmra.mxu0 %v2438
        %v3356 = vpop.f32.mrf.mxu0
        %v3357 = vadd.f32 %v2615, %v3356
        %v3358 = vpop.f32.mrf.mxu0
        %v3359 = vadd.f32 %v2619, %v3358
        %v3360 = vpop.f32.mrf.mxu0
        %v3361 = vadd.f32 %v2615, %v3360
        %v3362 = vpop.f32.mrf.mxu0
        %v3363 = vadd.f32 %v2619, %v3362
        %3364 = vmatprep.mubr.bf16.mxu0 %v2443
        %3365 = vmatmul.mubr.bf16.gmra.mxu0 %v2442
        %v3366 = vpop.f32.mrf.mxu0
        %v3367 = vadd.f32 %v2615, %v3366
        %v3368 = vpop.f32.mrf.mxu0
        %v3369 = vadd.f32 %v2619, %v3368
        %v3370 = vpop.f32.mrf.mxu0
        %v3371 = vadd.f32 %v2615, %v3370
        %v3372 = vpop.f32.mrf.mxu0
        %v3373 = vadd.f32 %v2619, %v3372
        %3374 = vmatprep.mubr.bf16.mxu0 %v2447
        %3375 = vmatmul.mubr.bf16.gmra.mxu0 %v2446
        %v3376 = vpop.f32.mrf.mxu0
        %v3377 = vadd.f32 %v2615, %v3376
        %v3378 = vpop.f32.mrf.mxu0
        %v3379 = vadd.f32 %v2619, %v3378
        %v3380 = vpop.f32.mrf.mxu0
        %v3381 = vadd.f32 %v2615, %v3380
        %v3382 = vpop.f32.mrf.mxu0
        %v3383 = vadd.f32 %v2619, %v3382
        %3384 = vmatprep.mubr.bf16.mxu0 %v2451
        %3385 = vmatmul.mubr.bf16.gmra.mxu0 %v2450
        %v3386 = vpop.f32.mrf.mxu0
        %v3387 = vadd.f32 %v2615, %v3386
        %v3388 = vpop.f32.mrf.mxu0
        %v3389 = vadd.f32 %v2619, %v3388
        %v3390 = vpop.f32.mrf.mxu0
        %v3391 = vadd.f32 %v2615, %v3390
        %v3392 = vpop.f32.mrf.mxu0
        %v3393 = vadd.f32 %v2619, %v3392
        %3394 = vmatprep.mubr.bf16.mxu0 %v2455
        %3395 = vmatmul.mubr.bf16.gmra.mxu0 %v2454
        %v3396 = vpop.f32.mrf.mxu0
        %v3397 = vadd.f32 %v2615, %v3396
        %v3398 = vpop.f32.mrf.mxu0
        %v3399 = vadd.f32 %v2619, %v3398
        %v3400 = vpop.f32.mrf.mxu0
        %v3401 = vadd.f32 %v2615, %v3400
        %v3402 = vpop.f32.mrf.mxu0
        %v3403 = vadd.f32 %v2619, %v3402
        %3404 = vmatprep.mubr.bf16.mxu0 %v2459
        %3405 = vmatmul.mubr.bf16.gmra.mxu0 %v2458
        %v3406 = vpop.f32.mrf.mxu0
        %v3407 = vadd.f32 %v2615, %v3406
        %v3408 = vpop.f32.mrf.mxu0
        %v3409 = vadd.f32 %v2619, %v3408
        %v3410 = vpop.f32.mrf.mxu0
        %v3411 = vadd.f32 %v2615, %v3410
        %v3412 = vpop.f32.mrf.mxu0
        %v3413 = vadd.f32 %v2619, %v3412
        %3414 = vmatprep.mubr.bf16.mxu0 %v2463
        %3415 = vmatmul.mubr.bf16.gmra.mxu0 %v2462
        %v3416 = vpop.f32.mrf.mxu0
        %v3417 = vadd.f32 %v2615, %v3416
        %v3418 = vpop.f32.mrf.mxu0
        %v3419 = vadd.f32 %v2619, %v3418
        %v3420 = vpop.f32.mrf.mxu0
        %v3421 = vadd.f32 %v2615, %v3420
        %v3422 = vpop.f32.mrf.mxu0
        %v3423 = vadd.f32 %v2619, %v3422
        %3424 = vmatprep.mubr.bf16.mxu0 %v2467
        %3425 = vmatmul.mubr.bf16.gmra.mxu0 %v2466
        %v3426 = vpop.f32.mrf.mxu0
        %v3427 = vadd.f32 %v2615, %v3426
        %v3428 = vpop.f32.mrf.mxu0
        %v3429 = vadd.f32 %v2619, %v3428
        %v3430 = vpop.f32.mrf.mxu0
        %v3431 = vadd.f32 %v2615, %v3430
        %v3432 = vpop.f32.mrf.mxu0
        %v3433 = vadd.f32 %v2619, %v3432
        %3434 = vmatprep.mubr.bf16.mxu0 %v2471
        %3435 = vmatmul.mubr.bf16.gmra.mxu0 %v2470
        %v3436 = vpop.f32.mrf.mxu0
        %v3437 = vadd.f32 %v2615, %v3436
        %v3438 = vpop.f32.mrf.mxu0
        %v3439 = vadd.f32 %v2619, %v3438
        %v3440 = vpop.f32.mrf.mxu0
        %v3441 = vadd.f32 %v2615, %v3440
        %v3442 = vpop.f32.mrf.mxu0
        %v3443 = vadd.f32 %v2619, %v3442
        %3444 = vmatprep.mubr.bf16.mxu0 %v2475
        %3445 = vmatmul.mubr.bf16.gmra.mxu0 %v2474
        %v3446 = vpop.f32.mrf.mxu0
        %v3447 = vadd.f32 %v2615, %v3446
        %v3448 = vpop.f32.mrf.mxu0
        %v3449 = vadd.f32 %v2619, %v3448
        %v3450 = vpop.f32.mrf.mxu0
        %v3451 = vadd.f32 %v2615, %v3450
        %v3452 = vpop.f32.mrf.mxu0
        %v3453 = vadd.f32 %v2619, %v3452
        %3454 = vmatprep.mubr.bf16.mxu0 %v2479
        %3455 = vmatmul.mubr.bf16.gmra.mxu0 %v2478
        %v3456 = vpop.f32.mrf.mxu0
        %v3457 = vadd.f32 %v2615, %v3456
        %v3458 = vpop.f32.mrf.mxu0
        %v3459 = vadd.f32 %v2619, %v3458
        %v3460 = vpop.f32.mrf.mxu0
        %v3461 = vadd.f32 %v2615, %v3460
        %v3462 = vpop.f32.mrf.mxu0
        %v3463 = vadd.f32 %v2619, %v3462
        %3464 = vdwg.mxu0
        %3465 = vmatprep.subr.bf16.mxu0 %v3109
        %3466 = vmatpush1.bf16.msra.mxu0 %v3108
        %3467 = vmatprep.subr.bf16.mxu0 %v3105
        %3468 = vmatpush1.bf16.msra.mxu0 %v3104
        %3469 = vmatprep.subr.bf16.mxu0 %v3101
        %3470 = vmatpush1.bf16.msra.mxu0 %v3100
        %3471 = vmatprep.subr.bf16.mxu0 %v3097
        %3472 = vmatpush1.bf16.msra.mxu0 %v3096
        %3473 = vmatprep.subr.bf16.mxu0 %v3093
        %3474 = vmatpush1.bf16.msra.mxu0 %v3092
        %3475 = vmatprep.subr.bf16.mxu0 %v3089
        %3476 = vmatpush1.bf16.msra.mxu0 %v3088
        %3477 = vmatprep.subr.bf16.mxu0 %v3085
        %3478 = vmatpush1.bf16.msra.mxu0 %v3084
        %3479 = vmatprep.subr.bf16.mxu0 %v3081
        %3480 = vmatpush1.bf16.msra.mxu0 %v3080
        %3481 = vmatprep.subr.bf16.mxu0 %v3141
        %3482 = vmatpush2.bf16.msra.mxu0 %v3140
        %3483 = vmatprep.subr.bf16.mxu0 %v3137
        %3484 = vmatpush2.bf16.msra.mxu0 %v3136
        %3485 = vmatprep.subr.bf16.mxu0 %v3133
        %3486 = vmatpush2.bf16.msra.mxu0 %v3132
        %3487 = vmatprep.subr.bf16.mxu0 %v3129
        %3488 = vmatpush2.bf16.msra.mxu0 %v3128
        %3489 = vmatprep.subr.bf16.mxu0 %v3125
        %3490 = vmatpush2.bf16.msra.mxu0 %v3124
        %3491 = vmatprep.subr.bf16.mxu0 %v3121
        %3492 = vmatpush2.bf16.msra.mxu0 %v3120
        %3493 = vmatprep.subr.bf16.mxu0 %v3117
        %3494 = vmatpush2.bf16.msra.mxu0 %v3116
        %3495 = vmatprep.subr.bf16.mxu0 %v3113
        %3496 = vmatpush2.bf16.msra.mxu0 %v3112
        %3497 = vmatprep.mubr.bf16.mxu0 %v2421
        %3498 = vmatmul.mubr.bf16.gmra.mxu0 %v2420
        %v3499 = vpop.f32.mrf.mxu0
        %v3500 = vadd.f32 %v3307, %v3499
        %v3501 = vpop.f32.mrf.mxu0
        %v3502 = vadd.f32 %v3309, %v3501
        %v3503 = vpop.f32.mrf.mxu0
        %v3504 = vadd.f32 %v3311, %v3503
        %v3505 = vpop.f32.mrf.mxu0
        %v3506 = vadd.f32 %v3313, %v3505
        %3507 = vmatprep.mubr.bf16.mxu0 %v2425
        %3508 = vmatmul.mubr.bf16.gmra.mxu0 %v2424
        %v3509 = vpop.f32.mrf.mxu0
        %v3510 = vadd.f32 %v3317, %v3509
        %v3511 = vpop.f32.mrf.mxu0
        %v3512 = vadd.f32 %v3319, %v3511
        %v3513 = vpop.f32.mrf.mxu0
        %v3514 = vadd.f32 %v3321, %v3513
        %v3515 = vpop.f32.mrf.mxu0
        %v3516 = vadd.f32 %v3323, %v3515
        %3517 = vmatprep.mubr.bf16.mxu0 %v2429
        %3518 = vmatmul.mubr.bf16.gmra.mxu0 %v2428
        %v3519 = vpop.f32.mrf.mxu0
        %v3520 = vadd.f32 %v3327, %v3519
        %v3521 = vpop.f32.mrf.mxu0
        %v3522 = vadd.f32 %v3329, %v3521
        %v3523 = vpop.f32.mrf.mxu0
        %v3524 = vadd.f32 %v3331, %v3523
        %v3525 = vpop.f32.mrf.mxu0
        %v3526 = vadd.f32 %v3333, %v3525
        %3527 = vmatprep.mubr.bf16.mxu0 %v2433
        %3528 = vmatmul.mubr.bf16.gmra.mxu0 %v2432
        %v3529 = vpop.f32.mrf.mxu0
        %v3530 = vadd.f32 %v3337, %v3529
        %v3531 = vpop.f32.mrf.mxu0
        %v3532 = vadd.f32 %v3339, %v3531
        %v3533 = vpop.f32.mrf.mxu0
        %v3534 = vadd.f32 %v3341, %v3533
        %v3535 = vpop.f32.mrf.mxu0
        %v3536 = vadd.f32 %v3343, %v3535
        %3537 = vmatprep.mubr.bf16.mxu0 %v2437
        %3538 = vmatmul.mubr.bf16.gmra.mxu0 %v2436
        %v3539 = vpop.f32.mrf.mxu0
        %v3540 = vadd.f32 %v3347, %v3539
        %v3541 = vpop.f32.mrf.mxu0
        %v3542 = vadd.f32 %v3349, %v3541
        %v3543 = vpop.f32.mrf.mxu0
        %v3544 = vadd.f32 %v3351, %v3543
        %v3545 = vpop.f32.mrf.mxu0
        %v3546 = vadd.f32 %v3353, %v3545
        %3547 = vmatprep.mubr.bf16.mxu0 %v2441
        %3548 = vmatmul.mubr.bf16.gmra.mxu0 %v2440
        %v3549 = vpop.f32.mrf.mxu0
        %v3550 = vadd.f32 %v3357, %v3549
        %v3551 = vpop.f32.mrf.mxu0
        %v3552 = vadd.f32 %v3359, %v3551
        %v3553 = vpop.f32.mrf.mxu0
        %v3554 = vadd.f32 %v3361, %v3553
        %v3555 = vpop.f32.mrf.mxu0
        %v3556 = vadd.f32 %v3363, %v3555
        %3557 = vmatprep.mubr.bf16.mxu0 %v2445
        %3558 = vmatmul.mubr.bf16.gmra.mxu0 %v2444
        %v3559 = vpop.f32.mrf.mxu0
        %v3560 = vadd.f32 %v3367, %v3559
        %v3561 = vpop.f32.mrf.mxu0
        %v3562 = vadd.f32 %v3369, %v3561
        %v3563 = vpop.f32.mrf.mxu0
        %v3564 = vadd.f32 %v3371, %v3563
        %v3565 = vpop.f32.mrf.mxu0
        %v3566 = vadd.f32 %v3373, %v3565
        %3567 = vmatprep.mubr.bf16.mxu0 %v2449
        %3568 = vmatmul.mubr.bf16.gmra.mxu0 %v2448
        %v3569 = vpop.f32.mrf.mxu0
        %v3570 = vadd.f32 %v3377, %v3569
        %v3571 = vpop.f32.mrf.mxu0
        %v3572 = vadd.f32 %v3379, %v3571
        %v3573 = vpop.f32.mrf.mxu0
        %v3574 = vadd.f32 %v3381, %v3573
        %v3575 = vpop.f32.mrf.mxu0
        %v3576 = vadd.f32 %v3383, %v3575
        %3577 = vmatprep.mubr.bf16.mxu0 %v2453
        %3578 = vmatmul.mubr.bf16.gmra.mxu0 %v2452
        %v3579 = vpop.f32.mrf.mxu0
        %v3580 = vadd.f32 %v3387, %v3579
        %v3581 = vpop.f32.mrf.mxu0
        %v3582 = vadd.f32 %v3389, %v3581
        %v3583 = vpop.f32.mrf.mxu0
        %v3584 = vadd.f32 %v3391, %v3583
        %v3585 = vpop.f32.mrf.mxu0
        %v3586 = vadd.f32 %v3393, %v3585
        %3587 = vmatprep.mubr.bf16.mxu0 %v2457
        %3588 = vmatmul.mubr.bf16.gmra.mxu0 %v2456
        %v3589 = vpop.f32.mrf.mxu0
        %v3590 = vadd.f32 %v3397, %v3589
        %v3591 = vpop.f32.mrf.mxu0
        %v3592 = vadd.f32 %v3399, %v3591
        %v3593 = vpop.f32.mrf.mxu0
        %v3594 = vadd.f32 %v3401, %v3593
        %v3595 = vpop.f32.mrf.mxu0
        %v3596 = vadd.f32 %v3403, %v3595
        %3597 = vmatprep.mubr.bf16.mxu0 %v2461
        %3598 = vmatmul.mubr.bf16.gmra.mxu0 %v2460
        %v3599 = vpop.f32.mrf.mxu0
        %v3600 = vadd.f32 %v3407, %v3599
        %v3601 = vpop.f32.mrf.mxu0
        %v3602 = vadd.f32 %v3409, %v3601
        %v3603 = vpop.f32.mrf.mxu0
        %v3604 = vadd.f32 %v3411, %v3603
        %v3605 = vpop.f32.mrf.mxu0
        %v3606 = vadd.f32 %v3413, %v3605
        %3607 = vmatprep.mubr.bf16.mxu0 %v2465
        %3608 = vmatmul.mubr.bf16.gmra.mxu0 %v2464
        %v3609 = vpop.f32.mrf.mxu0
        %v3610 = vadd.f32 %v3417, %v3609
        %v3611 = vpop.f32.mrf.mxu0
        %v3612 = vadd.f32 %v3419, %v3611
        %v3613 = vpop.f32.mrf.mxu0
        %v3614 = vadd.f32 %v3421, %v3613
        %v3615 = vpop.f32.mrf.mxu0
        %v3616 = vadd.f32 %v3423, %v3615
        %3617 = vmatprep.mubr.bf16.mxu0 %v2469
        %3618 = vmatmul.mubr.bf16.gmra.mxu0 %v2468
        %v3619 = vpop.f32.mrf.mxu0
        %v3620 = vadd.f32 %v3427, %v3619
        %v3621 = vpop.f32.mrf.mxu0
        %v3622 = vadd.f32 %v3429, %v3621
        %v3623 = vpop.f32.mrf.mxu0
        %v3624 = vadd.f32 %v3431, %v3623
        %v3625 = vpop.f32.mrf.mxu0
        %v3626 = vadd.f32 %v3433, %v3625
        %3627 = vmatprep.mubr.bf16.mxu0 %v2473
        %3628 = vmatmul.mubr.bf16.gmra.mxu0 %v2472
        %v3629 = vpop.f32.mrf.mxu0
        %v3630 = vadd.f32 %v3437, %v3629
        %v3631 = vpop.f32.mrf.mxu0
        %v3632 = vadd.f32 %v3439, %v3631
        %v3633 = vpop.f32.mrf.mxu0
        %v3634 = vadd.f32 %v3441, %v3633
        %v3635 = vpop.f32.mrf.mxu0
        %v3636 = vadd.f32 %v3443, %v3635
        %3637 = vmatprep.mubr.bf16.mxu0 %v2477
        %3638 = vmatmul.mubr.bf16.gmra.mxu0 %v2476
        %v3639 = vpop.f32.mrf.mxu0
        %v3640 = vadd.f32 %v3447, %v3639
        %v3641 = vpop.f32.mrf.mxu0
        %v3642 = vadd.f32 %v3449, %v3641
        %v3643 = vpop.f32.mrf.mxu0
        %v3644 = vadd.f32 %v3451, %v3643
        %v3645 = vpop.f32.mrf.mxu0
        %v3646 = vadd.f32 %v3453, %v3645
        %3647 = vmatprep.mubr.bf16.mxu0 %v2481
        %3648 = vmatmul.mubr.bf16.gmra.mxu0 %v2480
        %v3649 = vpop.f32.mrf.mxu0
        %v3650 = vadd.f32 %v3457, %v3649
        %v3651 = vpop.f32.mrf.mxu0
        %v3652 = vadd.f32 %v3459, %v3651
        %v3653 = vpop.f32.mrf.mxu0
        %v3654 = vadd.f32 %v3461, %v3653
        %v3655 = vpop.f32.mrf.mxu0
        %v3656 = vadd.f32 %v3463, %v3655
        %3657 = vdwg.mxu0
        %3658 = vmatprep.subr.bf16.mxu0 %v3047
        %3659 = vmatpush1.bf16.msra.mxu0 %v3046
        %3660 = vmatprep.subr.bf16.mxu0 %v3043
        %3661 = vmatpush1.bf16.msra.mxu0 %v3042
        %3662 = vmatprep.subr.bf16.mxu0 %v3039
        %3663 = vmatpush1.bf16.msra.mxu0 %v3038
        %3664 = vmatprep.subr.bf16.mxu0 %v3035
        %3665 = vmatpush1.bf16.msra.mxu0 %v3034
        %3666 = vmatprep.subr.bf16.mxu0 %v3031
        %3667 = vmatpush1.bf16.msra.mxu0 %v3030
        %3668 = vmatprep.subr.bf16.mxu0 %v3027
        %3669 = vmatpush1.bf16.msra.mxu0 %v3026
        %3670 = vmatprep.subr.bf16.mxu0 %v3023
        %3671 = vmatpush1.bf16.msra.mxu0 %v3022
        %3672 = vmatprep.subr.bf16.mxu0 %v3019
        %3673 = vmatpush1.bf16.msra.mxu0 %v3018
        %3674 = vmatprep.subr.bf16.mxu0 %v3079
        %3675 = vmatpush2.bf16.msra.mxu0 %v3078
        %3676 = vmatprep.subr.bf16.mxu0 %v3075
        %3677 = vmatpush2.bf16.msra.mxu0 %v3074
        %3678 = vmatprep.subr.bf16.mxu0 %v3071
        %3679 = vmatpush2.bf16.msra.mxu0 %v3070
        %3680 = vmatprep.subr.bf16.mxu0 %v3067
        %3681 = vmatpush2.bf16.msra.mxu0 %v3066
        %3682 = vmatprep.subr.bf16.mxu0 %v3063
        %3683 = vmatpush2.bf16.msra.mxu0 %v3062
        %3684 = vmatprep.subr.bf16.mxu0 %v3059
        %3685 = vmatpush2.bf16.msra.mxu0 %v3058
        %3686 = vmatprep.subr.bf16.mxu0 %v3055
        %3687 = vmatpush2.bf16.msra.mxu0 %v3054
        %3688 = vmatprep.subr.bf16.mxu0 %v3051
        %3689 = vmatpush2.bf16.msra.mxu0 %v3050
        %3690 = vmatprep.mubr.bf16.mxu0 %v2419
        %3691 = vmatmul.mubr.bf16.gmra.mxu0 %v2418
        %v3692 = vpop.f32.mrf.mxu0
        %v3693 = vadd.f32 %v2623, %v3692
        %v3694 = vpop.f32.mrf.mxu0
        %v3695 = vadd.f32 %v2627, %v3694
        %v3696 = vpop.f32.mrf.mxu0
        %v3697 = vadd.f32 %v2623, %v3696
        %v3698 = vpop.f32.mrf.mxu0
        %v3699 = vadd.f32 %v2627, %v3698
        %3700 = vmatprep.mubr.bf16.mxu0 %v2423
        %3701 = vmatmul.mubr.bf16.gmra.mxu0 %v2422
        %v3702 = vpop.f32.mrf.mxu0
        %v3703 = vadd.f32 %v2623, %v3702
        %v3704 = vpop.f32.mrf.mxu0
        %v3705 = vadd.f32 %v2627, %v3704
        %v3706 = vpop.f32.mrf.mxu0
        %v3707 = vadd.f32 %v2623, %v3706
        %v3708 = vpop.f32.mrf.mxu0
        %v3709 = vadd.f32 %v2627, %v3708
        %3710 = vmatprep.mubr.bf16.mxu0 %v2427
        %3711 = vmatmul.mubr.bf16.gmra.mxu0 %v2426
        %v3712 = vpop.f32.mrf.mxu0
        %v3713 = vadd.f32 %v2623, %v3712
        %v3714 = vpop.f32.mrf.mxu0
        %v3715 = vadd.f32 %v2627, %v3714
        %v3716 = vpop.f32.mrf.mxu0
        %v3717 = vadd.f32 %v2623, %v3716
        %v3718 = vpop.f32.mrf.mxu0
        %v3719 = vadd.f32 %v2627, %v3718
        %3720 = vmatprep.mubr.bf16.mxu0 %v2431
        %3721 = vmatmul.mubr.bf16.gmra.mxu0 %v2430
        %v3722 = vpop.f32.mrf.mxu0
        %v3723 = vadd.f32 %v2623, %v3722
        %v3724 = vpop.f32.mrf.mxu0
        %v3725 = vadd.f32 %v2627, %v3724
        %v3726 = vpop.f32.mrf.mxu0
        %v3727 = vadd.f32 %v2623, %v3726
        %v3728 = vpop.f32.mrf.mxu0
        %v3729 = vadd.f32 %v2627, %v3728
        %3730 = vmatprep.mubr.bf16.mxu0 %v2435
        %3731 = vmatmul.mubr.bf16.gmra.mxu0 %v2434
        %v3732 = vpop.f32.mrf.mxu0
        %v3733 = vadd.f32 %v2623, %v3732
        %v3734 = vpop.f32.mrf.mxu0
        %v3735 = vadd.f32 %v2627, %v3734
        %v3736 = vpop.f32.mrf.mxu0
        %v3737 = vadd.f32 %v2623, %v3736
        %v3738 = vpop.f32.mrf.mxu0
        %v3739 = vadd.f32 %v2627, %v3738
        %3740 = vmatprep.mubr.bf16.mxu0 %v2439
        %3741 = vmatmul.mubr.bf16.gmra.mxu0 %v2438
        %v3742 = vpop.f32.mrf.mxu0
        %v3743 = vadd.f32 %v2623, %v3742
        %v3744 = vpop.f32.mrf.mxu0
        %v3745 = vadd.f32 %v2627, %v3744
        %v3746 = vpop.f32.mrf.mxu0
        %v3747 = vadd.f32 %v2623, %v3746
        %v3748 = vpop.f32.mrf.mxu0
        %v3749 = vadd.f32 %v2627, %v3748
        %3750 = vmatprep.mubr.bf16.mxu0 %v2443
        %3751 = vmatmul.mubr.bf16.gmra.mxu0 %v2442
        %v3752 = vpop.f32.mrf.mxu0
        %v3753 = vadd.f32 %v2623, %v3752
        %v3754 = vpop.f32.mrf.mxu0
        %v3755 = vadd.f32 %v2627, %v3754
        %v3756 = vpop.f32.mrf.mxu0
        %v3757 = vadd.f32 %v2623, %v3756
        %v3758 = vpop.f32.mrf.mxu0
        %v3759 = vadd.f32 %v2627, %v3758
        %3760 = vmatprep.mubr.bf16.mxu0 %v2447
        %3761 = vmatmul.mubr.bf16.gmra.mxu0 %v2446
        %v3762 = vpop.f32.mrf.mxu0
        %v3763 = vadd.f32 %v2623, %v3762
        %v3764 = vpop.f32.mrf.mxu0
        %v3765 = vadd.f32 %v2627, %v3764
        %v3766 = vpop.f32.mrf.mxu0
        %v3767 = vadd.f32 %v2623, %v3766
        %v3768 = vpop.f32.mrf.mxu0
        %v3769 = vadd.f32 %v2627, %v3768
        %3770 = vmatprep.mubr.bf16.mxu0 %v2451
        %3771 = vmatmul.mubr.bf16.gmra.mxu0 %v2450
        %v3772 = vpop.f32.mrf.mxu0
        %v3773 = vadd.f32 %v2623, %v3772
        %v3774 = vpop.f32.mrf.mxu0
        %v3775 = vadd.f32 %v2627, %v3774
        %v3776 = vpop.f32.mrf.mxu0
        %v3777 = vadd.f32 %v2623, %v3776
        %v3778 = vpop.f32.mrf.mxu0
        %v3779 = vadd.f32 %v2627, %v3778
        %3780 = vmatprep.mubr.bf16.mxu0 %v2455
        %3781 = vmatmul.mubr.bf16.gmra.mxu0 %v2454
        %v3782 = vpop.f32.mrf.mxu0
        %v3783 = vadd.f32 %v2623, %v3782
        %v3784 = vpop.f32.mrf.mxu0
        %v3785 = vadd.f32 %v2627, %v3784
        %v3786 = vpop.f32.mrf.mxu0
        %v3787 = vadd.f32 %v2623, %v3786
        %v3788 = vpop.f32.mrf.mxu0
        %v3789 = vadd.f32 %v2627, %v3788
        %3790 = vmatprep.mubr.bf16.mxu0 %v2459
        %3791 = vmatmul.mubr.bf16.gmra.mxu0 %v2458
        %v3792 = vpop.f32.mrf.mxu0
        %v3793 = vadd.f32 %v2623, %v3792
        %v3794 = vpop.f32.mrf.mxu0
        %v3795 = vadd.f32 %v2627, %v3794
        %v3796 = vpop.f32.mrf.mxu0
        %v3797 = vadd.f32 %v2623, %v3796
        %v3798 = vpop.f32.mrf.mxu0
        %v3799 = vadd.f32 %v2627, %v3798
        %3800 = vmatprep.mubr.bf16.mxu0 %v2463
        %3801 = vmatmul.mubr.bf16.gmra.mxu0 %v2462
        %v3802 = vpop.f32.mrf.mxu0
        %v3803 = vadd.f32 %v2623, %v3802
        %v3804 = vpop.f32.mrf.mxu0
        %v3805 = vadd.f32 %v2627, %v3804
        %v3806 = vpop.f32.mrf.mxu0
        %v3807 = vadd.f32 %v2623, %v3806
        %v3808 = vpop.f32.mrf.mxu0
        %v3809 = vadd.f32 %v2627, %v3808
        %3810 = vmatprep.mubr.bf16.mxu0 %v2467
        %3811 = vmatmul.mubr.bf16.gmra.mxu0 %v2466
        %v3812 = vpop.f32.mrf.mxu0
        %v3813 = vadd.f32 %v2623, %v3812
        %v3814 = vpop.f32.mrf.mxu0
        %v3815 = vadd.f32 %v2627, %v3814
        %v3816 = vpop.f32.mrf.mxu0
        %v3817 = vadd.f32 %v2623, %v3816
        %v3818 = vpop.f32.mrf.mxu0
        %v3819 = vadd.f32 %v2627, %v3818
        %3820 = vmatprep.mubr.bf16.mxu0 %v2471
        %3821 = vmatmul.mubr.bf16.gmra.mxu0 %v2470
        %v3822 = vpop.f32.mrf.mxu0
        %v3823 = vadd.f32 %v2623, %v3822
        %v3824 = vpop.f32.mrf.mxu0
        %v3825 = vadd.f32 %v2627, %v3824
        %v3826 = vpop.f32.mrf.mxu0
        %v3827 = vadd.f32 %v2623, %v3826
        %v3828 = vpop.f32.mrf.mxu0
        %v3829 = vadd.f32 %v2627, %v3828
        %3830 = vmatprep.mubr.bf16.mxu0 %v2475
        %3831 = vmatmul.mubr.bf16.gmra.mxu0 %v2474
        %v3832 = vpop.f32.mrf.mxu0
        %v3833 = vadd.f32 %v2623, %v3832
        %v3834 = vpop.f32.mrf.mxu0
        %v3835 = vadd.f32 %v2627, %v3834
        %v3836 = vpop.f32.mrf.mxu0
        %v3837 = vadd.f32 %v2623, %v3836
        %v3838 = vpop.f32.mrf.mxu0
        %v3839 = vadd.f32 %v2627, %v3838
        %3840 = vmatprep.mubr.bf16.mxu0 %v2479
        %3841 = vmatmul.mubr.bf16.gmra.mxu0 %v2478
        %v3842 = vpop.f32.mrf.mxu0
        %v3843 = vadd.f32 %v2623, %v3842
        %v3844 = vpop.f32.mrf.mxu0
        %v3845 = vadd.f32 %v2627, %v3844
        %v3846 = vpop.f32.mrf.mxu0
        %v3847 = vadd.f32 %v2623, %v3846
        %v3848 = vpop.f32.mrf.mxu0
        %v3849 = vadd.f32 %v2627, %v3848
        %3850 = vdwg.mxu0
        %3851 = vmatprep.subr.bf16.mxu0 %v3111
        %3852 = vmatpush1.bf16.msra.mxu0 %v3110
        %3853 = vmatprep.subr.bf16.mxu0 %v3107
        %3854 = vmatpush1.bf16.msra.mxu0 %v3106
        %3855 = vmatprep.subr.bf16.mxu0 %v3103
        %3856 = vmatpush1.bf16.msra.mxu0 %v3102
        %3857 = vmatprep.subr.bf16.mxu0 %v3099
        %3858 = vmatpush1.bf16.msra.mxu0 %v3098
        %3859 = vmatprep.subr.bf16.mxu0 %v3095
        %3860 = vmatpush1.bf16.msra.mxu0 %v3094
        %3861 = vmatprep.subr.bf16.mxu0 %v3091
        %3862 = vmatpush1.bf16.msra.mxu0 %v3090
        %3863 = vmatprep.subr.bf16.mxu0 %v3087
        %3864 = vmatpush1.bf16.msra.mxu0 %v3086
        %3865 = vmatprep.subr.bf16.mxu0 %v3083
        %3866 = vmatpush1.bf16.msra.mxu0 %v3082
        %3867 = vmatprep.subr.bf16.mxu0 %v3143
        %3868 = vmatpush2.bf16.msra.mxu0 %v3142
        %3869 = vmatprep.subr.bf16.mxu0 %v3139
        %3870 = vmatpush2.bf16.msra.mxu0 %v3138
        %3871 = vmatprep.subr.bf16.mxu0 %v3135
        %3872 = vmatpush2.bf16.msra.mxu0 %v3134
        %3873 = vmatprep.subr.bf16.mxu0 %v3131
        %3874 = vmatpush2.bf16.msra.mxu0 %v3130
        %3875 = vmatprep.subr.bf16.mxu0 %v3127
        %3876 = vmatpush2.bf16.msra.mxu0 %v3126
        %3877 = vmatprep.subr.bf16.mxu0 %v3123
        %3878 = vmatpush2.bf16.msra.mxu0 %v3122
        %3879 = vmatprep.subr.bf16.mxu0 %v3119
        %3880 = vmatpush2.bf16.msra.mxu0 %v3118
        %3881 = vmatprep.subr.bf16.mxu0 %v3115
        %3882 = vmatpush2.bf16.msra.mxu0 %v3114
        %3883 = vmatprep.mubr.bf16.mxu0 %v2421
        %3884 = vmatmul.mubr.bf16.gmra.mxu0 %v2420
        %v3885 = vpop.f32.mrf.mxu0
        %v3886 = vadd.f32 %v3693, %v3885
        %v3887 = vpop.f32.mrf.mxu0
        %v3888 = vadd.f32 %v3695, %v3887
        %v3889 = vpop.f32.mrf.mxu0
        %v3890 = vadd.f32 %v3697, %v3889
        %v3891 = vpop.f32.mrf.mxu0
        %v3892 = vadd.f32 %v3699, %v3891
        %3893 = vmatprep.mubr.bf16.mxu0 %v2425
        %3894 = vmatmul.mubr.bf16.gmra.mxu0 %v2424
        %v3895 = vpop.f32.mrf.mxu0
        %v3896 = vadd.f32 %v3703, %v3895
        %v3897 = vpop.f32.mrf.mxu0
        %v3898 = vadd.f32 %v3705, %v3897
        %v3899 = vpop.f32.mrf.mxu0
        %v3900 = vadd.f32 %v3707, %v3899
        %v3901 = vpop.f32.mrf.mxu0
        %v3902 = vadd.f32 %v3709, %v3901
        %3903 = vmatprep.mubr.bf16.mxu0 %v2429
        %3904 = vmatmul.mubr.bf16.gmra.mxu0 %v2428
        %v3905 = vpop.f32.mrf.mxu0
        %v3906 = vadd.f32 %v3713, %v3905
        %v3907 = vpop.f32.mrf.mxu0
        %v3908 = vadd.f32 %v3715, %v3907
        %v3909 = vpop.f32.mrf.mxu0
        %v3910 = vadd.f32 %v3717, %v3909
        %v3911 = vpop.f32.mrf.mxu0
        %v3912 = vadd.f32 %v3719, %v3911
        %3913 = vmatprep.mubr.bf16.mxu0 %v2433
        %3914 = vmatmul.mubr.bf16.gmra.mxu0 %v2432
        %v3915 = vpop.f32.mrf.mxu0
        %v3916 = vadd.f32 %v3723, %v3915
        %v3917 = vpop.f32.mrf.mxu0
        %v3918 = vadd.f32 %v3725, %v3917
        %v3919 = vpop.f32.mrf.mxu0
        %v3920 = vadd.f32 %v3727, %v3919
        %v3921 = vpop.f32.mrf.mxu0
        %v3922 = vadd.f32 %v3729, %v3921
        %3923 = vmatprep.mubr.bf16.mxu0 %v2437
        %3924 = vmatmul.mubr.bf16.gmra.mxu0 %v2436
        %v3925 = vpop.f32.mrf.mxu0
        %v3926 = vadd.f32 %v3733, %v3925
        %v3927 = vpop.f32.mrf.mxu0
        %v3928 = vadd.f32 %v3735, %v3927
        %v3929 = vpop.f32.mrf.mxu0
        %v3930 = vadd.f32 %v3737, %v3929
        %v3931 = vpop.f32.mrf.mxu0
        %v3932 = vadd.f32 %v3739, %v3931
        %3933 = vmatprep.mubr.bf16.mxu0 %v2441
        %3934 = vmatmul.mubr.bf16.gmra.mxu0 %v2440
        %v3935 = vpop.f32.mrf.mxu0
        %v3936 = vadd.f32 %v3743, %v3935
        %v3937 = vpop.f32.mrf.mxu0
        %v3938 = vadd.f32 %v3745, %v3937
        %v3939 = vpop.f32.mrf.mxu0
        %v3940 = vadd.f32 %v3747, %v3939
        %v3941 = vpop.f32.mrf.mxu0
        %v3942 = vadd.f32 %v3749, %v3941
        %3943 = vmatprep.mubr.bf16.mxu0 %v2445
        %3944 = vmatmul.mubr.bf16.gmra.mxu0 %v2444
        %v3945 = vpop.f32.mrf.mxu0
        %v3946 = vadd.f32 %v3753, %v3945
        %v3947 = vpop.f32.mrf.mxu0
        %v3948 = vadd.f32 %v3755, %v3947
        %v3949 = vpop.f32.mrf.mxu0
        %v3950 = vadd.f32 %v3757, %v3949
        %v3951 = vpop.f32.mrf.mxu0
        %v3952 = vadd.f32 %v3759, %v3951
        %3953 = vmatprep.mubr.bf16.mxu0 %v2449
        %3954 = vmatmul.mubr.bf16.gmra.mxu0 %v2448
        %v3955 = vpop.f32.mrf.mxu0
        %v3956 = vadd.f32 %v3763, %v3955
        %v3957 = vpop.f32.mrf.mxu0
        %v3958 = vadd.f32 %v3765, %v3957
        %v3959 = vpop.f32.mrf.mxu0
        %v3960 = vadd.f32 %v3767, %v3959
        %v3961 = vpop.f32.mrf.mxu0
        %v3962 = vadd.f32 %v3769, %v3961
        %3963 = vmatprep.mubr.bf16.mxu0 %v2453
        %3964 = vmatmul.mubr.bf16.gmra.mxu0 %v2452
        %v3965 = vpop.f32.mrf.mxu0
        %v3966 = vadd.f32 %v3773, %v3965
        %v3967 = vpop.f32.mrf.mxu0
        %v3968 = vadd.f32 %v3775, %v3967
        %v3969 = vpop.f32.mrf.mxu0
        %v3970 = vadd.f32 %v3777, %v3969
        %v3971 = vpop.f32.mrf.mxu0
        %v3972 = vadd.f32 %v3779, %v3971
        %3973 = vmatprep.mubr.bf16.mxu0 %v2457
        %3974 = vmatmul.mubr.bf16.gmra.mxu0 %v2456
        %v3975 = vpop.f32.mrf.mxu0
        %v3976 = vadd.f32 %v3783, %v3975
        %v3977 = vpop.f32.mrf.mxu0
        %v3978 = vadd.f32 %v3785, %v3977
        %v3979 = vpop.f32.mrf.mxu0
        %v3980 = vadd.f32 %v3787, %v3979
        %v3981 = vpop.f32.mrf.mxu0
        %v3982 = vadd.f32 %v3789, %v3981
        %3983 = vmatprep.mubr.bf16.mxu0 %v2461
        %3984 = vmatmul.mubr.bf16.gmra.mxu0 %v2460
        %v3985 = vpop.f32.mrf.mxu0
        %v3986 = vadd.f32 %v3793, %v3985
        %v3987 = vpop.f32.mrf.mxu0
        %v3988 = vadd.f32 %v3795, %v3987
        %v3989 = vpop.f32.mrf.mxu0
        %v3990 = vadd.f32 %v3797, %v3989
        %v3991 = vpop.f32.mrf.mxu0
        %v3992 = vadd.f32 %v3799, %v3991
        %3993 = vmatprep.mubr.bf16.mxu0 %v2465
        %3994 = vmatmul.mubr.bf16.gmra.mxu0 %v2464
        %v3995 = vpop.f32.mrf.mxu0
        %v3996 = vadd.f32 %v3803, %v3995
        %v3997 = vpop.f32.mrf.mxu0
        %v3998 = vadd.f32 %v3805, %v3997
        %v3999 = vpop.f32.mrf.mxu0
        %v4000 = vadd.f32 %v3807, %v3999
        %v4001 = vpop.f32.mrf.mxu0
        %v4002 = vadd.f32 %v3809, %v4001
        %4003 = vmatprep.mubr.bf16.mxu0 %v2469
        %4004 = vmatmul.mubr.bf16.gmra.mxu0 %v2468
        %v4005 = vpop.f32.mrf.mxu0
        %v4006 = vadd.f32 %v3813, %v4005
        %v4007 = vpop.f32.mrf.mxu0
        %v4008 = vadd.f32 %v3815, %v4007
        %v4009 = vpop.f32.mrf.mxu0
        %v4010 = vadd.f32 %v3817, %v4009
        %v4011 = vpop.f32.mrf.mxu0
        %v4012 = vadd.f32 %v3819, %v4011
        %4013 = vmatprep.mubr.bf16.mxu0 %v2473
        %4014 = vmatmul.mubr.bf16.gmra.mxu0 %v2472
        %v4015 = vpop.f32.mrf.mxu0
        %v4016 = vadd.f32 %v3823, %v4015
        %v4017 = vpop.f32.mrf.mxu0
        %v4018 = vadd.f32 %v3825, %v4017
        %v4019 = vpop.f32.mrf.mxu0
        %v4020 = vadd.f32 %v3827, %v4019
        %v4021 = vpop.f32.mrf.mxu0
        %v4022 = vadd.f32 %v3829, %v4021
        %4023 = vmatprep.mubr.bf16.mxu0 %v2477
        %4024 = vmatmul.mubr.bf16.gmra.mxu0 %v2476
        %v4025 = vpop.f32.mrf.mxu0
        %v4026 = vadd.f32 %v3833, %v4025
        %v4027 = vpop.f32.mrf.mxu0
        %v4028 = vadd.f32 %v3835, %v4027
        %v4029 = vpop.f32.mrf.mxu0
        %v4030 = vadd.f32 %v3837, %v4029
        %v4031 = vpop.f32.mrf.mxu0
        %v4032 = vadd.f32 %v3839, %v4031
        %4033 = vmatprep.mubr.bf16.mxu0 %v2481
        %4034 = vmatmul.mubr.bf16.gmra.mxu0 %v2480
        %v4035 = vpop.f32.mrf.mxu0
        %v4036 = vadd.f32 %v3843, %v4035
        %v4037 = vpop.f32.mrf.mxu0
        %v4038 = vadd.f32 %v3845, %v4037
        %v4039 = vpop.f32.mrf.mxu0
        %v4040 = vadd.f32 %v3847, %v4039
        %v4041 = vpop.f32.mrf.mxu0
        %v4042 = vadd.f32 %v3849, %v4041
        %4043 = vdwg.mxu0
        %v4044 = vmax.f32 %v3500, 0.0
        %v4045 = vmax.f32 %v3502, 0.0
        %v4046 = vmax.f32 %v3886, 0.0
        %v4047 = vmax.f32 %v3888, 0.0
        %v4048 = vmax.f32 %v3504, 0.0
        %v4049 = vmax.f32 %v3506, 0.0
        %v4050 = vmax.f32 %v3890, 0.0
        %v4051 = vmax.f32 %v3892, 0.0
        %v4052 = vmax.f32 %v3510, 0.0
        %v4053 = vmax.f32 %v3512, 0.0
        %v4054 = vmax.f32 %v3896, 0.0
        %v4055 = vmax.f32 %v3898, 0.0
        %v4056 = vmax.f32 %v3514, 0.0
        %v4057 = vmax.f32 %v3516, 0.0
        %v4058 = vmax.f32 %v3900, 0.0
        %v4059 = vmax.f32 %v3902, 0.0
        %v4060 = vmax.f32 %v3520, 0.0
        %v4061 = vmax.f32 %v3522, 0.0
        %v4062 = vmax.f32 %v3906, 0.0
        %v4063 = vmax.f32 %v3908, 0.0
        %v4064 = vmax.f32 %v3524, 0.0
        %v4065 = vmax.f32 %v3526, 0.0
        %v4066 = vmax.f32 %v3910, 0.0
        %v4067 = vmax.f32 %v3912, 0.0
        %v4068 = vmax.f32 %v3530, 0.0
        %v4069 = vmax.f32 %v3532, 0.0
        %v4070 = vmax.f32 %v3916, 0.0
        %v4071 = vmax.f32 %v3918, 0.0
        %v4072 = vmax.f32 %v3534, 0.0
        %v4073 = vmax.f32 %v3536, 0.0
        %v4074 = vmax.f32 %v3920, 0.0
        %v4075 = vmax.f32 %v3922, 0.0
        %v4076 = vmax.f32 %v3540, 0.0
        %v4077 = vmax.f32 %v3542, 0.0
        %v4078 = vmax.f32 %v3926, 0.0
        %v4079 = vmax.f32 %v3928, 0.0
        %v4080 = vmax.f32 %v3544, 0.0
        %v4081 = vmax.f32 %v3546, 0.0
        %v4082 = vmax.f32 %v3930, 0.0
        %v4083 = vmax.f32 %v3932, 0.0
        %v4084 = vmax.f32 %v3550, 0.0
        %v4085 = vmax.f32 %v3552, 0.0
        %v4086 = vmax.f32 %v3936, 0.0
        %v4087 = vmax.f32 %v3938, 0.0
        %v4088 = vmax.f32 %v3554, 0.0
        %v4089 = vmax.f32 %v3556, 0.0
        %v4090 = vmax.f32 %v3940, 0.0
        %v4091 = vmax.f32 %v3942, 0.0
        %v4092 = vmax.f32 %v3560, 0.0
        %v4093 = vmax.f32 %v3562, 0.0
        %v4094 = vmax.f32 %v3946, 0.0
        %v4095 = vmax.f32 %v3948, 0.0
        %v4096 = vmax.f32 %v3564, 0.0
        %v4097 = vmax.f32 %v3566, 0.0
        %v4098 = vmax.f32 %v3950, 0.0
        %v4099 = vmax.f32 %v3952, 0.0
        %v4100 = vmax.f32 %v3570, 0.0
        %v4101 = vmax.f32 %v3572, 0.0
        %v4102 = vmax.f32 %v3956, 0.0
        %v4103 = vmax.f32 %v3958, 0.0
        %v4104 = vmax.f32 %v3574, 0.0
        %v4105 = vmax.f32 %v3576, 0.0
        %v4106 = vmax.f32 %v3960, 0.0
        %v4107 = vmax.f32 %v3962, 0.0
        %v4108 = vmax.f32 %v3580, 0.0
        %v4109 = vmax.f32 %v3582, 0.0
        %v4110 = vmax.f32 %v3966, 0.0
        %v4111 = vmax.f32 %v3968, 0.0
        %v4112 = vmax.f32 %v3584, 0.0
        %v4113 = vmax.f32 %v3586, 0.0
        %v4114 = vmax.f32 %v3970, 0.0
        %v4115 = vmax.f32 %v3972, 0.0
        %v4116 = vmax.f32 %v3590, 0.0
        %v4117 = vmax.f32 %v3592, 0.0
        %v4118 = vmax.f32 %v3976, 0.0
        %v4119 = vmax.f32 %v3978, 0.0
        %v4120 = vmax.f32 %v3594, 0.0
        %v4121 = vmax.f32 %v3596, 0.0
        %v4122 = vmax.f32 %v3980, 0.0
        %v4123 = vmax.f32 %v3982, 0.0
        %v4124 = vmax.f32 %v3600, 0.0
        %v4125 = vmax.f32 %v3602, 0.0
        %v4126 = vmax.f32 %v3986, 0.0
        %v4127 = vmax.f32 %v3988, 0.0
        %v4128 = vmax.f32 %v3604, 0.0
        %v4129 = vmax.f32 %v3606, 0.0
        %v4130 = vmax.f32 %v3990, 0.0
        %v4131 = vmax.f32 %v3992, 0.0
        %v4132 = vmax.f32 %v3610, 0.0
        %v4133 = vmax.f32 %v3612, 0.0
        %v4134 = vmax.f32 %v3996, 0.0
        %v4135 = vmax.f32 %v3998, 0.0
        %v4136 = vmax.f32 %v3614, 0.0
        %v4137 = vmax.f32 %v3616, 0.0
        %v4138 = vmax.f32 %v4000, 0.0
        %v4139 = vmax.f32 %v4002, 0.0
        %v4140 = vmax.f32 %v3620, 0.0
        %v4141 = vmax.f32 %v3622, 0.0
        %v4142 = vmax.f32 %v4006, 0.0
        %v4143 = vmax.f32 %v4008, 0.0
        %v4144 = vmax.f32 %v3624, 0.0
        %v4145 = vmax.f32 %v3626, 0.0
        %v4146 = vmax.f32 %v4010, 0.0
        %v4147 = vmax.f32 %v4012, 0.0
        %v4148 = vmax.f32 %v3630, 0.0
        %v4149 = vmax.f32 %v3632, 0.0
        %v4150 = vmax.f32 %v4016, 0.0
        %v4151 = vmax.f32 %v4018, 0.0
        %v4152 = vmax.f32 %v3634, 0.0
        %v4153 = vmax.f32 %v3636, 0.0
        %v4154 = vmax.f32 %v4020, 0.0
        %v4155 = vmax.f32 %v4022, 0.0
        %v4156 = vmax.f32 %v3640, 0.0
        %v4157 = vmax.f32 %v3642, 0.0
        %v4158 = vmax.f32 %v4026, 0.0
        %v4159 = vmax.f32 %v4028, 0.0
        %v4160 = vmax.f32 %v3644, 0.0
        %v4161 = vmax.f32 %v3646, 0.0
        %v4162 = vmax.f32 %v4030, 0.0
        %v4163 = vmax.f32 %v4032, 0.0
        %v4164 = vmax.f32 %v3650, 0.0
        %v4165 = vmax.f32 %v3652, 0.0
        %v4166 = vmax.f32 %v4036, 0.0
        %v4167 = vmax.f32 %v4038, 0.0
        %v4168 = vmax.f32 %v3654, 0.0
        %v4169 = vmax.f32 %v3656, 0.0
        %v4170 = vmax.f32 %v4040, 0.0
        %v4171 = vmax.f32 %v4042, 0.0
        %v4172 = vpack.c.bf16 %v4048, %v4044
        %v4173 = vpack.c.bf16 %v4049, %v4045
        %v4174 = vpack.c.bf16 %v4050, %v4046
        %v4175 = vpack.c.bf16 %v4051, %v4047
        %v4176 = vpack.c.bf16 %v4056, %v4052
        %v4177 = vpack.c.bf16 %v4057, %v4053
        %v4178 = vpack.c.bf16 %v4058, %v4054
        %v4179 = vpack.c.bf16 %v4059, %v4055
        %v4180 = vpack.c.bf16 %v4064, %v4060
        %v4181 = vpack.c.bf16 %v4065, %v4061
        %v4182 = vpack.c.bf16 %v4066, %v4062
        %v4183 = vpack.c.bf16 %v4067, %v4063
        %v4184 = vpack.c.bf16 %v4072, %v4068
        %v4185 = vpack.c.bf16 %v4073, %v4069
        %v4186 = vpack.c.bf16 %v4074, %v4070
        %v4187 = vpack.c.bf16 %v4075, %v4071
        %v4188 = vpack.c.bf16 %v4080, %v4076
        %v4189 = vpack.c.bf16 %v4081, %v4077
        %v4190 = vpack.c.bf16 %v4082, %v4078
        %v4191 = vpack.c.bf16 %v4083, %v4079
        %v4192 = vpack.c.bf16 %v4088, %v4084
        %v4193 = vpack.c.bf16 %v4089, %v4085
        %v4194 = vpack.c.bf16 %v4090, %v4086
        %v4195 = vpack.c.bf16 %v4091, %v4087
        %v4196 = vpack.c.bf16 %v4096, %v4092
        %v4197 = vpack.c.bf16 %v4097, %v4093
        %v4198 = vpack.c.bf16 %v4098, %v4094
        %v4199 = vpack.c.bf16 %v4099, %v4095
        %v4200 = vpack.c.bf16 %v4104, %v4100
        %v4201 = vpack.c.bf16 %v4105, %v4101
        %v4202 = vpack.c.bf16 %v4106, %v4102
        %v4203 = vpack.c.bf16 %v4107, %v4103
        %v4204 = vpack.c.bf16 %v4112, %v4108
        %v4205 = vpack.c.bf16 %v4113, %v4109
        %v4206 = vpack.c.bf16 %v4114, %v4110
        %v4207 = vpack.c.bf16 %v4115, %v4111
        %v4208 = vpack.c.bf16 %v4120, %v4116
        %v4209 = vpack.c.bf16 %v4121, %v4117
        %v4210 = vpack.c.bf16 %v4122, %v4118
        %v4211 = vpack.c.bf16 %v4123, %v4119
        %v4212 = vpack.c.bf16 %v4128, %v4124
        %v4213 = vpack.c.bf16 %v4129, %v4125
        %v4214 = vpack.c.bf16 %v4130, %v4126
        %v4215 = vpack.c.bf16 %v4131, %v4127
        %v4216 = vpack.c.bf16 %v4136, %v4132
        %v4217 = vpack.c.bf16 %v4137, %v4133
        %v4218 = vpack.c.bf16 %v4138, %v4134
        %v4219 = vpack.c.bf16 %v4139, %v4135
        %v4220 = vpack.c.bf16 %v4144, %v4140
        %v4221 = vpack.c.bf16 %v4145, %v4141
        %v4222 = vpack.c.bf16 %v4146, %v4142
        %v4223 = vpack.c.bf16 %v4147, %v4143
        %v4224 = vpack.c.bf16 %v4152, %v4148
        %v4225 = vpack.c.bf16 %v4153, %v4149
        %v4226 = vpack.c.bf16 %v4154, %v4150
        %v4227 = vpack.c.bf16 %v4155, %v4151
        %v4228 = vpack.c.bf16 %v4160, %v4156
        %v4229 = vpack.c.bf16 %v4161, %v4157
        %v4230 = vpack.c.bf16 %v4162, %v4158
        %v4231 = vpack.c.bf16 %v4163, %v4159
        %v4232 = vpack.c.bf16 %v4168, %v4164
        %v4233 = vpack.c.bf16 %v4169, %v4165
        %v4234 = vpack.c.bf16 %v4170, %v4166
        %v4235 = vpack.c.bf16 %v4171, %v4167
        %v4236 = vld [vmem:[#allocation10] sm:$0xff]
        %v4237 = vld [vmem:[#allocation10 + $0x8] sm:$0xff]
        %v4238 = vld [vmem:[#allocation10 + $0x10] sm:$0xff]
        %v4239 = vld [vmem:[#allocation10 + $0x18] sm:$0xff]
        %v4240 = vld [vmem:[#allocation10 + $0x20] sm:$0xff]
        %v4241 = vld [vmem:[#allocation10 + $0x28] sm:$0xff]
        %v4242 = vld [vmem:[#allocation10 + $0x30] sm:$0xff]
        %v4243 = vld [vmem:[#allocation10 + $0x38] sm:$0xff]
        %v4244 = vld [vmem:[#allocation10 + $0x40] sm:$0xff]
        %v4245 = vld [vmem:[#allocation10 + $0x48] sm:$0xff]
        %v4246 = vld [vmem:[#allocation10 + $0x50] sm:$0xff]
        %v4247 = vld [vmem:[#allocation10 + $0x58] sm:$0xff]
        %v4248 = vld [vmem:[#allocation10 + $0x60] sm:$0xff]
        %v4249 = vld [vmem:[#allocation10 + $0x68] sm:$0xff]
        %v4250 = vld [vmem:[#allocation10 + $0x70] sm:$0xff]
        %v4251 = vld [vmem:[#allocation10 + $0x78] sm:$0xff]
        %v4252 = vld [vmem:[#allocation10 + $0x80] sm:$0xff]
        %v4253 = vld [vmem:[#allocation10 + $0x88] sm:$0xff]
        %v4254 = vld [vmem:[#allocation10 + $0x90] sm:$0xff]
        %v4255 = vld [vmem:[#allocation10 + $0x98] sm:$0xff]
        %v4256 = vld [vmem:[#allocation10 + $0xa0] sm:$0xff]
        %v4257 = vld [vmem:[#allocation10 + $0xa8] sm:$0xff]
        %v4258 = vld [vmem:[#allocation10 + $0xb0] sm:$0xff]
        %v4259 = vld [vmem:[#allocation10 + $0xb8] sm:$0xff]
        %v4260 = vld [vmem:[#allocation10 + $0xc0] sm:$0xff]
        %v4261 = vld [vmem:[#allocation10 + $0xc8] sm:$0xff]
        %v4262 = vld [vmem:[#allocation10 + $0xd0] sm:$0xff]
        %v4263 = vld [vmem:[#allocation10 + $0xd8] sm:$0xff]
        %v4264 = vld [vmem:[#allocation10 + $0xe0] sm:$0xff]
        %v4265 = vld [vmem:[#allocation10 + $0xe8] sm:$0xff]
        %v4266 = vld [vmem:[#allocation10 + $0xf0] sm:$0xff]
        %v4267 = vld [vmem:[#allocation10 + $0xf8] sm:$0xff]
        %v4268 = vld [vmem:[#allocation10 + $0x100] sm:$0xff]
        %v4269 = vld [vmem:[#allocation10 + $0x108] sm:$0xff]
        %v4270 = vld [vmem:[#allocation10 + $0x110] sm:$0xff]
        %v4271 = vld [vmem:[#allocation10 + $0x118] sm:$0xff]
        %v4272 = vld [vmem:[#allocation10 + $0x120] sm:$0xff]
        %v4273 = vld [vmem:[#allocation10 + $0x128] sm:$0xff]
        %v4274 = vld [vmem:[#allocation10 + $0x130] sm:$0xff]
        %v4275 = vld [vmem:[#allocation10 + $0x138] sm:$0xff]
        %v4276 = vld [vmem:[#allocation10 + $0x140] sm:$0xff]
        %v4277 = vld [vmem:[#allocation10 + $0x148] sm:$0xff]
        %v4278 = vld [vmem:[#allocation10 + $0x150] sm:$0xff]
        %v4279 = vld [vmem:[#allocation10 + $0x158] sm:$0xff]
        %v4280 = vld [vmem:[#allocation10 + $0x160] sm:$0xff]
        %v4281 = vld [vmem:[#allocation10 + $0x168] sm:$0xff]
        %v4282 = vld [vmem:[#allocation10 + $0x170] sm:$0xff]
        %v4283 = vld [vmem:[#allocation10 + $0x178] sm:$0xff]
        %v4284 = vld [vmem:[#allocation10 + $0x180] sm:$0xff]
        %v4285 = vld [vmem:[#allocation10 + $0x188] sm:$0xff]
        %v4286 = vld [vmem:[#allocation10 + $0x190] sm:$0xff]
        %v4287 = vld [vmem:[#allocation10 + $0x198] sm:$0xff]
        %v4288 = vld [vmem:[#allocation10 + $0x1a0] sm:$0xff]
        %v4289 = vld [vmem:[#allocation10 + $0x1a8] sm:$0xff]
        %v4290 = vld [vmem:[#allocation10 + $0x1b0] sm:$0xff]
        %v4291 = vld [vmem:[#allocation10 + $0x1b8] sm:$0xff]
        %v4292 = vld [vmem:[#allocation10 + $0x1c0] sm:$0xff]
        %v4293 = vld [vmem:[#allocation10 + $0x1c8] sm:$0xff]
        %v4294 = vld [vmem:[#allocation10 + $0x1d0] sm:$0xff]
        %v4295 = vld [vmem:[#allocation10 + $0x1d8] sm:$0xff]
        %v4296 = vld [vmem:[#allocation10 + $0x1e0] sm:$0xff]
        %v4297 = vld [vmem:[#allocation10 + $0x1e8] sm:$0xff]
        %v4298 = vld [vmem:[#allocation10 + $0x1f0] sm:$0xff]
        %v4299 = vld [vmem:[#allocation10 + $0x1f8] sm:$0xff]
        %v4300 = vld [vmem:[#allocation10 + $0x200] sm:$0xff]
        %v4301 = vld [vmem:[#allocation10 + $0x208] sm:$0xff]
        %v4302 = vld [vmem:[#allocation10 + $0x210] sm:$0xff]
        %v4303 = vld [vmem:[#allocation10 + $0x218] sm:$0xff]
        %v4304 = vld [vmem:[#allocation10 + $0x220] sm:$0xff]
        %v4305 = vld [vmem:[#allocation10 + $0x228] sm:$0xff]
        %v4306 = vld [vmem:[#allocation10 + $0x230] sm:$0xff]
        %v4307 = vld [vmem:[#allocation10 + $0x238] sm:$0xff]
        %v4308 = vld [vmem:[#allocation10 + $0x240] sm:$0xff]
        %v4309 = vld [vmem:[#allocation10 + $0x248] sm:$0xff]
        %v4310 = vld [vmem:[#allocation10 + $0x250] sm:$0xff]
        %v4311 = vld [vmem:[#allocation10 + $0x258] sm:$0xff]
        %v4312 = vld [vmem:[#allocation10 + $0x260] sm:$0xff]
        %v4313 = vld [vmem:[#allocation10 + $0x268] sm:$0xff]
        %v4314 = vld [vmem:[#allocation10 + $0x270] sm:$0xff]
        %v4315 = vld [vmem:[#allocation10 + $0x278] sm:$0xff]
        %v4316 = vld [vmem:[#allocation10 + $0x280] sm:$0xff]
        %v4317 = vld [vmem:[#allocation10 + $0x288] sm:$0xff]
        %v4318 = vld [vmem:[#allocation10 + $0x290] sm:$0xff]
        %v4319 = vld [vmem:[#allocation10 + $0x298] sm:$0xff]
        %v4320 = vld [vmem:[#allocation10 + $0x2a0] sm:$0xff]
        %v4321 = vld [vmem:[#allocation10 + $0x2a8] sm:$0xff]
        %v4322 = vld [vmem:[#allocation10 + $0x2b0] sm:$0xff]
        %v4323 = vld [vmem:[#allocation10 + $0x2b8] sm:$0xff]
        %v4324 = vld [vmem:[#allocation10 + $0x2c0] sm:$0xff]
        %v4325 = vld [vmem:[#allocation10 + $0x2c8] sm:$0xff]
        %v4326 = vld [vmem:[#allocation10 + $0x2d0] sm:$0xff]
        %v4327 = vld [vmem:[#allocation10 + $0x2d8] sm:$0xff]
        %v4328 = vld [vmem:[#allocation10 + $0x2e0] sm:$0xff]
        %v4329 = vld [vmem:[#allocation10 + $0x2e8] sm:$0xff]
        %v4330 = vld [vmem:[#allocation10 + $0x2f0] sm:$0xff]
        %v4331 = vld [vmem:[#allocation10 + $0x2f8] sm:$0xff]
        %v4332 = vld [vmem:[#allocation10 + $0x300] sm:$0xff]
        %v4333 = vld [vmem:[#allocation10 + $0x308] sm:$0xff]
        %v4334 = vld [vmem:[#allocation10 + $0x310] sm:$0xff]
        %v4335 = vld [vmem:[#allocation10 + $0x318] sm:$0xff]
        %v4336 = vld [vmem:[#allocation10 + $0x320] sm:$0xff]
        %v4337 = vld [vmem:[#allocation10 + $0x328] sm:$0xff]
        %v4338 = vld [vmem:[#allocation10 + $0x330] sm:$0xff]
        %v4339 = vld [vmem:[#allocation10 + $0x338] sm:$0xff]
        %v4340 = vld [vmem:[#allocation10 + $0x340] sm:$0xff]
        %v4341 = vld [vmem:[#allocation10 + $0x348] sm:$0xff]
        %v4342 = vld [vmem:[#allocation10 + $0x350] sm:$0xff]
        %v4343 = vld [vmem:[#allocation10 + $0x358] sm:$0xff]
        %v4344 = vld [vmem:[#allocation10 + $0x360] sm:$0xff]
        %v4345 = vld [vmem:[#allocation10 + $0x368] sm:$0xff]
        %v4346 = vld [vmem:[#allocation10 + $0x370] sm:$0xff]
        %v4347 = vld [vmem:[#allocation10 + $0x378] sm:$0xff]
        %v4348 = vld [vmem:[#allocation10 + $0x380] sm:$0xff]
        %v4349 = vld [vmem:[#allocation10 + $0x388] sm:$0xff]
        %v4350 = vld [vmem:[#allocation10 + $0x390] sm:$0xff]
        %v4351 = vld [vmem:[#allocation10 + $0x398] sm:$0xff]
        %v4352 = vld [vmem:[#allocation10 + $0x3a0] sm:$0xff]
        %v4353 = vld [vmem:[#allocation10 + $0x3a8] sm:$0xff]
        %v4354 = vld [vmem:[#allocation10 + $0x3b0] sm:$0xff]
        %v4355 = vld [vmem:[#allocation10 + $0x3b8] sm:$0xff]
        %v4356 = vld [vmem:[#allocation10 + $0x3c0] sm:$0xff]
        %v4357 = vld [vmem:[#allocation10 + $0x3c8] sm:$0xff]
        %v4358 = vld [vmem:[#allocation10 + $0x3d0] sm:$0xff]
        %v4359 = vld [vmem:[#allocation10 + $0x3d8] sm:$0xff]
        %v4360 = vld [vmem:[#allocation10 + $0x3e0] sm:$0xff]
        %v4361 = vld [vmem:[#allocation10 + $0x3e8] sm:$0xff]
        %v4362 = vld [vmem:[#allocation10 + $0x3f0] sm:$0xff]
        %v4363 = vld [vmem:[#allocation10 + $0x3f8] sm:$0xff]
        %v4364 = vld [vmem:[%s11] sm:$0xf]
        %v4366 = vlaneseq
        %v4367 = vshrl.u32 %v4366, 7
        %v4368 = vsub.s32 0, %v4367
        %v4369 = vrot.slane %v4364, %v4368
        %v4370 = vlaneseq
        %v4371 = vshrl.u32 %v4370, 7
        %v4372 = vsub.s32 1, %v4371
        %v4373 = vrot.slane %v4364, %v4372
        %v4374 = vlaneseq
        %v4375 = vshrl.u32 %v4374, 7
        %v4376 = vsub.s32 2, %v4375
        %v4377 = vrot.slane %v4364, %v4376
        %v4378 = vlaneseq
        %v4379 = vshrl.u32 %v4378, 7
        %v4380 = vsub.s32 3, %v4379
        %v4381 = vrot.slane %v4364, %v4380
        %v4514 = vunpack.c.l.b16 %v4236
        %v4515 = vunpack.c.h.b16 %v4236
        %v4516 = vunpack.c.l.b16 %v4237
        %v4517 = vunpack.c.h.b16 %v4237
        %v4518 = vunpack.c.l.b16 %v4238
        %v4519 = vunpack.c.h.b16 %v4238
        %v4520 = vunpack.c.l.b16 %v4239
        %v4521 = vunpack.c.h.b16 %v4239
        %v4522 = vunpack.c.l.b16 %v4240
        %v4523 = vunpack.c.h.b16 %v4240
        %v4524 = vunpack.c.l.b16 %v4241
        %v4525 = vunpack.c.h.b16 %v4241
        %v4526 = vunpack.c.l.b16 %v4242
        %v4527 = vunpack.c.h.b16 %v4242
        %v4528 = vunpack.c.l.b16 %v4243
        %v4529 = vunpack.c.h.b16 %v4243
        %v4530 = vunpack.c.l.b16 %v4244
        %v4531 = vunpack.c.h.b16 %v4244
        %v4532 = vunpack.c.l.b16 %v4245
        %v4533 = vunpack.c.h.b16 %v4245
        %v4534 = vunpack.c.l.b16 %v4246
        %v4535 = vunpack.c.h.b16 %v4246
        %v4536 = vunpack.c.l.b16 %v4247
        %v4537 = vunpack.c.h.b16 %v4247
        %v4538 = vunpack.c.l.b16 %v4248
        %v4539 = vunpack.c.h.b16 %v4248
        %v4540 = vunpack.c.l.b16 %v4249
        %v4541 = vunpack.c.h.b16 %v4249
        %v4542 = vunpack.c.l.b16 %v4250
        %v4543 = vunpack.c.h.b16 %v4250
        %v4544 = vunpack.c.l.b16 %v4251
        %v4545 = vunpack.c.h.b16 %v4251
        %v4546 = vunpack.c.l.b16 %v4252
        %v4547 = vunpack.c.h.b16 %v4252
        %v4548 = vunpack.c.l.b16 %v4253
        %v4549 = vunpack.c.h.b16 %v4253
        %v4550 = vunpack.c.l.b16 %v4254
        %v4551 = vunpack.c.h.b16 %v4254
        %v4552 = vunpack.c.l.b16 %v4255
        %v4553 = vunpack.c.h.b16 %v4255
        %v4554 = vunpack.c.l.b16 %v4256
        %v4555 = vunpack.c.h.b16 %v4256
        %v4556 = vunpack.c.l.b16 %v4257
        %v4557 = vunpack.c.h.b16 %v4257
        %v4558 = vunpack.c.l.b16 %v4258
        %v4559 = vunpack.c.h.b16 %v4258
        %v4560 = vunpack.c.l.b16 %v4259
        %v4561 = vunpack.c.h.b16 %v4259
        %v4562 = vunpack.c.l.b16 %v4260
        %v4563 = vunpack.c.h.b16 %v4260
        %v4564 = vunpack.c.l.b16 %v4261
        %v4565 = vunpack.c.h.b16 %v4261
        %v4566 = vunpack.c.l.b16 %v4262
        %v4567 = vunpack.c.h.b16 %v4262
        %v4568 = vunpack.c.l.b16 %v4263
        %v4569 = vunpack.c.h.b16 %v4263
        %v4570 = vunpack.c.l.b16 %v4264
        %v4571 = vunpack.c.h.b16 %v4264
        %v4572 = vunpack.c.l.b16 %v4265
        %v4573 = vunpack.c.h.b16 %v4265
        %v4574 = vunpack.c.l.b16 %v4266
        %v4575 = vunpack.c.h.b16 %v4266
        %v4576 = vunpack.c.l.b16 %v4267
        %v4577 = vunpack.c.h.b16 %v4267
        %v4578 = vunpack.c.l.b16 %v4268
        %v4579 = vunpack.c.h.b16 %v4268
        %v4580 = vunpack.c.l.b16 %v4269
        %v4581 = vunpack.c.h.b16 %v4269
        %v4582 = vunpack.c.l.b16 %v4270
        %v4583 = vunpack.c.h.b16 %v4270
        %v4584 = vunpack.c.l.b16 %v4271
        %v4585 = vunpack.c.h.b16 %v4271
        %v4586 = vunpack.c.l.b16 %v4272
        %v4587 = vunpack.c.h.b16 %v4272
        %v4588 = vunpack.c.l.b16 %v4273
        %v4589 = vunpack.c.h.b16 %v4273
        %v4590 = vunpack.c.l.b16 %v4274
        %v4591 = vunpack.c.h.b16 %v4274
        %v4592 = vunpack.c.l.b16 %v4275
        %v4593 = vunpack.c.h.b16 %v4275
        %v4594 = vunpack.c.l.b16 %v4276
        %v4595 = vunpack.c.h.b16 %v4276
        %v4596 = vunpack.c.l.b16 %v4277
        %v4597 = vunpack.c.h.b16 %v4277
        %v4598 = vunpack.c.l.b16 %v4278
        %v4599 = vunpack.c.h.b16 %v4278
        %v4600 = vunpack.c.l.b16 %v4279
        %v4601 = vunpack.c.h.b16 %v4279
        %v4602 = vunpack.c.l.b16 %v4280
        %v4603 = vunpack.c.h.b16 %v4280
        %v4604 = vunpack.c.l.b16 %v4281
        %v4605 = vunpack.c.h.b16 %v4281
        %v4606 = vunpack.c.l.b16 %v4282
        %v4607 = vunpack.c.h.b16 %v4282
        %v4608 = vunpack.c.l.b16 %v4283
        %v4609 = vunpack.c.h.b16 %v4283
        %v4610 = vunpack.c.l.b16 %v4284
        %v4611 = vunpack.c.h.b16 %v4284
        %v4612 = vunpack.c.l.b16 %v4285
        %v4613 = vunpack.c.h.b16 %v4285
        %v4614 = vunpack.c.l.b16 %v4286
        %v4615 = vunpack.c.h.b16 %v4286
        %v4616 = vunpack.c.l.b16 %v4287
        %v4617 = vunpack.c.h.b16 %v4287
        %v4618 = vunpack.c.l.b16 %v4288
        %v4619 = vunpack.c.h.b16 %v4288
        %v4620 = vunpack.c.l.b16 %v4289
        %v4621 = vunpack.c.h.b16 %v4289
        %v4622 = vunpack.c.l.b16 %v4290
        %v4623 = vunpack.c.h.b16 %v4290
        %v4624 = vunpack.c.l.b16 %v4291
        %v4625 = vunpack.c.h.b16 %v4291
        %v4626 = vunpack.c.l.b16 %v4292
        %v4627 = vunpack.c.h.b16 %v4292
        %v4628 = vunpack.c.l.b16 %v4293
        %v4629 = vunpack.c.h.b16 %v4293
        %v4630 = vunpack.c.l.b16 %v4294
        %v4631 = vunpack.c.h.b16 %v4294
        %v4632 = vunpack.c.l.b16 %v4295
        %v4633 = vunpack.c.h.b16 %v4295
        %v4634 = vunpack.c.l.b16 %v4296
        %v4635 = vunpack.c.h.b16 %v4296
        %v4636 = vunpack.c.l.b16 %v4297
        %v4637 = vunpack.c.h.b16 %v4297
        %v4638 = vunpack.c.l.b16 %v4298
        %v4639 = vunpack.c.h.b16 %v4298
        %v4640 = vunpack.c.l.b16 %v4299
        %v4641 = vunpack.c.h.b16 %v4299
        %v4642 = vunpack.c.l.b16 %v4300
        %v4643 = vunpack.c.h.b16 %v4300
        %v4644 = vunpack.c.l.b16 %v4301
        %v4645 = vunpack.c.h.b16 %v4301
        %v4646 = vunpack.c.l.b16 %v4302
        %v4647 = vunpack.c.h.b16 %v4302
        %v4648 = vunpack.c.l.b16 %v4303
        %v4649 = vunpack.c.h.b16 %v4303
        %v4650 = vunpack.c.l.b16 %v4304
        %v4651 = vunpack.c.h.b16 %v4304
        %v4652 = vunpack.c.l.b16 %v4305
        %v4653 = vunpack.c.h.b16 %v4305
        %v4654 = vunpack.c.l.b16 %v4306
        %v4655 = vunpack.c.h.b16 %v4306
        %v4656 = vunpack.c.l.b16 %v4307
        %v4657 = vunpack.c.h.b16 %v4307
        %v4658 = vunpack.c.l.b16 %v4308
        %v4659 = vunpack.c.h.b16 %v4308
        %v4660 = vunpack.c.l.b16 %v4309
        %v4661 = vunpack.c.h.b16 %v4309
        %v4662 = vunpack.c.l.b16 %v4310
        %v4663 = vunpack.c.h.b16 %v4310
        %v4664 = vunpack.c.l.b16 %v4311
        %v4665 = vunpack.c.h.b16 %v4311
        %v4666 = vunpack.c.l.b16 %v4312
        %v4667 = vunpack.c.h.b16 %v4312
        %v4668 = vunpack.c.l.b16 %v4313
        %v4669 = vunpack.c.h.b16 %v4313
        %v4670 = vunpack.c.l.b16 %v4314
        %v4671 = vunpack.c.h.b16 %v4314
        %v4672 = vunpack.c.l.b16 %v4315
        %v4673 = vunpack.c.h.b16 %v4315
        %v4674 = vunpack.c.l.b16 %v4316
        %v4675 = vunpack.c.h.b16 %v4316
        %v4676 = vunpack.c.l.b16 %v4317
        %v4677 = vunpack.c.h.b16 %v4317
        %v4678 = vunpack.c.l.b16 %v4318
        %v4679 = vunpack.c.h.b16 %v4318
        %v4680 = vunpack.c.l.b16 %v4319
        %v4681 = vunpack.c.h.b16 %v4319
        %v4682 = vunpack.c.l.b16 %v4320
        %v4683 = vunpack.c.h.b16 %v4320
        %v4684 = vunpack.c.l.b16 %v4321
        %v4685 = vunpack.c.h.b16 %v4321
        %v4686 = vunpack.c.l.b16 %v4322
        %v4687 = vunpack.c.h.b16 %v4322
        %v4688 = vunpack.c.l.b16 %v4323
        %v4689 = vunpack.c.h.b16 %v4323
        %v4690 = vunpack.c.l.b16 %v4324
        %v4691 = vunpack.c.h.b16 %v4324
        %v4692 = vunpack.c.l.b16 %v4325
        %v4693 = vunpack.c.h.b16 %v4325
        %v4694 = vunpack.c.l.b16 %v4326
        %v4695 = vunpack.c.h.b16 %v4326
        %v4696 = vunpack.c.l.b16 %v4327
        %v4697 = vunpack.c.h.b16 %v4327
        %v4698 = vunpack.c.l.b16 %v4328
        %v4699 = vunpack.c.h.b16 %v4328
        %v4700 = vunpack.c.l.b16 %v4329
        %v4701 = vunpack.c.h.b16 %v4329
        %v4702 = vunpack.c.l.b16 %v4330
        %v4703 = vunpack.c.h.b16 %v4330
        %v4704 = vunpack.c.l.b16 %v4331
        %v4705 = vunpack.c.h.b16 %v4331
        %v4706 = vunpack.c.l.b16 %v4332
        %v4707 = vunpack.c.h.b16 %v4332
        %v4708 = vunpack.c.l.b16 %v4333
        %v4709 = vunpack.c.h.b16 %v4333
        %v4710 = vunpack.c.l.b16 %v4334
        %v4711 = vunpack.c.h.b16 %v4334
        %v4712 = vunpack.c.l.b16 %v4335
        %v4713 = vunpack.c.h.b16 %v4335
        %v4714 = vunpack.c.l.b16 %v4336
        %v4715 = vunpack.c.h.b16 %v4336
        %v4716 = vunpack.c.l.b16 %v4337
        %v4717 = vunpack.c.h.b16 %v4337
        %v4718 = vunpack.c.l.b16 %v4338
        %v4719 = vunpack.c.h.b16 %v4338
        %v4720 = vunpack.c.l.b16 %v4339
        %v4721 = vunpack.c.h.b16 %v4339
        %v4722 = vunpack.c.l.b16 %v4340
        %v4723 = vunpack.c.h.b16 %v4340
        %v4724 = vunpack.c.l.b16 %v4341
        %v4725 = vunpack.c.h.b16 %v4341
        %v4726 = vunpack.c.l.b16 %v4342
        %v4727 = vunpack.c.h.b16 %v4342
        %v4728 = vunpack.c.l.b16 %v4343
        %v4729 = vunpack.c.h.b16 %v4343
        %v4730 = vunpack.c.l.b16 %v4344
        %v4731 = vunpack.c.h.b16 %v4344
        %v4732 = vunpack.c.l.b16 %v4345
        %v4733 = vunpack.c.h.b16 %v4345
        %v4734 = vunpack.c.l.b16 %v4346
        %v4735 = vunpack.c.h.b16 %v4346
        %v4736 = vunpack.c.l.b16 %v4347
        %v4737 = vunpack.c.h.b16 %v4347
        %v4738 = vunpack.c.l.b16 %v4348
        %v4739 = vunpack.c.h.b16 %v4348
        %v4740 = vunpack.c.l.b16 %v4349
        %v4741 = vunpack.c.h.b16 %v4349
        %v4742 = vunpack.c.l.b16 %v4350
        %v4743 = vunpack.c.h.b16 %v4350
        %v4744 = vunpack.c.l.b16 %v4351
        %v4745 = vunpack.c.h.b16 %v4351
        %v4746 = vunpack.c.l.b16 %v4352
        %v4747 = vunpack.c.h.b16 %v4352
        %v4748 = vunpack.c.l.b16 %v4353
        %v4749 = vunpack.c.h.b16 %v4353
        %v4750 = vunpack.c.l.b16 %v4354
        %v4751 = vunpack.c.h.b16 %v4354
        %v4752 = vunpack.c.l.b16 %v4355
        %v4753 = vunpack.c.h.b16 %v4355
        %v4754 = vunpack.c.l.b16 %v4356
        %v4755 = vunpack.c.h.b16 %v4356
        %v4756 = vunpack.c.l.b16 %v4357
        %v4757 = vunpack.c.h.b16 %v4357
        %v4758 = vunpack.c.l.b16 %v4358
        %v4759 = vunpack.c.h.b16 %v4358
        %v4760 = vunpack.c.l.b16 %v4359
        %v4761 = vunpack.c.h.b16 %v4359
        %v4762 = vunpack.c.l.b16 %v4360
        %v4763 = vunpack.c.h.b16 %v4360
        %v4764 = vunpack.c.l.b16 %v4361
        %v4765 = vunpack.c.h.b16 %v4361
        %v4766 = vunpack.c.l.b16 %v4362
        %v4767 = vunpack.c.h.b16 %v4362
        %v4768 = vunpack.c.l.b16 %v4363
        %v4769 = vunpack.c.h.b16 %v4363
        %v4770 = vpack.c.b16 %v4518, %v4514
        %v4771 = vpack.c.b16 %v4519, %v4515
        %v4772 = vpack.c.b16 %v4520, %v4516
        %v4773 = vpack.c.b16 %v4521, %v4517
        %v4774 = vpack.c.b16 %v4526, %v4522
        %v4775 = vpack.c.b16 %v4527, %v4523
        %v4776 = vpack.c.b16 %v4528, %v4524
        %v4777 = vpack.c.b16 %v4529, %v4525
        %v4778 = vpack.c.b16 %v4534, %v4530
        %v4779 = vpack.c.b16 %v4535, %v4531
        %v4780 = vpack.c.b16 %v4536, %v4532
        %v4781 = vpack.c.b16 %v4537, %v4533
        %v4782 = vpack.c.b16 %v4542, %v4538
        %v4783 = vpack.c.b16 %v4543, %v4539
        %v4784 = vpack.c.b16 %v4544, %v4540
        %v4785 = vpack.c.b16 %v4545, %v4541
        %v4786 = vpack.c.b16 %v4550, %v4546
        %v4787 = vpack.c.b16 %v4551, %v4547
        %v4788 = vpack.c.b16 %v4552, %v4548
        %v4789 = vpack.c.b16 %v4553, %v4549
        %v4790 = vpack.c.b16 %v4558, %v4554
        %v4791 = vpack.c.b16 %v4559, %v4555
        %v4792 = vpack.c.b16 %v4560, %v4556
        %v4793 = vpack.c.b16 %v4561, %v4557
        %v4794 = vpack.c.b16 %v4566, %v4562
        %v4795 = vpack.c.b16 %v4567, %v4563
        %v4796 = vpack.c.b16 %v4568, %v4564
        %v4797 = vpack.c.b16 %v4569, %v4565
        %v4798 = vpack.c.b16 %v4574, %v4570
        %v4799 = vpack.c.b16 %v4575, %v4571
        %v4800 = vpack.c.b16 %v4576, %v4572
        %v4801 = vpack.c.b16 %v4577, %v4573
        %v4802 = vpack.c.b16 %v4582, %v4578
        %v4803 = vpack.c.b16 %v4583, %v4579
        %v4804 = vpack.c.b16 %v4584, %v4580
        %v4805 = vpack.c.b16 %v4585, %v4581
        %v4806 = vpack.c.b16 %v4590, %v4586
        %v4807 = vpack.c.b16 %v4591, %v4587
        %v4808 = vpack.c.b16 %v4592, %v4588
        %v4809 = vpack.c.b16 %v4593, %v4589
        %v4810 = vpack.c.b16 %v4598, %v4594
        %v4811 = vpack.c.b16 %v4599, %v4595
        %v4812 = vpack.c.b16 %v4600, %v4596
        %v4813 = vpack.c.b16 %v4601, %v4597
        %v4814 = vpack.c.b16 %v4606, %v4602
        %v4815 = vpack.c.b16 %v4607, %v4603
        %v4816 = vpack.c.b16 %v4608, %v4604
        %v4817 = vpack.c.b16 %v4609, %v4605
        %v4818 = vpack.c.b16 %v4614, %v4610
        %v4819 = vpack.c.b16 %v4615, %v4611
        %v4820 = vpack.c.b16 %v4616, %v4612
        %v4821 = vpack.c.b16 %v4617, %v4613
        %v4822 = vpack.c.b16 %v4622, %v4618
        %v4823 = vpack.c.b16 %v4623, %v4619
        %v4824 = vpack.c.b16 %v4624, %v4620
        %v4825 = vpack.c.b16 %v4625, %v4621
        %v4826 = vpack.c.b16 %v4630, %v4626
        %v4827 = vpack.c.b16 %v4631, %v4627
        %v4828 = vpack.c.b16 %v4632, %v4628
        %v4829 = vpack.c.b16 %v4633, %v4629
        %v4830 = vpack.c.b16 %v4638, %v4634
        %v4831 = vpack.c.b16 %v4639, %v4635
        %v4832 = vpack.c.b16 %v4640, %v4636
        %v4833 = vpack.c.b16 %v4641, %v4637
        %v4834 = vpack.c.b16 %v4646, %v4642
        %v4835 = vpack.c.b16 %v4647, %v4643
        %v4836 = vpack.c.b16 %v4648, %v4644
        %v4837 = vpack.c.b16 %v4649, %v4645
        %v4838 = vpack.c.b16 %v4654, %v4650
        %v4839 = vpack.c.b16 %v4655, %v4651
        %v4840 = vpack.c.b16 %v4656, %v4652
        %v4841 = vpack.c.b16 %v4657, %v4653
        %v4842 = vpack.c.b16 %v4662, %v4658
        %v4843 = vpack.c.b16 %v4663, %v4659
        %v4844 = vpack.c.b16 %v4664, %v4660
        %v4845 = vpack.c.b16 %v4665, %v4661
        %v4846 = vpack.c.b16 %v4670, %v4666
        %v4847 = vpack.c.b16 %v4671, %v4667
        %v4848 = vpack.c.b16 %v4672, %v4668
        %v4849 = vpack.c.b16 %v4673, %v4669
        %v4850 = vpack.c.b16 %v4678, %v4674
        %v4851 = vpack.c.b16 %v4679, %v4675
        %v4852 = vpack.c.b16 %v4680, %v4676
        %v4853 = vpack.c.b16 %v4681, %v4677
        %v4854 = vpack.c.b16 %v4686, %v4682
        %v4855 = vpack.c.b16 %v4687, %v4683
        %v4856 = vpack.c.b16 %v4688, %v4684
        %v4857 = vpack.c.b16 %v4689, %v4685
        %v4858 = vpack.c.b16 %v4694, %v4690
        %v4859 = vpack.c.b16 %v4695, %v4691
        %v4860 = vpack.c.b16 %v4696, %v4692
        %v4861 = vpack.c.b16 %v4697, %v4693
        %v4862 = vpack.c.b16 %v4702, %v4698
        %v4863 = vpack.c.b16 %v4703, %v4699
        %v4864 = vpack.c.b16 %v4704, %v4700
        %v4865 = vpack.c.b16 %v4705, %v4701
        %v4866 = vpack.c.b16 %v4710, %v4706
        %v4867 = vpack.c.b16 %v4711, %v4707
        %v4868 = vpack.c.b16 %v4712, %v4708
        %v4869 = vpack.c.b16 %v4713, %v4709
        %v4870 = vpack.c.b16 %v4718, %v4714
        %v4871 = vpack.c.b16 %v4719, %v4715
        %v4872 = vpack.c.b16 %v4720, %v4716
        %v4873 = vpack.c.b16 %v4721, %v4717
        %v4874 = vpack.c.b16 %v4726, %v4722
        %v4875 = vpack.c.b16 %v4727, %v4723
        %v4876 = vpack.c.b16 %v4728, %v4724
        %v4877 = vpack.c.b16 %v4729, %v4725
        %v4878 = vpack.c.b16 %v4734, %v4730
        %v4879 = vpack.c.b16 %v4735, %v4731
        %v4880 = vpack.c.b16 %v4736, %v4732
        %v4881 = vpack.c.b16 %v4737, %v4733
        %v4882 = vpack.c.b16 %v4742, %v4738
        %v4883 = vpack.c.b16 %v4743, %v4739
        %v4884 = vpack.c.b16 %v4744, %v4740
        %v4885 = vpack.c.b16 %v4745, %v4741
        %v4886 = vpack.c.b16 %v4750, %v4746
        %v4887 = vpack.c.b16 %v4751, %v4747
        %v4888 = vpack.c.b16 %v4752, %v4748
        %v4889 = vpack.c.b16 %v4753, %v4749
        %v4890 = vpack.c.b16 %v4758, %v4754
        %v4891 = vpack.c.b16 %v4759, %v4755
        %v4892 = vpack.c.b16 %v4760, %v4756
        %v4893 = vpack.c.b16 %v4761, %v4757
        %v4894 = vpack.c.b16 %v4766, %v4762
        %v4895 = vpack.c.b16 %v4767, %v4763
        %v4896 = vpack.c.b16 %v4768, %v4764
        %v4897 = vpack.c.b16 %v4769, %v4765
        %5026 = vmatprep.subr.bf16.mxu0 %v4799
        %5027 = vmatpush1.bf16.msra.mxu0 %v4798
        %5028 = vmatprep.subr.bf16.mxu0 %v4795
        %5029 = vmatpush1.bf16.msra.mxu0 %v4794
        %5030 = vmatprep.subr.bf16.mxu0 %v4791
        %5031 = vmatpush1.bf16.msra.mxu0 %v4790
        %5032 = vmatprep.subr.bf16.mxu0 %v4787
        %5033 = vmatpush1.bf16.msra.mxu0 %v4786
        %5034 = vmatprep.subr.bf16.mxu0 %v4783
        %5035 = vmatpush1.bf16.msra.mxu0 %v4782
        %5036 = vmatprep.subr.bf16.mxu0 %v4779
        %5037 = vmatpush1.bf16.msra.mxu0 %v4778
        %5038 = vmatprep.subr.bf16.mxu0 %v4775
        %5039 = vmatpush1.bf16.msra.mxu0 %v4774
        %5040 = vmatprep.subr.bf16.mxu0 %v4771
        %5041 = vmatpush1.bf16.msra.mxu0 %v4770
        %5042 = vmatprep.subr.bf16.mxu0 %v4831
        %5043 = vmatpush2.bf16.msra.mxu0 %v4830
        %5044 = vmatprep.subr.bf16.mxu0 %v4827
        %5045 = vmatpush2.bf16.msra.mxu0 %v4826
        %5046 = vmatprep.subr.bf16.mxu0 %v4823
        %5047 = vmatpush2.bf16.msra.mxu0 %v4822
        %5048 = vmatprep.subr.bf16.mxu0 %v4819
        %5049 = vmatpush2.bf16.msra.mxu0 %v4818
        %5050 = vmatprep.subr.bf16.mxu0 %v4815
        %5051 = vmatpush2.bf16.msra.mxu0 %v4814
        %5052 = vmatprep.subr.bf16.mxu0 %v4811
        %5053 = vmatpush2.bf16.msra.mxu0 %v4810
        %5054 = vmatprep.subr.bf16.mxu0 %v4807
        %5055 = vmatpush2.bf16.msra.mxu0 %v4806
        %5056 = vmatprep.subr.bf16.mxu0 %v4803
        %5057 = vmatpush2.bf16.msra.mxu0 %v4802
        %5058 = vmatprep.mubr.bf16.mxu0 %v4173
        %5059 = vmatmul.mubr.bf16.gmra.mxu0 %v4172
        %v5060 = vpop.f32.mrf.mxu0
        %v5061 = vadd.f32 %v4369, %v5060
        %v5062 = vpop.f32.mrf.mxu0
        %v5063 = vadd.f32 %v4373, %v5062
        %v5064 = vpop.f32.mrf.mxu0
        %v5065 = vadd.f32 %v4369, %v5064
        %v5066 = vpop.f32.mrf.mxu0
        %v5067 = vadd.f32 %v4373, %v5066
        %5068 = vmatprep.mubr.bf16.mxu0 %v4177
        %5069 = vmatmul.mubr.bf16.gmra.mxu0 %v4176
        %v5070 = vpop.f32.mrf.mxu0
        %v5071 = vadd.f32 %v4369, %v5070
        %v5072 = vpop.f32.mrf.mxu0
        %v5073 = vadd.f32 %v4373, %v5072
        %v5074 = vpop.f32.mrf.mxu0
        %v5075 = vadd.f32 %v4369, %v5074
        %v5076 = vpop.f32.mrf.mxu0
        %v5077 = vadd.f32 %v4373, %v5076
        %5078 = vmatprep.mubr.bf16.mxu0 %v4181
        %5079 = vmatmul.mubr.bf16.gmra.mxu0 %v4180
        %v5080 = vpop.f32.mrf.mxu0
        %v5081 = vadd.f32 %v4369, %v5080
        %v5082 = vpop.f32.mrf.mxu0
        %v5083 = vadd.f32 %v4373, %v5082
        %v5084 = vpop.f32.mrf.mxu0
        %v5085 = vadd.f32 %v4369, %v5084
        %v5086 = vpop.f32.mrf.mxu0
        %v5087 = vadd.f32 %v4373, %v5086
        %5088 = vmatprep.mubr.bf16.mxu0 %v4185
        %5089 = vmatmul.mubr.bf16.gmra.mxu0 %v4184
        %v5090 = vpop.f32.mrf.mxu0
        %v5091 = vadd.f32 %v4369, %v5090
        %v5092 = vpop.f32.mrf.mxu0
        %v5093 = vadd.f32 %v4373, %v5092
        %v5094 = vpop.f32.mrf.mxu0
        %v5095 = vadd.f32 %v4369, %v5094
        %v5096 = vpop.f32.mrf.mxu0
        %v5097 = vadd.f32 %v4373, %v5096
        %5098 = vmatprep.mubr.bf16.mxu0 %v4189
        %5099 = vmatmul.mubr.bf16.gmra.mxu0 %v4188
        %v5100 = vpop.f32.mrf.mxu0
        %v5101 = vadd.f32 %v4369, %v5100
        %v5102 = vpop.f32.mrf.mxu0
        %v5103 = vadd.f32 %v4373, %v5102
        %v5104 = vpop.f32.mrf.mxu0
        %v5105 = vadd.f32 %v4369, %v5104
        %v5106 = vpop.f32.mrf.mxu0
        %v5107 = vadd.f32 %v4373, %v5106
        %5108 = vmatprep.mubr.bf16.mxu0 %v4193
        %5109 = vmatmul.mubr.bf16.gmra.mxu0 %v4192
        %v5110 = vpop.f32.mrf.mxu0
        %v5111 = vadd.f32 %v4369, %v5110
        %v5112 = vpop.f32.mrf.mxu0
        %v5113 = vadd.f32 %v4373, %v5112
        %v5114 = vpop.f32.mrf.mxu0
        %v5115 = vadd.f32 %v4369, %v5114
        %v5116 = vpop.f32.mrf.mxu0
        %v5117 = vadd.f32 %v4373, %v5116
        %5118 = vmatprep.mubr.bf16.mxu0 %v4197
        %5119 = vmatmul.mubr.bf16.gmra.mxu0 %v4196
        %v5120 = vpop.f32.mrf.mxu0
        %v5121 = vadd.f32 %v4369, %v5120
        %v5122 = vpop.f32.mrf.mxu0
        %v5123 = vadd.f32 %v4373, %v5122
        %v5124 = vpop.f32.mrf.mxu0
        %v5125 = vadd.f32 %v4369, %v5124
        %v5126 = vpop.f32.mrf.mxu0
        %v5127 = vadd.f32 %v4373, %v5126
        %5128 = vmatprep.mubr.bf16.mxu0 %v4201
        %5129 = vmatmul.mubr.bf16.gmra.mxu0 %v4200
        %v5130 = vpop.f32.mrf.mxu0
        %v5131 = vadd.f32 %v4369, %v5130
        %v5132 = vpop.f32.mrf.mxu0
        %v5133 = vadd.f32 %v4373, %v5132
        %v5134 = vpop.f32.mrf.mxu0
        %v5135 = vadd.f32 %v4369, %v5134
        %v5136 = vpop.f32.mrf.mxu0
        %v5137 = vadd.f32 %v4373, %v5136
        %5138 = vmatprep.mubr.bf16.mxu0 %v4205
        %5139 = vmatmul.mubr.bf16.gmra.mxu0 %v4204
        %v5140 = vpop.f32.mrf.mxu0
        %v5141 = vadd.f32 %v4369, %v5140
        %v5142 = vpop.f32.mrf.mxu0
        %v5143 = vadd.f32 %v4373, %v5142
        %v5144 = vpop.f32.mrf.mxu0
        %v5145 = vadd.f32 %v4369, %v5144
        %v5146 = vpop.f32.mrf.mxu0
        %v5147 = vadd.f32 %v4373, %v5146
        %5148 = vmatprep.mubr.bf16.mxu0 %v4209
        %5149 = vmatmul.mubr.bf16.gmra.mxu0 %v4208
        %v5150 = vpop.f32.mrf.mxu0
        %v5151 = vadd.f32 %v4369, %v5150
        %v5152 = vpop.f32.mrf.mxu0
        %v5153 = vadd.f32 %v4373, %v5152
        %v5154 = vpop.f32.mrf.mxu0
        %v5155 = vadd.f32 %v4369, %v5154
        %v5156 = vpop.f32.mrf.mxu0
        %v5157 = vadd.f32 %v4373, %v5156
        %5158 = vmatprep.mubr.bf16.mxu0 %v4213
        %5159 = vmatmul.mubr.bf16.gmra.mxu0 %v4212
        %v5160 = vpop.f32.mrf.mxu0
        %v5161 = vadd.f32 %v4369, %v5160
        %v5162 = vpop.f32.mrf.mxu0
        %v5163 = vadd.f32 %v4373, %v5162
        %v5164 = vpop.f32.mrf.mxu0
        %v5165 = vadd.f32 %v4369, %v5164
        %v5166 = vpop.f32.mrf.mxu0
        %v5167 = vadd.f32 %v4373, %v5166
        %5168 = vmatprep.mubr.bf16.mxu0 %v4217
        %5169 = vmatmul.mubr.bf16.gmra.mxu0 %v4216
        %v5170 = vpop.f32.mrf.mxu0
        %v5171 = vadd.f32 %v4369, %v5170
        %v5172 = vpop.f32.mrf.mxu0
        %v5173 = vadd.f32 %v4373, %v5172
        %v5174 = vpop.f32.mrf.mxu0
        %v5175 = vadd.f32 %v4369, %v5174
        %v5176 = vpop.f32.mrf.mxu0
        %v5177 = vadd.f32 %v4373, %v5176
        %5178 = vmatprep.mubr.bf16.mxu0 %v4221
        %5179 = vmatmul.mubr.bf16.gmra.mxu0 %v4220
        %v5180 = vpop.f32.mrf.mxu0
        %v5181 = vadd.f32 %v4369, %v5180
        %v5182 = vpop.f32.mrf.mxu0
        %v5183 = vadd.f32 %v4373, %v5182
        %v5184 = vpop.f32.mrf.mxu0
        %v5185 = vadd.f32 %v4369, %v5184
        %v5186 = vpop.f32.mrf.mxu0
        %v5187 = vadd.f32 %v4373, %v5186
        %5188 = vmatprep.mubr.bf16.mxu0 %v4225
        %5189 = vmatmul.mubr.bf16.gmra.mxu0 %v4224
        %v5190 = vpop.f32.mrf.mxu0
        %v5191 = vadd.f32 %v4369, %v5190
        %v5192 = vpop.f32.mrf.mxu0
        %v5193 = vadd.f32 %v4373, %v5192
        %v5194 = vpop.f32.mrf.mxu0
        %v5195 = vadd.f32 %v4369, %v5194
        %v5196 = vpop.f32.mrf.mxu0
        %v5197 = vadd.f32 %v4373, %v5196
        %5198 = vmatprep.mubr.bf16.mxu0 %v4229
        %5199 = vmatmul.mubr.bf16.gmra.mxu0 %v4228
        %v5200 = vpop.f32.mrf.mxu0
        %v5201 = vadd.f32 %v4369, %v5200
        %v5202 = vpop.f32.mrf.mxu0
        %v5203 = vadd.f32 %v4373, %v5202
        %v5204 = vpop.f32.mrf.mxu0
        %v5205 = vadd.f32 %v4369, %v5204
        %v5206 = vpop.f32.mrf.mxu0
        %v5207 = vadd.f32 %v4373, %v5206
        %5208 = vmatprep.mubr.bf16.mxu0 %v4233
        %5209 = vmatmul.mubr.bf16.gmra.mxu0 %v4232
        %v5210 = vpop.f32.mrf.mxu0
        %v5211 = vadd.f32 %v4369, %v5210
        %v5212 = vpop.f32.mrf.mxu0
        %v5213 = vadd.f32 %v4373, %v5212
        %v5214 = vpop.f32.mrf.mxu0
        %v5215 = vadd.f32 %v4369, %v5214
        %v5216 = vpop.f32.mrf.mxu0
        %v5217 = vadd.f32 %v4373, %v5216
        %5218 = vdwg.mxu0
        %5219 = vmatprep.subr.bf16.mxu0 %v4863
        %5220 = vmatpush1.bf16.msra.mxu0 %v4862
        %5221 = vmatprep.subr.bf16.mxu0 %v4859
        %5222 = vmatpush1.bf16.msra.mxu0 %v4858
        %5223 = vmatprep.subr.bf16.mxu0 %v4855
        %5224 = vmatpush1.bf16.msra.mxu0 %v4854
        %5225 = vmatprep.subr.bf16.mxu0 %v4851
        %5226 = vmatpush1.bf16.msra.mxu0 %v4850
        %5227 = vmatprep.subr.bf16.mxu0 %v4847
        %5228 = vmatpush1.bf16.msra.mxu0 %v4846
        %5229 = vmatprep.subr.bf16.mxu0 %v4843
        %5230 = vmatpush1.bf16.msra.mxu0 %v4842
        %5231 = vmatprep.subr.bf16.mxu0 %v4839
        %5232 = vmatpush1.bf16.msra.mxu0 %v4838
        %5233 = vmatprep.subr.bf16.mxu0 %v4835
        %5234 = vmatpush1.bf16.msra.mxu0 %v4834
        %5235 = vmatprep.subr.bf16.mxu0 %v4895
        %5236 = vmatpush2.bf16.msra.mxu0 %v4894
        %5237 = vmatprep.subr.bf16.mxu0 %v4891
        %5238 = vmatpush2.bf16.msra.mxu0 %v4890
        %5239 = vmatprep.subr.bf16.mxu0 %v4887
        %5240 = vmatpush2.bf16.msra.mxu0 %v4886
        %5241 = vmatprep.subr.bf16.mxu0 %v4883
        %5242 = vmatpush2.bf16.msra.mxu0 %v4882
        %5243 = vmatprep.subr.bf16.mxu0 %v4879
        %5244 = vmatpush2.bf16.msra.mxu0 %v4878
        %5245 = vmatprep.subr.bf16.mxu0 %v4875
        %5246 = vmatpush2.bf16.msra.mxu0 %v4874
        %5247 = vmatprep.subr.bf16.mxu0 %v4871
        %5248 = vmatpush2.bf16.msra.mxu0 %v4870
        %5249 = vmatprep.subr.bf16.mxu0 %v4867
        %5250 = vmatpush2.bf16.msra.mxu0 %v4866
        %5251 = vmatprep.mubr.bf16.mxu0 %v4175
        %5252 = vmatmul.mubr.bf16.gmra.mxu0 %v4174
        %v5253 = vpop.f32.mrf.mxu0
        %v5254 = vadd.f32 %v5061, %v5253
        %v5255 = vpop.f32.mrf.mxu0
        %v5256 = vadd.f32 %v5063, %v5255
        %v5257 = vpop.f32.mrf.mxu0
        %v5258 = vadd.f32 %v5065, %v5257
        %v5259 = vpop.f32.mrf.mxu0
        %v5260 = vadd.f32 %v5067, %v5259
        %5261 = vmatprep.mubr.bf16.mxu0 %v4179
        %5262 = vmatmul.mubr.bf16.gmra.mxu0 %v4178
        %v5263 = vpop.f32.mrf.mxu0
        %v5264 = vadd.f32 %v5071, %v5263
        %v5265 = vpop.f32.mrf.mxu0
        %v5266 = vadd.f32 %v5073, %v5265
        %v5267 = vpop.f32.mrf.mxu0
        %v5268 = vadd.f32 %v5075, %v5267
        %v5269 = vpop.f32.mrf.mxu0
        %v5270 = vadd.f32 %v5077, %v5269
        %5271 = vmatprep.mubr.bf16.mxu0 %v4183
        %5272 = vmatmul.mubr.bf16.gmra.mxu0 %v4182
        %v5273 = vpop.f32.mrf.mxu0
        %v5274 = vadd.f32 %v5081, %v5273
        %v5275 = vpop.f32.mrf.mxu0
        %v5276 = vadd.f32 %v5083, %v5275
        %v5277 = vpop.f32.mrf.mxu0
        %v5278 = vadd.f32 %v5085, %v5277
        %v5279 = vpop.f32.mrf.mxu0
        %v5280 = vadd.f32 %v5087, %v5279
        %5281 = vmatprep.mubr.bf16.mxu0 %v4187
        %5282 = vmatmul.mubr.bf16.gmra.mxu0 %v4186
        %v5283 = vpop.f32.mrf.mxu0
        %v5284 = vadd.f32 %v5091, %v5283
        %v5285 = vpop.f32.mrf.mxu0
        %v5286 = vadd.f32 %v5093, %v5285
        %v5287 = vpop.f32.mrf.mxu0
        %v5288 = vadd.f32 %v5095, %v5287
        %v5289 = vpop.f32.mrf.mxu0
        %v5290 = vadd.f32 %v5097, %v5289
        %5291 = vmatprep.mubr.bf16.mxu0 %v4191
        %5292 = vmatmul.mubr.bf16.gmra.mxu0 %v4190
        %v5293 = vpop.f32.mrf.mxu0
        %v5294 = vadd.f32 %v5101, %v5293
        %v5295 = vpop.f32.mrf.mxu0
        %v5296 = vadd.f32 %v5103, %v5295
        %v5297 = vpop.f32.mrf.mxu0
        %v5298 = vadd.f32 %v5105, %v5297
        %v5299 = vpop.f32.mrf.mxu0
        %v5300 = vadd.f32 %v5107, %v5299
        %5301 = vmatprep.mubr.bf16.mxu0 %v4195
        %5302 = vmatmul.mubr.bf16.gmra.mxu0 %v4194
        %v5303 = vpop.f32.mrf.mxu0
        %v5304 = vadd.f32 %v5111, %v5303
        %v5305 = vpop.f32.mrf.mxu0
        %v5306 = vadd.f32 %v5113, %v5305
        %v5307 = vpop.f32.mrf.mxu0
        %v5308 = vadd.f32 %v5115, %v5307
        %v5309 = vpop.f32.mrf.mxu0
        %v5310 = vadd.f32 %v5117, %v5309
        %5311 = vmatprep.mubr.bf16.mxu0 %v4199
        %5312 = vmatmul.mubr.bf16.gmra.mxu0 %v4198
        %v5313 = vpop.f32.mrf.mxu0
        %v5314 = vadd.f32 %v5121, %v5313
        %v5315 = vpop.f32.mrf.mxu0
        %v5316 = vadd.f32 %v5123, %v5315
        %v5317 = vpop.f32.mrf.mxu0
        %v5318 = vadd.f32 %v5125, %v5317
        %v5319 = vpop.f32.mrf.mxu0
        %v5320 = vadd.f32 %v5127, %v5319
        %5321 = vmatprep.mubr.bf16.mxu0 %v4203
        %5322 = vmatmul.mubr.bf16.gmra.mxu0 %v4202
        %v5323 = vpop.f32.mrf.mxu0
        %v5324 = vadd.f32 %v5131, %v5323
        %v5325 = vpop.f32.mrf.mxu0
        %v5326 = vadd.f32 %v5133, %v5325
        %v5327 = vpop.f32.mrf.mxu0
        %v5328 = vadd.f32 %v5135, %v5327
        %v5329 = vpop.f32.mrf.mxu0
        %v5330 = vadd.f32 %v5137, %v5329
        %5331 = vmatprep.mubr.bf16.mxu0 %v4207
        %5332 = vmatmul.mubr.bf16.gmra.mxu0 %v4206
        %v5333 = vpop.f32.mrf.mxu0
        %v5334 = vadd.f32 %v5141, %v5333
        %v5335 = vpop.f32.mrf.mxu0
        %v5336 = vadd.f32 %v5143, %v5335
        %v5337 = vpop.f32.mrf.mxu0
        %v5338 = vadd.f32 %v5145, %v5337
        %v5339 = vpop.f32.mrf.mxu0
        %v5340 = vadd.f32 %v5147, %v5339
        %5341 = vmatprep.mubr.bf16.mxu0 %v4211
        %5342 = vmatmul.mubr.bf16.gmra.mxu0 %v4210
        %v5343 = vpop.f32.mrf.mxu0
        %v5344 = vadd.f32 %v5151, %v5343
        %v5345 = vpop.f32.mrf.mxu0
        %v5346 = vadd.f32 %v5153, %v5345
        %v5347 = vpop.f32.mrf.mxu0
        %v5348 = vadd.f32 %v5155, %v5347
        %v5349 = vpop.f32.mrf.mxu0
        %v5350 = vadd.f32 %v5157, %v5349
        %5351 = vmatprep.mubr.bf16.mxu0 %v4215
        %5352 = vmatmul.mubr.bf16.gmra.mxu0 %v4214
        %v5353 = vpop.f32.mrf.mxu0
        %v5354 = vadd.f32 %v5161, %v5353
        %v5355 = vpop.f32.mrf.mxu0
        %v5356 = vadd.f32 %v5163, %v5355
        %v5357 = vpop.f32.mrf.mxu0
        %v5358 = vadd.f32 %v5165, %v5357
        %v5359 = vpop.f32.mrf.mxu0
        %v5360 = vadd.f32 %v5167, %v5359
        %5361 = vmatprep.mubr.bf16.mxu0 %v4219
        %5362 = vmatmul.mubr.bf16.gmra.mxu0 %v4218
        %v5363 = vpop.f32.mrf.mxu0
        %v5364 = vadd.f32 %v5171, %v5363
        %v5365 = vpop.f32.mrf.mxu0
        %v5366 = vadd.f32 %v5173, %v5365
        %v5367 = vpop.f32.mrf.mxu0
        %v5368 = vadd.f32 %v5175, %v5367
        %v5369 = vpop.f32.mrf.mxu0
        %v5370 = vadd.f32 %v5177, %v5369
        %5371 = vmatprep.mubr.bf16.mxu0 %v4223
        %5372 = vmatmul.mubr.bf16.gmra.mxu0 %v4222
        %v5373 = vpop.f32.mrf.mxu0
        %v5374 = vadd.f32 %v5181, %v5373
        %v5375 = vpop.f32.mrf.mxu0
        %v5376 = vadd.f32 %v5183, %v5375
        %v5377 = vpop.f32.mrf.mxu0
        %v5378 = vadd.f32 %v5185, %v5377
        %v5379 = vpop.f32.mrf.mxu0
        %v5380 = vadd.f32 %v5187, %v5379
        %5381 = vmatprep.mubr.bf16.mxu0 %v4227
        %5382 = vmatmul.mubr.bf16.gmra.mxu0 %v4226
        %v5383 = vpop.f32.mrf.mxu0
        %v5384 = vadd.f32 %v5191, %v5383
        %v5385 = vpop.f32.mrf.mxu0
        %v5386 = vadd.f32 %v5193, %v5385
        %v5387 = vpop.f32.mrf.mxu0
        %v5388 = vadd.f32 %v5195, %v5387
        %v5389 = vpop.f32.mrf.mxu0
        %v5390 = vadd.f32 %v5197, %v5389
        %5391 = vmatprep.mubr.bf16.mxu0 %v4231
        %5392 = vmatmul.mubr.bf16.gmra.mxu0 %v4230
        %v5393 = vpop.f32.mrf.mxu0
        %v5394 = vadd.f32 %v5201, %v5393
        %v5395 = vpop.f32.mrf.mxu0
        %v5396 = vadd.f32 %v5203, %v5395
        %v5397 = vpop.f32.mrf.mxu0
        %v5398 = vadd.f32 %v5205, %v5397
        %v5399 = vpop.f32.mrf.mxu0
        %v5400 = vadd.f32 %v5207, %v5399
        %5401 = vmatprep.mubr.bf16.mxu0 %v4235
        %5402 = vmatmul.mubr.bf16.gmra.mxu0 %v4234
        %v5403 = vpop.f32.mrf.mxu0
        %v5404 = vadd.f32 %v5211, %v5403
        %v5405 = vpop.f32.mrf.mxu0
        %v5406 = vadd.f32 %v5213, %v5405
        %v5407 = vpop.f32.mrf.mxu0
        %v5408 = vadd.f32 %v5215, %v5407
        %v5409 = vpop.f32.mrf.mxu0
        %v5410 = vadd.f32 %v5217, %v5409
        %5411 = vdwg.mxu0
        %5412 = vmatprep.subr.bf16.mxu0 %v4801
        %5413 = vmatpush1.bf16.msra.mxu0 %v4800
        %5414 = vmatprep.subr.bf16.mxu0 %v4797
        %5415 = vmatpush1.bf16.msra.mxu0 %v4796
        %5416 = vmatprep.subr.bf16.mxu0 %v4793
        %5417 = vmatpush1.bf16.msra.mxu0 %v4792
        %5418 = vmatprep.subr.bf16.mxu0 %v4789
        %5419 = vmatpush1.bf16.msra.mxu0 %v4788
        %5420 = vmatprep.subr.bf16.mxu0 %v4785
        %5421 = vmatpush1.bf16.msra.mxu0 %v4784
        %5422 = vmatprep.subr.bf16.mxu0 %v4781
        %5423 = vmatpush1.bf16.msra.mxu0 %v4780
        %5424 = vmatprep.subr.bf16.mxu0 %v4777
        %5425 = vmatpush1.bf16.msra.mxu0 %v4776
        %5426 = vmatprep.subr.bf16.mxu0 %v4773
        %5427 = vmatpush1.bf16.msra.mxu0 %v4772
        %5428 = vmatprep.subr.bf16.mxu0 %v4833
        %5429 = vmatpush2.bf16.msra.mxu0 %v4832
        %5430 = vmatprep.subr.bf16.mxu0 %v4829
        %5431 = vmatpush2.bf16.msra.mxu0 %v4828
        %5432 = vmatprep.subr.bf16.mxu0 %v4825
        %5433 = vmatpush2.bf16.msra.mxu0 %v4824
        %5434 = vmatprep.subr.bf16.mxu0 %v4821
        %5435 = vmatpush2.bf16.msra.mxu0 %v4820
        %5436 = vmatprep.subr.bf16.mxu0 %v4817
        %5437 = vmatpush2.bf16.msra.mxu0 %v4816
        %5438 = vmatprep.subr.bf16.mxu0 %v4813
        %5439 = vmatpush2.bf16.msra.mxu0 %v4812
        %5440 = vmatprep.subr.bf16.mxu0 %v4809
        %5441 = vmatpush2.bf16.msra.mxu0 %v4808
        %5442 = vmatprep.subr.bf16.mxu0 %v4805
        %5443 = vmatpush2.bf16.msra.mxu0 %v4804
        %5444 = vmatprep.mubr.bf16.mxu0 %v4173
        %5445 = vmatmul.mubr.bf16.gmra.mxu0 %v4172
        %v5446 = vpop.f32.mrf.mxu0
        %v5447 = vadd.f32 %v4377, %v5446
        %v5448 = vpop.f32.mrf.mxu0
        %v5449 = vadd.f32 %v4381, %v5448
        %v5450 = vpop.f32.mrf.mxu0
        %v5451 = vadd.f32 %v4377, %v5450
        %v5452 = vpop.f32.mrf.mxu0
        %v5453 = vadd.f32 %v4381, %v5452
        %5454 = vmatprep.mubr.bf16.mxu0 %v4177
        %5455 = vmatmul.mubr.bf16.gmra.mxu0 %v4176
        %v5456 = vpop.f32.mrf.mxu0
        %v5457 = vadd.f32 %v4377, %v5456
        %v5458 = vpop.f32.mrf.mxu0
        %v5459 = vadd.f32 %v4381, %v5458
        %v5460 = vpop.f32.mrf.mxu0
        %v5461 = vadd.f32 %v4377, %v5460
        %v5462 = vpop.f32.mrf.mxu0
        %v5463 = vadd.f32 %v4381, %v5462
        %5464 = vmatprep.mubr.bf16.mxu0 %v4181
        %5465 = vmatmul.mubr.bf16.gmra.mxu0 %v4180
        %v5466 = vpop.f32.mrf.mxu0
        %v5467 = vadd.f32 %v4377, %v5466
        %v5468 = vpop.f32.mrf.mxu0
        %v5469 = vadd.f32 %v4381, %v5468
        %v5470 = vpop.f32.mrf.mxu0
        %v5471 = vadd.f32 %v4377, %v5470
        %v5472 = vpop.f32.mrf.mxu0
        %v5473 = vadd.f32 %v4381, %v5472
        %5474 = vmatprep.mubr.bf16.mxu0 %v4185
        %5475 = vmatmul.mubr.bf16.gmra.mxu0 %v4184
        %v5476 = vpop.f32.mrf.mxu0
        %v5477 = vadd.f32 %v4377, %v5476
        %v5478 = vpop.f32.mrf.mxu0
        %v5479 = vadd.f32 %v4381, %v5478
        %v5480 = vpop.f32.mrf.mxu0
        %v5481 = vadd.f32 %v4377, %v5480
        %v5482 = vpop.f32.mrf.mxu0
        %v5483 = vadd.f32 %v4381, %v5482
        %5484 = vmatprep.mubr.bf16.mxu0 %v4189
        %5485 = vmatmul.mubr.bf16.gmra.mxu0 %v4188
        %v5486 = vpop.f32.mrf.mxu0
        %v5487 = vadd.f32 %v4377, %v5486
        %v5488 = vpop.f32.mrf.mxu0
        %v5489 = vadd.f32 %v4381, %v5488
        %v5490 = vpop.f32.mrf.mxu0
        %v5491 = vadd.f32 %v4377, %v5490
        %v5492 = vpop.f32.mrf.mxu0
        %v5493 = vadd.f32 %v4381, %v5492
        %5494 = vmatprep.mubr.bf16.mxu0 %v4193
        %5495 = vmatmul.mubr.bf16.gmra.mxu0 %v4192
        %v5496 = vpop.f32.mrf.mxu0
        %v5497 = vadd.f32 %v4377, %v5496
        %v5498 = vpop.f32.mrf.mxu0
        %v5499 = vadd.f32 %v4381, %v5498
        %v5500 = vpop.f32.mrf.mxu0
        %v5501 = vadd.f32 %v4377, %v5500
        %v5502 = vpop.f32.mrf.mxu0
        %v5503 = vadd.f32 %v4381, %v5502
        %5504 = vmatprep.mubr.bf16.mxu0 %v4197
        %5505 = vmatmul.mubr.bf16.gmra.mxu0 %v4196
        %v5506 = vpop.f32.mrf.mxu0
        %v5507 = vadd.f32 %v4377, %v5506
        %v5508 = vpop.f32.mrf.mxu0
        %v5509 = vadd.f32 %v4381, %v5508
        %v5510 = vpop.f32.mrf.mxu0
        %v5511 = vadd.f32 %v4377, %v5510
        %v5512 = vpop.f32.mrf.mxu0
        %v5513 = vadd.f32 %v4381, %v5512
        %5514 = vmatprep.mubr.bf16.mxu0 %v4201
        %5515 = vmatmul.mubr.bf16.gmra.mxu0 %v4200
        %v5516 = vpop.f32.mrf.mxu0
        %v5517 = vadd.f32 %v4377, %v5516
        %v5518 = vpop.f32.mrf.mxu0
        %v5519 = vadd.f32 %v4381, %v5518
        %v5520 = vpop.f32.mrf.mxu0
        %v5521 = vadd.f32 %v4377, %v5520
        %v5522 = vpop.f32.mrf.mxu0
        %v5523 = vadd.f32 %v4381, %v5522
        %5524 = vmatprep.mubr.bf16.mxu0 %v4205
        %5525 = vmatmul.mubr.bf16.gmra.mxu0 %v4204
        %v5526 = vpop.f32.mrf.mxu0
        %v5527 = vadd.f32 %v4377, %v5526
        %v5528 = vpop.f32.mrf.mxu0
        %v5529 = vadd.f32 %v4381, %v5528
        %v5530 = vpop.f32.mrf.mxu0
        %v5531 = vadd.f32 %v4377, %v5530
        %v5532 = vpop.f32.mrf.mxu0
        %v5533 = vadd.f32 %v4381, %v5532
        %5534 = vmatprep.mubr.bf16.mxu0 %v4209
        %5535 = vmatmul.mubr.bf16.gmra.mxu0 %v4208
        %v5536 = vpop.f32.mrf.mxu0
        %v5537 = vadd.f32 %v4377, %v5536
        %v5538 = vpop.f32.mrf.mxu0
        %v5539 = vadd.f32 %v4381, %v5538
        %v5540 = vpop.f32.mrf.mxu0
        %v5541 = vadd.f32 %v4377, %v5540
        %v5542 = vpop.f32.mrf.mxu0
        %v5543 = vadd.f32 %v4381, %v5542
        %5544 = vmatprep.mubr.bf16.mxu0 %v4213
        %5545 = vmatmul.mubr.bf16.gmra.mxu0 %v4212
        %v5546 = vpop.f32.mrf.mxu0
        %v5547 = vadd.f32 %v4377, %v5546
        %v5548 = vpop.f32.mrf.mxu0
        %v5549 = vadd.f32 %v4381, %v5548
        %v5550 = vpop.f32.mrf.mxu0
        %v5551 = vadd.f32 %v4377, %v5550
        %v5552 = vpop.f32.mrf.mxu0
        %v5553 = vadd.f32 %v4381, %v5552
        %5554 = vmatprep.mubr.bf16.mxu0 %v4217
        %5555 = vmatmul.mubr.bf16.gmra.mxu0 %v4216
        %v5556 = vpop.f32.mrf.mxu0
        %v5557 = vadd.f32 %v4377, %v5556
        %v5558 = vpop.f32.mrf.mxu0
        %v5559 = vadd.f32 %v4381, %v5558
        %v5560 = vpop.f32.mrf.mxu0
        %v5561 = vadd.f32 %v4377, %v5560
        %v5562 = vpop.f32.mrf.mxu0
        %v5563 = vadd.f32 %v4381, %v5562
        %5564 = vmatprep.mubr.bf16.mxu0 %v4221
        %5565 = vmatmul.mubr.bf16.gmra.mxu0 %v4220
        %v5566 = vpop.f32.mrf.mxu0
        %v5567 = vadd.f32 %v4377, %v5566
        %v5568 = vpop.f32.mrf.mxu0
        %v5569 = vadd.f32 %v4381, %v5568
        %v5570 = vpop.f32.mrf.mxu0
        %v5571 = vadd.f32 %v4377, %v5570
        %v5572 = vpop.f32.mrf.mxu0
        %v5573 = vadd.f32 %v4381, %v5572
        %5574 = vmatprep.mubr.bf16.mxu0 %v4225
        %5575 = vmatmul.mubr.bf16.gmra.mxu0 %v4224
        %v5576 = vpop.f32.mrf.mxu0
        %v5577 = vadd.f32 %v4377, %v5576
        %v5578 = vpop.f32.mrf.mxu0
        %v5579 = vadd.f32 %v4381, %v5578
        %v5580 = vpop.f32.mrf.mxu0
        %v5581 = vadd.f32 %v4377, %v5580
        %v5582 = vpop.f32.mrf.mxu0
        %v5583 = vadd.f32 %v4381, %v5582
        %5584 = vmatprep.mubr.bf16.mxu0 %v4229
        %5585 = vmatmul.mubr.bf16.gmra.mxu0 %v4228
        %v5586 = vpop.f32.mrf.mxu0
        %v5587 = vadd.f32 %v4377, %v5586
        %v5588 = vpop.f32.mrf.mxu0
        %v5589 = vadd.f32 %v4381, %v5588
        %v5590 = vpop.f32.mrf.mxu0
        %v5591 = vadd.f32 %v4377, %v5590
        %v5592 = vpop.f32.mrf.mxu0
        %v5593 = vadd.f32 %v4381, %v5592
        %5594 = vmatprep.mubr.bf16.mxu0 %v4233
        %5595 = vmatmul.mubr.bf16.gmra.mxu0 %v4232
        %v5596 = vpop.f32.mrf.mxu0
        %v5597 = vadd.f32 %v4377, %v5596
        %v5598 = vpop.f32.mrf.mxu0
        %v5599 = vadd.f32 %v4381, %v5598
        %v5600 = vpop.f32.mrf.mxu0
        %v5601 = vadd.f32 %v4377, %v5600
        %v5602 = vpop.f32.mrf.mxu0
        %v5603 = vadd.f32 %v4381, %v5602
        %5604 = vdwg.mxu0
        %5605 = vmatprep.subr.bf16.mxu0 %v4865
        %5606 = vmatpush1.bf16.msra.mxu0 %v4864
        %5607 = vmatprep.subr.bf16.mxu0 %v4861
        %5608 = vmatpush1.bf16.msra.mxu0 %v4860
        %5609 = vmatprep.subr.bf16.mxu0 %v4857
        %5610 = vmatpush1.bf16.msra.mxu0 %v4856
        %5611 = vmatprep.subr.bf16.mxu0 %v4853
        %5612 = vmatpush1.bf16.msra.mxu0 %v4852
        %5613 = vmatprep.subr.bf16.mxu0 %v4849
        %5614 = vmatpush1.bf16.msra.mxu0 %v4848
        %5615 = vmatprep.subr.bf16.mxu0 %v4845
        %5616 = vmatpush1.bf16.msra.mxu0 %v4844
        %5617 = vmatprep.subr.bf16.mxu0 %v4841
        %5618 = vmatpush1.bf16.msra.mxu0 %v4840
        %5619 = vmatprep.subr.bf16.mxu0 %v4837
        %5620 = vmatpush1.bf16.msra.mxu0 %v4836
        %5621 = vmatprep.subr.bf16.mxu0 %v4897
        %5622 = vmatpush2.bf16.msra.mxu0 %v4896
        %5623 = vmatprep.subr.bf16.mxu0 %v4893
        %5624 = vmatpush2.bf16.msra.mxu0 %v4892
        %5625 = vmatprep.subr.bf16.mxu0 %v4889
        %5626 = vmatpush2.bf16.msra.mxu0 %v4888
        %5627 = vmatprep.subr.bf16.mxu0 %v4885
        %5628 = vmatpush2.bf16.msra.mxu0 %v4884
        %5629 = vmatprep.subr.bf16.mxu0 %v4881
        %5630 = vmatpush2.bf16.msra.mxu0 %v4880
        %5631 = vmatprep.subr.bf16.mxu0 %v4877
        %5632 = vmatpush2.bf16.msra.mxu0 %v4876
        %5633 = vmatprep.subr.bf16.mxu0 %v4873
        %5634 = vmatpush2.bf16.msra.mxu0 %v4872
        %5635 = vmatprep.subr.bf16.mxu0 %v4869
        %5636 = vmatpush2.bf16.msra.mxu0 %v4868
        %5637 = vmatprep.mubr.bf16.mxu0 %v4175
        %5638 = vmatmul.mubr.bf16.gmra.mxu0 %v4174
        %v5639 = vpop.f32.mrf.mxu0
        %v5640 = vadd.f32 %v5447, %v5639
        %v5641 = vpop.f32.mrf.mxu0
        %v5642 = vadd.f32 %v5449, %v5641
        %v5643 = vpop.f32.mrf.mxu0
        %v5644 = vadd.f32 %v5451, %v5643
        %v5645 = vpop.f32.mrf.mxu0
        %v5646 = vadd.f32 %v5453, %v5645
        %5647 = vmatprep.mubr.bf16.mxu0 %v4179
        %5648 = vmatmul.mubr.bf16.gmra.mxu0 %v4178
        %v5649 = vpop.f32.mrf.mxu0
        %v5650 = vadd.f32 %v5457, %v5649
        %v5651 = vpop.f32.mrf.mxu0
        %v5652 = vadd.f32 %v5459, %v5651
        %v5653 = vpop.f32.mrf.mxu0
        %v5654 = vadd.f32 %v5461, %v5653
        %v5655 = vpop.f32.mrf.mxu0
        %v5656 = vadd.f32 %v5463, %v5655
        %5657 = vmatprep.mubr.bf16.mxu0 %v4183
        %5658 = vmatmul.mubr.bf16.gmra.mxu0 %v4182
        %v5659 = vpop.f32.mrf.mxu0
        %v5660 = vadd.f32 %v5467, %v5659
        %v5661 = vpop.f32.mrf.mxu0
        %v5662 = vadd.f32 %v5469, %v5661
        %v5663 = vpop.f32.mrf.mxu0
        %v5664 = vadd.f32 %v5471, %v5663
        %v5665 = vpop.f32.mrf.mxu0
        %v5666 = vadd.f32 %v5473, %v5665
        %5667 = vmatprep.mubr.bf16.mxu0 %v4187
        %5668 = vmatmul.mubr.bf16.gmra.mxu0 %v4186
        %v5669 = vpop.f32.mrf.mxu0
        %v5670 = vadd.f32 %v5477, %v5669
        %v5671 = vpop.f32.mrf.mxu0
        %v5672 = vadd.f32 %v5479, %v5671
        %v5673 = vpop.f32.mrf.mxu0
        %v5674 = vadd.f32 %v5481, %v5673
        %v5675 = vpop.f32.mrf.mxu0
        %v5676 = vadd.f32 %v5483, %v5675
        %5677 = vmatprep.mubr.bf16.mxu0 %v4191
        %5678 = vmatmul.mubr.bf16.gmra.mxu0 %v4190
        %v5679 = vpop.f32.mrf.mxu0
        %v5680 = vadd.f32 %v5487, %v5679
        %v5681 = vpop.f32.mrf.mxu0
        %v5682 = vadd.f32 %v5489, %v5681
        %v5683 = vpop.f32.mrf.mxu0
        %v5684 = vadd.f32 %v5491, %v5683
        %v5685 = vpop.f32.mrf.mxu0
        %v5686 = vadd.f32 %v5493, %v5685
        %5687 = vmatprep.mubr.bf16.mxu0 %v4195
        %5688 = vmatmul.mubr.bf16.gmra.mxu0 %v4194
        %v5689 = vpop.f32.mrf.mxu0
        %v5690 = vadd.f32 %v5497, %v5689
        %v5691 = vpop.f32.mrf.mxu0
        %v5692 = vadd.f32 %v5499, %v5691
        %v5693 = vpop.f32.mrf.mxu0
        %v5694 = vadd.f32 %v5501, %v5693
        %v5695 = vpop.f32.mrf.mxu0
        %v5696 = vadd.f32 %v5503, %v5695
        %5697 = vmatprep.mubr.bf16.mxu0 %v4199
        %5698 = vmatmul.mubr.bf16.gmra.mxu0 %v4198
        %v5699 = vpop.f32.mrf.mxu0
        %v5700 = vadd.f32 %v5507, %v5699
        %v5701 = vpop.f32.mrf.mxu0
        %v5702 = vadd.f32 %v5509, %v5701
        %v5703 = vpop.f32.mrf.mxu0
        %v5704 = vadd.f32 %v5511, %v5703
        %v5705 = vpop.f32.mrf.mxu0
        %v5706 = vadd.f32 %v5513, %v5705
        %5707 = vmatprep.mubr.bf16.mxu0 %v4203
        %5708 = vmatmul.mubr.bf16.gmra.mxu0 %v4202
        %v5709 = vpop.f32.mrf.mxu0
        %v5710 = vadd.f32 %v5517, %v5709
        %v5711 = vpop.f32.mrf.mxu0
        %v5712 = vadd.f32 %v5519, %v5711
        %v5713 = vpop.f32.mrf.mxu0
        %v5714 = vadd.f32 %v5521, %v5713
        %v5715 = vpop.f32.mrf.mxu0
        %v5716 = vadd.f32 %v5523, %v5715
        %5717 = vmatprep.mubr.bf16.mxu0 %v4207
        %5718 = vmatmul.mubr.bf16.gmra.mxu0 %v4206
        %v5719 = vpop.f32.mrf.mxu0
        %v5720 = vadd.f32 %v5527, %v5719
        %v5721 = vpop.f32.mrf.mxu0
        %v5722 = vadd.f32 %v5529, %v5721
        %v5723 = vpop.f32.mrf.mxu0
        %v5724 = vadd.f32 %v5531, %v5723
        %v5725 = vpop.f32.mrf.mxu0
        %v5726 = vadd.f32 %v5533, %v5725
        %5727 = vmatprep.mubr.bf16.mxu0 %v4211
        %5728 = vmatmul.mubr.bf16.gmra.mxu0 %v4210
        %v5729 = vpop.f32.mrf.mxu0
        %v5730 = vadd.f32 %v5537, %v5729
        %v5731 = vpop.f32.mrf.mxu0
        %v5732 = vadd.f32 %v5539, %v5731
        %v5733 = vpop.f32.mrf.mxu0
        %v5734 = vadd.f32 %v5541, %v5733
        %v5735 = vpop.f32.mrf.mxu0
        %v5736 = vadd.f32 %v5543, %v5735
        %5737 = vmatprep.mubr.bf16.mxu0 %v4215
        %5738 = vmatmul.mubr.bf16.gmra.mxu0 %v4214
        %v5739 = vpop.f32.mrf.mxu0
        %v5740 = vadd.f32 %v5547, %v5739
        %v5741 = vpop.f32.mrf.mxu0
        %v5742 = vadd.f32 %v5549, %v5741
        %v5743 = vpop.f32.mrf.mxu0
        %v5744 = vadd.f32 %v5551, %v5743
        %v5745 = vpop.f32.mrf.mxu0
        %v5746 = vadd.f32 %v5553, %v5745
        %5747 = vmatprep.mubr.bf16.mxu0 %v4219
        %5748 = vmatmul.mubr.bf16.gmra.mxu0 %v4218
        %v5749 = vpop.f32.mrf.mxu0
        %v5750 = vadd.f32 %v5557, %v5749
        %v5751 = vpop.f32.mrf.mxu0
        %v5752 = vadd.f32 %v5559, %v5751
        %v5753 = vpop.f32.mrf.mxu0
        %v5754 = vadd.f32 %v5561, %v5753
        %v5755 = vpop.f32.mrf.mxu0
        %v5756 = vadd.f32 %v5563, %v5755
        %5757 = vmatprep.mubr.bf16.mxu0 %v4223
        %5758 = vmatmul.mubr.bf16.gmra.mxu0 %v4222
        %v5759 = vpop.f32.mrf.mxu0
        %v5760 = vadd.f32 %v5567, %v5759
        %v5761 = vpop.f32.mrf.mxu0
        %v5762 = vadd.f32 %v5569, %v5761
        %v5763 = vpop.f32.mrf.mxu0
        %v5764 = vadd.f32 %v5571, %v5763
        %v5765 = vpop.f32.mrf.mxu0
        %v5766 = vadd.f32 %v5573, %v5765
        %5767 = vmatprep.mubr.bf16.mxu0 %v4227
        %5768 = vmatmul.mubr.bf16.gmra.mxu0 %v4226
        %v5769 = vpop.f32.mrf.mxu0
        %v5770 = vadd.f32 %v5577, %v5769
        %v5771 = vpop.f32.mrf.mxu0
        %v5772 = vadd.f32 %v5579, %v5771
        %v5773 = vpop.f32.mrf.mxu0
        %v5774 = vadd.f32 %v5581, %v5773
        %v5775 = vpop.f32.mrf.mxu0
        %v5776 = vadd.f32 %v5583, %v5775
        %5777 = vmatprep.mubr.bf16.mxu0 %v4231
        %5778 = vmatmul.mubr.bf16.gmra.mxu0 %v4230
        %v5779 = vpop.f32.mrf.mxu0
        %v5780 = vadd.f32 %v5587, %v5779
        %v5781 = vpop.f32.mrf.mxu0
        %v5782 = vadd.f32 %v5589, %v5781
        %v5783 = vpop.f32.mrf.mxu0
        %v5784 = vadd.f32 %v5591, %v5783
        %v5785 = vpop.f32.mrf.mxu0
        %v5786 = vadd.f32 %v5593, %v5785
        %5787 = vmatprep.mubr.bf16.mxu0 %v4235
        %5788 = vmatmul.mubr.bf16.gmra.mxu0 %v4234
        %v5789 = vpop.f32.mrf.mxu0
        %v5790 = vadd.f32 %v5597, %v5789
        %v5791 = vpop.f32.mrf.mxu0
        %v5792 = vadd.f32 %v5599, %v5791
        %v5793 = vpop.f32.mrf.mxu0
        %v5794 = vadd.f32 %v5601, %v5793
        %v5795 = vpop.f32.mrf.mxu0
        %v5796 = vadd.f32 %v5603, %v5795
        %5797 = vdwg.mxu0
        %v5798 = vmax.f32 %v5254, 0.0
        %v5799 = vmax.f32 %v5256, 0.0
        %v5800 = vmax.f32 %v5640, 0.0
        %v5801 = vmax.f32 %v5642, 0.0
        %v5802 = vmax.f32 %v5258, 0.0
        %v5803 = vmax.f32 %v5260, 0.0
        %v5804 = vmax.f32 %v5644, 0.0
        %v5805 = vmax.f32 %v5646, 0.0
        %v5806 = vmax.f32 %v5264, 0.0
        %v5807 = vmax.f32 %v5266, 0.0
        %v5808 = vmax.f32 %v5650, 0.0
        %v5809 = vmax.f32 %v5652, 0.0
        %v5810 = vmax.f32 %v5268, 0.0
        %v5811 = vmax.f32 %v5270, 0.0
        %v5812 = vmax.f32 %v5654, 0.0
        %v5813 = vmax.f32 %v5656, 0.0
        %v5814 = vmax.f32 %v5274, 0.0
        %v5815 = vmax.f32 %v5276, 0.0
        %v5816 = vmax.f32 %v5660, 0.0
        %v5817 = vmax.f32 %v5662, 0.0
        %v5818 = vmax.f32 %v5278, 0.0
        %v5819 = vmax.f32 %v5280, 0.0
        %v5820 = vmax.f32 %v5664, 0.0
        %v5821 = vmax.f32 %v5666, 0.0
        %v5822 = vmax.f32 %v5284, 0.0
        %v5823 = vmax.f32 %v5286, 0.0
        %v5824 = vmax.f32 %v5670, 0.0
        %v5825 = vmax.f32 %v5672, 0.0
        %v5826 = vmax.f32 %v5288, 0.0
        %v5827 = vmax.f32 %v5290, 0.0
        %v5828 = vmax.f32 %v5674, 0.0
        %v5829 = vmax.f32 %v5676, 0.0
        %v5830 = vmax.f32 %v5294, 0.0
        %v5831 = vmax.f32 %v5296, 0.0
        %v5832 = vmax.f32 %v5680, 0.0
        %v5833 = vmax.f32 %v5682, 0.0
        %v5834 = vmax.f32 %v5298, 0.0
        %v5835 = vmax.f32 %v5300, 0.0
        %v5836 = vmax.f32 %v5684, 0.0
        %v5837 = vmax.f32 %v5686, 0.0
        %v5838 = vmax.f32 %v5304, 0.0
        %v5839 = vmax.f32 %v5306, 0.0
        %v5840 = vmax.f32 %v5690, 0.0
        %v5841 = vmax.f32 %v5692, 0.0
        %v5842 = vmax.f32 %v5308, 0.0
        %v5843 = vmax.f32 %v5310, 0.0
        %v5844 = vmax.f32 %v5694, 0.0
        %v5845 = vmax.f32 %v5696, 0.0
        %v5846 = vmax.f32 %v5314, 0.0
        %v5847 = vmax.f32 %v5316, 0.0
        %v5848 = vmax.f32 %v5700, 0.0
        %v5849 = vmax.f32 %v5702, 0.0
        %v5850 = vmax.f32 %v5318, 0.0
        %v5851 = vmax.f32 %v5320, 0.0
        %v5852 = vmax.f32 %v5704, 0.0
        %v5853 = vmax.f32 %v5706, 0.0
        %v5854 = vmax.f32 %v5324, 0.0
        %v5855 = vmax.f32 %v5326, 0.0
        %v5856 = vmax.f32 %v5710, 0.0
        %v5857 = vmax.f32 %v5712, 0.0
        %v5858 = vmax.f32 %v5328, 0.0
        %v5859 = vmax.f32 %v5330, 0.0
        %v5860 = vmax.f32 %v5714, 0.0
        %v5861 = vmax.f32 %v5716, 0.0
        %v5862 = vmax.f32 %v5334, 0.0
        %v5863 = vmax.f32 %v5336, 0.0
        %v5864 = vmax.f32 %v5720, 0.0
        %v5865 = vmax.f32 %v5722, 0.0
        %v5866 = vmax.f32 %v5338, 0.0
        %v5867 = vmax.f32 %v5340, 0.0
        %v5868 = vmax.f32 %v5724, 0.0
        %v5869 = vmax.f32 %v5726, 0.0
        %v5870 = vmax.f32 %v5344, 0.0
        %v5871 = vmax.f32 %v5346, 0.0
        %v5872 = vmax.f32 %v5730, 0.0
        %v5873 = vmax.f32 %v5732, 0.0
        %v5874 = vmax.f32 %v5348, 0.0
        %v5875 = vmax.f32 %v5350, 0.0
        %v5876 = vmax.f32 %v5734, 0.0
        %v5877 = vmax.f32 %v5736, 0.0
        %v5878 = vmax.f32 %v5354, 0.0
        %v5879 = vmax.f32 %v5356, 0.0
        %v5880 = vmax.f32 %v5740, 0.0
        %v5881 = vmax.f32 %v5742, 0.0
        %v5882 = vmax.f32 %v5358, 0.0
        %v5883 = vmax.f32 %v5360, 0.0
        %v5884 = vmax.f32 %v5744, 0.0
        %v5885 = vmax.f32 %v5746, 0.0
        %v5886 = vmax.f32 %v5364, 0.0
        %v5887 = vmax.f32 %v5366, 0.0
        %v5888 = vmax.f32 %v5750, 0.0
        %v5889 = vmax.f32 %v5752, 0.0
        %v5890 = vmax.f32 %v5368, 0.0
        %v5891 = vmax.f32 %v5370, 0.0
        %v5892 = vmax.f32 %v5754, 0.0
        %v5893 = vmax.f32 %v5756, 0.0
        %v5894 = vmax.f32 %v5374, 0.0
        %v5895 = vmax.f32 %v5376, 0.0
        %v5896 = vmax.f32 %v5760, 0.0
        %v5897 = vmax.f32 %v5762, 0.0
        %v5898 = vmax.f32 %v5378, 0.0
        %v5899 = vmax.f32 %v5380, 0.0
        %v5900 = vmax.f32 %v5764, 0.0
        %v5901 = vmax.f32 %v5766, 0.0
        %v5902 = vmax.f32 %v5384, 0.0
        %v5903 = vmax.f32 %v5386, 0.0
        %v5904 = vmax.f32 %v5770, 0.0
        %v5905 = vmax.f32 %v5772, 0.0
        %v5906 = vmax.f32 %v5388, 0.0
        %v5907 = vmax.f32 %v5390, 0.0
        %v5908 = vmax.f32 %v5774, 0.0
        %v5909 = vmax.f32 %v5776, 0.0
        %v5910 = vmax.f32 %v5394, 0.0
        %v5911 = vmax.f32 %v5396, 0.0
        %v5912 = vmax.f32 %v5780, 0.0
        %v5913 = vmax.f32 %v5782, 0.0
        %v5914 = vmax.f32 %v5398, 0.0
        %v5915 = vmax.f32 %v5400, 0.0
        %v5916 = vmax.f32 %v5784, 0.0
        %v5917 = vmax.f32 %v5786, 0.0
        %v5918 = vmax.f32 %v5404, 0.0
        %v5919 = vmax.f32 %v5406, 0.0
        %v5920 = vmax.f32 %v5790, 0.0
        %v5921 = vmax.f32 %v5792, 0.0
        %v5922 = vmax.f32 %v5408, 0.0
        %v5923 = vmax.f32 %v5410, 0.0
        %v5924 = vmax.f32 %v5794, 0.0
        %v5925 = vmax.f32 %v5796, 0.0
        %v5926 = vpack.c.bf16 %v5802, %v5798
        %v5927 = vpack.c.bf16 %v5803, %v5799
        %v5928 = vpack.c.bf16 %v5804, %v5800
        %v5929 = vpack.c.bf16 %v5805, %v5801
        %v5930 = vpack.c.bf16 %v5810, %v5806
        %v5931 = vpack.c.bf16 %v5811, %v5807
        %v5932 = vpack.c.bf16 %v5812, %v5808
        %v5933 = vpack.c.bf16 %v5813, %v5809
        %v5934 = vpack.c.bf16 %v5818, %v5814
        %v5935 = vpack.c.bf16 %v5819, %v5815
        %v5936 = vpack.c.bf16 %v5820, %v5816
        %v5937 = vpack.c.bf16 %v5821, %v5817
        %v5938 = vpack.c.bf16 %v5826, %v5822
        %v5939 = vpack.c.bf16 %v5827, %v5823
        %v5940 = vpack.c.bf16 %v5828, %v5824
        %v5941 = vpack.c.bf16 %v5829, %v5825
        %v5942 = vpack.c.bf16 %v5834, %v5830
        %v5943 = vpack.c.bf16 %v5835, %v5831
        %v5944 = vpack.c.bf16 %v5836, %v5832
        %v5945 = vpack.c.bf16 %v5837, %v5833
        %v5946 = vpack.c.bf16 %v5842, %v5838
        %v5947 = vpack.c.bf16 %v5843, %v5839
        %v5948 = vpack.c.bf16 %v5844, %v5840
        %v5949 = vpack.c.bf16 %v5845, %v5841
        %v5950 = vpack.c.bf16 %v5850, %v5846
        %v5951 = vpack.c.bf16 %v5851, %v5847
        %v5952 = vpack.c.bf16 %v5852, %v5848
        %v5953 = vpack.c.bf16 %v5853, %v5849
        %v5954 = vpack.c.bf16 %v5858, %v5854
        %v5955 = vpack.c.bf16 %v5859, %v5855
        %v5956 = vpack.c.bf16 %v5860, %v5856
        %v5957 = vpack.c.bf16 %v5861, %v5857
        %v5958 = vpack.c.bf16 %v5866, %v5862
        %v5959 = vpack.c.bf16 %v5867, %v5863
        %v5960 = vpack.c.bf16 %v5868, %v5864
        %v5961 = vpack.c.bf16 %v5869, %v5865
        %v5962 = vpack.c.bf16 %v5874, %v5870
        %v5963 = vpack.c.bf16 %v5875, %v5871
        %v5964 = vpack.c.bf16 %v5876, %v5872
        %v5965 = vpack.c.bf16 %v5877, %v5873
        %v5966 = vpack.c.bf16 %v5882, %v5878
        %v5967 = vpack.c.bf16 %v5883, %v5879
        %v5968 = vpack.c.bf16 %v5884, %v5880
        %v5969 = vpack.c.bf16 %v5885, %v5881
        %v5970 = vpack.c.bf16 %v5890, %v5886
        %v5971 = vpack.c.bf16 %v5891, %v5887
        %v5972 = vpack.c.bf16 %v5892, %v5888
        %v5973 = vpack.c.bf16 %v5893, %v5889
        %v5974 = vpack.c.bf16 %v5898, %v5894
        %v5975 = vpack.c.bf16 %v5899, %v5895
        %v5976 = vpack.c.bf16 %v5900, %v5896
        %v5977 = vpack.c.bf16 %v5901, %v5897
        %v5978 = vpack.c.bf16 %v5906, %v5902
        %v5979 = vpack.c.bf16 %v5907, %v5903
        %v5980 = vpack.c.bf16 %v5908, %v5904
        %v5981 = vpack.c.bf16 %v5909, %v5905
        %v5982 = vpack.c.bf16 %v5914, %v5910
        %v5983 = vpack.c.bf16 %v5915, %v5911
        %v5984 = vpack.c.bf16 %v5916, %v5912
        %v5985 = vpack.c.bf16 %v5917, %v5913
        %v5986 = vpack.c.bf16 %v5922, %v5918
        %v5987 = vpack.c.bf16 %v5923, %v5919
        %v5988 = vpack.c.bf16 %v5924, %v5920
        %v5989 = vpack.c.bf16 %v5925, %v5921
        %v5990 = vld [vmem:[#allocation11] sm:$0xff]
        %v5991 = vld [vmem:[#allocation11 + $0x8] sm:$0xff]
        %v5992 = vld [vmem:[#allocation11 + $0x10] sm:$0xff]
        %v5993 = vld [vmem:[#allocation11 + $0x18] sm:$0xff]
        %v5994 = vld [vmem:[#allocation11 + $0x20] sm:$0xff]
        %v5995 = vld [vmem:[#allocation11 + $0x28] sm:$0xff]
        %v5996 = vld [vmem:[#allocation11 + $0x30] sm:$0xff]
        %v5997 = vld [vmem:[#allocation11 + $0x38] sm:$0xff]
        %v5998 = vld [vmem:[#allocation11 + $0x40] sm:$0xff]
        %v5999 = vld [vmem:[#allocation11 + $0x48] sm:$0xff]
        %v6000 = vld [vmem:[#allocation11 + $0x50] sm:$0xff]
        %v6001 = vld [vmem:[#allocation11 + $0x58] sm:$0xff]
        %v6002 = vld [vmem:[#allocation11 + $0x60] sm:$0xff]
        %v6003 = vld [vmem:[#allocation11 + $0x68] sm:$0xff]
        %v6004 = vld [vmem:[#allocation11 + $0x70] sm:$0xff]
        %v6005 = vld [vmem:[#allocation11 + $0x78] sm:$0xff]
        %v6006 = vld [vmem:[#allocation11 + $0x80] sm:$0xff]
        %v6007 = vld [vmem:[#allocation11 + $0x88] sm:$0xff]
        %v6008 = vld [vmem:[#allocation11 + $0x90] sm:$0xff]
        %v6009 = vld [vmem:[#allocation11 + $0x98] sm:$0xff]
        %v6010 = vld [vmem:[#allocation11 + $0xa0] sm:$0xff]
        %v6011 = vld [vmem:[#allocation11 + $0xa8] sm:$0xff]
        %v6012 = vld [vmem:[#allocation11 + $0xb0] sm:$0xff]
        %v6013 = vld [vmem:[#allocation11 + $0xb8] sm:$0xff]
        %v6014 = vld [vmem:[#allocation11 + $0xc0] sm:$0xff]
        %v6015 = vld [vmem:[#allocation11 + $0xc8] sm:$0xff]
        %v6016 = vld [vmem:[#allocation11 + $0xd0] sm:$0xff]
        %v6017 = vld [vmem:[#allocation11 + $0xd8] sm:$0xff]
        %v6018 = vld [vmem:[#allocation11 + $0xe0] sm:$0xff]
        %v6019 = vld [vmem:[#allocation11 + $0xe8] sm:$0xff]
        %v6020 = vld [vmem:[#allocation11 + $0xf0] sm:$0xff]
        %v6021 = vld [vmem:[#allocation11 + $0xf8] sm:$0xff]
        %v6022 = vld [vmem:[#allocation11 + $0x100] sm:$0xff]
        %v6023 = vld [vmem:[#allocation11 + $0x108] sm:$0xff]
        %v6024 = vld [vmem:[#allocation11 + $0x110] sm:$0xff]
        %v6025 = vld [vmem:[#allocation11 + $0x118] sm:$0xff]
        %v6026 = vld [vmem:[#allocation11 + $0x120] sm:$0xff]
        %v6027 = vld [vmem:[#allocation11 + $0x128] sm:$0xff]
        %v6028 = vld [vmem:[#allocation11 + $0x130] sm:$0xff]
        %v6029 = vld [vmem:[#allocation11 + $0x138] sm:$0xff]
        %v6030 = vld [vmem:[#allocation11 + $0x140] sm:$0xff]
        %v6031 = vld [vmem:[#allocation11 + $0x148] sm:$0xff]
        %v6032 = vld [vmem:[#allocation11 + $0x150] sm:$0xff]
        %v6033 = vld [vmem:[#allocation11 + $0x158] sm:$0xff]
        %v6034 = vld [vmem:[#allocation11 + $0x160] sm:$0xff]
        %v6035 = vld [vmem:[#allocation11 + $0x168] sm:$0xff]
        %v6036 = vld [vmem:[#allocation11 + $0x170] sm:$0xff]
        %v6037 = vld [vmem:[#allocation11 + $0x178] sm:$0xff]
        %v6038 = vld [vmem:[#allocation11 + $0x180] sm:$0xff]
        %v6039 = vld [vmem:[#allocation11 + $0x188] sm:$0xff]
        %v6040 = vld [vmem:[#allocation11 + $0x190] sm:$0xff]
        %v6041 = vld [vmem:[#allocation11 + $0x198] sm:$0xff]
        %v6042 = vld [vmem:[#allocation11 + $0x1a0] sm:$0xff]
        %v6043 = vld [vmem:[#allocation11 + $0x1a8] sm:$0xff]
        %v6044 = vld [vmem:[#allocation11 + $0x1b0] sm:$0xff]
        %v6045 = vld [vmem:[#allocation11 + $0x1b8] sm:$0xff]
        %v6046 = vld [vmem:[#allocation11 + $0x1c0] sm:$0xff]
        %v6047 = vld [vmem:[#allocation11 + $0x1c8] sm:$0xff]
        %v6048 = vld [vmem:[#allocation11 + $0x1d0] sm:$0xff]
        %v6049 = vld [vmem:[#allocation11 + $0x1d8] sm:$0xff]
        %v6050 = vld [vmem:[#allocation11 + $0x1e0] sm:$0xff]
        %v6051 = vld [vmem:[#allocation11 + $0x1e8] sm:$0xff]
        %v6052 = vld [vmem:[#allocation11 + $0x1f0] sm:$0xff]
        %v6053 = vld [vmem:[#allocation11 + $0x1f8] sm:$0xff]
        %v6054 = vld [vmem:[#allocation11 + $0x200] sm:$0xff]
        %v6055 = vld [vmem:[#allocation11 + $0x208] sm:$0xff]
        %v6056 = vld [vmem:[#allocation11 + $0x210] sm:$0xff]
        %v6057 = vld [vmem:[#allocation11 + $0x218] sm:$0xff]
        %v6058 = vld [vmem:[#allocation11 + $0x220] sm:$0xff]
        %v6059 = vld [vmem:[#allocation11 + $0x228] sm:$0xff]
        %v6060 = vld [vmem:[#allocation11 + $0x230] sm:$0xff]
        %v6061 = vld [vmem:[#allocation11 + $0x238] sm:$0xff]
        %v6062 = vld [vmem:[#allocation11 + $0x240] sm:$0xff]
        %v6063 = vld [vmem:[#allocation11 + $0x248] sm:$0xff]
        %v6064 = vld [vmem:[#allocation11 + $0x250] sm:$0xff]
        %v6065 = vld [vmem:[#allocation11 + $0x258] sm:$0xff]
        %v6066 = vld [vmem:[#allocation11 + $0x260] sm:$0xff]
        %v6067 = vld [vmem:[#allocation11 + $0x268] sm:$0xff]
        %v6068 = vld [vmem:[#allocation11 + $0x270] sm:$0xff]
        %v6069 = vld [vmem:[#allocation11 + $0x278] sm:$0xff]
        %v6070 = vld [vmem:[#allocation11 + $0x280] sm:$0xff]
        %v6071 = vld [vmem:[#allocation11 + $0x288] sm:$0xff]
        %v6072 = vld [vmem:[#allocation11 + $0x290] sm:$0xff]
        %v6073 = vld [vmem:[#allocation11 + $0x298] sm:$0xff]
        %v6074 = vld [vmem:[#allocation11 + $0x2a0] sm:$0xff]
        %v6075 = vld [vmem:[#allocation11 + $0x2a8] sm:$0xff]
        %v6076 = vld [vmem:[#allocation11 + $0x2b0] sm:$0xff]
        %v6077 = vld [vmem:[#allocation11 + $0x2b8] sm:$0xff]
        %v6078 = vld [vmem:[#allocation11 + $0x2c0] sm:$0xff]
        %v6079 = vld [vmem:[#allocation11 + $0x2c8] sm:$0xff]
        %v6080 = vld [vmem:[#allocation11 + $0x2d0] sm:$0xff]
        %v6081 = vld [vmem:[#allocation11 + $0x2d8] sm:$0xff]
        %v6082 = vld [vmem:[#allocation11 + $0x2e0] sm:$0xff]
        %v6083 = vld [vmem:[#allocation11 + $0x2e8] sm:$0xff]
        %v6084 = vld [vmem:[#allocation11 + $0x2f0] sm:$0xff]
        %v6085 = vld [vmem:[#allocation11 + $0x2f8] sm:$0xff]
        %v6086 = vld [vmem:[#allocation11 + $0x300] sm:$0xff]
        %v6087 = vld [vmem:[#allocation11 + $0x308] sm:$0xff]
        %v6088 = vld [vmem:[#allocation11 + $0x310] sm:$0xff]
        %v6089 = vld [vmem:[#allocation11 + $0x318] sm:$0xff]
        %v6090 = vld [vmem:[#allocation11 + $0x320] sm:$0xff]
        %v6091 = vld [vmem:[#allocation11 + $0x328] sm:$0xff]
        %v6092 = vld [vmem:[#allocation11 + $0x330] sm:$0xff]
        %v6093 = vld [vmem:[#allocation11 + $0x338] sm:$0xff]
        %v6094 = vld [vmem:[#allocation11 + $0x340] sm:$0xff]
        %v6095 = vld [vmem:[#allocation11 + $0x348] sm:$0xff]
        %v6096 = vld [vmem:[#allocation11 + $0x350] sm:$0xff]
        %v6097 = vld [vmem:[#allocation11 + $0x358] sm:$0xff]
        %v6098 = vld [vmem:[#allocation11 + $0x360] sm:$0xff]
        %v6099 = vld [vmem:[#allocation11 + $0x368] sm:$0xff]
        %v6100 = vld [vmem:[#allocation11 + $0x370] sm:$0xff]
        %v6101 = vld [vmem:[#allocation11 + $0x378] sm:$0xff]
        %v6102 = vld [vmem:[#allocation11 + $0x380] sm:$0xff]
        %v6103 = vld [vmem:[#allocation11 + $0x388] sm:$0xff]
        %v6104 = vld [vmem:[#allocation11 + $0x390] sm:$0xff]
        %v6105 = vld [vmem:[#allocation11 + $0x398] sm:$0xff]
        %v6106 = vld [vmem:[#allocation11 + $0x3a0] sm:$0xff]
        %v6107 = vld [vmem:[#allocation11 + $0x3a8] sm:$0xff]
        %v6108 = vld [vmem:[#allocation11 + $0x3b0] sm:$0xff]
        %v6109 = vld [vmem:[#allocation11 + $0x3b8] sm:$0xff]
        %v6110 = vld [vmem:[#allocation11 + $0x3c0] sm:$0xff]
        %v6111 = vld [vmem:[#allocation11 + $0x3c8] sm:$0xff]
        %v6112 = vld [vmem:[#allocation11 + $0x3d0] sm:$0xff]
        %v6113 = vld [vmem:[#allocation11 + $0x3d8] sm:$0xff]
        %v6114 = vld [vmem:[#allocation11 + $0x3e0] sm:$0xff]
        %v6115 = vld [vmem:[#allocation11 + $0x3e8] sm:$0xff]
        %v6116 = vld [vmem:[#allocation11 + $0x3f0] sm:$0xff]
        %v6117 = vld [vmem:[#allocation11 + $0x3f8] sm:$0xff]
        %v6118 = vld [vmem:[%s13] sm:$0xf]
        %v6120 = vlaneseq
        %v6121 = vshrl.u32 %v6120, 7
        %v6122 = vsub.s32 0, %v6121
        %v6123 = vrot.slane %v6118, %v6122
        %v6124 = vlaneseq
        %v6125 = vshrl.u32 %v6124, 7
        %v6126 = vsub.s32 1, %v6125
        %v6127 = vrot.slane %v6118, %v6126
        %v6128 = vlaneseq
        %v6129 = vshrl.u32 %v6128, 7
        %v6130 = vsub.s32 2, %v6129
        %v6131 = vrot.slane %v6118, %v6130
        %v6132 = vlaneseq
        %v6133 = vshrl.u32 %v6132, 7
        %v6134 = vsub.s32 3, %v6133
        %v6135 = vrot.slane %v6118, %v6134
        %v6268 = vunpack.c.l.b16 %v5990
        %v6269 = vunpack.c.h.b16 %v5990
        %v6270 = vunpack.c.l.b16 %v5991
        %v6271 = vunpack.c.h.b16 %v5991
        %v6272 = vunpack.c.l.b16 %v5992
        %v6273 = vunpack.c.h.b16 %v5992
        %v6274 = vunpack.c.l.b16 %v5993
        %v6275 = vunpack.c.h.b16 %v5993
        %v6276 = vunpack.c.l.b16 %v5994
        %v6277 = vunpack.c.h.b16 %v5994
        %v6278 = vunpack.c.l.b16 %v5995
        %v6279 = vunpack.c.h.b16 %v5995
        %v6280 = vunpack.c.l.b16 %v5996
        %v6281 = vunpack.c.h.b16 %v5996
        %v6282 = vunpack.c.l.b16 %v5997
        %v6283 = vunpack.c.h.b16 %v5997
        %v6284 = vunpack.c.l.b16 %v5998
        %v6285 = vunpack.c.h.b16 %v5998
        %v6286 = vunpack.c.l.b16 %v5999
        %v6287 = vunpack.c.h.b16 %v5999
        %v6288 = vunpack.c.l.b16 %v6000
        %v6289 = vunpack.c.h.b16 %v6000
        %v6290 = vunpack.c.l.b16 %v6001
        %v6291 = vunpack.c.h.b16 %v6001
        %v6292 = vunpack.c.l.b16 %v6002
        %v6293 = vunpack.c.h.b16 %v6002
        %v6294 = vunpack.c.l.b16 %v6003
        %v6295 = vunpack.c.h.b16 %v6003
        %v6296 = vunpack.c.l.b16 %v6004
        %v6297 = vunpack.c.h.b16 %v6004
        %v6298 = vunpack.c.l.b16 %v6005
        %v6299 = vunpack.c.h.b16 %v6005
        %v6300 = vunpack.c.l.b16 %v6006
        %v6301 = vunpack.c.h.b16 %v6006
        %v6302 = vunpack.c.l.b16 %v6007
        %v6303 = vunpack.c.h.b16 %v6007
        %v6304 = vunpack.c.l.b16 %v6008
        %v6305 = vunpack.c.h.b16 %v6008
        %v6306 = vunpack.c.l.b16 %v6009
        %v6307 = vunpack.c.h.b16 %v6009
        %v6308 = vunpack.c.l.b16 %v6010
        %v6309 = vunpack.c.h.b16 %v6010
        %v6310 = vunpack.c.l.b16 %v6011
        %v6311 = vunpack.c.h.b16 %v6011
        %v6312 = vunpack.c.l.b16 %v6012
        %v6313 = vunpack.c.h.b16 %v6012
        %v6314 = vunpack.c.l.b16 %v6013
        %v6315 = vunpack.c.h.b16 %v6013
        %v6316 = vunpack.c.l.b16 %v6014
        %v6317 = vunpack.c.h.b16 %v6014
        %v6318 = vunpack.c.l.b16 %v6015
        %v6319 = vunpack.c.h.b16 %v6015
        %v6320 = vunpack.c.l.b16 %v6016
        %v6321 = vunpack.c.h.b16 %v6016
        %v6322 = vunpack.c.l.b16 %v6017
        %v6323 = vunpack.c.h.b16 %v6017
        %v6324 = vunpack.c.l.b16 %v6018
        %v6325 = vunpack.c.h.b16 %v6018
        %v6326 = vunpack.c.l.b16 %v6019
        %v6327 = vunpack.c.h.b16 %v6019
        %v6328 = vunpack.c.l.b16 %v6020
        %v6329 = vunpack.c.h.b16 %v6020
        %v6330 = vunpack.c.l.b16 %v6021
        %v6331 = vunpack.c.h.b16 %v6021
        %v6332 = vunpack.c.l.b16 %v6022
        %v6333 = vunpack.c.h.b16 %v6022
        %v6334 = vunpack.c.l.b16 %v6023
        %v6335 = vunpack.c.h.b16 %v6023
        %v6336 = vunpack.c.l.b16 %v6024
        %v6337 = vunpack.c.h.b16 %v6024
        %v6338 = vunpack.c.l.b16 %v6025
        %v6339 = vunpack.c.h.b16 %v6025
        %v6340 = vunpack.c.l.b16 %v6026
        %v6341 = vunpack.c.h.b16 %v6026
        %v6342 = vunpack.c.l.b16 %v6027
        %v6343 = vunpack.c.h.b16 %v6027
        %v6344 = vunpack.c.l.b16 %v6028
        %v6345 = vunpack.c.h.b16 %v6028
        %v6346 = vunpack.c.l.b16 %v6029
        %v6347 = vunpack.c.h.b16 %v6029
        %v6348 = vunpack.c.l.b16 %v6030
        %v6349 = vunpack.c.h.b16 %v6030
        %v6350 = vunpack.c.l.b16 %v6031
        %v6351 = vunpack.c.h.b16 %v6031
        %v6352 = vunpack.c.l.b16 %v6032
        %v6353 = vunpack.c.h.b16 %v6032
        %v6354 = vunpack.c.l.b16 %v6033
        %v6355 = vunpack.c.h.b16 %v6033
        %v6356 = vunpack.c.l.b16 %v6034
        %v6357 = vunpack.c.h.b16 %v6034
        %v6358 = vunpack.c.l.b16 %v6035
        %v6359 = vunpack.c.h.b16 %v6035
        %v6360 = vunpack.c.l.b16 %v6036
        %v6361 = vunpack.c.h.b16 %v6036
        %v6362 = vunpack.c.l.b16 %v6037
        %v6363 = vunpack.c.h.b16 %v6037
        %v6364 = vunpack.c.l.b16 %v6038
        %v6365 = vunpack.c.h.b16 %v6038
        %v6366 = vunpack.c.l.b16 %v6039
        %v6367 = vunpack.c.h.b16 %v6039
        %v6368 = vunpack.c.l.b16 %v6040
        %v6369 = vunpack.c.h.b16 %v6040
        %v6370 = vunpack.c.l.b16 %v6041
        %v6371 = vunpack.c.h.b16 %v6041
        %v6372 = vunpack.c.l.b16 %v6042
        %v6373 = vunpack.c.h.b16 %v6042
        %v6374 = vunpack.c.l.b16 %v6043
        %v6375 = vunpack.c.h.b16 %v6043
        %v6376 = vunpack.c.l.b16 %v6044
        %v6377 = vunpack.c.h.b16 %v6044
        %v6378 = vunpack.c.l.b16 %v6045
        %v6379 = vunpack.c.h.b16 %v6045
        %v6380 = vunpack.c.l.b16 %v6046
        %v6381 = vunpack.c.h.b16 %v6046
        %v6382 = vunpack.c.l.b16 %v6047
        %v6383 = vunpack.c.h.b16 %v6047
        %v6384 = vunpack.c.l.b16 %v6048
        %v6385 = vunpack.c.h.b16 %v6048
        %v6386 = vunpack.c.l.b16 %v6049
        %v6387 = vunpack.c.h.b16 %v6049
        %v6388 = vunpack.c.l.b16 %v6050
        %v6389 = vunpack.c.h.b16 %v6050
        %v6390 = vunpack.c.l.b16 %v6051
        %v6391 = vunpack.c.h.b16 %v6051
        %v6392 = vunpack.c.l.b16 %v6052
        %v6393 = vunpack.c.h.b16 %v6052
        %v6394 = vunpack.c.l.b16 %v6053
        %v6395 = vunpack.c.h.b16 %v6053
        %v6396 = vunpack.c.l.b16 %v6054
        %v6397 = vunpack.c.h.b16 %v6054
        %v6398 = vunpack.c.l.b16 %v6055
        %v6399 = vunpack.c.h.b16 %v6055
        %v6400 = vunpack.c.l.b16 %v6056
        %v6401 = vunpack.c.h.b16 %v6056
        %v6402 = vunpack.c.l.b16 %v6057
        %v6403 = vunpack.c.h.b16 %v6057
        %v6404 = vunpack.c.l.b16 %v6058
        %v6405 = vunpack.c.h.b16 %v6058
        %v6406 = vunpack.c.l.b16 %v6059
        %v6407 = vunpack.c.h.b16 %v6059
        %v6408 = vunpack.c.l.b16 %v6060
        %v6409 = vunpack.c.h.b16 %v6060
        %v6410 = vunpack.c.l.b16 %v6061
        %v6411 = vunpack.c.h.b16 %v6061
        %v6412 = vunpack.c.l.b16 %v6062
        %v6413 = vunpack.c.h.b16 %v6062
        %v6414 = vunpack.c.l.b16 %v6063
        %v6415 = vunpack.c.h.b16 %v6063
        %v6416 = vunpack.c.l.b16 %v6064
        %v6417 = vunpack.c.h.b16 %v6064
        %v6418 = vunpack.c.l.b16 %v6065
        %v6419 = vunpack.c.h.b16 %v6065
        %v6420 = vunpack.c.l.b16 %v6066
        %v6421 = vunpack.c.h.b16 %v6066
        %v6422 = vunpack.c.l.b16 %v6067
        %v6423 = vunpack.c.h.b16 %v6067
        %v6424 = vunpack.c.l.b16 %v6068
        %v6425 = vunpack.c.h.b16 %v6068
        %v6426 = vunpack.c.l.b16 %v6069
        %v6427 = vunpack.c.h.b16 %v6069
        %v6428 = vunpack.c.l.b16 %v6070
        %v6429 = vunpack.c.h.b16 %v6070
        %v6430 = vunpack.c.l.b16 %v6071
        %v6431 = vunpack.c.h.b16 %v6071
        %v6432 = vunpack.c.l.b16 %v6072
        %v6433 = vunpack.c.h.b16 %v6072
        %v6434 = vunpack.c.l.b16 %v6073
        %v6435 = vunpack.c.h.b16 %v6073
        %v6436 = vunpack.c.l.b16 %v6074
        %v6437 = vunpack.c.h.b16 %v6074
        %v6438 = vunpack.c.l.b16 %v6075
        %v6439 = vunpack.c.h.b16 %v6075
        %v6440 = vunpack.c.l.b16 %v6076
        %v6441 = vunpack.c.h.b16 %v6076
        %v6442 = vunpack.c.l.b16 %v6077
        %v6443 = vunpack.c.h.b16 %v6077
        %v6444 = vunpack.c.l.b16 %v6078
        %v6445 = vunpack.c.h.b16 %v6078
        %v6446 = vunpack.c.l.b16 %v6079
        %v6447 = vunpack.c.h.b16 %v6079
        %v6448 = vunpack.c.l.b16 %v6080
        %v6449 = vunpack.c.h.b16 %v6080
        %v6450 = vunpack.c.l.b16 %v6081
        %v6451 = vunpack.c.h.b16 %v6081
        %v6452 = vunpack.c.l.b16 %v6082
        %v6453 = vunpack.c.h.b16 %v6082
        %v6454 = vunpack.c.l.b16 %v6083
        %v6455 = vunpack.c.h.b16 %v6083
        %v6456 = vunpack.c.l.b16 %v6084
        %v6457 = vunpack.c.h.b16 %v6084
        %v6458 = vunpack.c.l.b16 %v6085
        %v6459 = vunpack.c.h.b16 %v6085
        %v6460 = vunpack.c.l.b16 %v6086
        %v6461 = vunpack.c.h.b16 %v6086
        %v6462 = vunpack.c.l.b16 %v6087
        %v6463 = vunpack.c.h.b16 %v6087
        %v6464 = vunpack.c.l.b16 %v6088
        %v6465 = vunpack.c.h.b16 %v6088
        %v6466 = vunpack.c.l.b16 %v6089
        %v6467 = vunpack.c.h.b16 %v6089
        %v6468 = vunpack.c.l.b16 %v6090
        %v6469 = vunpack.c.h.b16 %v6090
        %v6470 = vunpack.c.l.b16 %v6091
        %v6471 = vunpack.c.h.b16 %v6091
        %v6472 = vunpack.c.l.b16 %v6092
        %v6473 = vunpack.c.h.b16 %v6092
        %v6474 = vunpack.c.l.b16 %v6093
        %v6475 = vunpack.c.h.b16 %v6093
        %v6476 = vunpack.c.l.b16 %v6094
        %v6477 = vunpack.c.h.b16 %v6094
        %v6478 = vunpack.c.l.b16 %v6095
        %v6479 = vunpack.c.h.b16 %v6095
        %v6480 = vunpack.c.l.b16 %v6096
        %v6481 = vunpack.c.h.b16 %v6096
        %v6482 = vunpack.c.l.b16 %v6097
        %v6483 = vunpack.c.h.b16 %v6097
        %v6484 = vunpack.c.l.b16 %v6098
        %v6485 = vunpack.c.h.b16 %v6098
        %v6486 = vunpack.c.l.b16 %v6099
        %v6487 = vunpack.c.h.b16 %v6099
        %v6488 = vunpack.c.l.b16 %v6100
        %v6489 = vunpack.c.h.b16 %v6100
        %v6490 = vunpack.c.l.b16 %v6101
        %v6491 = vunpack.c.h.b16 %v6101
        %v6492 = vunpack.c.l.b16 %v6102
        %v6493 = vunpack.c.h.b16 %v6102
        %v6494 = vunpack.c.l.b16 %v6103
        %v6495 = vunpack.c.h.b16 %v6103
        %v6496 = vunpack.c.l.b16 %v6104
        %v6497 = vunpack.c.h.b16 %v6104
        %v6498 = vunpack.c.l.b16 %v6105
        %v6499 = vunpack.c.h.b16 %v6105
        %v6500 = vunpack.c.l.b16 %v6106
        %v6501 = vunpack.c.h.b16 %v6106
        %v6502 = vunpack.c.l.b16 %v6107
        %v6503 = vunpack.c.h.b16 %v6107
        %v6504 = vunpack.c.l.b16 %v6108
        %v6505 = vunpack.c.h.b16 %v6108
        %v6506 = vunpack.c.l.b16 %v6109
        %v6507 = vunpack.c.h.b16 %v6109
        %v6508 = vunpack.c.l.b16 %v6110
        %v6509 = vunpack.c.h.b16 %v6110
        %v6510 = vunpack.c.l.b16 %v6111
        %v6511 = vunpack.c.h.b16 %v6111
        %v6512 = vunpack.c.l.b16 %v6112
        %v6513 = vunpack.c.h.b16 %v6112
        %v6514 = vunpack.c.l.b16 %v6113
        %v6515 = vunpack.c.h.b16 %v6113
        %v6516 = vunpack.c.l.b16 %v6114
        %v6517 = vunpack.c.h.b16 %v6114
        %v6518 = vunpack.c.l.b16 %v6115
        %v6519 = vunpack.c.h.b16 %v6115
        %v6520 = vunpack.c.l.b16 %v6116
        %v6521 = vunpack.c.h.b16 %v6116
        %v6522 = vunpack.c.l.b16 %v6117
        %v6523 = vunpack.c.h.b16 %v6117
        %v6524 = vpack.c.b16 %v6272, %v6268
        %v6525 = vpack.c.b16 %v6273, %v6269
        %v6526 = vpack.c.b16 %v6274, %v6270
        %v6527 = vpack.c.b16 %v6275, %v6271
        %v6528 = vpack.c.b16 %v6280, %v6276
        %v6529 = vpack.c.b16 %v6281, %v6277
        %v6530 = vpack.c.b16 %v6282, %v6278
        %v6531 = vpack.c.b16 %v6283, %v6279
        %v6532 = vpack.c.b16 %v6288, %v6284
        %v6533 = vpack.c.b16 %v6289, %v6285
        %v6534 = vpack.c.b16 %v6290, %v6286
        %v6535 = vpack.c.b16 %v6291, %v6287
        %v6536 = vpack.c.b16 %v6296, %v6292
        %v6537 = vpack.c.b16 %v6297, %v6293
        %v6538 = vpack.c.b16 %v6298, %v6294
        %v6539 = vpack.c.b16 %v6299, %v6295
        %v6540 = vpack.c.b16 %v6304, %v6300
        %v6541 = vpack.c.b16 %v6305, %v6301
        %v6542 = vpack.c.b16 %v6306, %v6302
        %v6543 = vpack.c.b16 %v6307, %v6303
        %v6544 = vpack.c.b16 %v6312, %v6308
        %v6545 = vpack.c.b16 %v6313, %v6309
        %v6546 = vpack.c.b16 %v6314, %v6310
        %v6547 = vpack.c.b16 %v6315, %v6311
        %v6548 = vpack.c.b16 %v6320, %v6316
        %v6549 = vpack.c.b16 %v6321, %v6317
        %v6550 = vpack.c.b16 %v6322, %v6318
        %v6551 = vpack.c.b16 %v6323, %v6319
        %v6552 = vpack.c.b16 %v6328, %v6324
        %v6553 = vpack.c.b16 %v6329, %v6325
        %v6554 = vpack.c.b16 %v6330, %v6326
        %v6555 = vpack.c.b16 %v6331, %v6327
        %v6556 = vpack.c.b16 %v6336, %v6332
        %v6557 = vpack.c.b16 %v6337, %v6333
        %v6558 = vpack.c.b16 %v6338, %v6334
        %v6559 = vpack.c.b16 %v6339, %v6335
        %v6560 = vpack.c.b16 %v6344, %v6340
        %v6561 = vpack.c.b16 %v6345, %v6341
        %v6562 = vpack.c.b16 %v6346, %v6342
        %v6563 = vpack.c.b16 %v6347, %v6343
        %v6564 = vpack.c.b16 %v6352, %v6348
        %v6565 = vpack.c.b16 %v6353, %v6349
        %v6566 = vpack.c.b16 %v6354, %v6350
        %v6567 = vpack.c.b16 %v6355, %v6351
        %v6568 = vpack.c.b16 %v6360, %v6356
        %v6569 = vpack.c.b16 %v6361, %v6357
        %v6570 = vpack.c.b16 %v6362, %v6358
        %v6571 = vpack.c.b16 %v6363, %v6359
        %v6572 = vpack.c.b16 %v6368, %v6364
        %v6573 = vpack.c.b16 %v6369, %v6365
        %v6574 = vpack.c.b16 %v6370, %v6366
        %v6575 = vpack.c.b16 %v6371, %v6367
        %v6576 = vpack.c.b16 %v6376, %v6372
        %v6577 = vpack.c.b16 %v6377, %v6373
        %v6578 = vpack.c.b16 %v6378, %v6374
        %v6579 = vpack.c.b16 %v6379, %v6375
        %v6580 = vpack.c.b16 %v6384, %v6380
        %v6581 = vpack.c.b16 %v6385, %v6381
        %v6582 = vpack.c.b16 %v6386, %v6382
        %v6583 = vpack.c.b16 %v6387, %v6383
        %v6584 = vpack.c.b16 %v6392, %v6388
        %v6585 = vpack.c.b16 %v6393, %v6389
        %v6586 = vpack.c.b16 %v6394, %v6390
        %v6587 = vpack.c.b16 %v6395, %v6391
        %v6588 = vpack.c.b16 %v6400, %v6396
        %v6589 = vpack.c.b16 %v6401, %v6397
        %v6590 = vpack.c.b16 %v6402, %v6398
        %v6591 = vpack.c.b16 %v6403, %v6399
        %v6592 = vpack.c.b16 %v6408, %v6404
        %v6593 = vpack.c.b16 %v6409, %v6405
        %v6594 = vpack.c.b16 %v6410, %v6406
        %v6595 = vpack.c.b16 %v6411, %v6407
        %v6596 = vpack.c.b16 %v6416, %v6412
        %v6597 = vpack.c.b16 %v6417, %v6413
        %v6598 = vpack.c.b16 %v6418, %v6414
        %v6599 = vpack.c.b16 %v6419, %v6415
        %v6600 = vpack.c.b16 %v6424, %v6420
        %v6601 = vpack.c.b16 %v6425, %v6421
        %v6602 = vpack.c.b16 %v6426, %v6422
        %v6603 = vpack.c.b16 %v6427, %v6423
        %v6604 = vpack.c.b16 %v6432, %v6428
        %v6605 = vpack.c.b16 %v6433, %v6429
        %v6606 = vpack.c.b16 %v6434, %v6430
        %v6607 = vpack.c.b16 %v6435, %v6431
        %v6608 = vpack.c.b16 %v6440, %v6436
        %v6609 = vpack.c.b16 %v6441, %v6437
        %v6610 = vpack.c.b16 %v6442, %v6438
        %v6611 = vpack.c.b16 %v6443, %v6439
        %v6612 = vpack.c.b16 %v6448, %v6444
        %v6613 = vpack.c.b16 %v6449, %v6445
        %v6614 = vpack.c.b16 %v6450, %v6446
        %v6615 = vpack.c.b16 %v6451, %v6447
        %v6616 = vpack.c.b16 %v6456, %v6452
        %v6617 = vpack.c.b16 %v6457, %v6453
        %v6618 = vpack.c.b16 %v6458, %v6454
        %v6619 = vpack.c.b16 %v6459, %v6455
        %v6620 = vpack.c.b16 %v6464, %v6460
        %v6621 = vpack.c.b16 %v6465, %v6461
        %v6622 = vpack.c.b16 %v6466, %v6462
        %v6623 = vpack.c.b16 %v6467, %v6463
        %v6624 = vpack.c.b16 %v6472, %v6468
        %v6625 = vpack.c.b16 %v6473, %v6469
        %v6626 = vpack.c.b16 %v6474, %v6470
        %v6627 = vpack.c.b16 %v6475, %v6471
        %v6628 = vpack.c.b16 %v6480, %v6476
        %v6629 = vpack.c.b16 %v6481, %v6477
        %v6630 = vpack.c.b16 %v6482, %v6478
        %v6631 = vpack.c.b16 %v6483, %v6479
        %v6632 = vpack.c.b16 %v6488, %v6484
        %v6633 = vpack.c.b16 %v6489, %v6485
        %v6634 = vpack.c.b16 %v6490, %v6486
        %v6635 = vpack.c.b16 %v6491, %v6487
        %v6636 = vpack.c.b16 %v6496, %v6492
        %v6637 = vpack.c.b16 %v6497, %v6493
        %v6638 = vpack.c.b16 %v6498, %v6494
        %v6639 = vpack.c.b16 %v6499, %v6495
        %v6640 = vpack.c.b16 %v6504, %v6500
        %v6641 = vpack.c.b16 %v6505, %v6501
        %v6642 = vpack.c.b16 %v6506, %v6502
        %v6643 = vpack.c.b16 %v6507, %v6503
        %v6644 = vpack.c.b16 %v6512, %v6508
        %v6645 = vpack.c.b16 %v6513, %v6509
        %v6646 = vpack.c.b16 %v6514, %v6510
        %v6647 = vpack.c.b16 %v6515, %v6511
        %v6648 = vpack.c.b16 %v6520, %v6516
        %v6649 = vpack.c.b16 %v6521, %v6517
        %v6650 = vpack.c.b16 %v6522, %v6518
        %v6651 = vpack.c.b16 %v6523, %v6519
        %6780 = vmatprep.subr.bf16.mxu0 %v6553
        %6781 = vmatpush1.bf16.msra.mxu0 %v6552
        %6782 = vmatprep.subr.bf16.mxu0 %v6549
        %6783 = vmatpush1.bf16.msra.mxu0 %v6548
        %6784 = vmatprep.subr.bf16.mxu0 %v6545
        %6785 = vmatpush1.bf16.msra.mxu0 %v6544
        %6786 = vmatprep.subr.bf16.mxu0 %v6541
        %6787 = vmatpush1.bf16.msra.mxu0 %v6540
        %6788 = vmatprep.subr.bf16.mxu0 %v6537
        %6789 = vmatpush1.bf16.msra.mxu0 %v6536
        %6790 = vmatprep.subr.bf16.mxu0 %v6533
        %6791 = vmatpush1.bf16.msra.mxu0 %v6532
        %6792 = vmatprep.subr.bf16.mxu0 %v6529
        %6793 = vmatpush1.bf16.msra.mxu0 %v6528
        %6794 = vmatprep.subr.bf16.mxu0 %v6525
        %6795 = vmatpush1.bf16.msra.mxu0 %v6524
        %6796 = vmatprep.subr.bf16.mxu0 %v6585
        %6797 = vmatpush2.bf16.msra.mxu0 %v6584
        %6798 = vmatprep.subr.bf16.mxu0 %v6581
        %6799 = vmatpush2.bf16.msra.mxu0 %v6580
        %6800 = vmatprep.subr.bf16.mxu0 %v6577
        %6801 = vmatpush2.bf16.msra.mxu0 %v6576
        %6802 = vmatprep.subr.bf16.mxu0 %v6573
        %6803 = vmatpush2.bf16.msra.mxu0 %v6572
        %6804 = vmatprep.subr.bf16.mxu0 %v6569
        %6805 = vmatpush2.bf16.msra.mxu0 %v6568
        %6806 = vmatprep.subr.bf16.mxu0 %v6565
        %6807 = vmatpush2.bf16.msra.mxu0 %v6564
        %6808 = vmatprep.subr.bf16.mxu0 %v6561
        %6809 = vmatpush2.bf16.msra.mxu0 %v6560
        %6810 = vmatprep.subr.bf16.mxu0 %v6557
        %6811 = vmatpush2.bf16.msra.mxu0 %v6556
        %6812 = vmatprep.mubr.bf16.mxu0 %v5927
        %6813 = vmatmul.mubr.bf16.gmra.mxu0 %v5926
        %v6814 = vpop.f32.mrf.mxu0
        %v6815 = vadd.f32 %v6123, %v6814
        %v6816 = vpop.f32.mrf.mxu0
        %v6817 = vadd.f32 %v6127, %v6816
        %v6818 = vpop.f32.mrf.mxu0
        %v6819 = vadd.f32 %v6123, %v6818
        %v6820 = vpop.f32.mrf.mxu0
        %v6821 = vadd.f32 %v6127, %v6820
        %6822 = vmatprep.mubr.bf16.mxu0 %v5931
        %6823 = vmatmul.mubr.bf16.gmra.mxu0 %v5930
        %v6824 = vpop.f32.mrf.mxu0
        %v6825 = vadd.f32 %v6123, %v6824
        %v6826 = vpop.f32.mrf.mxu0
        %v6827 = vadd.f32 %v6127, %v6826
        %v6828 = vpop.f32.mrf.mxu0
        %v6829 = vadd.f32 %v6123, %v6828
        %v6830 = vpop.f32.mrf.mxu0
        %v6831 = vadd.f32 %v6127, %v6830
        %6832 = vmatprep.mubr.bf16.mxu0 %v5935
        %6833 = vmatmul.mubr.bf16.gmra.mxu0 %v5934
        %v6834 = vpop.f32.mrf.mxu0
        %v6835 = vadd.f32 %v6123, %v6834
        %v6836 = vpop.f32.mrf.mxu0
        %v6837 = vadd.f32 %v6127, %v6836
        %v6838 = vpop.f32.mrf.mxu0
        %v6839 = vadd.f32 %v6123, %v6838
        %v6840 = vpop.f32.mrf.mxu0
        %v6841 = vadd.f32 %v6127, %v6840
        %6842 = vmatprep.mubr.bf16.mxu0 %v5939
        %6843 = vmatmul.mubr.bf16.gmra.mxu0 %v5938
        %v6844 = vpop.f32.mrf.mxu0
        %v6845 = vadd.f32 %v6123, %v6844
        %v6846 = vpop.f32.mrf.mxu0
        %v6847 = vadd.f32 %v6127, %v6846
        %v6848 = vpop.f32.mrf.mxu0
        %v6849 = vadd.f32 %v6123, %v6848
        %v6850 = vpop.f32.mrf.mxu0
        %v6851 = vadd.f32 %v6127, %v6850
        %6852 = vmatprep.mubr.bf16.mxu0 %v5943
        %6853 = vmatmul.mubr.bf16.gmra.mxu0 %v5942
        %v6854 = vpop.f32.mrf.mxu0
        %v6855 = vadd.f32 %v6123, %v6854
        %v6856 = vpop.f32.mrf.mxu0
        %v6857 = vadd.f32 %v6127, %v6856
        %v6858 = vpop.f32.mrf.mxu0
        %v6859 = vadd.f32 %v6123, %v6858
        %v6860 = vpop.f32.mrf.mxu0
        %v6861 = vadd.f32 %v6127, %v6860
        %6862 = vmatprep.mubr.bf16.mxu0 %v5947
        %6863 = vmatmul.mubr.bf16.gmra.mxu0 %v5946
        %v6864 = vpop.f32.mrf.mxu0
        %v6865 = vadd.f32 %v6123, %v6864
        %v6866 = vpop.f32.mrf.mxu0
        %v6867 = vadd.f32 %v6127, %v6866
        %v6868 = vpop.f32.mrf.mxu0
        %v6869 = vadd.f32 %v6123, %v6868
        %v6870 = vpop.f32.mrf.mxu0
        %v6871 = vadd.f32 %v6127, %v6870
        %6872 = vmatprep.mubr.bf16.mxu0 %v5951
        %6873 = vmatmul.mubr.bf16.gmra.mxu0 %v5950
        %v6874 = vpop.f32.mrf.mxu0
        %v6875 = vadd.f32 %v6123, %v6874
        %v6876 = vpop.f32.mrf.mxu0
        %v6877 = vadd.f32 %v6127, %v6876
        %v6878 = vpop.f32.mrf.mxu0
        %v6879 = vadd.f32 %v6123, %v6878
        %v6880 = vpop.f32.mrf.mxu0
        %v6881 = vadd.f32 %v6127, %v6880
        %6882 = vmatprep.mubr.bf16.mxu0 %v5955
        %6883 = vmatmul.mubr.bf16.gmra.mxu0 %v5954
        %v6884 = vpop.f32.mrf.mxu0
        %v6885 = vadd.f32 %v6123, %v6884
        %v6886 = vpop.f32.mrf.mxu0
        %v6887 = vadd.f32 %v6127, %v6886
        %v6888 = vpop.f32.mrf.mxu0
        %v6889 = vadd.f32 %v6123, %v6888
        %v6890 = vpop.f32.mrf.mxu0
        %v6891 = vadd.f32 %v6127, %v6890
        %6892 = vmatprep.mubr.bf16.mxu0 %v5959
        %6893 = vmatmul.mubr.bf16.gmra.mxu0 %v5958
        %v6894 = vpop.f32.mrf.mxu0
        %v6895 = vadd.f32 %v6123, %v6894
        %v6896 = vpop.f32.mrf.mxu0
        %v6897 = vadd.f32 %v6127, %v6896
        %v6898 = vpop.f32.mrf.mxu0
        %v6899 = vadd.f32 %v6123, %v6898
        %v6900 = vpop.f32.mrf.mxu0
        %v6901 = vadd.f32 %v6127, %v6900
        %6902 = vmatprep.mubr.bf16.mxu0 %v5963
        %6903 = vmatmul.mubr.bf16.gmra.mxu0 %v5962
        %v6904 = vpop.f32.mrf.mxu0
        %v6905 = vadd.f32 %v6123, %v6904
        %v6906 = vpop.f32.mrf.mxu0
        %v6907 = vadd.f32 %v6127, %v6906
        %v6908 = vpop.f32.mrf.mxu0
        %v6909 = vadd.f32 %v6123, %v6908
        %v6910 = vpop.f32.mrf.mxu0
        %v6911 = vadd.f32 %v6127, %v6910
        %6912 = vmatprep.mubr.bf16.mxu0 %v5967
        %6913 = vmatmul.mubr.bf16.gmra.mxu0 %v5966
        %v6914 = vpop.f32.mrf.mxu0
        %v6915 = vadd.f32 %v6123, %v6914
        %v6916 = vpop.f32.mrf.mxu0
        %v6917 = vadd.f32 %v6127, %v6916
        %v6918 = vpop.f32.mrf.mxu0
        %v6919 = vadd.f32 %v6123, %v6918
        %v6920 = vpop.f32.mrf.mxu0
        %v6921 = vadd.f32 %v6127, %v6920
        %6922 = vmatprep.mubr.bf16.mxu0 %v5971
        %6923 = vmatmul.mubr.bf16.gmra.mxu0 %v5970
        %v6924 = vpop.f32.mrf.mxu0
        %v6925 = vadd.f32 %v6123, %v6924
        %v6926 = vpop.f32.mrf.mxu0
        %v6927 = vadd.f32 %v6127, %v6926
        %v6928 = vpop.f32.mrf.mxu0
        %v6929 = vadd.f32 %v6123, %v6928
        %v6930 = vpop.f32.mrf.mxu0
        %v6931 = vadd.f32 %v6127, %v6930
        %6932 = vmatprep.mubr.bf16.mxu0 %v5975
        %6933 = vmatmul.mubr.bf16.gmra.mxu0 %v5974
        %v6934 = vpop.f32.mrf.mxu0
        %v6935 = vadd.f32 %v6123, %v6934
        %v6936 = vpop.f32.mrf.mxu0
        %v6937 = vadd.f32 %v6127, %v6936
        %v6938 = vpop.f32.mrf.mxu0
        %v6939 = vadd.f32 %v6123, %v6938
        %v6940 = vpop.f32.mrf.mxu0
        %v6941 = vadd.f32 %v6127, %v6940
        %6942 = vmatprep.mubr.bf16.mxu0 %v5979
        %6943 = vmatmul.mubr.bf16.gmra.mxu0 %v5978
        %v6944 = vpop.f32.mrf.mxu0
        %v6945 = vadd.f32 %v6123, %v6944
        %v6946 = vpop.f32.mrf.mxu0
        %v6947 = vadd.f32 %v6127, %v6946
        %v6948 = vpop.f32.mrf.mxu0
        %v6949 = vadd.f32 %v6123, %v6948
        %v6950 = vpop.f32.mrf.mxu0
        %v6951 = vadd.f32 %v6127, %v6950
        %6952 = vmatprep.mubr.bf16.mxu0 %v5983
        %6953 = vmatmul.mubr.bf16.gmra.mxu0 %v5982
        %v6954 = vpop.f32.mrf.mxu0
        %v6955 = vadd.f32 %v6123, %v6954
        %v6956 = vpop.f32.mrf.mxu0
        %v6957 = vadd.f32 %v6127, %v6956
        %v6958 = vpop.f32.mrf.mxu0
        %v6959 = vadd.f32 %v6123, %v6958
        %v6960 = vpop.f32.mrf.mxu0
        %v6961 = vadd.f32 %v6127, %v6960
        %6962 = vmatprep.mubr.bf16.mxu0 %v5987
        %6963 = vmatmul.mubr.bf16.gmra.mxu0 %v5986
        %v6964 = vpop.f32.mrf.mxu0
        %v6965 = vadd.f32 %v6123, %v6964
        %v6966 = vpop.f32.mrf.mxu0
        %v6967 = vadd.f32 %v6127, %v6966
        %v6968 = vpop.f32.mrf.mxu0
        %v6969 = vadd.f32 %v6123, %v6968
        %v6970 = vpop.f32.mrf.mxu0
        %v6971 = vadd.f32 %v6127, %v6970
        %6972 = vdwg.mxu0
        %6973 = vmatprep.subr.bf16.mxu0 %v6617
        %6974 = vmatpush1.bf16.msra.mxu0 %v6616
        %6975 = vmatprep.subr.bf16.mxu0 %v6613
        %6976 = vmatpush1.bf16.msra.mxu0 %v6612
        %6977 = vmatprep.subr.bf16.mxu0 %v6609
        %6978 = vmatpush1.bf16.msra.mxu0 %v6608
        %6979 = vmatprep.subr.bf16.mxu0 %v6605
        %6980 = vmatpush1.bf16.msra.mxu0 %v6604
        %6981 = vmatprep.subr.bf16.mxu0 %v6601
        %6982 = vmatpush1.bf16.msra.mxu0 %v6600
        %6983 = vmatprep.subr.bf16.mxu0 %v6597
        %6984 = vmatpush1.bf16.msra.mxu0 %v6596
        %6985 = vmatprep.subr.bf16.mxu0 %v6593
        %6986 = vmatpush1.bf16.msra.mxu0 %v6592
        %6987 = vmatprep.subr.bf16.mxu0 %v6589
        %6988 = vmatpush1.bf16.msra.mxu0 %v6588
        %6989 = vmatprep.subr.bf16.mxu0 %v6649
        %6990 = vmatpush2.bf16.msra.mxu0 %v6648
        %6991 = vmatprep.subr.bf16.mxu0 %v6645
        %6992 = vmatpush2.bf16.msra.mxu0 %v6644
        %6993 = vmatprep.subr.bf16.mxu0 %v6641
        %6994 = vmatpush2.bf16.msra.mxu0 %v6640
        %6995 = vmatprep.subr.bf16.mxu0 %v6637
        %6996 = vmatpush2.bf16.msra.mxu0 %v6636
        %6997 = vmatprep.subr.bf16.mxu0 %v6633
        %6998 = vmatpush2.bf16.msra.mxu0 %v6632
        %6999 = vmatprep.subr.bf16.mxu0 %v6629
        %7000 = vmatpush2.bf16.msra.mxu0 %v6628
        %7001 = vmatprep.subr.bf16.mxu0 %v6625
        %7002 = vmatpush2.bf16.msra.mxu0 %v6624
        %7003 = vmatprep.subr.bf16.mxu0 %v6621
        %7004 = vmatpush2.bf16.msra.mxu0 %v6620
        %7005 = vmatprep.mubr.bf16.mxu0 %v5929
        %7006 = vmatmul.mubr.bf16.gmra.mxu0 %v5928
        %v7007 = vpop.f32.mrf.mxu0
        %v7008 = vadd.f32 %v6815, %v7007
        %v7009 = vpop.f32.mrf.mxu0
        %v7010 = vadd.f32 %v6817, %v7009
        %v7011 = vpop.f32.mrf.mxu0
        %v7012 = vadd.f32 %v6819, %v7011
        %v7013 = vpop.f32.mrf.mxu0
        %v7014 = vadd.f32 %v6821, %v7013
        %7015 = vmatprep.mubr.bf16.mxu0 %v5933
        %7016 = vmatmul.mubr.bf16.gmra.mxu0 %v5932
        %v7017 = vpop.f32.mrf.mxu0
        %v7018 = vadd.f32 %v6825, %v7017
        %v7019 = vpop.f32.mrf.mxu0
        %v7020 = vadd.f32 %v6827, %v7019
        %v7021 = vpop.f32.mrf.mxu0
        %v7022 = vadd.f32 %v6829, %v7021
        %v7023 = vpop.f32.mrf.mxu0
        %v7024 = vadd.f32 %v6831, %v7023
        %7025 = vmatprep.mubr.bf16.mxu0 %v5937
        %7026 = vmatmul.mubr.bf16.gmra.mxu0 %v5936
        %v7027 = vpop.f32.mrf.mxu0
        %v7028 = vadd.f32 %v6835, %v7027
        %v7029 = vpop.f32.mrf.mxu0
        %v7030 = vadd.f32 %v6837, %v7029
        %v7031 = vpop.f32.mrf.mxu0
        %v7032 = vadd.f32 %v6839, %v7031
        %v7033 = vpop.f32.mrf.mxu0
        %v7034 = vadd.f32 %v6841, %v7033
        %7035 = vmatprep.mubr.bf16.mxu0 %v5941
        %7036 = vmatmul.mubr.bf16.gmra.mxu0 %v5940
        %v7037 = vpop.f32.mrf.mxu0
        %v7038 = vadd.f32 %v6845, %v7037
        %v7039 = vpop.f32.mrf.mxu0
        %v7040 = vadd.f32 %v6847, %v7039
        %v7041 = vpop.f32.mrf.mxu0
        %v7042 = vadd.f32 %v6849, %v7041
        %v7043 = vpop.f32.mrf.mxu0
        %v7044 = vadd.f32 %v6851, %v7043
        %7045 = vmatprep.mubr.bf16.mxu0 %v5945
        %7046 = vmatmul.mubr.bf16.gmra.mxu0 %v5944
        %v7047 = vpop.f32.mrf.mxu0
        %v7048 = vadd.f32 %v6855, %v7047
        %v7049 = vpop.f32.mrf.mxu0
        %v7050 = vadd.f32 %v6857, %v7049
        %v7051 = vpop.f32.mrf.mxu0
        %v7052 = vadd.f32 %v6859, %v7051
        %v7053 = vpop.f32.mrf.mxu0
        %v7054 = vadd.f32 %v6861, %v7053
        %7055 = vmatprep.mubr.bf16.mxu0 %v5949
        %7056 = vmatmul.mubr.bf16.gmra.mxu0 %v5948
        %v7057 = vpop.f32.mrf.mxu0
        %v7058 = vadd.f32 %v6865, %v7057
        %v7059 = vpop.f32.mrf.mxu0
        %v7060 = vadd.f32 %v6867, %v7059
        %v7061 = vpop.f32.mrf.mxu0
        %v7062 = vadd.f32 %v6869, %v7061
        %v7063 = vpop.f32.mrf.mxu0
        %v7064 = vadd.f32 %v6871, %v7063
        %7065 = vmatprep.mubr.bf16.mxu0 %v5953
        %7066 = vmatmul.mubr.bf16.gmra.mxu0 %v5952
        %v7067 = vpop.f32.mrf.mxu0
        %v7068 = vadd.f32 %v6875, %v7067
        %v7069 = vpop.f32.mrf.mxu0
        %v7070 = vadd.f32 %v6877, %v7069
        %v7071 = vpop.f32.mrf.mxu0
        %v7072 = vadd.f32 %v6879, %v7071
        %v7073 = vpop.f32.mrf.mxu0
        %v7074 = vadd.f32 %v6881, %v7073
        %7075 = vmatprep.mubr.bf16.mxu0 %v5957
        %7076 = vmatmul.mubr.bf16.gmra.mxu0 %v5956
        %v7077 = vpop.f32.mrf.mxu0
        %v7078 = vadd.f32 %v6885, %v7077
        %v7079 = vpop.f32.mrf.mxu0
        %v7080 = vadd.f32 %v6887, %v7079
        %v7081 = vpop.f32.mrf.mxu0
        %v7082 = vadd.f32 %v6889, %v7081
        %v7083 = vpop.f32.mrf.mxu0
        %v7084 = vadd.f32 %v6891, %v7083
        %7085 = vmatprep.mubr.bf16.mxu0 %v5961
        %7086 = vmatmul.mubr.bf16.gmra.mxu0 %v5960
        %v7087 = vpop.f32.mrf.mxu0
        %v7088 = vadd.f32 %v6895, %v7087
        %v7089 = vpop.f32.mrf.mxu0
        %v7090 = vadd.f32 %v6897, %v7089
        %v7091 = vpop.f32.mrf.mxu0
        %v7092 = vadd.f32 %v6899, %v7091
        %v7093 = vpop.f32.mrf.mxu0
        %v7094 = vadd.f32 %v6901, %v7093
        %7095 = vmatprep.mubr.bf16.mxu0 %v5965
        %7096 = vmatmul.mubr.bf16.gmra.mxu0 %v5964
        %v7097 = vpop.f32.mrf.mxu0
        %v7098 = vadd.f32 %v6905, %v7097
        %v7099 = vpop.f32.mrf.mxu0
        %v7100 = vadd.f32 %v6907, %v7099
        %v7101 = vpop.f32.mrf.mxu0
        %v7102 = vadd.f32 %v6909, %v7101
        %v7103 = vpop.f32.mrf.mxu0
        %v7104 = vadd.f32 %v6911, %v7103
        %7105 = vmatprep.mubr.bf16.mxu0 %v5969
        %7106 = vmatmul.mubr.bf16.gmra.mxu0 %v5968
        %v7107 = vpop.f32.mrf.mxu0
        %v7108 = vadd.f32 %v6915, %v7107
        %v7109 = vpop.f32.mrf.mxu0
        %v7110 = vadd.f32 %v6917, %v7109
        %v7111 = vpop.f32.mrf.mxu0
        %v7112 = vadd.f32 %v6919, %v7111
        %v7113 = vpop.f32.mrf.mxu0
        %v7114 = vadd.f32 %v6921, %v7113
        %7115 = vmatprep.mubr.bf16.mxu0 %v5973
        %7116 = vmatmul.mubr.bf16.gmra.mxu0 %v5972
        %v7117 = vpop.f32.mrf.mxu0
        %v7118 = vadd.f32 %v6925, %v7117
        %v7119 = vpop.f32.mrf.mxu0
        %v7120 = vadd.f32 %v6927, %v7119
        %v7121 = vpop.f32.mrf.mxu0
        %v7122 = vadd.f32 %v6929, %v7121
        %v7123 = vpop.f32.mrf.mxu0
        %v7124 = vadd.f32 %v6931, %v7123
        %7125 = vmatprep.mubr.bf16.mxu0 %v5977
        %7126 = vmatmul.mubr.bf16.gmra.mxu0 %v5976
        %v7127 = vpop.f32.mrf.mxu0
        %v7128 = vadd.f32 %v6935, %v7127
        %v7129 = vpop.f32.mrf.mxu0
        %v7130 = vadd.f32 %v6937, %v7129
        %v7131 = vpop.f32.mrf.mxu0
        %v7132 = vadd.f32 %v6939, %v7131
        %v7133 = vpop.f32.mrf.mxu0
        %v7134 = vadd.f32 %v6941, %v7133
        %7135 = vmatprep.mubr.bf16.mxu0 %v5981
        %7136 = vmatmul.mubr.bf16.gmra.mxu0 %v5980
        %v7137 = vpop.f32.mrf.mxu0
        %v7138 = vadd.f32 %v6945, %v7137
        %v7139 = vpop.f32.mrf.mxu0
        %v7140 = vadd.f32 %v6947, %v7139
        %v7141 = vpop.f32.mrf.mxu0
        %v7142 = vadd.f32 %v6949, %v7141
        %v7143 = vpop.f32.mrf.mxu0
        %v7144 = vadd.f32 %v6951, %v7143
        %7145 = vmatprep.mubr.bf16.mxu0 %v5985
        %7146 = vmatmul.mubr.bf16.gmra.mxu0 %v5984
        %v7147 = vpop.f32.mrf.mxu0
        %v7148 = vadd.f32 %v6955, %v7147
        %v7149 = vpop.f32.mrf.mxu0
        %v7150 = vadd.f32 %v6957, %v7149
        %v7151 = vpop.f32.mrf.mxu0
        %v7152 = vadd.f32 %v6959, %v7151
        %v7153 = vpop.f32.mrf.mxu0
        %v7154 = vadd.f32 %v6961, %v7153
        %7155 = vmatprep.mubr.bf16.mxu0 %v5989
        %7156 = vmatmul.mubr.bf16.gmra.mxu0 %v5988
        %v7157 = vpop.f32.mrf.mxu0
        %v7158 = vadd.f32 %v6965, %v7157
        %v7159 = vpop.f32.mrf.mxu0
        %v7160 = vadd.f32 %v6967, %v7159
        %v7161 = vpop.f32.mrf.mxu0
        %v7162 = vadd.f32 %v6969, %v7161
        %v7163 = vpop.f32.mrf.mxu0
        %v7164 = vadd.f32 %v6971, %v7163
        %7165 = vdwg.mxu0
        %7166 = vmatprep.subr.bf16.mxu0 %v6555
        %7167 = vmatpush1.bf16.msra.mxu0 %v6554
        %7168 = vmatprep.subr.bf16.mxu0 %v6551
        %7169 = vmatpush1.bf16.msra.mxu0 %v6550
        %7170 = vmatprep.subr.bf16.mxu0 %v6547
        %7171 = vmatpush1.bf16.msra.mxu0 %v6546
        %7172 = vmatprep.subr.bf16.mxu0 %v6543
        %7173 = vmatpush1.bf16.msra.mxu0 %v6542
        %7174 = vmatprep.subr.bf16.mxu0 %v6539
        %7175 = vmatpush1.bf16.msra.mxu0 %v6538
        %7176 = vmatprep.subr.bf16.mxu0 %v6535
        %7177 = vmatpush1.bf16.msra.mxu0 %v6534
        %7178 = vmatprep.subr.bf16.mxu0 %v6531
        %7179 = vmatpush1.bf16.msra.mxu0 %v6530
        %7180 = vmatprep.subr.bf16.mxu0 %v6527
        %7181 = vmatpush1.bf16.msra.mxu0 %v6526
        %7182 = vmatprep.subr.bf16.mxu0 %v6587
        %7183 = vmatpush2.bf16.msra.mxu0 %v6586
        %7184 = vmatprep.subr.bf16.mxu0 %v6583
        %7185 = vmatpush2.bf16.msra.mxu0 %v6582
        %7186 = vmatprep.subr.bf16.mxu0 %v6579
        %7187 = vmatpush2.bf16.msra.mxu0 %v6578
        %7188 = vmatprep.subr.bf16.mxu0 %v6575
        %7189 = vmatpush2.bf16.msra.mxu0 %v6574
        %7190 = vmatprep.subr.bf16.mxu0 %v6571
        %7191 = vmatpush2.bf16.msra.mxu0 %v6570
        %7192 = vmatprep.subr.bf16.mxu0 %v6567
        %7193 = vmatpush2.bf16.msra.mxu0 %v6566
        %7194 = vmatprep.subr.bf16.mxu0 %v6563
        %7195 = vmatpush2.bf16.msra.mxu0 %v6562
        %7196 = vmatprep.subr.bf16.mxu0 %v6559
        %7197 = vmatpush2.bf16.msra.mxu0 %v6558
        %7198 = vmatprep.mubr.bf16.mxu0 %v5927
        %7199 = vmatmul.mubr.bf16.gmra.mxu0 %v5926
        %v7200 = vpop.f32.mrf.mxu0
        %v7201 = vadd.f32 %v6131, %v7200
        %v7202 = vpop.f32.mrf.mxu0
        %v7203 = vadd.f32 %v6135, %v7202
        %v7204 = vpop.f32.mrf.mxu0
        %v7205 = vadd.f32 %v6131, %v7204
        %v7206 = vpop.f32.mrf.mxu0
        %v7207 = vadd.f32 %v6135, %v7206
        %7208 = vmatprep.mubr.bf16.mxu0 %v5931
        %7209 = vmatmul.mubr.bf16.gmra.mxu0 %v5930
        %v7210 = vpop.f32.mrf.mxu0
        %v7211 = vadd.f32 %v6131, %v7210
        %v7212 = vpop.f32.mrf.mxu0
        %v7213 = vadd.f32 %v6135, %v7212
        %v7214 = vpop.f32.mrf.mxu0
        %v7215 = vadd.f32 %v6131, %v7214
        %v7216 = vpop.f32.mrf.mxu0
        %v7217 = vadd.f32 %v6135, %v7216
        %7218 = vmatprep.mubr.bf16.mxu0 %v5935
        %7219 = vmatmul.mubr.bf16.gmra.mxu0 %v5934
        %v7220 = vpop.f32.mrf.mxu0
        %v7221 = vadd.f32 %v6131, %v7220
        %v7222 = vpop.f32.mrf.mxu0
        %v7223 = vadd.f32 %v6135, %v7222
        %v7224 = vpop.f32.mrf.mxu0
        %v7225 = vadd.f32 %v6131, %v7224
        %v7226 = vpop.f32.mrf.mxu0
        %v7227 = vadd.f32 %v6135, %v7226
        %7228 = vmatprep.mubr.bf16.mxu0 %v5939
        %7229 = vmatmul.mubr.bf16.gmra.mxu0 %v5938
        %v7230 = vpop.f32.mrf.mxu0
        %v7231 = vadd.f32 %v6131, %v7230
        %v7232 = vpop.f32.mrf.mxu0
        %v7233 = vadd.f32 %v6135, %v7232
        %v7234 = vpop.f32.mrf.mxu0
        %v7235 = vadd.f32 %v6131, %v7234
        %v7236 = vpop.f32.mrf.mxu0
        %v7237 = vadd.f32 %v6135, %v7236
        %7238 = vmatprep.mubr.bf16.mxu0 %v5943
        %7239 = vmatmul.mubr.bf16.gmra.mxu0 %v5942
        %v7240 = vpop.f32.mrf.mxu0
        %v7241 = vadd.f32 %v6131, %v7240
        %v7242 = vpop.f32.mrf.mxu0
        %v7243 = vadd.f32 %v6135, %v7242
        %v7244 = vpop.f32.mrf.mxu0
        %v7245 = vadd.f32 %v6131, %v7244
        %v7246 = vpop.f32.mrf.mxu0
        %v7247 = vadd.f32 %v6135, %v7246
        %7248 = vmatprep.mubr.bf16.mxu0 %v5947
        %7249 = vmatmul.mubr.bf16.gmra.mxu0 %v5946
        %v7250 = vpop.f32.mrf.mxu0
        %v7251 = vadd.f32 %v6131, %v7250
        %v7252 = vpop.f32.mrf.mxu0
        %v7253 = vadd.f32 %v6135, %v7252
        %v7254 = vpop.f32.mrf.mxu0
        %v7255 = vadd.f32 %v6131, %v7254
        %v7256 = vpop.f32.mrf.mxu0
        %v7257 = vadd.f32 %v6135, %v7256
        %7258 = vmatprep.mubr.bf16.mxu0 %v5951
        %7259 = vmatmul.mubr.bf16.gmra.mxu0 %v5950
        %v7260 = vpop.f32.mrf.mxu0
        %v7261 = vadd.f32 %v6131, %v7260
        %v7262 = vpop.f32.mrf.mxu0
        %v7263 = vadd.f32 %v6135, %v7262
        %v7264 = vpop.f32.mrf.mxu0
        %v7265 = vadd.f32 %v6131, %v7264
        %v7266 = vpop.f32.mrf.mxu0
        %v7267 = vadd.f32 %v6135, %v7266
        %7268 = vmatprep.mubr.bf16.mxu0 %v5955
        %7269 = vmatmul.mubr.bf16.gmra.mxu0 %v5954
        %v7270 = vpop.f32.mrf.mxu0
        %v7271 = vadd.f32 %v6131, %v7270
        %v7272 = vpop.f32.mrf.mxu0
        %v7273 = vadd.f32 %v6135, %v7272
        %v7274 = vpop.f32.mrf.mxu0
        %v7275 = vadd.f32 %v6131, %v7274
        %v7276 = vpop.f32.mrf.mxu0
        %v7277 = vadd.f32 %v6135, %v7276
        %7278 = vmatprep.mubr.bf16.mxu0 %v5959
        %7279 = vmatmul.mubr.bf16.gmra.mxu0 %v5958
        %v7280 = vpop.f32.mrf.mxu0
        %v7281 = vadd.f32 %v6131, %v7280
        %v7282 = vpop.f32.mrf.mxu0
        %v7283 = vadd.f32 %v6135, %v7282
        %v7284 = vpop.f32.mrf.mxu0
        %v7285 = vadd.f32 %v6131, %v7284
        %v7286 = vpop.f32.mrf.mxu0
        %v7287 = vadd.f32 %v6135, %v7286
        %7288 = vmatprep.mubr.bf16.mxu0 %v5963
        %7289 = vmatmul.mubr.bf16.gmra.mxu0 %v5962
        %v7290 = vpop.f32.mrf.mxu0
        %v7291 = vadd.f32 %v6131, %v7290
        %v7292 = vpop.f32.mrf.mxu0
        %v7293 = vadd.f32 %v6135, %v7292
        %v7294 = vpop.f32.mrf.mxu0
        %v7295 = vadd.f32 %v6131, %v7294
        %v7296 = vpop.f32.mrf.mxu0
        %v7297 = vadd.f32 %v6135, %v7296
        %7298 = vmatprep.mubr.bf16.mxu0 %v5967
        %7299 = vmatmul.mubr.bf16.gmra.mxu0 %v5966
        %v7300 = vpop.f32.mrf.mxu0
        %v7301 = vadd.f32 %v6131, %v7300
        %v7302 = vpop.f32.mrf.mxu0
        %v7303 = vadd.f32 %v6135, %v7302
        %v7304 = vpop.f32.mrf.mxu0
        %v7305 = vadd.f32 %v6131, %v7304
        %v7306 = vpop.f32.mrf.mxu0
        %v7307 = vadd.f32 %v6135, %v7306
        %7308 = vmatprep.mubr.bf16.mxu0 %v5971
        %7309 = vmatmul.mubr.bf16.gmra.mxu0 %v5970
        %v7310 = vpop.f32.mrf.mxu0
        %v7311 = vadd.f32 %v6131, %v7310
        %v7312 = vpop.f32.mrf.mxu0
        %v7313 = vadd.f32 %v6135, %v7312
        %v7314 = vpop.f32.mrf.mxu0
        %v7315 = vadd.f32 %v6131, %v7314
        %v7316 = vpop.f32.mrf.mxu0
        %v7317 = vadd.f32 %v6135, %v7316
        %7318 = vmatprep.mubr.bf16.mxu0 %v5975
        %7319 = vmatmul.mubr.bf16.gmra.mxu0 %v5974
        %v7320 = vpop.f32.mrf.mxu0
        %v7321 = vadd.f32 %v6131, %v7320
        %v7322 = vpop.f32.mrf.mxu0
        %v7323 = vadd.f32 %v6135, %v7322
        %v7324 = vpop.f32.mrf.mxu0
        %v7325 = vadd.f32 %v6131, %v7324
        %v7326 = vpop.f32.mrf.mxu0
        %v7327 = vadd.f32 %v6135, %v7326
        %7328 = vmatprep.mubr.bf16.mxu0 %v5979
        %7329 = vmatmul.mubr.bf16.gmra.mxu0 %v5978
        %v7330 = vpop.f32.mrf.mxu0
        %v7331 = vadd.f32 %v6131, %v7330
        %v7332 = vpop.f32.mrf.mxu0
        %v7333 = vadd.f32 %v6135, %v7332
        %v7334 = vpop.f32.mrf.mxu0
        %v7335 = vadd.f32 %v6131, %v7334
        %v7336 = vpop.f32.mrf.mxu0
        %v7337 = vadd.f32 %v6135, %v7336
        %7338 = vmatprep.mubr.bf16.mxu0 %v5983
        %7339 = vmatmul.mubr.bf16.gmra.mxu0 %v5982
        %v7340 = vpop.f32.mrf.mxu0
        %v7341 = vadd.f32 %v6131, %v7340
        %v7342 = vpop.f32.mrf.mxu0
        %v7343 = vadd.f32 %v6135, %v7342
        %v7344 = vpop.f32.mrf.mxu0
        %v7345 = vadd.f32 %v6131, %v7344
        %v7346 = vpop.f32.mrf.mxu0
        %v7347 = vadd.f32 %v6135, %v7346
        %7348 = vmatprep.mubr.bf16.mxu0 %v5987
        %7349 = vmatmul.mubr.bf16.gmra.mxu0 %v5986
        %v7350 = vpop.f32.mrf.mxu0
        %v7351 = vadd.f32 %v6131, %v7350
        %v7352 = vpop.f32.mrf.mxu0
        %v7353 = vadd.f32 %v6135, %v7352
        %v7354 = vpop.f32.mrf.mxu0
        %v7355 = vadd.f32 %v6131, %v7354
        %v7356 = vpop.f32.mrf.mxu0
        %v7357 = vadd.f32 %v6135, %v7356
        %7358 = vdwg.mxu0
        %7359 = vmatprep.subr.bf16.mxu0 %v6619
        %7360 = vmatpush1.bf16.msra.mxu0 %v6618
        %7361 = vmatprep.subr.bf16.mxu0 %v6615
        %7362 = vmatpush1.bf16.msra.mxu0 %v6614
        %7363 = vmatprep.subr.bf16.mxu0 %v6611
        %7364 = vmatpush1.bf16.msra.mxu0 %v6610
        %7365 = vmatprep.subr.bf16.mxu0 %v6607
        %7366 = vmatpush1.bf16.msra.mxu0 %v6606
        %7367 = vmatprep.subr.bf16.mxu0 %v6603
        %7368 = vmatpush1.bf16.msra.mxu0 %v6602
        %7369 = vmatprep.subr.bf16.mxu0 %v6599
        %7370 = vmatpush1.bf16.msra.mxu0 %v6598
        %7371 = vmatprep.subr.bf16.mxu0 %v6595
        %7372 = vmatpush1.bf16.msra.mxu0 %v6594
        %7373 = vmatprep.subr.bf16.mxu0 %v6591
        %7374 = vmatpush1.bf16.msra.mxu0 %v6590
        %7375 = vmatprep.subr.bf16.mxu0 %v6651
        %7376 = vmatpush2.bf16.msra.mxu0 %v6650
        %7377 = vmatprep.subr.bf16.mxu0 %v6647
        %7378 = vmatpush2.bf16.msra.mxu0 %v6646
        %7379 = vmatprep.subr.bf16.mxu0 %v6643
        %7380 = vmatpush2.bf16.msra.mxu0 %v6642
        %7381 = vmatprep.subr.bf16.mxu0 %v6639
        %7382 = vmatpush2.bf16.msra.mxu0 %v6638
        %7383 = vmatprep.subr.bf16.mxu0 %v6635
        %7384 = vmatpush2.bf16.msra.mxu0 %v6634
        %7385 = vmatprep.subr.bf16.mxu0 %v6631
        %7386 = vmatpush2.bf16.msra.mxu0 %v6630
        %7387 = vmatprep.subr.bf16.mxu0 %v6627
        %7388 = vmatpush2.bf16.msra.mxu0 %v6626
        %7389 = vmatprep.subr.bf16.mxu0 %v6623
        %7390 = vmatpush2.bf16.msra.mxu0 %v6622
        %7391 = vmatprep.mubr.bf16.mxu0 %v5929
        %7392 = vmatmul.mubr.bf16.gmra.mxu0 %v5928
        %v7393 = vpop.f32.mrf.mxu0
        %v7394 = vadd.f32 %v7201, %v7393
        %v7395 = vpop.f32.mrf.mxu0
        %v7396 = vadd.f32 %v7203, %v7395
        %v7397 = vpop.f32.mrf.mxu0
        %v7398 = vadd.f32 %v7205, %v7397
        %v7399 = vpop.f32.mrf.mxu0
        %v7400 = vadd.f32 %v7207, %v7399
        %7401 = vmatprep.mubr.bf16.mxu0 %v5933
        %7402 = vmatmul.mubr.bf16.gmra.mxu0 %v5932
        %v7403 = vpop.f32.mrf.mxu0
        %v7404 = vadd.f32 %v7211, %v7403
        %v7405 = vpop.f32.mrf.mxu0
        %v7406 = vadd.f32 %v7213, %v7405
        %v7407 = vpop.f32.mrf.mxu0
        %v7408 = vadd.f32 %v7215, %v7407
        %v7409 = vpop.f32.mrf.mxu0
        %v7410 = vadd.f32 %v7217, %v7409
        %7411 = vmatprep.mubr.bf16.mxu0 %v5937
        %7412 = vmatmul.mubr.bf16.gmra.mxu0 %v5936
        %v7413 = vpop.f32.mrf.mxu0
        %v7414 = vadd.f32 %v7221, %v7413
        %v7415 = vpop.f32.mrf.mxu0
        %v7416 = vadd.f32 %v7223, %v7415
        %v7417 = vpop.f32.mrf.mxu0
        %v7418 = vadd.f32 %v7225, %v7417
        %v7419 = vpop.f32.mrf.mxu0
        %v7420 = vadd.f32 %v7227, %v7419
        %7421 = vmatprep.mubr.bf16.mxu0 %v5941
        %7422 = vmatmul.mubr.bf16.gmra.mxu0 %v5940
        %v7423 = vpop.f32.mrf.mxu0
        %v7424 = vadd.f32 %v7231, %v7423
        %v7425 = vpop.f32.mrf.mxu0
        %v7426 = vadd.f32 %v7233, %v7425
        %v7427 = vpop.f32.mrf.mxu0
        %v7428 = vadd.f32 %v7235, %v7427
        %v7429 = vpop.f32.mrf.mxu0
        %v7430 = vadd.f32 %v7237, %v7429
        %7431 = vmatprep.mubr.bf16.mxu0 %v5945
        %7432 = vmatmul.mubr.bf16.gmra.mxu0 %v5944
        %v7433 = vpop.f32.mrf.mxu0
        %v7434 = vadd.f32 %v7241, %v7433
        %v7435 = vpop.f32.mrf.mxu0
        %v7436 = vadd.f32 %v7243, %v7435
        %v7437 = vpop.f32.mrf.mxu0
        %v7438 = vadd.f32 %v7245, %v7437
        %v7439 = vpop.f32.mrf.mxu0
        %v7440 = vadd.f32 %v7247, %v7439
        %7441 = vmatprep.mubr.bf16.mxu0 %v5949
        %7442 = vmatmul.mubr.bf16.gmra.mxu0 %v5948
        %v7443 = vpop.f32.mrf.mxu0
        %v7444 = vadd.f32 %v7251, %v7443
        %v7445 = vpop.f32.mrf.mxu0
        %v7446 = vadd.f32 %v7253, %v7445
        %v7447 = vpop.f32.mrf.mxu0
        %v7448 = vadd.f32 %v7255, %v7447
        %v7449 = vpop.f32.mrf.mxu0
        %v7450 = vadd.f32 %v7257, %v7449
        %7451 = vmatprep.mubr.bf16.mxu0 %v5953
        %7452 = vmatmul.mubr.bf16.gmra.mxu0 %v5952
        %v7453 = vpop.f32.mrf.mxu0
        %v7454 = vadd.f32 %v7261, %v7453
        %v7455 = vpop.f32.mrf.mxu0
        %v7456 = vadd.f32 %v7263, %v7455
        %v7457 = vpop.f32.mrf.mxu0
        %v7458 = vadd.f32 %v7265, %v7457
        %v7459 = vpop.f32.mrf.mxu0
        %v7460 = vadd.f32 %v7267, %v7459
        %7461 = vmatprep.mubr.bf16.mxu0 %v5957
        %7462 = vmatmul.mubr.bf16.gmra.mxu0 %v5956
        %v7463 = vpop.f32.mrf.mxu0
        %v7464 = vadd.f32 %v7271, %v7463
        %v7465 = vpop.f32.mrf.mxu0
        %v7466 = vadd.f32 %v7273, %v7465
        %v7467 = vpop.f32.mrf.mxu0
        %v7468 = vadd.f32 %v7275, %v7467
        %v7469 = vpop.f32.mrf.mxu0
        %v7470 = vadd.f32 %v7277, %v7469
        %7471 = vmatprep.mubr.bf16.mxu0 %v5961
        %7472 = vmatmul.mubr.bf16.gmra.mxu0 %v5960
        %v7473 = vpop.f32.mrf.mxu0
        %v7474 = vadd.f32 %v7281, %v7473
        %v7475 = vpop.f32.mrf.mxu0
        %v7476 = vadd.f32 %v7283, %v7475
        %v7477 = vpop.f32.mrf.mxu0
        %v7478 = vadd.f32 %v7285, %v7477
        %v7479 = vpop.f32.mrf.mxu0
        %v7480 = vadd.f32 %v7287, %v7479
        %7481 = vmatprep.mubr.bf16.mxu0 %v5965
        %7482 = vmatmul.mubr.bf16.gmra.mxu0 %v5964
        %v7483 = vpop.f32.mrf.mxu0
        %v7484 = vadd.f32 %v7291, %v7483
        %v7485 = vpop.f32.mrf.mxu0
        %v7486 = vadd.f32 %v7293, %v7485
        %v7487 = vpop.f32.mrf.mxu0
        %v7488 = vadd.f32 %v7295, %v7487
        %v7489 = vpop.f32.mrf.mxu0
        %v7490 = vadd.f32 %v7297, %v7489
        %7491 = vmatprep.mubr.bf16.mxu0 %v5969
        %7492 = vmatmul.mubr.bf16.gmra.mxu0 %v5968
        %v7493 = vpop.f32.mrf.mxu0
        %v7494 = vadd.f32 %v7301, %v7493
        %v7495 = vpop.f32.mrf.mxu0
        %v7496 = vadd.f32 %v7303, %v7495
        %v7497 = vpop.f32.mrf.mxu0
        %v7498 = vadd.f32 %v7305, %v7497
        %v7499 = vpop.f32.mrf.mxu0
        %v7500 = vadd.f32 %v7307, %v7499
        %7501 = vmatprep.mubr.bf16.mxu0 %v5973
        %7502 = vmatmul.mubr.bf16.gmra.mxu0 %v5972
        %v7503 = vpop.f32.mrf.mxu0
        %v7504 = vadd.f32 %v7311, %v7503
        %v7505 = vpop.f32.mrf.mxu0
        %v7506 = vadd.f32 %v7313, %v7505
        %v7507 = vpop.f32.mrf.mxu0
        %v7508 = vadd.f32 %v7315, %v7507
        %v7509 = vpop.f32.mrf.mxu0
        %v7510 = vadd.f32 %v7317, %v7509
        %7511 = vmatprep.mubr.bf16.mxu0 %v5977
        %7512 = vmatmul.mubr.bf16.gmra.mxu0 %v5976
        %v7513 = vpop.f32.mrf.mxu0
        %v7514 = vadd.f32 %v7321, %v7513
        %v7515 = vpop.f32.mrf.mxu0
        %v7516 = vadd.f32 %v7323, %v7515
        %v7517 = vpop.f32.mrf.mxu0
        %v7518 = vadd.f32 %v7325, %v7517
        %v7519 = vpop.f32.mrf.mxu0
        %v7520 = vadd.f32 %v7327, %v7519
        %7521 = vmatprep.mubr.bf16.mxu0 %v5981
        %7522 = vmatmul.mubr.bf16.gmra.mxu0 %v5980
        %v7523 = vpop.f32.mrf.mxu0
        %v7524 = vadd.f32 %v7331, %v7523
        %v7525 = vpop.f32.mrf.mxu0
        %v7526 = vadd.f32 %v7333, %v7525
        %v7527 = vpop.f32.mrf.mxu0
        %v7528 = vadd.f32 %v7335, %v7527
        %v7529 = vpop.f32.mrf.mxu0
        %v7530 = vadd.f32 %v7337, %v7529
        %7531 = vmatprep.mubr.bf16.mxu0 %v5985
        %7532 = vmatmul.mubr.bf16.gmra.mxu0 %v5984
        %v7533 = vpop.f32.mrf.mxu0
        %v7534 = vadd.f32 %v7341, %v7533
        %v7535 = vpop.f32.mrf.mxu0
        %v7536 = vadd.f32 %v7343, %v7535
        %v7537 = vpop.f32.mrf.mxu0
        %v7538 = vadd.f32 %v7345, %v7537
        %v7539 = vpop.f32.mrf.mxu0
        %v7540 = vadd.f32 %v7347, %v7539
        %7541 = vmatprep.mubr.bf16.mxu0 %v5989
        %7542 = vmatmul.mubr.bf16.gmra.mxu0 %v5988
        %v7543 = vpop.f32.mrf.mxu0
        %v7544 = vadd.f32 %v7351, %v7543
        %v7545 = vpop.f32.mrf.mxu0
        %v7546 = vadd.f32 %v7353, %v7545
        %v7547 = vpop.f32.mrf.mxu0
        %v7548 = vadd.f32 %v7355, %v7547
        %v7549 = vpop.f32.mrf.mxu0
        %v7550 = vadd.f32 %v7357, %v7549
        %7551 = vdwg.mxu0
        %v7552 = vmax.f32 %v7008, 0.0
        %v7553 = vmax.f32 %v7010, 0.0
        %v7554 = vmax.f32 %v7394, 0.0
        %v7555 = vmax.f32 %v7396, 0.0
        %v7556 = vmax.f32 %v7012, 0.0
        %v7557 = vmax.f32 %v7014, 0.0
        %v7558 = vmax.f32 %v7398, 0.0
        %v7559 = vmax.f32 %v7400, 0.0
        %v7560 = vmax.f32 %v7018, 0.0
        %v7561 = vmax.f32 %v7020, 0.0
        %v7562 = vmax.f32 %v7404, 0.0
        %v7563 = vmax.f32 %v7406, 0.0
        %v7564 = vmax.f32 %v7022, 0.0
        %v7565 = vmax.f32 %v7024, 0.0
        %v7566 = vmax.f32 %v7408, 0.0
        %v7567 = vmax.f32 %v7410, 0.0
        %v7568 = vmax.f32 %v7028, 0.0
        %v7569 = vmax.f32 %v7030, 0.0
        %v7570 = vmax.f32 %v7414, 0.0
        %v7571 = vmax.f32 %v7416, 0.0
        %v7572 = vmax.f32 %v7032, 0.0
        %v7573 = vmax.f32 %v7034, 0.0
        %v7574 = vmax.f32 %v7418, 0.0
        %v7575 = vmax.f32 %v7420, 0.0
        %v7576 = vmax.f32 %v7038, 0.0
        %v7577 = vmax.f32 %v7040, 0.0
        %v7578 = vmax.f32 %v7424, 0.0
        %v7579 = vmax.f32 %v7426, 0.0
        %v7580 = vmax.f32 %v7042, 0.0
        %v7581 = vmax.f32 %v7044, 0.0
        %v7582 = vmax.f32 %v7428, 0.0
        %v7583 = vmax.f32 %v7430, 0.0
        %v7584 = vmax.f32 %v7048, 0.0
        %v7585 = vmax.f32 %v7050, 0.0
        %v7586 = vmax.f32 %v7434, 0.0
        %v7587 = vmax.f32 %v7436, 0.0
        %v7588 = vmax.f32 %v7052, 0.0
        %v7589 = vmax.f32 %v7054, 0.0
        %v7590 = vmax.f32 %v7438, 0.0
        %v7591 = vmax.f32 %v7440, 0.0
        %v7592 = vmax.f32 %v7058, 0.0
        %v7593 = vmax.f32 %v7060, 0.0
        %v7594 = vmax.f32 %v7444, 0.0
        %v7595 = vmax.f32 %v7446, 0.0
        %v7596 = vmax.f32 %v7062, 0.0
        %v7597 = vmax.f32 %v7064, 0.0
        %v7598 = vmax.f32 %v7448, 0.0
        %v7599 = vmax.f32 %v7450, 0.0
        %v7600 = vmax.f32 %v7068, 0.0
        %v7601 = vmax.f32 %v7070, 0.0
        %v7602 = vmax.f32 %v7454, 0.0
        %v7603 = vmax.f32 %v7456, 0.0
        %v7604 = vmax.f32 %v7072, 0.0
        %v7605 = vmax.f32 %v7074, 0.0
        %v7606 = vmax.f32 %v7458, 0.0
        %v7607 = vmax.f32 %v7460, 0.0
        %v7608 = vmax.f32 %v7078, 0.0
        %v7609 = vmax.f32 %v7080, 0.0
        %v7610 = vmax.f32 %v7464, 0.0
        %v7611 = vmax.f32 %v7466, 0.0
        %v7612 = vmax.f32 %v7082, 0.0
        %v7613 = vmax.f32 %v7084, 0.0
        %v7614 = vmax.f32 %v7468, 0.0
        %v7615 = vmax.f32 %v7470, 0.0
        %v7616 = vmax.f32 %v7088, 0.0
        %v7617 = vmax.f32 %v7090, 0.0
        %v7618 = vmax.f32 %v7474, 0.0
        %v7619 = vmax.f32 %v7476, 0.0
        %v7620 = vmax.f32 %v7092, 0.0
        %v7621 = vmax.f32 %v7094, 0.0
        %v7622 = vmax.f32 %v7478, 0.0
        %v7623 = vmax.f32 %v7480, 0.0
        %v7624 = vmax.f32 %v7098, 0.0
        %v7625 = vmax.f32 %v7100, 0.0
        %v7626 = vmax.f32 %v7484, 0.0
        %v7627 = vmax.f32 %v7486, 0.0
        %v7628 = vmax.f32 %v7102, 0.0
        %v7629 = vmax.f32 %v7104, 0.0
        %v7630 = vmax.f32 %v7488, 0.0
        %v7631 = vmax.f32 %v7490, 0.0
        %v7632 = vmax.f32 %v7108, 0.0
        %v7633 = vmax.f32 %v7110, 0.0
        %v7634 = vmax.f32 %v7494, 0.0
        %v7635 = vmax.f32 %v7496, 0.0
        %v7636 = vmax.f32 %v7112, 0.0
        %v7637 = vmax.f32 %v7114, 0.0
        %v7638 = vmax.f32 %v7498, 0.0
        %v7639 = vmax.f32 %v7500, 0.0
        %v7640 = vmax.f32 %v7118, 0.0
        %v7641 = vmax.f32 %v7120, 0.0
        %v7642 = vmax.f32 %v7504, 0.0
        %v7643 = vmax.f32 %v7506, 0.0
        %v7644 = vmax.f32 %v7122, 0.0
        %v7645 = vmax.f32 %v7124, 0.0
        %v7646 = vmax.f32 %v7508, 0.0
        %v7647 = vmax.f32 %v7510, 0.0
        %v7648 = vmax.f32 %v7128, 0.0
        %v7649 = vmax.f32 %v7130, 0.0
        %v7650 = vmax.f32 %v7514, 0.0
        %v7651 = vmax.f32 %v7516, 0.0
        %v7652 = vmax.f32 %v7132, 0.0
        %v7653 = vmax.f32 %v7134, 0.0
        %v7654 = vmax.f32 %v7518, 0.0
        %v7655 = vmax.f32 %v7520, 0.0
        %v7656 = vmax.f32 %v7138, 0.0
        %v7657 = vmax.f32 %v7140, 0.0
        %v7658 = vmax.f32 %v7524, 0.0
        %v7659 = vmax.f32 %v7526, 0.0
        %v7660 = vmax.f32 %v7142, 0.0
        %v7661 = vmax.f32 %v7144, 0.0
        %v7662 = vmax.f32 %v7528, 0.0
        %v7663 = vmax.f32 %v7530, 0.0
        %v7664 = vmax.f32 %v7148, 0.0
        %v7665 = vmax.f32 %v7150, 0.0
        %v7666 = vmax.f32 %v7534, 0.0
        %v7667 = vmax.f32 %v7536, 0.0
        %v7668 = vmax.f32 %v7152, 0.0
        %v7669 = vmax.f32 %v7154, 0.0
        %v7670 = vmax.f32 %v7538, 0.0
        %v7671 = vmax.f32 %v7540, 0.0
        %v7672 = vmax.f32 %v7158, 0.0
        %v7673 = vmax.f32 %v7160, 0.0
        %v7674 = vmax.f32 %v7544, 0.0
        %v7675 = vmax.f32 %v7546, 0.0
        %v7676 = vmax.f32 %v7162, 0.0
        %v7677 = vmax.f32 %v7164, 0.0
        %v7678 = vmax.f32 %v7548, 0.0
        %v7679 = vmax.f32 %v7550, 0.0
        %v7680 = vpack.c.bf16 %v7556, %v7552
        %v7681 = vpack.c.bf16 %v7557, %v7553
        %v7682 = vpack.c.bf16 %v7558, %v7554
        %v7683 = vpack.c.bf16 %v7559, %v7555
        %v7684 = vpack.c.bf16 %v7564, %v7560
        %v7685 = vpack.c.bf16 %v7565, %v7561
        %v7686 = vpack.c.bf16 %v7566, %v7562
        %v7687 = vpack.c.bf16 %v7567, %v7563
        %v7688 = vpack.c.bf16 %v7572, %v7568
        %v7689 = vpack.c.bf16 %v7573, %v7569
        %v7690 = vpack.c.bf16 %v7574, %v7570
        %v7691 = vpack.c.bf16 %v7575, %v7571
        %v7692 = vpack.c.bf16 %v7580, %v7576
        %v7693 = vpack.c.bf16 %v7581, %v7577
        %v7694 = vpack.c.bf16 %v7582, %v7578
        %v7695 = vpack.c.bf16 %v7583, %v7579
        %v7696 = vpack.c.bf16 %v7588, %v7584
        %v7697 = vpack.c.bf16 %v7589, %v7585
        %v7698 = vpack.c.bf16 %v7590, %v7586
        %v7699 = vpack.c.bf16 %v7591, %v7587
        %v7700 = vpack.c.bf16 %v7596, %v7592
        %v7701 = vpack.c.bf16 %v7597, %v7593
        %v7702 = vpack.c.bf16 %v7598, %v7594
        %v7703 = vpack.c.bf16 %v7599, %v7595
        %v7704 = vpack.c.bf16 %v7604, %v7600
        %v7705 = vpack.c.bf16 %v7605, %v7601
        %v7706 = vpack.c.bf16 %v7606, %v7602
        %v7707 = vpack.c.bf16 %v7607, %v7603
        %v7708 = vpack.c.bf16 %v7612, %v7608
        %v7709 = vpack.c.bf16 %v7613, %v7609
        %v7710 = vpack.c.bf16 %v7614, %v7610
        %v7711 = vpack.c.bf16 %v7615, %v7611
        %v7712 = vpack.c.bf16 %v7620, %v7616
        %v7713 = vpack.c.bf16 %v7621, %v7617
        %v7714 = vpack.c.bf16 %v7622, %v7618
        %v7715 = vpack.c.bf16 %v7623, %v7619
        %v7716 = vpack.c.bf16 %v7628, %v7624
        %v7717 = vpack.c.bf16 %v7629, %v7625
        %v7718 = vpack.c.bf16 %v7630, %v7626
        %v7719 = vpack.c.bf16 %v7631, %v7627
        %v7720 = vpack.c.bf16 %v7636, %v7632
        %v7721 = vpack.c.bf16 %v7637, %v7633
        %v7722 = vpack.c.bf16 %v7638, %v7634
        %v7723 = vpack.c.bf16 %v7639, %v7635
        %v7724 = vpack.c.bf16 %v7644, %v7640
        %v7725 = vpack.c.bf16 %v7645, %v7641
        %v7726 = vpack.c.bf16 %v7646, %v7642
        %v7727 = vpack.c.bf16 %v7647, %v7643
        %v7728 = vpack.c.bf16 %v7652, %v7648
        %v7729 = vpack.c.bf16 %v7653, %v7649
        %v7730 = vpack.c.bf16 %v7654, %v7650
        %v7731 = vpack.c.bf16 %v7655, %v7651
        %v7732 = vpack.c.bf16 %v7660, %v7656
        %v7733 = vpack.c.bf16 %v7661, %v7657
        %v7734 = vpack.c.bf16 %v7662, %v7658
        %v7735 = vpack.c.bf16 %v7663, %v7659
        %v7736 = vpack.c.bf16 %v7668, %v7664
        %v7737 = vpack.c.bf16 %v7669, %v7665
        %v7738 = vpack.c.bf16 %v7670, %v7666
        %v7739 = vpack.c.bf16 %v7671, %v7667
        %v7740 = vpack.c.bf16 %v7676, %v7672
        %v7741 = vpack.c.bf16 %v7677, %v7673
        %v7742 = vpack.c.bf16 %v7678, %v7674
        %v7743 = vpack.c.bf16 %v7679, %v7675
        %v7744 = vld [vmem:[#allocation13] sm:$0xf]
        %v7745 = vld [vmem:[#allocation13 + $0x4] sm:$0xf]
        %v7746 = vld [vmem:[#allocation13 + $0x8] sm:$0xf]
        %v7747 = vld [vmem:[#allocation13 + $0xc] sm:$0xf]
        %v7748 = vld [vmem:[#allocation13 + $0x10] sm:$0xf]
        %v7749 = vld [vmem:[#allocation13 + $0x14] sm:$0xf]
        %v7750 = vld [vmem:[#allocation13 + $0x18] sm:$0xf]
        %v7751 = vld [vmem:[#allocation13 + $0x1c] sm:$0xf]
        %v7752 = vld [vmem:[#allocation13 + $0x20] sm:$0xf]
        %v7753 = vld [vmem:[#allocation13 + $0x24] sm:$0xf]
        %v7754 = vld [vmem:[#allocation13 + $0x28] sm:$0xf]
        %v7755 = vld [vmem:[#allocation13 + $0x2c] sm:$0xf]
        %v7756 = vld [vmem:[#allocation13 + $0x30] sm:$0xf]
        %v7757 = vld [vmem:[#allocation13 + $0x34] sm:$0xf]
        %v7758 = vld [vmem:[#allocation13 + $0x38] sm:$0xf]
        %v7759 = vld [vmem:[#allocation13 + $0x3c] sm:$0xf]
        %v7760 = vld [vmem:[#allocation13 + $0x40] sm:$0xf]
        %v7761 = vld [vmem:[#allocation13 + $0x44] sm:$0xf]
        %v7762 = vld [vmem:[#allocation13 + $0x48] sm:$0xf]
        %v7763 = vld [vmem:[#allocation13 + $0x4c] sm:$0xf]
        %v7764 = vld [vmem:[#allocation13 + $0x50] sm:$0xf]
        %v7765 = vld [vmem:[#allocation13 + $0x54] sm:$0xf]
        %v7766 = vld [vmem:[#allocation13 + $0x58] sm:$0xf]
        %v7767 = vld [vmem:[#allocation13 + $0x5c] sm:$0xf]
        %v7768 = vld [vmem:[#allocation13 + $0x60] sm:$0xf]
        %v7769 = vld [vmem:[#allocation13 + $0x64] sm:$0xf]
        %v7770 = vld [vmem:[#allocation13 + $0x68] sm:$0xf]
        %v7771 = vld [vmem:[#allocation13 + $0x6c] sm:$0xf]
        %v7772 = vld [vmem:[#allocation13 + $0x70] sm:$0xf]
        %v7773 = vld [vmem:[#allocation13 + $0x74] sm:$0xf]
        %v7774 = vld [vmem:[#allocation13 + $0x78] sm:$0xf]
        %v7775 = vld [vmem:[#allocation13 + $0x7c] sm:$0xf]
        %v7776 = vld [vmem:[#allocation13 + $0x80] sm:$0xf]
        %v7777 = vld [vmem:[#allocation13 + $0x84] sm:$0xf]
        %v7778 = vld [vmem:[#allocation13 + $0x88] sm:$0xf]
        %v7779 = vld [vmem:[#allocation13 + $0x8c] sm:$0xf]
        %v7780 = vld [vmem:[#allocation13 + $0x90] sm:$0xf]
        %v7781 = vld [vmem:[#allocation13 + $0x94] sm:$0xf]
        %v7782 = vld [vmem:[#allocation13 + $0x98] sm:$0xf]
        %v7783 = vld [vmem:[#allocation13 + $0x9c] sm:$0xf]
        %v7784 = vld [vmem:[#allocation13 + $0xa0] sm:$0xf]
        %v7785 = vld [vmem:[#allocation13 + $0xa4] sm:$0xf]
        %v7786 = vld [vmem:[#allocation13 + $0xa8] sm:$0xf]
        %v7787 = vld [vmem:[#allocation13 + $0xac] sm:$0xf]
        %v7788 = vld [vmem:[#allocation13 + $0xb0] sm:$0xf]
        %v7789 = vld [vmem:[#allocation13 + $0xb4] sm:$0xf]
        %v7790 = vld [vmem:[#allocation13 + $0xb8] sm:$0xf]
        %v7791 = vld [vmem:[#allocation13 + $0xbc] sm:$0xf]
        %v7792 = vld [vmem:[#allocation13 + $0xc0] sm:$0xf]
        %v7793 = vld [vmem:[#allocation13 + $0xc4] sm:$0xf]
        %v7794 = vld [vmem:[#allocation13 + $0xc8] sm:$0xf]
        %v7795 = vld [vmem:[#allocation13 + $0xcc] sm:$0xf]
        %v7796 = vld [vmem:[#allocation13 + $0xd0] sm:$0xf]
        %v7797 = vld [vmem:[#allocation13 + $0xd4] sm:$0xf]
        %v7798 = vld [vmem:[#allocation13 + $0xd8] sm:$0xf]
        %v7799 = vld [vmem:[#allocation13 + $0xdc] sm:$0xf]
        %v7800 = vld [vmem:[#allocation13 + $0xe0] sm:$0xf]
        %v7801 = vld [vmem:[#allocation13 + $0xe4] sm:$0xf]
        %v7802 = vld [vmem:[#allocation13 + $0xe8] sm:$0xf]
        %v7803 = vld [vmem:[#allocation13 + $0xec] sm:$0xf]
        %v7804 = vld [vmem:[#allocation13 + $0xf0] sm:$0xf]
        %v7805 = vld [vmem:[#allocation13 + $0xf4] sm:$0xf]
        %v7806 = vld [vmem:[#allocation13 + $0xf8] sm:$0xf]
        %v7807 = vld [vmem:[#allocation13 + $0xfc] sm:$0xf]
        %v7808 = vld [vmem:[%s15] sm:$0x1]
        %v7810 = vlaneseq
        %v7811 = vshrl.u32 %v7810, 7
        %v7812 = vsub.s32 0, %v7811
        %v7813 = vrot.slane %v7808, %v7812
        %v7879 = vunpack.c.l.b16 %v7744
        %v7880 = vunpack.c.l.b16 %v7745
        %v7881 = vunpack.c.l.b16 %v7746
        %v7882 = vunpack.c.l.b16 %v7747
        %v7883 = vunpack.c.l.b16 %v7748
        %v7884 = vunpack.c.l.b16 %v7749
        %v7885 = vunpack.c.l.b16 %v7750
        %v7886 = vunpack.c.l.b16 %v7751
        %v7887 = vunpack.c.l.b16 %v7752
        %v7888 = vunpack.c.l.b16 %v7753
        %v7889 = vunpack.c.l.b16 %v7754
        %v7890 = vunpack.c.l.b16 %v7755
        %v7891 = vunpack.c.l.b16 %v7756
        %v7892 = vunpack.c.l.b16 %v7757
        %v7893 = vunpack.c.l.b16 %v7758
        %v7894 = vunpack.c.l.b16 %v7759
        %v7895 = vunpack.c.l.b16 %v7760
        %v7896 = vunpack.c.l.b16 %v7761
        %v7897 = vunpack.c.l.b16 %v7762
        %v7898 = vunpack.c.l.b16 %v7763
        %v7899 = vunpack.c.l.b16 %v7764
        %v7900 = vunpack.c.l.b16 %v7765
        %v7901 = vunpack.c.l.b16 %v7766
        %v7902 = vunpack.c.l.b16 %v7767
        %v7903 = vunpack.c.l.b16 %v7768
        %v7904 = vunpack.c.l.b16 %v7769
        %v7905 = vunpack.c.l.b16 %v7770
        %v7906 = vunpack.c.l.b16 %v7771
        %v7907 = vunpack.c.l.b16 %v7772
        %v7908 = vunpack.c.l.b16 %v7773
        %v7909 = vunpack.c.l.b16 %v7774
        %v7910 = vunpack.c.l.b16 %v7775
        %v7911 = vunpack.c.l.b16 %v7776
        %v7912 = vunpack.c.l.b16 %v7777
        %v7913 = vunpack.c.l.b16 %v7778
        %v7914 = vunpack.c.l.b16 %v7779
        %v7915 = vunpack.c.l.b16 %v7780
        %v7916 = vunpack.c.l.b16 %v7781
        %v7917 = vunpack.c.l.b16 %v7782
        %v7918 = vunpack.c.l.b16 %v7783
        %v7919 = vunpack.c.l.b16 %v7784
        %v7920 = vunpack.c.l.b16 %v7785
        %v7921 = vunpack.c.l.b16 %v7786
        %v7922 = vunpack.c.l.b16 %v7787
        %v7923 = vunpack.c.l.b16 %v7788
        %v7924 = vunpack.c.l.b16 %v7789
        %v7925 = vunpack.c.l.b16 %v7790
        %v7926 = vunpack.c.l.b16 %v7791
        %v7927 = vunpack.c.l.b16 %v7792
        %v7928 = vunpack.c.l.b16 %v7793
        %v7929 = vunpack.c.l.b16 %v7794
        %v7930 = vunpack.c.l.b16 %v7795
        %v7931 = vunpack.c.l.b16 %v7796
        %v7932 = vunpack.c.l.b16 %v7797
        %v7933 = vunpack.c.l.b16 %v7798
        %v7934 = vunpack.c.l.b16 %v7799
        %v7935 = vunpack.c.l.b16 %v7800
        %v7936 = vunpack.c.l.b16 %v7801
        %v7937 = vunpack.c.l.b16 %v7802
        %v7938 = vunpack.c.l.b16 %v7803
        %v7939 = vunpack.c.l.b16 %v7804
        %v7940 = vunpack.c.l.b16 %v7805
        %v7941 = vunpack.c.l.b16 %v7806
        %v7942 = vunpack.c.l.b16 %v7807
        %v7943 = vpack.c.b16 %v7880, %v7879
        %v7944 = vpack.c.b16 %v7882, %v7881
        %v7945 = vpack.c.b16 %v7884, %v7883
        %v7946 = vpack.c.b16 %v7886, %v7885
        %v7947 = vpack.c.b16 %v7888, %v7887
        %v7948 = vpack.c.b16 %v7890, %v7889
        %v7949 = vpack.c.b16 %v7892, %v7891
        %v7950 = vpack.c.b16 %v7894, %v7893
        %v7951 = vpack.c.b16 %v7896, %v7895
        %v7952 = vpack.c.b16 %v7898, %v7897
        %v7953 = vpack.c.b16 %v7900, %v7899
        %v7954 = vpack.c.b16 %v7902, %v7901
        %v7955 = vpack.c.b16 %v7904, %v7903
        %v7956 = vpack.c.b16 %v7906, %v7905
        %v7957 = vpack.c.b16 %v7908, %v7907
        %v7958 = vpack.c.b16 %v7910, %v7909
        %v7959 = vpack.c.b16 %v7912, %v7911
        %v7960 = vpack.c.b16 %v7914, %v7913
        %v7961 = vpack.c.b16 %v7916, %v7915
        %v7962 = vpack.c.b16 %v7918, %v7917
        %v7963 = vpack.c.b16 %v7920, %v7919
        %v7964 = vpack.c.b16 %v7922, %v7921
        %v7965 = vpack.c.b16 %v7924, %v7923
        %v7966 = vpack.c.b16 %v7926, %v7925
        %v7967 = vpack.c.b16 %v7928, %v7927
        %v7968 = vpack.c.b16 %v7930, %v7929
        %v7969 = vpack.c.b16 %v7932, %v7931
        %v7970 = vpack.c.b16 %v7934, %v7933
        %v7971 = vpack.c.b16 %v7936, %v7935
        %v7972 = vpack.c.b16 %v7938, %v7937
        %v7973 = vpack.c.b16 %v7940, %v7939
        %v7974 = vpack.c.b16 %v7942, %v7941
        %8007 = vmatprep.subr.bf16.mxu0 0
        %8008 = vmatpush1.bf16.msra.mxu0 %v7950
        %8009 = vmatprep.subr.bf16.mxu0 0
        %8010 = vmatpush1.bf16.msra.mxu0 %v7949
        %8011 = vmatprep.subr.bf16.mxu0 0
        %8012 = vmatpush1.bf16.msra.mxu0 %v7948
        %8013 = vmatprep.subr.bf16.mxu0 0
        %8014 = vmatpush1.bf16.msra.mxu0 %v7947
        %8015 = vmatprep.subr.bf16.mxu0 0
        %8016 = vmatpush1.bf16.msra.mxu0 %v7946
        %8017 = vmatprep.subr.bf16.mxu0 0
        %8018 = vmatpush1.bf16.msra.mxu0 %v7945
        %8019 = vmatprep.subr.bf16.mxu0 0
        %8020 = vmatpush1.bf16.msra.mxu0 %v7944
        %8021 = vmatprep.subr.bf16.mxu0 0
        %8022 = vmatpush1.bf16.msra.mxu0 %v7943
        %8023 = vmatprep.subr.bf16.mxu0 0
        %8024 = vmatpush2.bf16.msra.mxu0 %v7958
        %8025 = vmatprep.subr.bf16.mxu0 0
        %8026 = vmatpush2.bf16.msra.mxu0 %v7957
        %8027 = vmatprep.subr.bf16.mxu0 0
        %8028 = vmatpush2.bf16.msra.mxu0 %v7956
        %8029 = vmatprep.subr.bf16.mxu0 0
        %8030 = vmatpush2.bf16.msra.mxu0 %v7955
        %8031 = vmatprep.subr.bf16.mxu0 0
        %8032 = vmatpush2.bf16.msra.mxu0 %v7954
        %8033 = vmatprep.subr.bf16.mxu0 0
        %8034 = vmatpush2.bf16.msra.mxu0 %v7953
        %8035 = vmatprep.subr.bf16.mxu0 0
        %8036 = vmatpush2.bf16.msra.mxu0 %v7952
        %8037 = vmatprep.subr.bf16.mxu0 0
        %8038 = vmatpush2.bf16.msra.mxu0 %v7951
        %8039 = vmatprep.mubr.bf16.mxu0 %v7681
        %8040 = vmatmul.mubr.bf16.gmra.mxu0 %v7680
        %v8041 = vpop.f32.mrf.mxu0
        %v8042 = vadd.f32 %v7813, %v8041
        %v8043 = vpop.f32.mrf.mxu0
        %v8044 = vpop.f32.mrf.mxu0
        %v8045 = vadd.f32 %v7813, %v8044
        %v8046 = vpop.f32.mrf.mxu0
        %8047 = vmatprep.mubr.bf16.mxu0 %v7685
        %8048 = vmatmul.mubr.bf16.gmra.mxu0 %v7684
        %v8049 = vpop.f32.mrf.mxu0
        %v8050 = vadd.f32 %v7813, %v8049
        %v8051 = vpop.f32.mrf.mxu0
        %v8052 = vpop.f32.mrf.mxu0
        %v8053 = vadd.f32 %v7813, %v8052
        %v8054 = vpop.f32.mrf.mxu0
        %8055 = vmatprep.mubr.bf16.mxu0 %v7689
        %8056 = vmatmul.mubr.bf16.gmra.mxu0 %v7688
        %v8057 = vpop.f32.mrf.mxu0
        %v8058 = vadd.f32 %v7813, %v8057
        %v8059 = vpop.f32.mrf.mxu0
        %v8060 = vpop.f32.mrf.mxu0
        %v8061 = vadd.f32 %v7813, %v8060
        %v8062 = vpop.f32.mrf.mxu0
        %8063 = vmatprep.mubr.bf16.mxu0 %v7693
        %8064 = vmatmul.mubr.bf16.gmra.mxu0 %v7692
        %v8065 = vpop.f32.mrf.mxu0
        %v8066 = vadd.f32 %v7813, %v8065
        %v8067 = vpop.f32.mrf.mxu0
        %v8068 = vpop.f32.mrf.mxu0
        %v8069 = vadd.f32 %v7813, %v8068
        %v8070 = vpop.f32.mrf.mxu0
        %8071 = vmatprep.mubr.bf16.mxu0 %v7697
        %8072 = vmatmul.mubr.bf16.gmra.mxu0 %v7696
        %v8073 = vpop.f32.mrf.mxu0
        %v8074 = vadd.f32 %v7813, %v8073
        %v8075 = vpop.f32.mrf.mxu0
        %v8076 = vpop.f32.mrf.mxu0
        %v8077 = vadd.f32 %v7813, %v8076
        %v8078 = vpop.f32.mrf.mxu0
        %8079 = vmatprep.mubr.bf16.mxu0 %v7701
        %8080 = vmatmul.mubr.bf16.gmra.mxu0 %v7700
        %v8081 = vpop.f32.mrf.mxu0
        %v8082 = vadd.f32 %v7813, %v8081
        %v8083 = vpop.f32.mrf.mxu0
        %v8084 = vpop.f32.mrf.mxu0
        %v8085 = vadd.f32 %v7813, %v8084
        %v8086 = vpop.f32.mrf.mxu0
        %8087 = vmatprep.mubr.bf16.mxu0 %v7705
        %8088 = vmatmul.mubr.bf16.gmra.mxu0 %v7704
        %v8089 = vpop.f32.mrf.mxu0
        %v8090 = vadd.f32 %v7813, %v8089
        %v8091 = vpop.f32.mrf.mxu0
        %v8092 = vpop.f32.mrf.mxu0
        %v8093 = vadd.f32 %v7813, %v8092
        %v8094 = vpop.f32.mrf.mxu0
        %8095 = vmatprep.mubr.bf16.mxu0 %v7709
        %8096 = vmatmul.mubr.bf16.gmra.mxu0 %v7708
        %v8097 = vpop.f32.mrf.mxu0
        %v8098 = vadd.f32 %v7813, %v8097
        %v8099 = vpop.f32.mrf.mxu0
        %v8100 = vpop.f32.mrf.mxu0
        %v8101 = vadd.f32 %v7813, %v8100
        %v8102 = vpop.f32.mrf.mxu0
        %8103 = vmatprep.mubr.bf16.mxu0 %v7713
        %8104 = vmatmul.mubr.bf16.gmra.mxu0 %v7712
        %v8105 = vpop.f32.mrf.mxu0
        %v8106 = vadd.f32 %v7813, %v8105
        %v8107 = vpop.f32.mrf.mxu0
        %v8108 = vpop.f32.mrf.mxu0
        %v8109 = vadd.f32 %v7813, %v8108
        %v8110 = vpop.f32.mrf.mxu0
        %8111 = vmatprep.mubr.bf16.mxu0 %v7717
        %8112 = vmatmul.mubr.bf16.gmra.mxu0 %v7716
        %v8113 = vpop.f32.mrf.mxu0
        %v8114 = vadd.f32 %v7813, %v8113
        %v8115 = vpop.f32.mrf.mxu0
        %v8116 = vpop.f32.mrf.mxu0
        %v8117 = vadd.f32 %v7813, %v8116
        %v8118 = vpop.f32.mrf.mxu0
        %8119 = vmatprep.mubr.bf16.mxu0 %v7721
        %8120 = vmatmul.mubr.bf16.gmra.mxu0 %v7720
        %v8121 = vpop.f32.mrf.mxu0
        %v8122 = vadd.f32 %v7813, %v8121
        %v8123 = vpop.f32.mrf.mxu0
        %v8124 = vpop.f32.mrf.mxu0
        %v8125 = vadd.f32 %v7813, %v8124
        %v8126 = vpop.f32.mrf.mxu0
        %8127 = vmatprep.mubr.bf16.mxu0 %v7725
        %8128 = vmatmul.mubr.bf16.gmra.mxu0 %v7724
        %v8129 = vpop.f32.mrf.mxu0
        %v8130 = vadd.f32 %v7813, %v8129
        %v8131 = vpop.f32.mrf.mxu0
        %v8132 = vpop.f32.mrf.mxu0
        %v8133 = vadd.f32 %v7813, %v8132
        %v8134 = vpop.f32.mrf.mxu0
        %8135 = vmatprep.mubr.bf16.mxu0 %v7729
        %8136 = vmatmul.mubr.bf16.gmra.mxu0 %v7728
        %v8137 = vpop.f32.mrf.mxu0
        %v8138 = vadd.f32 %v7813, %v8137
        %v8139 = vpop.f32.mrf.mxu0
        %v8140 = vpop.f32.mrf.mxu0
        %v8141 = vadd.f32 %v7813, %v8140
        %v8142 = vpop.f32.mrf.mxu0
        %8143 = vmatprep.mubr.bf16.mxu0 %v7733
        %8144 = vmatmul.mubr.bf16.gmra.mxu0 %v7732
        %v8145 = vpop.f32.mrf.mxu0
        %v8146 = vadd.f32 %v7813, %v8145
        %v8147 = vpop.f32.mrf.mxu0
        %v8148 = vpop.f32.mrf.mxu0
        %v8149 = vadd.f32 %v7813, %v8148
        %v8150 = vpop.f32.mrf.mxu0
        %8151 = vmatprep.mubr.bf16.mxu0 %v7737
        %8152 = vmatmul.mubr.bf16.gmra.mxu0 %v7736
        %v8153 = vpop.f32.mrf.mxu0
        %v8154 = vadd.f32 %v7813, %v8153
        %v8155 = vpop.f32.mrf.mxu0
        %v8156 = vpop.f32.mrf.mxu0
        %v8157 = vadd.f32 %v7813, %v8156
        %v8158 = vpop.f32.mrf.mxu0
        %8159 = vmatprep.mubr.bf16.mxu0 %v7741
        %8160 = vmatmul.mubr.bf16.gmra.mxu0 %v7740
        %v8161 = vpop.f32.mrf.mxu0
        %v8162 = vadd.f32 %v7813, %v8161
        %v8163 = vpop.f32.mrf.mxu0
        %v8164 = vpop.f32.mrf.mxu0
        %v8165 = vadd.f32 %v7813, %v8164
        %v8166 = vpop.f32.mrf.mxu0
        %8167 = vdwg.mxu0
        %8168 = vmatprep.subr.bf16.mxu0 0
        %8169 = vmatpush1.bf16.msra.mxu0 %v7966
        %8170 = vmatprep.subr.bf16.mxu0 0
        %8171 = vmatpush1.bf16.msra.mxu0 %v7965
        %8172 = vmatprep.subr.bf16.mxu0 0
        %8173 = vmatpush1.bf16.msra.mxu0 %v7964
        %8174 = vmatprep.subr.bf16.mxu0 0
        %8175 = vmatpush1.bf16.msra.mxu0 %v7963
        %8176 = vmatprep.subr.bf16.mxu0 0
        %8177 = vmatpush1.bf16.msra.mxu0 %v7962
        %8178 = vmatprep.subr.bf16.mxu0 0
        %8179 = vmatpush1.bf16.msra.mxu0 %v7961
        %8180 = vmatprep.subr.bf16.mxu0 0
        %8181 = vmatpush1.bf16.msra.mxu0 %v7960
        %8182 = vmatprep.subr.bf16.mxu0 0
        %8183 = vmatpush1.bf16.msra.mxu0 %v7959
        %8184 = vmatprep.subr.bf16.mxu0 0
        %8185 = vmatpush2.bf16.msra.mxu0 %v7974
        %8186 = vmatprep.subr.bf16.mxu0 0
        %8187 = vmatpush2.bf16.msra.mxu0 %v7973
        %8188 = vmatprep.subr.bf16.mxu0 0
        %8189 = vmatpush2.bf16.msra.mxu0 %v7972
        %8190 = vmatprep.subr.bf16.mxu0 0
        %8191 = vmatpush2.bf16.msra.mxu0 %v7971
        %8192 = vmatprep.subr.bf16.mxu0 0
        %8193 = vmatpush2.bf16.msra.mxu0 %v7970
        %8194 = vmatprep.subr.bf16.mxu0 0
        %8195 = vmatpush2.bf16.msra.mxu0 %v7969
        %8196 = vmatprep.subr.bf16.mxu0 0
        %8197 = vmatpush2.bf16.msra.mxu0 %v7968
        %8198 = vmatprep.subr.bf16.mxu0 0
        %8199 = vmatpush2.bf16.msra.mxu0 %v7967
        %8200 = vmatprep.mubr.bf16.mxu0 %v7683
        %8201 = vmatmul.mubr.bf16.gmra.mxu0 %v7682
        %v8202 = vpop.f32.mrf.mxu0
        %v8203 = vadd.f32 %v8042, %v8202
        %v8204 = vpop.f32.mrf.mxu0
        %v8205 = vpop.f32.mrf.mxu0
        %v8206 = vadd.f32 %v8045, %v8205
        %v8207 = vpop.f32.mrf.mxu0
        %8208 = vmatprep.mubr.bf16.mxu0 %v7687
        %8209 = vmatmul.mubr.bf16.gmra.mxu0 %v7686
        %v8210 = vpop.f32.mrf.mxu0
        %v8211 = vadd.f32 %v8050, %v8210
        %v8212 = vpop.f32.mrf.mxu0
        %v8213 = vpop.f32.mrf.mxu0
        %v8214 = vadd.f32 %v8053, %v8213
        %v8215 = vpop.f32.mrf.mxu0
        %8216 = vmatprep.mubr.bf16.mxu0 %v7691
        %8217 = vmatmul.mubr.bf16.gmra.mxu0 %v7690
        %v8218 = vpop.f32.mrf.mxu0
        %v8219 = vadd.f32 %v8058, %v8218
        %v8220 = vpop.f32.mrf.mxu0
        %v8221 = vpop.f32.mrf.mxu0
        %v8222 = vadd.f32 %v8061, %v8221
        %v8223 = vpop.f32.mrf.mxu0
        %8224 = vmatprep.mubr.bf16.mxu0 %v7695
        %8225 = vmatmul.mubr.bf16.gmra.mxu0 %v7694
        %v8226 = vpop.f32.mrf.mxu0
        %v8227 = vadd.f32 %v8066, %v8226
        %v8228 = vpop.f32.mrf.mxu0
        %v8229 = vpop.f32.mrf.mxu0
        %v8230 = vadd.f32 %v8069, %v8229
        %v8231 = vpop.f32.mrf.mxu0
        %8232 = vmatprep.mubr.bf16.mxu0 %v7699
        %8233 = vmatmul.mubr.bf16.gmra.mxu0 %v7698
        %v8234 = vpop.f32.mrf.mxu0
        %v8235 = vadd.f32 %v8074, %v8234
        %v8236 = vpop.f32.mrf.mxu0
        %v8237 = vpop.f32.mrf.mxu0
        %v8238 = vadd.f32 %v8077, %v8237
        %v8239 = vpop.f32.mrf.mxu0
        %8240 = vmatprep.mubr.bf16.mxu0 %v7703
        %8241 = vmatmul.mubr.bf16.gmra.mxu0 %v7702
        %v8242 = vpop.f32.mrf.mxu0
        %v8243 = vadd.f32 %v8082, %v8242
        %v8244 = vpop.f32.mrf.mxu0
        %v8245 = vpop.f32.mrf.mxu0
        %v8246 = vadd.f32 %v8085, %v8245
        %v8247 = vpop.f32.mrf.mxu0
        %8248 = vmatprep.mubr.bf16.mxu0 %v7707
        %8249 = vmatmul.mubr.bf16.gmra.mxu0 %v7706
        %v8250 = vpop.f32.mrf.mxu0
        %v8251 = vadd.f32 %v8090, %v8250
        %v8252 = vpop.f32.mrf.mxu0
        %v8253 = vpop.f32.mrf.mxu0
        %v8254 = vadd.f32 %v8093, %v8253
        %v8255 = vpop.f32.mrf.mxu0
        %8256 = vmatprep.mubr.bf16.mxu0 %v7711
        %8257 = vmatmul.mubr.bf16.gmra.mxu0 %v7710
        %v8258 = vpop.f32.mrf.mxu0
        %v8259 = vadd.f32 %v8098, %v8258
        %v8260 = vpop.f32.mrf.mxu0
        %v8261 = vpop.f32.mrf.mxu0
        %v8262 = vadd.f32 %v8101, %v8261
        %v8263 = vpop.f32.mrf.mxu0
        %8264 = vmatprep.mubr.bf16.mxu0 %v7715
        %8265 = vmatmul.mubr.bf16.gmra.mxu0 %v7714
        %v8266 = vpop.f32.mrf.mxu0
        %v8267 = vadd.f32 %v8106, %v8266
        %v8268 = vpop.f32.mrf.mxu0
        %v8269 = vpop.f32.mrf.mxu0
        %v8270 = vadd.f32 %v8109, %v8269
        %v8271 = vpop.f32.mrf.mxu0
        %8272 = vmatprep.mubr.bf16.mxu0 %v7719
        %8273 = vmatmul.mubr.bf16.gmra.mxu0 %v7718
        %v8274 = vpop.f32.mrf.mxu0
        %v8275 = vadd.f32 %v8114, %v8274
        %v8276 = vpop.f32.mrf.mxu0
        %v8277 = vpop.f32.mrf.mxu0
        %v8278 = vadd.f32 %v8117, %v8277
        %v8279 = vpop.f32.mrf.mxu0
        %8280 = vmatprep.mubr.bf16.mxu0 %v7723
        %8281 = vmatmul.mubr.bf16.gmra.mxu0 %v7722
        %v8282 = vpop.f32.mrf.mxu0
        %v8283 = vadd.f32 %v8122, %v8282
        %v8284 = vpop.f32.mrf.mxu0
        %v8285 = vpop.f32.mrf.mxu0
        %v8286 = vadd.f32 %v8125, %v8285
        %v8287 = vpop.f32.mrf.mxu0
        %8288 = vmatprep.mubr.bf16.mxu0 %v7727
        %8289 = vmatmul.mubr.bf16.gmra.mxu0 %v7726
        %v8290 = vpop.f32.mrf.mxu0
        %v8291 = vadd.f32 %v8130, %v8290
        %v8292 = vpop.f32.mrf.mxu0
        %v8293 = vpop.f32.mrf.mxu0
        %v8294 = vadd.f32 %v8133, %v8293
        %v8295 = vpop.f32.mrf.mxu0
        %8296 = vmatprep.mubr.bf16.mxu0 %v7731
        %8297 = vmatmul.mubr.bf16.gmra.mxu0 %v7730
        %v8298 = vpop.f32.mrf.mxu0
        %v8299 = vadd.f32 %v8138, %v8298
        %v8300 = vpop.f32.mrf.mxu0
        %v8301 = vpop.f32.mrf.mxu0
        %v8302 = vadd.f32 %v8141, %v8301
        %v8303 = vpop.f32.mrf.mxu0
        %8304 = vmatprep.mubr.bf16.mxu0 %v7735
        %8305 = vmatmul.mubr.bf16.gmra.mxu0 %v7734
        %v8306 = vpop.f32.mrf.mxu0
        %v8307 = vadd.f32 %v8146, %v8306
        %v8308 = vpop.f32.mrf.mxu0
        %v8309 = vpop.f32.mrf.mxu0
        %v8310 = vadd.f32 %v8149, %v8309
        %v8311 = vpop.f32.mrf.mxu0
        %8312 = vmatprep.mubr.bf16.mxu0 %v7739
        %8313 = vmatmul.mubr.bf16.gmra.mxu0 %v7738
        %v8314 = vpop.f32.mrf.mxu0
        %v8315 = vadd.f32 %v8154, %v8314
        %v8316 = vpop.f32.mrf.mxu0
        %v8317 = vpop.f32.mrf.mxu0
        %v8318 = vadd.f32 %v8157, %v8317
        %v8319 = vpop.f32.mrf.mxu0
        %8320 = vmatprep.mubr.bf16.mxu0 %v7743
        %8321 = vmatmul.mubr.bf16.gmra.mxu0 %v7742
        %v8322 = vpop.f32.mrf.mxu0
        %v8323 = vadd.f32 %v8162, %v8322
        %v8324 = vpop.f32.mrf.mxu0
        %v8325 = vpop.f32.mrf.mxu0
        %v8326 = vadd.f32 %v8165, %v8325
        %v8327 = vpop.f32.mrf.mxu0
        %8328 = vdwg.mxu0
        %v8329 = vld [vmem:[%s17] sm:$0x1]
        %v8330 = vld [vmem:[%s18] sm:$0x1]
        %vm8331 = vcmp.gt.f32.partialorder %v8330, 0.5
        %vm8332 = vcmp.gt.f32.partialorder %v8329, 0.5
        %vm8333 = vcmp.eq.f32.partialorder %v8329, 1.0
        %v8334 = vsel %vm8333, 1, 0
        %v8335 = vlaneseq
        %v8336 = vshrl.u32 %v8335, 7
        %v8337 = vsub.s32 0, %v8336
        %v8338 = vrot.slane %v8334, %v8337
        %vm8339 = vcmp.eq.s32.totalorder %v8338, 1
        %v8340 = vsel %vm8339, %v8203, -inf
        %v8341 = vsel %vm8339, %v8206, -inf
        %v8342 = vsel %vm8339, %v8211, -inf
        %v8343 = vsel %vm8339, %v8214, -inf
        %v8344 = vsel %vm8339, %v8219, -inf
        %v8345 = vsel %vm8339, %v8222, -inf
        %v8346 = vsel %vm8339, %v8227, -inf
        %v8347 = vsel %vm8339, %v8230, -inf
        %v8348 = vsel %vm8339, %v8235, -inf
        %v8349 = vsel %vm8339, %v8238, -inf
        %v8350 = vsel %vm8339, %v8243, -inf
        %v8351 = vsel %vm8339, %v8246, -inf
        %v8352 = vsel %vm8339, %v8251, -inf
        %v8353 = vsel %vm8339, %v8254, -inf
        %v8354 = vsel %vm8339, %v8259, -inf
        %v8355 = vsel %vm8339, %v8262, -inf
        %v8356 = vsel %vm8339, %v8267, -inf
        %v8357 = vsel %vm8339, %v8270, -inf
        %v8358 = vsel %vm8339, %v8275, -inf
        %v8359 = vsel %vm8339, %v8278, -inf
        %v8360 = vsel %vm8339, %v8283, -inf
        %v8361 = vsel %vm8339, %v8286, -inf
        %v8362 = vsel %vm8339, %v8291, -inf
        %v8363 = vsel %vm8339, %v8294, -inf
        %v8364 = vsel %vm8339, %v8299, -inf
        %v8365 = vsel %vm8339, %v8302, -inf
        %v8366 = vsel %vm8339, %v8307, -inf
        %v8367 = vsel %vm8339, %v8310, -inf
        %v8368 = vsel %vm8339, %v8315, -inf
        %v8369 = vsel %vm8339, %v8318, -inf
        %v8370 = vsel %vm8339, %v8323, -inf
        %v8371 = vsel %vm8339, %v8326, -inf
        %8372 = vmax.xlane.f32.xlu0 %v8340
        %v8373 = vpop.xlane.xlu0 %8372
        %8374 = vmax.xlane.f32.xlu0 %v8341
        %v8375 = vpop.xlane.xlu0 %8374
        %8376 = vmax.xlane.f32.xlu0 %v8342
        %v8377 = vpop.xlane.xlu0 %8376
        %8378 = vmax.xlane.f32.xlu0 %v8343
        %v8379 = vpop.xlane.xlu0 %8378
        %8380 = vmax.xlane.f32.xlu0 %v8344
        %v8381 = vpop.xlane.xlu0 %8380
        %8382 = vmax.xlane.f32.xlu0 %v8345
        %v8383 = vpop.xlane.xlu0 %8382
        %8384 = vmax.xlane.f32.xlu0 %v8346
        %v8385 = vpop.xlane.xlu0 %8384
        %8386 = vmax.xlane.f32.xlu0 %v8347
        %v8387 = vpop.xlane.xlu0 %8386
        %8388 = vmax.xlane.f32.xlu0 %v8348
        %v8389 = vpop.xlane.xlu0 %8388
        %8390 = vmax.xlane.f32.xlu0 %v8349
        %v8391 = vpop.xlane.xlu0 %8390
        %8392 = vmax.xlane.f32.xlu0 %v8350
        %v8393 = vpop.xlane.xlu0 %8392
        %8394 = vmax.xlane.f32.xlu0 %v8351
        %v8395 = vpop.xlane.xlu0 %8394
        %8396 = vmax.xlane.f32.xlu0 %v8352
        %v8397 = vpop.xlane.xlu0 %8396
        %8398 = vmax.xlane.f32.xlu0 %v8353
        %v8399 = vpop.xlane.xlu0 %8398
        %8400 = vmax.xlane.f32.xlu0 %v8354
        %v8401 = vpop.xlane.xlu0 %8400
        %8402 = vmax.xlane.f32.xlu0 %v8355
        %v8403 = vpop.xlane.xlu0 %8402
        %8404 = vmax.xlane.f32.xlu0 %v8356
        %v8405 = vpop.xlane.xlu0 %8404
        %8406 = vmax.xlane.f32.xlu0 %v8357
        %v8407 = vpop.xlane.xlu0 %8406
        %8408 = vmax.xlane.f32.xlu0 %v8358
        %v8409 = vpop.xlane.xlu0 %8408
        %8410 = vmax.xlane.f32.xlu0 %v8359
        %v8411 = vpop.xlane.xlu0 %8410
        %8412 = vmax.xlane.f32.xlu0 %v8360
        %v8413 = vpop.xlane.xlu0 %8412
        %8414 = vmax.xlane.f32.xlu0 %v8361
        %v8415 = vpop.xlane.xlu0 %8414
        %8416 = vmax.xlane.f32.xlu0 %v8362
        %v8417 = vpop.xlane.xlu0 %8416
        %8418 = vmax.xlane.f32.xlu0 %v8363
        %v8419 = vpop.xlane.xlu0 %8418
        %8420 = vmax.xlane.f32.xlu0 %v8364
        %v8421 = vpop.xlane.xlu0 %8420
        %8422 = vmax.xlane.f32.xlu0 %v8365
        %v8423 = vpop.xlane.xlu0 %8422
        %8424 = vmax.xlane.f32.xlu0 %v8366
        %v8425 = vpop.xlane.xlu0 %8424
        %8426 = vmax.xlane.f32.xlu0 %v8367
        %v8427 = vpop.xlane.xlu0 %8426
        %8428 = vmax.xlane.f32.xlu0 %v8368
        %v8429 = vpop.xlane.xlu0 %8428
        %8430 = vmax.xlane.f32.xlu0 %v8369
        %v8431 = vpop.xlane.xlu0 %8430
        %8432 = vmax.xlane.f32.xlu0 %v8370
        %v8433 = vpop.xlane.xlu0 %8432
        %8434 = vmax.xlane.f32.xlu0 %v8371
        %v8435 = vpop.xlane.xlu0 %8434
        %v8436 = vsel %vm8339, %v8373, 0.0
        %v8437 = vsel %vm8339, %v8375, 0.0
        %v8438 = vsel %vm8339, %v8377, 0.0
        %v8439 = vsel %vm8339, %v8379, 0.0
        %v8440 = vsel %vm8339, %v8381, 0.0
        %v8441 = vsel %vm8339, %v8383, 0.0
        %v8442 = vsel %vm8339, %v8385, 0.0
        %v8443 = vsel %vm8339, %v8387, 0.0
        %v8444 = vsel %vm8339, %v8389, 0.0
        %v8445 = vsel %vm8339, %v8391, 0.0
        %v8446 = vsel %vm8339, %v8393, 0.0
        %v8447 = vsel %vm8339, %v8395, 0.0
        %v8448 = vsel %vm8339, %v8397, 0.0
        %v8449 = vsel %vm8339, %v8399, 0.0
        %v8450 = vsel %vm8339, %v8401, 0.0
        %v8451 = vsel %vm8339, %v8403, 0.0
        %v8452 = vsel %vm8339, %v8405, 0.0
        %v8453 = vsel %vm8339, %v8407, 0.0
        %v8454 = vsel %vm8339, %v8409, 0.0
        %v8455 = vsel %vm8339, %v8411, 0.0
        %v8456 = vsel %vm8339, %v8413, 0.0
        %v8457 = vsel %vm8339, %v8415, 0.0
        %v8458 = vsel %vm8339, %v8417, 0.0
        %v8459 = vsel %vm8339, %v8419, 0.0
        %v8460 = vsel %vm8339, %v8421, 0.0
        %v8461 = vsel %vm8339, %v8423, 0.0
        %v8462 = vsel %vm8339, %v8425, 0.0
        %v8463 = vsel %vm8339, %v8427, 0.0
        %v8464 = vsel %vm8339, %v8429, 0.0
        %v8465 = vsel %vm8339, %v8431, 0.0
        %v8466 = vsel %vm8339, %v8433, 0.0
        %v8467 = vsel %vm8339, %v8435, 0.0
        %vm8468 = vcmp.eq.f32.partialorder %v8329, 2.0
        %v8469 = vsel %vm8468, 1, 0
        %v8470 = vlaneseq
        %v8471 = vshrl.u32 %v8470, 7
        %v8472 = vsub.s32 0, %v8471
        %v8473 = vrot.slane %v8469, %v8472
        %vm8474 = vcmp.eq.s32.totalorder %v8473, 1
        %v8475 = vsel %vm8474, %v8203, -inf
        %v8476 = vsel %vm8474, %v8206, -inf
        %v8477 = vsel %vm8474, %v8211, -inf
        %v8478 = vsel %vm8474, %v8214, -inf
        %v8479 = vsel %vm8474, %v8219, -inf
        %v8480 = vsel %vm8474, %v8222, -inf
        %v8481 = vsel %vm8474, %v8227, -inf
        %v8482 = vsel %vm8474, %v8230, -inf
        %v8483 = vsel %vm8474, %v8235, -inf
        %v8484 = vsel %vm8474, %v8238, -inf
        %v8485 = vsel %vm8474, %v8243, -inf
        %v8486 = vsel %vm8474, %v8246, -inf
        %v8487 = vsel %vm8474, %v8251, -inf
        %v8488 = vsel %vm8474, %v8254, -inf
        %v8489 = vsel %vm8474, %v8259, -inf
        %v8490 = vsel %vm8474, %v8262, -inf
        %v8491 = vsel %vm8474, %v8267, -inf
        %v8492 = vsel %vm8474, %v8270, -inf
        %v8493 = vsel %vm8474, %v8275, -inf
        %v8494 = vsel %vm8474, %v8278, -inf
        %v8495 = vsel %vm8474, %v8283, -inf
        %v8496 = vsel %vm8474, %v8286, -inf
        %v8497 = vsel %vm8474, %v8291, -inf
        %v8498 = vsel %vm8474, %v8294, -inf
        %v8499 = vsel %vm8474, %v8299, -inf
        %v8500 = vsel %vm8474, %v8302, -inf
        %v8501 = vsel %vm8474, %v8307, -inf
        %v8502 = vsel %vm8474, %v8310, -inf
        %v8503 = vsel %vm8474, %v8315, -inf
        %v8504 = vsel %vm8474, %v8318, -inf
        %v8505 = vsel %vm8474, %v8323, -inf
        %v8506 = vsel %vm8474, %v8326, -inf
        %8507 = vmax.xlane.f32.xlu0 %v8475
        %v8508 = vpop.xlane.xlu0 %8507
        %8509 = vmax.xlane.f32.xlu0 %v8476
        %v8510 = vpop.xlane.xlu0 %8509
        %8511 = vmax.xlane.f32.xlu0 %v8477
        %v8512 = vpop.xlane.xlu0 %8511
        %8513 = vmax.xlane.f32.xlu0 %v8478
        %v8514 = vpop.xlane.xlu0 %8513
        %8515 = vmax.xlane.f32.xlu0 %v8479
        %v8516 = vpop.xlane.xlu0 %8515
        %8517 = vmax.xlane.f32.xlu0 %v8480
        %v8518 = vpop.xlane.xlu0 %8517
        %8519 = vmax.xlane.f32.xlu0 %v8481
        %v8520 = vpop.xlane.xlu0 %8519
        %8521 = vmax.xlane.f32.xlu0 %v8482
        %v8522 = vpop.xlane.xlu0 %8521
        %8523 = vmax.xlane.f32.xlu0 %v8483
        %v8524 = vpop.xlane.xlu0 %8523
        %8525 = vmax.xlane.f32.xlu0 %v8484
        %v8526 = vpop.xlane.xlu0 %8525
        %8527 = vmax.xlane.f32.xlu0 %v8485
        %v8528 = vpop.xlane.xlu0 %8527
        %8529 = vmax.xlane.f32.xlu0 %v8486
        %v8530 = vpop.xlane.xlu0 %8529
        %8531 = vmax.xlane.f32.xlu0 %v8487
        %v8532 = vpop.xlane.xlu0 %8531
        %8533 = vmax.xlane.f32.xlu0 %v8488
        %v8534 = vpop.xlane.xlu0 %8533
        %8535 = vmax.xlane.f32.xlu0 %v8489
        %v8536 = vpop.xlane.xlu0 %8535
        %8537 = vmax.xlane.f32.xlu0 %v8490
        %v8538 = vpop.xlane.xlu0 %8537
        %8539 = vmax.xlane.f32.xlu0 %v8491
        %v8540 = vpop.xlane.xlu0 %8539
        %8541 = vmax.xlane.f32.xlu0 %v8492
        %v8542 = vpop.xlane.xlu0 %8541
        %8543 = vmax.xlane.f32.xlu0 %v8493
        %v8544 = vpop.xlane.xlu0 %8543
        %8545 = vmax.xlane.f32.xlu0 %v8494
        %v8546 = vpop.xlane.xlu0 %8545
        %8547 = vmax.xlane.f32.xlu0 %v8495
        %v8548 = vpop.xlane.xlu0 %8547
        %8549 = vmax.xlane.f32.xlu0 %v8496
        %v8550 = vpop.xlane.xlu0 %8549
        %8551 = vmax.xlane.f32.xlu0 %v8497
        %v8552 = vpop.xlane.xlu0 %8551
        %8553 = vmax.xlane.f32.xlu0 %v8498
        %v8554 = vpop.xlane.xlu0 %8553
        %8555 = vmax.xlane.f32.xlu0 %v8499
        %v8556 = vpop.xlane.xlu0 %8555
        %8557 = vmax.xlane.f32.xlu0 %v8500
        %v8558 = vpop.xlane.xlu0 %8557
        %8559 = vmax.xlane.f32.xlu0 %v8501
        %v8560 = vpop.xlane.xlu0 %8559
        %8561 = vmax.xlane.f32.xlu0 %v8502
        %v8562 = vpop.xlane.xlu0 %8561
        %8563 = vmax.xlane.f32.xlu0 %v8503
        %v8564 = vpop.xlane.xlu0 %8563
        %8565 = vmax.xlane.f32.xlu0 %v8504
        %v8566 = vpop.xlane.xlu0 %8565
        %8567 = vmax.xlane.f32.xlu0 %v8505
        %v8568 = vpop.xlane.xlu0 %8567
        %8569 = vmax.xlane.f32.xlu0 %v8506
        %v8570 = vpop.xlane.xlu0 %8569
        %v8571 = vsel %vm8474, %v8508, %v8436
        %v8572 = vsel %vm8474, %v8510, %v8437
        %v8573 = vsel %vm8474, %v8512, %v8438
        %v8574 = vsel %vm8474, %v8514, %v8439
        %v8575 = vsel %vm8474, %v8516, %v8440
        %v8576 = vsel %vm8474, %v8518, %v8441
        %v8577 = vsel %vm8474, %v8520, %v8442
        %v8578 = vsel %vm8474, %v8522, %v8443
        %v8579 = vsel %vm8474, %v8524, %v8444
        %v8580 = vsel %vm8474, %v8526, %v8445
        %v8581 = vsel %vm8474, %v8528, %v8446
        %v8582 = vsel %vm8474, %v8530, %v8447
        %v8583 = vsel %vm8474, %v8532, %v8448
        %v8584 = vsel %vm8474, %v8534, %v8449
        %v8585 = vsel %vm8474, %v8536, %v8450
        %v8586 = vsel %vm8474, %v8538, %v8451
        %v8587 = vsel %vm8474, %v8540, %v8452
        %v8588 = vsel %vm8474, %v8542, %v8453
        %v8589 = vsel %vm8474, %v8544, %v8454
        %v8590 = vsel %vm8474, %v8546, %v8455
        %v8591 = vsel %vm8474, %v8548, %v8456
        %v8592 = vsel %vm8474, %v8550, %v8457
        %v8593 = vsel %vm8474, %v8552, %v8458
        %v8594 = vsel %vm8474, %v8554, %v8459
        %v8595 = vsel %vm8474, %v8556, %v8460
        %v8596 = vsel %vm8474, %v8558, %v8461
        %v8597 = vsel %vm8474, %v8560, %v8462
        %v8598 = vsel %vm8474, %v8562, %v8463
        %v8599 = vsel %vm8474, %v8564, %v8464
        %v8600 = vsel %vm8474, %v8566, %v8465
        %v8601 = vsel %vm8474, %v8568, %v8466
        %v8602 = vsel %vm8474, %v8570, %v8467
        %v8603 = vsub.f32 %v8203, %v8571
        %v8604 = vsub.f32 %v8206, %v8572
        %v8605 = vsub.f32 %v8211, %v8573
        %v8606 = vsub.f32 %v8214, %v8574
        %v8607 = vsub.f32 %v8219, %v8575
        %v8608 = vsub.f32 %v8222, %v8576
        %v8609 = vsub.f32 %v8227, %v8577
        %v8610 = vsub.f32 %v8230, %v8578
        %v8611 = vsub.f32 %v8235, %v8579
        %v8612 = vsub.f32 %v8238, %v8580
        %v8613 = vsub.f32 %v8243, %v8581
        %v8614 = vsub.f32 %v8246, %v8582
        %v8615 = vsub.f32 %v8251, %v8583
        %v8616 = vsub.f32 %v8254, %v8584
        %v8617 = vsub.f32 %v8259, %v8585
        %v8618 = vsub.f32 %v8262, %v8586
        %v8619 = vsub.f32 %v8267, %v8587
        %v8620 = vsub.f32 %v8270, %v8588
        %v8621 = vsub.f32 %v8275, %v8589
        %v8622 = vsub.f32 %v8278, %v8590
        %v8623 = vsub.f32 %v8283, %v8591
        %v8624 = vsub.f32 %v8286, %v8592
        %v8625 = vsub.f32 %v8291, %v8593
        %v8626 = vsub.f32 %v8294, %v8594
        %v8627 = vsub.f32 %v8299, %v8595
        %v8628 = vsub.f32 %v8302, %v8596
        %v8629 = vsub.f32 %v8307, %v8597
        %v8630 = vsub.f32 %v8310, %v8598
        %v8631 = vsub.f32 %v8315, %v8599
        %v8632 = vsub.f32 %v8318, %v8600
        %v8633 = vsub.f32 %v8323, %v8601
        %v8634 = vsub.f32 %v8326, %v8602
        %v8635 = vsel %vm8332, 1, 0
        %v8636 = vlaneseq
        %v8637 = vshrl.u32 %v8636, 7
        %v8638 = vsub.s32 0, %v8637
        %v8639 = vrot.slane %v8635, %v8638
        %vm8640 = vcmp.eq.s32.totalorder %v8639, 1
        %v8641 = vsel %vm8640, %v8603, -1e+30
        %v8642 = vsel %vm8640, %v8604, -1e+30
        %v8643 = vsel %vm8640, %v8605, -1e+30
        %v8644 = vsel %vm8640, %v8606, -1e+30
        %v8645 = vsel %vm8640, %v8607, -1e+30
        %v8646 = vsel %vm8640, %v8608, -1e+30
        %v8647 = vsel %vm8640, %v8609, -1e+30
        %v8648 = vsel %vm8640, %v8610, -1e+30
        %v8649 = vsel %vm8640, %v8611, -1e+30
        %v8650 = vsel %vm8640, %v8612, -1e+30
        %v8651 = vsel %vm8640, %v8613, -1e+30
        %v8652 = vsel %vm8640, %v8614, -1e+30
        %v8653 = vsel %vm8640, %v8615, -1e+30
        %v8654 = vsel %vm8640, %v8616, -1e+30
        %v8655 = vsel %vm8640, %v8617, -1e+30
        %v8656 = vsel %vm8640, %v8618, -1e+30
        %v8657 = vsel %vm8640, %v8619, -1e+30
        %v8658 = vsel %vm8640, %v8620, -1e+30
        %v8659 = vsel %vm8640, %v8621, -1e+30
        %v8660 = vsel %vm8640, %v8622, -1e+30
        %v8661 = vsel %vm8640, %v8623, -1e+30
        %v8662 = vsel %vm8640, %v8624, -1e+30
        %v8663 = vsel %vm8640, %v8625, -1e+30
        %v8664 = vsel %vm8640, %v8626, -1e+30
        %v8665 = vsel %vm8640, %v8627, -1e+30
        %v8666 = vsel %vm8640, %v8628, -1e+30
        %v8667 = vsel %vm8640, %v8629, -1e+30
        %v8668 = vsel %vm8640, %v8630, -1e+30
        %v8669 = vsel %vm8640, %v8631, -1e+30
        %v8670 = vsel %vm8640, %v8632, -1e+30
        %v8671 = vsel %vm8640, %v8633, -1e+30
        %v8672 = vsel %vm8640, %v8634, -1e+30
        %v8673 = vmul.f32 %v8641, 1.442695
        %v8674 = vpow.pop %v8673
        %v8675 = vmul.f32 %v8642, 1.442695
        %v8676 = vpow.pop %v8675
        %v8677 = vmul.f32 %v8643, 1.442695
        %v8678 = vpow.pop %v8677
        %v8679 = vmul.f32 %v8644, 1.442695
        %v8680 = vpow.pop %v8679
        %v8681 = vmul.f32 %v8645, 1.442695
        %v8682 = vpow.pop %v8681
        %v8683 = vmul.f32 %v8646, 1.442695
        %v8684 = vpow.pop %v8683
        %v8685 = vmul.f32 %v8647, 1.442695
        %v8686 = vpow.pop %v8685
        %v8687 = vmul.f32 %v8648, 1.442695
        %v8688 = vpow.pop %v8687
        %v8689 = vmul.f32 %v8649, 1.442695
        %v8690 = vpow.pop %v8689
        %v8691 = vmul.f32 %v8650, 1.442695
        %v8692 = vpow.pop %v8691
        %v8693 = vmul.f32 %v8651, 1.442695
        %v8694 = vpow.pop %v8693
        %v8695 = vmul.f32 %v8652, 1.442695
        %v8696 = vpow.pop %v8695
        %v8697 = vmul.f32 %v8653, 1.442695
        %v8698 = vpow.pop %v8697
        %v8699 = vmul.f32 %v8654, 1.442695
        %v8700 = vpow.pop %v8699
        %v8701 = vmul.f32 %v8655, 1.442695
        %v8702 = vpow.pop %v8701
        %v8703 = vmul.f32 %v8656, 1.442695
        %v8704 = vpow.pop %v8703
        %v8705 = vmul.f32 %v8657, 1.442695
        %v8706 = vpow.pop %v8705
        %v8707 = vmul.f32 %v8658, 1.442695
        %v8708 = vpow.pop %v8707
        %v8709 = vmul.f32 %v8659, 1.442695
        %v8710 = vpow.pop %v8709
        %v8711 = vmul.f32 %v8660, 1.442695
        %v8712 = vpow.pop %v8711
        %v8713 = vmul.f32 %v8661, 1.442695
        %v8714 = vpow.pop %v8713
        %v8715 = vmul.f32 %v8662, 1.442695
        %v8716 = vpow.pop %v8715
        %v8717 = vmul.f32 %v8663, 1.442695
        %v8718 = vpow.pop %v8717
        %v8719 = vmul.f32 %v8664, 1.442695
        %v8720 = vpow.pop %v8719
        %v8721 = vmul.f32 %v8665, 1.442695
        %v8722 = vpow.pop %v8721
        %v8723 = vmul.f32 %v8666, 1.442695
        %v8724 = vpow.pop %v8723
        %v8725 = vmul.f32 %v8667, 1.442695
        %v8726 = vpow.pop %v8725
        %v8727 = vmul.f32 %v8668, 1.442695
        %v8728 = vpow.pop %v8727
        %v8729 = vmul.f32 %v8669, 1.442695
        %v8730 = vpow.pop %v8729
        %v8731 = vmul.f32 %v8670, 1.442695
        %v8732 = vpow.pop %v8731
        %v8733 = vmul.f32 %v8671, 1.442695
        %v8734 = vpow.pop %v8733
        %v8735 = vmul.f32 %v8672, 1.442695
        %v8736 = vpow.pop %v8735
        %v8737 = vpack.c.bf16 %v8676, %v8674
        %v8738 = vpack.c.bf16 %v8680, %v8678
        %v8739 = vpack.c.bf16 %v8684, %v8682
        %v8740 = vpack.c.bf16 %v8688, %v8686
        %v8741 = vpack.c.bf16 %v8692, %v8690
        %v8742 = vpack.c.bf16 %v8696, %v8694
        %v8743 = vpack.c.bf16 %v8700, %v8698
        %v8744 = vpack.c.bf16 %v8704, %v8702
        %v8745 = vpack.c.bf16 %v8708, %v8706
        %v8746 = vpack.c.bf16 %v8712, %v8710
        %v8747 = vpack.c.bf16 %v8716, %v8714
        %v8748 = vpack.c.bf16 %v8720, %v8718
        %v8749 = vpack.c.bf16 %v8724, %v8722
        %v8750 = vpack.c.bf16 %v8728, %v8726
        %v8751 = vpack.c.bf16 %v8732, %v8730
        %v8752 = vpack.c.bf16 %v8736, %v8734
        %v8753 = vld [vmem:[#allocation14] sm:$0xf]
        %v8754 = vld [vmem:[#allocation14 + $0x4] sm:$0xf]
        %v8755 = vld [vmem:[#allocation14 + $0x8] sm:$0xf]
        %v8756 = vld [vmem:[#allocation14 + $0xc] sm:$0xf]
        %v8757 = vld [vmem:[#allocation14 + $0x10] sm:$0xf]
        %v8758 = vld [vmem:[#allocation14 + $0x14] sm:$0xf]
        %v8759 = vld [vmem:[#allocation14 + $0x18] sm:$0xf]
        %v8760 = vld [vmem:[#allocation14 + $0x1c] sm:$0xf]
        %v8761 = vld [vmem:[#allocation14 + $0x20] sm:$0xf]
        %v8762 = vld [vmem:[#allocation14 + $0x24] sm:$0xf]
        %v8763 = vld [vmem:[#allocation14 + $0x28] sm:$0xf]
        %v8764 = vld [vmem:[#allocation14 + $0x2c] sm:$0xf]
        %v8765 = vld [vmem:[#allocation14 + $0x30] sm:$0xf]
        %v8766 = vld [vmem:[#allocation14 + $0x34] sm:$0xf]
        %v8767 = vld [vmem:[#allocation14 + $0x38] sm:$0xf]
        %v8768 = vld [vmem:[#allocation14 + $0x3c] sm:$0xf]
        %v8769 = vsel %vm8332, 0.0, 1.0
        %v8771 = vlaneseq
        %v8772 = vshrl.u32 %v8771, 7
        %v8773 = vsub.s32 0, %v8772
        %v8774 = vrot.slane %v8769, %v8773
        %v8792 = vunpack.c.l.b16 %v8753
        %v8793 = vunpack.c.l.b16 %v8754
        %v8794 = vunpack.c.l.b16 %v8755
        %v8795 = vunpack.c.l.b16 %v8756
        %v8796 = vunpack.c.l.b16 %v8757
        %v8797 = vunpack.c.l.b16 %v8758
        %v8798 = vunpack.c.l.b16 %v8759
        %v8799 = vunpack.c.l.b16 %v8760
        %v8800 = vunpack.c.l.b16 %v8761
        %v8801 = vunpack.c.l.b16 %v8762
        %v8802 = vunpack.c.l.b16 %v8763
        %v8803 = vunpack.c.l.b16 %v8764
        %v8804 = vunpack.c.l.b16 %v8765
        %v8805 = vunpack.c.l.b16 %v8766
        %v8806 = vunpack.c.l.b16 %v8767
        %v8807 = vunpack.c.l.b16 %v8768
        %v8808 = vpack.c.b16 %v8793, %v8792
        %v8809 = vpack.c.b16 %v8795, %v8794
        %v8810 = vpack.c.b16 %v8797, %v8796
        %v8811 = vpack.c.b16 %v8799, %v8798
        %v8812 = vpack.c.b16 %v8801, %v8800
        %v8813 = vpack.c.b16 %v8803, %v8802
        %v8814 = vpack.c.b16 %v8805, %v8804
        %v8815 = vpack.c.b16 %v8807, %v8806
        %8824 = vmatprep.subr.bf16.mxu0 0
        %8825 = vmatpush1.bf16.msra.mxu0 %v8815
        %8826 = vmatprep.subr.bf16.mxu0 0
        %8827 = vmatpush1.bf16.msra.mxu0 %v8814
        %8828 = vmatprep.subr.bf16.mxu0 0
        %8829 = vmatpush1.bf16.msra.mxu0 %v8813
        %8830 = vmatprep.subr.bf16.mxu0 0
        %8831 = vmatpush1.bf16.msra.mxu0 %v8812
        %8832 = vmatprep.subr.bf16.mxu0 0
        %8833 = vmatpush1.bf16.msra.mxu0 %v8811
        %8834 = vmatprep.subr.bf16.mxu0 0
        %8835 = vmatpush1.bf16.msra.mxu0 %v8810
        %8836 = vmatprep.subr.bf16.mxu0 0
        %8837 = vmatpush1.bf16.msra.mxu0 %v8809
        %8838 = vmatprep.subr.bf16.mxu0 0
        %8839 = vmatpush1.bf16.msra.mxu0 %v8808
        %8840 = vmatprep.subr.bf16.mxu0 0
        %8841 = vmatpush2.bf16.msra.mxu0 0
        %8842 = vmatprep.subr.bf16.mxu0 0
        %8843 = vmatpush2.bf16.msra.mxu0 0
        %8844 = vmatprep.subr.bf16.mxu0 0
        %8845 = vmatpush2.bf16.msra.mxu0 0
        %8846 = vmatprep.subr.bf16.mxu0 0
        %8847 = vmatpush2.bf16.msra.mxu0 0
        %8848 = vmatprep.subr.bf16.mxu0 0
        %8849 = vmatpush2.bf16.msra.mxu0 0
        %8850 = vmatprep.subr.bf16.mxu0 0
        %8851 = vmatpush2.bf16.msra.mxu0 0
        %8852 = vmatprep.subr.bf16.mxu0 0
        %8853 = vmatpush2.bf16.msra.mxu0 0
        %8854 = vmatprep.subr.bf16.mxu0 0
        %8855 = vmatpush2.bf16.msra.mxu0 0
        %8856 = vmatprep.mubr.bf16.mxu0 0
        %8857 = vmatmul.mubr.bf16.gmra.mxu0 %v8737
        %v8858 = vpop.f32.mrf.mxu0
        %v8859 = vadd.f32 %v8774, %v8858
        %v8860 = vpop.f32.mrf.mxu0
        %v8861 = vpop.f32.mrf.mxu0
        %v8862 = vadd.f32 %v8774, %v8861
        %v8863 = vpop.f32.mrf.mxu0
        %8864 = vmatprep.mubr.bf16.mxu0 0
        %8865 = vmatmul.mubr.bf16.gmra.mxu0 %v8738
        %v8866 = vpop.f32.mrf.mxu0
        %v8867 = vadd.f32 %v8774, %v8866
        %v8868 = vpop.f32.mrf.mxu0
        %v8869 = vpop.f32.mrf.mxu0
        %v8870 = vadd.f32 %v8774, %v8869
        %v8871 = vpop.f32.mrf.mxu0
        %8872 = vmatprep.mubr.bf16.mxu0 0
        %8873 = vmatmul.mubr.bf16.gmra.mxu0 %v8739
        %v8874 = vpop.f32.mrf.mxu0
        %v8875 = vadd.f32 %v8774, %v8874
        %v8876 = vpop.f32.mrf.mxu0
        %v8877 = vpop.f32.mrf.mxu0
        %v8878 = vadd.f32 %v8774, %v8877
        %v8879 = vpop.f32.mrf.mxu0
        %8880 = vmatprep.mubr.bf16.mxu0 0
        %8881 = vmatmul.mubr.bf16.gmra.mxu0 %v8740
        %v8882 = vpop.f32.mrf.mxu0
        %v8883 = vadd.f32 %v8774, %v8882
        %v8884 = vpop.f32.mrf.mxu0
        %v8885 = vpop.f32.mrf.mxu0
        %v8886 = vadd.f32 %v8774, %v8885
        %v8887 = vpop.f32.mrf.mxu0
        %8888 = vmatprep.mubr.bf16.mxu0 0
        %8889 = vmatmul.mubr.bf16.gmra.mxu0 %v8741
        %v8890 = vpop.f32.mrf.mxu0
        %v8891 = vadd.f32 %v8774, %v8890
        %v8892 = vpop.f32.mrf.mxu0
        %v8893 = vpop.f32.mrf.mxu0
        %v8894 = vadd.f32 %v8774, %v8893
        %v8895 = vpop.f32.mrf.mxu0
        %8896 = vmatprep.mubr.bf16.mxu0 0
        %8897 = vmatmul.mubr.bf16.gmra.mxu0 %v8742
        %v8898 = vpop.f32.mrf.mxu0
        %v8899 = vadd.f32 %v8774, %v8898
        %v8900 = vpop.f32.mrf.mxu0
        %v8901 = vpop.f32.mrf.mxu0
        %v8902 = vadd.f32 %v8774, %v8901
        %v8903 = vpop.f32.mrf.mxu0
        %8904 = vmatprep.mubr.bf16.mxu0 0
        %8905 = vmatmul.mubr.bf16.gmra.mxu0 %v8743
        %v8906 = vpop.f32.mrf.mxu0
        %v8907 = vadd.f32 %v8774, %v8906
        %v8908 = vpop.f32.mrf.mxu0
        %v8909 = vpop.f32.mrf.mxu0
        %v8910 = vadd.f32 %v8774, %v8909
        %v8911 = vpop.f32.mrf.mxu0
        %8912 = vmatprep.mubr.bf16.mxu0 0
        %8913 = vmatmul.mubr.bf16.gmra.mxu0 %v8744
        %v8914 = vpop.f32.mrf.mxu0
        %v8915 = vadd.f32 %v8774, %v8914
        %v8916 = vpop.f32.mrf.mxu0
        %v8917 = vpop.f32.mrf.mxu0
        %v8918 = vadd.f32 %v8774, %v8917
        %v8919 = vpop.f32.mrf.mxu0
        %8920 = vmatprep.mubr.bf16.mxu0 0
        %8921 = vmatmul.mubr.bf16.gmra.mxu0 %v8745
        %v8922 = vpop.f32.mrf.mxu0
        %v8923 = vadd.f32 %v8774, %v8922
        %v8924 = vpop.f32.mrf.mxu0
        %v8925 = vpop.f32.mrf.mxu0
        %v8926 = vadd.f32 %v8774, %v8925
        %v8927 = vpop.f32.mrf.mxu0
        %8928 = vmatprep.mubr.bf16.mxu0 0
        %8929 = vmatmul.mubr.bf16.gmra.mxu0 %v8746
        %v8930 = vpop.f32.mrf.mxu0
        %v8931 = vadd.f32 %v8774, %v8930
        %v8932 = vpop.f32.mrf.mxu0
        %v8933 = vpop.f32.mrf.mxu0
        %v8934 = vadd.f32 %v8774, %v8933
        %v8935 = vpop.f32.mrf.mxu0
        %8936 = vmatprep.mubr.bf16.mxu0 0
        %8937 = vmatmul.mubr.bf16.gmra.mxu0 %v8747
        %v8938 = vpop.f32.mrf.mxu0
        %v8939 = vadd.f32 %v8774, %v8938
        %v8940 = vpop.f32.mrf.mxu0
        %v8941 = vpop.f32.mrf.mxu0
        %v8942 = vadd.f32 %v8774, %v8941
        %v8943 = vpop.f32.mrf.mxu0
        %8944 = vmatprep.mubr.bf16.mxu0 0
        %8945 = vmatmul.mubr.bf16.gmra.mxu0 %v8748
        %v8946 = vpop.f32.mrf.mxu0
        %v8947 = vadd.f32 %v8774, %v8946
        %v8948 = vpop.f32.mrf.mxu0
        %v8949 = vpop.f32.mrf.mxu0
        %v8950 = vadd.f32 %v8774, %v8949
        %v8951 = vpop.f32.mrf.mxu0
        %8952 = vmatprep.mubr.bf16.mxu0 0
        %8953 = vmatmul.mubr.bf16.gmra.mxu0 %v8749
        %v8954 = vpop.f32.mrf.mxu0
        %v8955 = vadd.f32 %v8774, %v8954
        %v8956 = vpop.f32.mrf.mxu0
        %v8957 = vpop.f32.mrf.mxu0
        %v8958 = vadd.f32 %v8774, %v8957
        %v8959 = vpop.f32.mrf.mxu0
        %8960 = vmatprep.mubr.bf16.mxu0 0
        %8961 = vmatmul.mubr.bf16.gmra.mxu0 %v8750
        %v8962 = vpop.f32.mrf.mxu0
        %v8963 = vadd.f32 %v8774, %v8962
        %v8964 = vpop.f32.mrf.mxu0
        %v8965 = vpop.f32.mrf.mxu0
        %v8966 = vadd.f32 %v8774, %v8965
        %v8967 = vpop.f32.mrf.mxu0
        %8968 = vmatprep.mubr.bf16.mxu0 0
        %8969 = vmatmul.mubr.bf16.gmra.mxu0 %v8751
        %v8970 = vpop.f32.mrf.mxu0
        %v8971 = vadd.f32 %v8774, %v8970
        %v8972 = vpop.f32.mrf.mxu0
        %v8973 = vpop.f32.mrf.mxu0
        %v8974 = vadd.f32 %v8774, %v8973
        %v8975 = vpop.f32.mrf.mxu0
        %8976 = vmatprep.mubr.bf16.mxu0 0
        %8977 = vmatmul.mubr.bf16.gmra.mxu0 %v8752
        %v8978 = vpop.f32.mrf.mxu0
        %v8979 = vadd.f32 %v8774, %v8978
        %v8980 = vpop.f32.mrf.mxu0
        %v8981 = vpop.f32.mrf.mxu0
        %v8982 = vadd.f32 %v8774, %v8981
        %v8983 = vpop.f32.mrf.mxu0
        %8984 = vdwg.mxu0
        %v8985 = vunpack.c.l.bf16 %v8737
        %v8986 = vunpack.c.h.bf16 %v8737
        %v8987 = vunpack.c.l.bf16 %v8738
        %v8988 = vunpack.c.h.bf16 %v8738
        %v8989 = vunpack.c.l.bf16 %v8739
        %v8990 = vunpack.c.h.bf16 %v8739
        %v8991 = vunpack.c.l.bf16 %v8740
        %v8992 = vunpack.c.h.bf16 %v8740
        %v8993 = vunpack.c.l.bf16 %v8741
        %v8994 = vunpack.c.h.bf16 %v8741
        %v8995 = vunpack.c.l.bf16 %v8742
        %v8996 = vunpack.c.h.bf16 %v8742
        %v8997 = vunpack.c.l.bf16 %v8743
        %v8998 = vunpack.c.h.bf16 %v8743
        %v8999 = vunpack.c.l.bf16 %v8744
        %v9000 = vunpack.c.h.bf16 %v8744
        %v9001 = vunpack.c.l.bf16 %v8745
        %v9002 = vunpack.c.h.bf16 %v8745
        %v9003 = vunpack.c.l.bf16 %v8746
        %v9004 = vunpack.c.h.bf16 %v8746
        %v9005 = vunpack.c.l.bf16 %v8747
        %v9006 = vunpack.c.h.bf16 %v8747
        %v9007 = vunpack.c.l.bf16 %v8748
        %v9008 = vunpack.c.h.bf16 %v8748
        %v9009 = vunpack.c.l.bf16 %v8749
        %v9010 = vunpack.c.h.bf16 %v8749
        %v9011 = vunpack.c.l.bf16 %v8750
        %v9012 = vunpack.c.h.bf16 %v8750
        %v9013 = vunpack.c.l.bf16 %v8751
        %v9014 = vunpack.c.h.bf16 %v8751
        %v9015 = vunpack.c.l.bf16 %v8752
        %v9016 = vunpack.c.h.bf16 %v8752
        %v9017 = vrcp.pop %v8859
        %v9018 = vmul.f32 %v8985, %v9017
        %v9019 = vrcp.pop %v8862
        %v9020 = vmul.f32 %v8986, %v9019
        %v9021 = vrcp.pop %v8867
        %v9022 = vmul.f32 %v8987, %v9021
        %v9023 = vrcp.pop %v8870
        %v9024 = vmul.f32 %v8988, %v9023
        %v9025 = vrcp.pop %v8875
        %v9026 = vmul.f32 %v8989, %v9025
        %v9027 = vrcp.pop %v8878
        %v9028 = vmul.f32 %v8990, %v9027
        %v9029 = vrcp.pop %v8883
        %v9030 = vmul.f32 %v8991, %v9029
        %v9031 = vrcp.pop %v8886
        %v9032 = vmul.f32 %v8992, %v9031
        %v9033 = vrcp.pop %v8891
        %v9034 = vmul.f32 %v8993, %v9033
        %v9035 = vrcp.pop %v8894
        %v9036 = vmul.f32 %v8994, %v9035
        %v9037 = vrcp.pop %v8899
        %v9038 = vmul.f32 %v8995, %v9037
        %v9039 = vrcp.pop %v8902
        %v9040 = vmul.f32 %v8996, %v9039
        %v9041 = vrcp.pop %v8907
        %v9042 = vmul.f32 %v8997, %v9041
        %v9043 = vrcp.pop %v8910
        %v9044 = vmul.f32 %v8998, %v9043
        %v9045 = vrcp.pop %v8915
        %v9046 = vmul.f32 %v8999, %v9045
        %v9047 = vrcp.pop %v8918
        %v9048 = vmul.f32 %v9000, %v9047
        %v9049 = vrcp.pop %v8923
        %v9050 = vmul.f32 %v9001, %v9049
        %v9051 = vrcp.pop %v8926
        %v9052 = vmul.f32 %v9002, %v9051
        %v9053 = vrcp.pop %v8931
        %v9054 = vmul.f32 %v9003, %v9053
        %v9055 = vrcp.pop %v8934
        %v9056 = vmul.f32 %v9004, %v9055
        %v9057 = vrcp.pop %v8939
        %v9058 = vmul.f32 %v9005, %v9057
        %v9059 = vrcp.pop %v8942
        %v9060 = vmul.f32 %v9006, %v9059
        %v9061 = vrcp.pop %v8947
        %v9062 = vmul.f32 %v9007, %v9061
        %v9063 = vrcp.pop %v8950
        %v9064 = vmul.f32 %v9008, %v9063
        %v9065 = vrcp.pop %v8955
        %v9066 = vmul.f32 %v9009, %v9065
        %v9067 = vrcp.pop %v8958
        %v9068 = vmul.f32 %v9010, %v9067
        %v9069 = vrcp.pop %v8963
        %v9070 = vmul.f32 %v9011, %v9069
        %v9071 = vrcp.pop %v8966
        %v9072 = vmul.f32 %v9012, %v9071
        %v9073 = vrcp.pop %v8971
        %v9074 = vmul.f32 %v9013, %v9073
        %v9075 = vrcp.pop %v8974
        %v9076 = vmul.f32 %v9014, %v9075
        %v9077 = vrcp.pop %v8979
        %v9078 = vmul.f32 %v9015, %v9077
        %v9079 = vrcp.pop %v8982
        %v9080 = vmul.f32 %v9016, %v9079
        %v9081 = vsel %vm8331, 1, 0
        %v9082 = vlaneseq
        %v9083 = vshrl.u32 %v9082, 7
        %v9084 = vsub.s32 0, %v9083
        %v9085 = vrot.slane %v9081, %v9084
        %vm9086 = vcmp.eq.s32.totalorder %v9085, 1
        %v9087 = vsel %vm9086, %v8203, %v9018
        %v9088 = vsel %vm9086, %v8206, %v9020
        %v9089 = vsel %vm9086, %v8211, %v9022
        %v9090 = vsel %vm9086, %v8214, %v9024
        %v9091 = vsel %vm9086, %v8219, %v9026
        %v9092 = vsel %vm9086, %v8222, %v9028
        %v9093 = vsel %vm9086, %v8227, %v9030
        %v9094 = vsel %vm9086, %v8230, %v9032
        %v9095 = vsel %vm9086, %v8235, %v9034
        %v9096 = vsel %vm9086, %v8238, %v9036
        %v9097 = vsel %vm9086, %v8243, %v9038
        %v9098 = vsel %vm9086, %v8246, %v9040
        %v9099 = vsel %vm9086, %v8251, %v9042
        %v9100 = vsel %vm9086, %v8254, %v9044
        %v9101 = vsel %vm9086, %v8259, %v9046
        %v9102 = vsel %vm9086, %v8262, %v9048
        %v9103 = vsel %vm9086, %v8267, %v9050
        %v9104 = vsel %vm9086, %v8270, %v9052
        %v9105 = vsel %vm9086, %v8275, %v9054
        %v9106 = vsel %vm9086, %v8278, %v9056
        %v9107 = vsel %vm9086, %v8283, %v9058
        %v9108 = vsel %vm9086, %v8286, %v9060
        %v9109 = vsel %vm9086, %v8291, %v9062
        %v9110 = vsel %vm9086, %v8294, %v9064
        %v9111 = vsel %vm9086, %v8299, %v9066
        %v9112 = vsel %vm9086, %v8302, %v9068
        %v9113 = vsel %vm9086, %v8307, %v9070
        %v9114 = vsel %vm9086, %v8310, %v9072
        %v9115 = vsel %vm9086, %v8315, %v9074
        %v9116 = vsel %vm9086, %v8318, %v9076
        %v9117 = vsel %vm9086, %v8323, %v9078
        %v9118 = vsel %vm9086, %v8326, %v9080
        %9119 = vst [vmem:[%s725] sm:$0xff] %v9087
        %9120 = vst [vmem:[%s725 + $0x8] sm:$0xff] %v9088
        %9121 = vst [vmem:[%s725 + $0x10] sm:$0xff] %v9089
        %9122 = vst [vmem:[%s725 + $0x18] sm:$0xff] %v9090
        %9123 = vst [vmem:[%s725 + $0x20] sm:$0xff] %v9091
        %9124 = vst [vmem:[%s725 + $0x28] sm:$0xff] %v9092
        %9125 = vst [vmem:[%s725 + $0x30] sm:$0xff] %v9093
        %9126 = vst [vmem:[%s725 + $0x38] sm:$0xff] %v9094
        %9127 = vst [vmem:[%s725 + $0x40] sm:$0xff] %v9095
        %9128 = vst [vmem:[%s725 + $0x48] sm:$0xff] %v9096
        %9129 = vst [vmem:[%s725 + $0x50] sm:$0xff] %v9097
        %9130 = vst [vmem:[%s725 + $0x58] sm:$0xff] %v9098
        %9131 = vst [vmem:[%s725 + $0x60] sm:$0xff] %v9099
        %9132 = vst [vmem:[%s725 + $0x68] sm:$0xff] %v9100
        %9133 = vst [vmem:[%s725 + $0x70] sm:$0xff] %v9101
        %9134 = vst [vmem:[%s725 + $0x78] sm:$0xff] %v9102
        %9135 = vst [vmem:[%s725 + $0x80] sm:$0xff] %v9103
        %9136 = vst [vmem:[%s725 + $0x88] sm:$0xff] %v9104
        %9137 = vst [vmem:[%s725 + $0x90] sm:$0xff] %v9105
        %9138 = vst [vmem:[%s725 + $0x98] sm:$0xff] %v9106
        %9139 = vst [vmem:[%s725 + $0xa0] sm:$0xff] %v9107
        %9140 = vst [vmem:[%s725 + $0xa8] sm:$0xff] %v9108
        %9141 = vst [vmem:[%s725 + $0xb0] sm:$0xff] %v9109
        %9142 = vst [vmem:[%s725 + $0xb8] sm:$0xff] %v9110
        %9143 = vst [vmem:[%s725 + $0xc0] sm:$0xff] %v9111
        %9144 = vst [vmem:[%s725 + $0xc8] sm:$0xff] %v9112
        %9145 = vst [vmem:[%s725 + $0xd0] sm:$0xff] %v9113
        %9146 = vst [vmem:[%s725 + $0xd8] sm:$0xff] %v9114
        %9147 = vst [vmem:[%s725 + $0xe0] sm:$0xff] %v9115
        %9148 = vst [vmem:[%s725 + $0xe8] sm:$0xff] %v9116
        %9149 = vst [vmem:[%s725 + $0xf0] sm:$0xff] %v9117
        %9150 = vst [vmem:[%s725 + $0xf8] sm:$0xff] %v9118
        %s9151 = sand.u32 %s455, 1
        %s9152 = scalar_lea.sflag [#allocation4], %s9151
        %s9153 = sand.u32 %s455, 1
        %s9154 = smul.addr %s9153, 256
        %s9155 = scalar_lea.vmem [#allocation16], %s9154
        // Predicated region
        $region129: #{tpu_custom_call.1} parent=95 // pred_check
          %p9156 = pneg %p465
        $region130: #{tpu_custom_call.1} parent=95 // pred_check_branch
          %9158 = sbr.rel (%p9156) target = $region132
        $region131: #{tpu_custom_call.1} parent=95 // pred_region
          %s9159 = smul.u32 32, %s38
          %s9161 = ssub.s32 4096, 4096
          %9162 = vsyncadd %s9152, %s9161
          %s9163 = smul.addr %s9159, 128
          %s9164 = scalar_lea.hbm %s19, %s9163
          %s9165 = sshll.u32 %s9155, 4
          %s9166 = int_to_ptr.vmem [resolvable:$true] %s9165
          %9171 = dma.vmem_to_hbm [thread:$0]  %s9166, 4096, %s9164, %s9152, 128, 128, 8
        $region132: #{tpu_custom_call.1} parent=95 // pred_fallthru
          _
      $region96: #{tpu_custom_call.1} parent=5 // pred_fallthru
        _
      %p9172 = scmp.le.s32.totalorder 2, %s33
      // Predicated region
      $region133: #{tpu_custom_call.1} parent=5 // pred_check
        %p9173 = pneg %p9172
      $region134: #{tpu_custom_call.1} parent=5 // pred_check_branch
        %9175 = sbr.rel (%p9173) target = $region136
      $region135: #{tpu_custom_call.1} parent=5 // pred_region
        %s9176 = ssub.s32 %s33, 2
        // Predicated region
        $region137: #{tpu_custom_call.1} parent=135 // pred_check
          %p9177 = pneg %p471
        $region138: #{tpu_custom_call.1} parent=135 // pred_check_branch
          %9179 = sbr.rel (%p9177) target = $region140
        $region139: #{tpu_custom_call.1} parent=135 // pred_region
          %s9180 = sand.u32 %s456, 1
          %s9181 = scalar_lea.sflag [#allocation4], %s9180
          %s9182 = sand.u32 %s456, 1
          %s9183 = smul.addr %s9182, 256
          %s9184 = scalar_lea.vmem [#allocation16], %s9183
          %9185 = dma.done %s9181, 4096
        $region140: #{tpu_custom_call.1} parent=135 // pred_fallthru
          _
      $region136: #{tpu_custom_call.1} parent=5 // pred_fallthru
        _
    $region6: #{tpu_custom_call.1} parent=1 // loop_footer
      %s37 = sadd.s32 1, %s33
    $region7: #{tpu_custom_call.1} parent=1 // loop_footer_branch
      %32 = sbr.rel target = $region3
    $region8: #{tpu_custom_call.1} parent=1 // loop_exit
      _
    %9186 = vsyncpa [#allocation3], 1
    %s9187 = scalar_lea.sflag [#allocation3], 1
    %9188 = vsyncpa %s9187, 1
    %9189 = vsyncpa [#allocation6], 1
    %9190 = vsyncpa [#allocation9], 1
    %9191 = vsyncpa [#allocation12], 1
    %9192 = vsyncpa [#allocation15], 1
    %9193 = vsyncpa [#allocation4], 1
    %s9194 = scalar_lea.sflag [#allocation4], 1
    %9195 = vsyncpa %s9194, 1

</llo_original>
